<compile_context>
chip_gen: v6e
topology: v6e:2x2x1
jax: 0.10.0
libtpu: 0.0.40
codegen_flags: <defaults>
</compile_context>

<pallas_src>
import functools

import jax
import jax.numpy as jnp
from jax.experimental import pallas as pl
from jax.experimental.pallas import tpu as pltpu


_CPARAMS = pltpu.CompilerParams(
    dimension_semantics=("parallel",),
    vmem_limit_bytes=48 * 1024 * 1024,
)


# --------------------------------------------------------------------------- kernels
def _conv3x3_acc(x_ref, w_ref, gb, th, W, cin, cout):
    """3x3 conv (stride 1) on a zero-halo slab as 9 shifted MXU dots, f32 accumulation.

    x_ref: (gb, th+2, W+2, cin) bf16 halo slab (zero borders already included).
    w_ref: (9, cin, cout) bf16, tap order (ky, kx) row-major, BN scale folded in.
    Returns (gb*th*W, cout) f32.
    """
    m = gb * th * W
    acc = jnp.zeros((m, cout), jnp.float32)
    for ky in range(3):
        for kx in range(3):
            win = x_ref[:, ky:ky + th, kx:kx + W, :].reshape(m, cin)
            acc = acc + jnp.dot(win, w_ref[3 * ky + kx],
                                preferred_element_type=jnp.float32)
    return acc


def conv_bn_relu_kernel(gb, th, W, cin, cout, x_ref, w_ref, shift_ref, o_ref):
    # Up() conv1: 3x3 conv (BN scale folded into w) + shift + ReLU -> bf16.
    h = jnp.maximum(_conv3x3_acc(x_ref, w_ref, gb, th, W, cin, cout)
                    + shift_ref[...], 0.0)
    o_ref[...] = h.astype(o_ref.dtype).reshape(gb, th * W, cout)


def conv_bn_relu_depthnet_kernel(gb, th, W, cin, cout, D, C,
                                 x_ref, w_ref, shift_ref,
                                 wdep_ref, bdep_ref, wctx_ref, bctx_ref,
                                 r_ref, o_ref):
    # Up() conv2 fused with the 1x1 depthnet, softmax over the D depth bins and the
    # depth x context outer product.  Output is lane-dense (gb, th*W, D*C) f32.
    h = jnp.maximum(_conv3x3_acc(x_ref, w_ref, gb, th, W, cin, cout)
                    + shift_ref[...], 0.0).astype(jnp.bfloat16)

    # Context columns of dn_w are pre-tiled host-side to (cin, D*C): ctx_wide falls out
    # of the MXU already lane-dense (no cross-lane concat on the XLU).
    ctx_wide = (jnp.dot(h, wctx_ref[...], preferred_element_type=jnp.float32)
                + bctx_ref[...])                                    # (m, D*C)
    dl = (jnp.dot(h, wdep_ref[...], preferred_element_type=jnp.float32)
          + bdep_ref[...])                                          # (m, D) depth logits
    dl = dl - jnp.max(dl, axis=-1, keepdims=True)                   # softmax (torch dim=1)
    e = jnp.exp(dl)
    depth = e * pl.reciprocal(jnp.sum(e, axis=-1, keepdims=True), approx=True)
    # Expand depth (m, D) -> (m, D*C) on the MXU with a 0/1 expansion matrix.
    depth_wide = jnp.dot(depth, r_ref[...], preferred_element_type=jnp.float32)
    o_ref[...] = (depth_wide * ctx_wide).reshape(gb, th * W, D * C)


# --------------------------------------------------------------------------- wrappers
def _resident(shape):
    # Constant index_map -> operand stays VMEM-resident across the whole grid.
    nd = len(shape)
    return pl.BlockSpec(shape, lambda *_: (0,) * nd)


def conv3x3_bn_relu(slabs, w, shift, th, gb):
    ns, thp, wp, cin = slabs.shape
    W = wp - 2
    cout = w.shape[-1]
    kern = functools.partial(conv_bn_relu_kernel, gb, th, W, cin, cout)
    return pl.pallas_call(
        kern,
        out_shape=jax.ShapeDtypeStruct((ns, th * W, cout), jnp.bfloat16),
        grid_spec=pltpu.PrefetchScalarGridSpec(
            num_scalar_prefetch=0,
            grid=(ns // gb,),
            in_specs=[
                pl.BlockSpec((gb, thp, wp, cin), lambda s: (s, 0, 0, 0)),
                _resident(w.shape),
                _resident(shift.shape),
            ],
            out_specs=pl.BlockSpec((gb, th * W, cout), lambda s: (s, 0, 0)),
        ),
        compiler_params=_CPARAMS,
    )(slabs, w, shift)


def conv3x3_bn_relu_depthnet(slabs, w, shift, wdep, bdep, wctx, bctx, r, th, gb, D, C):
    ns, thp, wp, cin = slabs.shape
    W = wp - 2
    cout = w.shape[-1]
    kern = functools.partial(conv_bn_relu_depthnet_kernel, gb, th, W, cin, cout, D, C)
    return pl.pallas_call(
        kern,
        out_shape=jax.ShapeDtypeStruct((ns, th * W, D * C), jnp.float32),
        grid_spec=pltpu.PrefetchScalarGridSpec(
            num_scalar_prefetch=0,
            grid=(ns // gb,),
            in_specs=[
                pl.BlockSpec((gb, thp, wp, cin), lambda s: (s, 0, 0, 0)),
                _resident(w.shape),
                _resident(shift.shape),
                _resident(wdep.shape),
                _resident(bdep.shape),
                _resident(wctx.shape),
                _resident(bctx.shape),
                _resident(r.shape),
            ],
            out_specs=pl.BlockSpec((gb, th * W, D * C), lambda s: (s, 0, 0)),
        ),
        compiler_params=_CPARAMS,
    )(slabs, w, shift, wdep, bdep, wctx, bctx, r)


# --------------------------------------------------------------------------- host glue
def _pick_tiling(B, H, W, cin, target_rows=512, max_slab_bytes=4 << 20):
    # th: output rows per slab (always divides H); gb: slabs per grid step (divides B*nt).
    # Targets per-step matmul M = gb*th*W >= ~target_rows (amortizes the ~0.35us
    # per-grid-step overhead) while keeping grid length >= 2 so both v7x TCs get work.
    th = H
    while th % 2 == 0 and (th + 2) * (W + 2) * cin * 2 > max_slab_bytes:
        th //= 2
    ns = B * (H // th)
    gb = 1
    while (gb * th * W < target_rows and ns % (gb * 2) == 0
           and ns // (gb * 2) >= 2):
        gb *= 2
    return th, gb


def _make_slabs(x_nhwc, th):
    # (B, H, W, C) -> (B*(H//th), th+2, W+2, C): zero-halo row slabs (Conv2d padding=1).
    # ~(th+2)/th row duplication; replaces the previous 9x im2col materialization.
    B, H, W, C = x_nhwc.shape
    nt = H // th
    xp = jnp.pad(x_nhwc, ((0, 0), (1, 1), (1, 1), (0, 0)))
    slabs = jnp.stack([xp[:, i * th:i * th + th + 2] for i in range(nt)], axis=1)
    return slabs.reshape(B * nt, th + 2, W + 2, C)


def upsample_bilinear_ac(x, scale=2):
    # nn.Upsample(scale_factor=2, mode='bilinear', align_corners=True), NHWC
    B, H, W, C = x.shape
    Ho, Wo = H * scale, W * scale

    def coords(n_in, n_out):
        src = jnp.arange(n_out, dtype=jnp.float32) * (n_in - 1) / max(n_out - 1, 1)
        lo = jnp.clip(jnp.floor(src).astype(jnp.int32), 0, n_in - 1)
        hi = jnp.clip(lo + 1, 0, n_in - 1)
        return src - lo.astype(jnp.float32), lo, hi

    wy, y0, y1 = coords(H, Ho)
    wx, x0, x1 = coords(W, Wo)
    wxb = wx[None, None, :, None]
    top = x[:, y0][:, :, x0] * (1 - wxb) + x[:, y0][:, :, x1] * wxb
    bot = x[:, y1][:, :, x0] * (1 - wxb) + x[:, y1][:, :, x1] * wxb
    wyb = wy[None, :, None, None]
    return top * (1 - wyb) + bot * wyb


def stub_trunk(x_nhwc, params):
    # TODO(synk): pretrained EfficientNet-b0 trunk not reimplemented; deterministic
    # stand-in producing reduction_4 (112ch @ /16) and reduction_5 (320ch @ /32).
    def pool(x, f):
        B, H, W, C = x.shape
        return x.reshape(B, H // f, f, W // f, f, C).mean(axis=(2, 4))

    r4 = jnp.tanh(pool(x_nhwc, 16) @ params["r4_w"])
    r5 = jnp.tanh(pool(x_nhwc, 32) @ params["r5_w"])
    return r4, r5


def cam_encode_forward(x_nchw, params, D, C):
    x = jnp.transpose(x_nchw, (0, 2, 3, 1))                   # NCHW -> NHWC
    red4, red5 = stub_trunk(x, params)
    # Up(320 + 112, 512): upsample reduction_5, cat [x2, x1], 2x(conv3x3 + BN + ReLU)
    up5 = upsample_bilinear_ac(red5, 2)
    cat = jnp.concatenate([red4, up5], axis=-1)               # 112 + 320 = 432 channels
    B, H, W, cin0 = cat.shape

    cin1 = 512                       # pad 432 -> 512: every lane/K dim a multiple of 128
    th, gb = _pick_tiling(B, H, W, cin1)

    # ---- conv1 + BN + ReLU (Pallas) ----
    cat_b = jnp.pad(cat.astype(jnp.bfloat16),                 # bf16 BEFORE slab build
                    ((0, 0), (0, 0), (0, 0), (0, cin1 - cin0)))
    slabs1 = _make_slabs(cat_b, th)                                       # (ns, th+2, W+2, 512)
    w1 = jnp.pad(params["conv1_w"], ((0, 0), (0, 0), (0, cin1 - cin0), (0, 0)))
    w1 = (w1 * params["bn1_scale"][None, None, None, :]                  # fold BN scale
          ).reshape(9, cin1, 512).astype(jnp.bfloat16)
    shift1 = params["bn1_shift"].reshape(1, 512).astype(jnp.float32)
    h = conv3x3_bn_relu(slabs1, w1, shift1, th, gb)                       # (ns, th*W, 512) bf16
    h = h.reshape(B, H, W, 512)

    # ---- conv2 + BN + ReLU fused with depthnet / softmax / outer product (Pallas) ----
    slabs2 = _make_slabs(h, th)
    w2 = (params["conv2_w"] * params["bn2_scale"][None, None, None, :]
          ).reshape(9, 512, 512).astype(jnp.bfloat16)
    shift2 = params["bn2_shift"].reshape(1, 512).astype(jnp.float32)
    wdep = params["dn_w"][:, :D].astype(jnp.bfloat16)                     # (512, D)
    bdep = params["dn_b"][:D].reshape(1, D).astype(jnp.float32)
    wctx = jnp.tile(params["dn_w"][:, D:], (1, D)).astype(jnp.bfloat16)   # (512, D*C)
    bctx = jnp.tile(params["dn_b"][D:], (D,)).reshape(1, D * C).astype(jnp.float32)
    r = jnp.repeat(jnp.eye(D, dtype=jnp.float32), C, axis=1)              # (D, D*C)

    flat = conv3x3_bn_relu_depthnet(slabs2, w2, shift2, wdep, bdep,
                                    wctx, bctx, r, th, gb, D, C)          # (ns, th*W, D*C) f32
    # TODO(synk): downstream voxel pooling could consume (B, H, W, D, C) directly and
    # skip this transpose (one full HBM round-trip of the result).
    return flat.reshape(B, H, W, D, C).transpose(0, 4, 3, 1, 2)           # (B, C, D, H, W)


# --------------------------------------------------------------------------- params / reference
def init_params(key, D, C):
    ks = jax.random.split(key, 16)
    n = lambda k, s, sc: sc * jax.random.normal(k, s, jnp.float32)
    p = {}
    p["r4_w"] = n(ks[0], (3, 112), 0.5)
    p["r5_w"] = n(ks[1], (3, 320), 0.5)
    p["conv1_w"] = n(ks[2], (3, 3, 432, 512), 1.0 / (9 * 432) ** 0.5)
    p["conv2_w"] = n(ks[3], (3, 3, 512, 512), 1.0 / (9 * 512) ** 0.5)
    eps = 1e-5
    for i, name in enumerate(["bn1", "bn2"]):
        gamma = 1.0 + n(ks[4 + 4 * i], (512,), 0.1)
        beta = n(ks[5 + 4 * i], (512,), 0.1)
        mean = n(ks[6 + 4 * i], (512,), 0.05)
        var = 1.0 + jnp.abs(n(ks[7 + 4 * i], (512,), 0.1))
        scale = gamma / jnp.sqrt(var + eps)          # inference-mode BN, folded
        p[name + "_scale"] = scale
        p[name + "_shift"] = beta - mean * scale
    p["dn_w"] = n(ks[12], (512, D + C), 1.0 / 512 ** 0.5)
    p["dn_b"] = n(ks[13], (D + C,), 0.01)
    return p


def ref_forward(x_nchw, params, D, C):
    # Pure-JAX f32 reference for the kernel-implemented path (same glue as above).
    x = jnp.transpose(x_nchw, (0, 2, 3, 1))
    red4, red5 = stub_trunk(x, params)
    cat = jnp.concatenate([red4, upsample_bilinear_ac(red5, 2)], axis=-1)

    def conv_ref(inp, w, scale, shift):
        out = jax.lax.conv_general_dilated(
            inp, w, (1, 1), "SAME",
            dimension_numbers=("NHWC", "HWIO", "NHWC"),
            precision=jax.lax.Precision.HIGHEST)
        return jnp.maximum(out * scale + shift, 0.0)

    h = conv_ref(cat, params["conv1_w"], params["bn1_scale"], params["bn1_shift"])
    h = conv_ref(h, params["conv2_w"], params["bn2_scale"], params["bn2_shift"])
    logits = h @ params["dn_w"] + params["dn_b"]
    depth = jax.nn.softmax(logits[..., :D], axis=-1)
    ctx = logits[..., D:D + C]
    new_x = depth[..., :, None] * ctx[..., None, :]          # (B, H, W, D, C)
    return new_x.transpose(0, 4, 3, 1, 2)


if __name__ == "__main__":
    D_, C_ = 8, 16                       # CamEncode(D, C, downsample); D*C = 128 lanes
    B, Hin, Win = 2, 64, 64              # 3-channel image, stride-16 features -> 4x4 map
    key = jax.random.PRNGKey(0)
    kx_, kp_ = jax.random.split(key)
    x = jax.random.normal(kx_, (B, 3, Hin, Win), jnp.float32)
    params = init_params(kp_, D_, C_)

    out = jax.block_until_ready(cam_encode_forward(x, params, D_, C_))
    assert out.shape == (B, C_, D_, Hin // 16, Win // 16), out.shape
    assert bool(jnp.isfinite(out).all())

    ref = ref_forward(x, params, D_, C_)
    max_err = float(jnp.max(jnp.abs(out - ref)))
    assert max_err < 5e-2, max_err       # bf16 MXU operands, f32 accumulation
    print("KERNEL_OK")
</pallas_src>

<mosaic_0001>
module attributes {stable_mosaic.version = 11 : i64} {
  func.func @conv_bn_relu_kernel(%arg0: i32, %arg1: memref<1x6x6x512xbf16, #tpu.memory_space<vmem>>, %arg2: memref<9x512x512xbf16, #tpu.memory_space<vmem>>, %arg3: memref<1x512xf32, #tpu.memory_space<vmem>>, %arg4: memref<1x16x512xbf16, #tpu.memory_space<vmem>>) attributes {dimension_semantics = [#tpu.dimension_semantics<parallel>], iteration_bounds = array<i64: 2>, scalar_prefetch = 0 : i64, scratch_operands = 0 : i64, tpu.core_type = #tpu.core_type<tc>, window_params = [{transform_indices = @transform_0, window_bounds = array<i64: 1, 6, 6, 512>}, {pipeline_mode = #tpu.pipeline_mode<synchronous>, transform_indices = @transform_1, window_bounds = array<i64: 9, 512, 512>}, {pipeline_mode = #tpu.pipeline_mode<synchronous>, transform_indices = @transform_2, window_bounds = array<i64: 1, 512>}, {transform_indices = @transform_3, window_bounds = array<i64: 1, 16, 512>}]} {
    %cst = arith.constant 0.000000e+00 : f32
    %0 = vector.broadcast %cst : f32 to vector<16x512xf32>
    %c0 = arith.constant 0 : index
    %c0_0 = arith.constant 0 : index
    %c0_1 = arith.constant 0 : index
    %c0_2 = arith.constant 0 : index
    %1 = vector.load %arg1[%c0, %c0_0, %c0_1, %c0_2] : memref<1x6x6x512xbf16, #tpu.memory_space<vmem>>, vector<1x4x4x512xbf16>
    %2 = vector.shape_cast %1 : vector<1x4x4x512xbf16> to vector<16x512xbf16>
    %c0_3 = arith.constant 0 : index
    %c0_4 = arith.constant 0 : index
    %c0_5 = arith.constant 0 : index
    %3 = vector.load %arg2[%c0_3, %c0_4, %c0_5] : memref<9x512x512xbf16, #tpu.memory_space<vmem>>, vector<1x512x512xbf16>
    %4 = vector.shape_cast %3 : vector<1x512x512xbf16> to vector<512x512xbf16>
    %cst_6 = arith.constant dense<0.000000e+00> : vector<16x512xf32>
    %5 = tpu.matmul %2, %4, %cst_6 {dimension_numbers = #tpu.dot_dimension_numbers<[1], [0], [0], [1], [0, 0, 1, 1], [], []>} : vector<16x512xbf16>, vector<512x512xbf16>, vector<16x512xf32> -> vector<16x512xf32>
    %6 = arith.addf %0, %5 : vector<16x512xf32>
    %c0_7 = arith.constant 0 : index
    %c0_8 = arith.constant 0 : index
    %c1 = arith.constant 1 : index
    %c0_9 = arith.constant 0 : index
    %7 = vector.load %arg1[%c0_7, %c0_8, %c1, %c0_9] : memref<1x6x6x512xbf16, #tpu.memory_space<vmem>>, vector<1x4x4x512xbf16>
    %8 = vector.shape_cast %7 : vector<1x4x4x512xbf16> to vector<16x512xbf16>
    %c1_10 = arith.constant 1 : index
    %c0_11 = arith.constant 0 : index
    %c0_12 = arith.constant 0 : index
    %9 = vector.load %arg2[%c1_10, %c0_11, %c0_12] : memref<9x512x512xbf16, #tpu.memory_space<vmem>>, vector<1x512x512xbf16>
    %10 = vector.shape_cast %9 : vector<1x512x512xbf16> to vector<512x512xbf16>
    %cst_13 = arith.constant dense<0.000000e+00> : vector<16x512xf32>
    %11 = tpu.matmul %8, %10, %cst_13 {dimension_numbers = #tpu.dot_dimension_numbers<[1], [0], [0], [1], [0, 0, 1, 1], [], []>} : vector<16x512xbf16>, vector<512x512xbf16>, vector<16x512xf32> -> vector<16x512xf32>
    %12 = arith.addf %6, %11 : vector<16x512xf32>
    %c0_14 = arith.constant 0 : index
    %c0_15 = arith.constant 0 : index
    %c2 = arith.constant 2 : index
    %c0_16 = arith.constant 0 : index
    %13 = vector.load %arg1[%c0_14, %c0_15, %c2, %c0_16] : memref<1x6x6x512xbf16, #tpu.memory_space<vmem>>, vector<1x4x4x512xbf16>
    %14 = vector.shape_cast %13 : vector<1x4x4x512xbf16> to vector<16x512xbf16>
    %c2_17 = arith.constant 2 : index
    %c0_18 = arith.constant 0 : index
    %c0_19 = arith.constant 0 : index
    %15 = vector.load %arg2[%c2_17, %c0_18, %c0_19] : memref<9x512x512xbf16, #tpu.memory_space<vmem>>, vector<1x512x512xbf16>
    %16 = vector.shape_cast %15 : vector<1x512x512xbf16> to vector<512x512xbf16>
    %cst_20 = arith.constant dense<0.000000e+00> : vector<16x512xf32>
    %17 = tpu.matmul %14, %16, %cst_20 {dimension_numbers = #tpu.dot_dimension_numbers<[1], [0], [0], [1], [0, 0, 1, 1], [], []>} : vector<16x512xbf16>, vector<512x512xbf16>, vector<16x512xf32> -> vector<16x512xf32>
    %18 = arith.addf %12, %17 : vector<16x512xf32>
    %c0_21 = arith.constant 0 : index
    %c1_22 = arith.constant 1 : index
    %c0_23 = arith.constant 0 : index
    %c0_24 = arith.constant 0 : index
    %19 = vector.load %arg1[%c0_21, %c1_22, %c0_23, %c0_24] : memref<1x6x6x512xbf16, #tpu.memory_space<vmem>>, vector<1x4x4x512xbf16>
    %20 = vector.shape_cast %19 : vector<1x4x4x512xbf16> to vector<16x512xbf16>
    %c3 = arith.constant 3 : index
    %c0_25 = arith.constant 0 : index
    %c0_26 = arith.constant 0 : index
    %21 = vector.load %arg2[%c3, %c0_25, %c0_26] : memref<9x512x512xbf16, #tpu.memory_space<vmem>>, vector<1x512x512xbf16>
    %22 = vector.shape_cast %21 : vector<1x512x512xbf16> to vector<512x512xbf16>
    %cst_27 = arith.constant dense<0.000000e+00> : vector<16x512xf32>
    %23 = tpu.matmul %20, %22, %cst_27 {dimension_numbers = #tpu.dot_dimension_numbers<[1], [0], [0], [1], [0, 0, 1, 1], [], []>} : vector<16x512xbf16>, vector<512x512xbf16>, vector<16x512xf32> -> vector<16x512xf32>
    %24 = arith.addf %18, %23 : vector<16x512xf32>
    %c0_28 = arith.constant 0 : index
    %c1_29 = arith.constant 1 : index
    %c1_30 = arith.constant 1 : index
    %c0_31 = arith.constant 0 : index
    %25 = vector.load %arg1[%c0_28, %c1_29, %c1_30, %c0_31] : memref<1x6x6x512xbf16, #tpu.memory_space<vmem>>, vector<1x4x4x512xbf16>
    %26 = vector.shape_cast %25 : vector<1x4x4x512xbf16> to vector<16x512xbf16>
    %c4 = arith.constant 4 : index
    %c0_32 = arith.constant 0 : index
    %c0_33 = arith.constant 0 : index
    %27 = vector.load %arg2[%c4, %c0_32, %c0_33] : memref<9x512x512xbf16, #tpu.memory_space<vmem>>, vector<1x512x512xbf16>
    %28 = vector.shape_cast %27 : vector<1x512x512xbf16> to vector<512x512xbf16>
    %cst_34 = arith.constant dense<0.000000e+00> : vector<16x512xf32>
    %29 = tpu.matmul %26, %28, %cst_34 {dimension_numbers = #tpu.dot_dimension_numbers<[1], [0], [0], [1], [0, 0, 1, 1], [], []>} : vector<16x512xbf16>, vector<512x512xbf16>, vector<16x512xf32> -> vector<16x512xf32>
    %30 = arith.addf %24, %29 : vector<16x512xf32>
    %c0_35 = arith.constant 0 : index
    %c1_36 = arith.constant 1 : index
    %c2_37 = arith.constant 2 : index
    %c0_38 = arith.constant 0 : index
    %31 = vector.load %arg1[%c0_35, %c1_36, %c2_37, %c0_38] : memref<1x6x6x512xbf16, #tpu.memory_space<vmem>>, vector<1x4x4x512xbf16>
    %32 = vector.shape_cast %31 : vector<1x4x4x512xbf16> to vector<16x512xbf16>
    %c5 = arith.constant 5 : index
    %c0_39 = arith.constant 0 : index
    %c0_40 = arith.constant 0 : index
    %33 = vector.load %arg2[%c5, %c0_39, %c0_40] : memref<9x512x512xbf16, #tpu.memory_space<vmem>>, vector<1x512x512xbf16>
    %34 = vector.shape_cast %33 : vector<1x512x512xbf16> to vector<512x512xbf16>
    %cst_41 = arith.constant dense<0.000000e+00> : vector<16x512xf32>
    %35 = tpu.matmul %32, %34, %cst_41 {dimension_numbers = #tpu.dot_dimension_numbers<[1], [0], [0], [1], [0, 0, 1, 1], [], []>} : vector<16x512xbf16>, vector<512x512xbf16>, vector<16x512xf32> -> vector<16x512xf32>
    %36 = arith.addf %30, %35 : vector<16x512xf32>
    %c0_42 = arith.constant 0 : index
    %c2_43 = arith.constant 2 : index
    %c0_44 = arith.constant 0 : index
    %c0_45 = arith.constant 0 : index
    %37 = vector.load %arg1[%c0_42, %c2_43, %c0_44, %c0_45] : memref<1x6x6x512xbf16, #tpu.memory_space<vmem>>, vector<1x4x4x512xbf16>
    %38 = vector.shape_cast %37 : vector<1x4x4x512xbf16> to vector<16x512xbf16>
    %c6 = arith.constant 6 : index
    %c0_46 = arith.constant 0 : index
    %c0_47 = arith.constant 0 : index
    %39 = vector.load %arg2[%c6, %c0_46, %c0_47] : memref<9x512x512xbf16, #tpu.memory_space<vmem>>, vector<1x512x512xbf16>
    %40 = vector.shape_cast %39 : vector<1x512x512xbf16> to vector<512x512xbf16>
    %cst_48 = arith.constant dense<0.000000e+00> : vector<16x512xf32>
    %41 = tpu.matmul %38, %40, %cst_48 {dimension_numbers = #tpu.dot_dimension_numbers<[1], [0], [0], [1], [0, 0, 1, 1], [], []>} : vector<16x512xbf16>, vector<512x512xbf16>, vector<16x512xf32> -> vector<16x512xf32>
    %42 = arith.addf %36, %41 : vector<16x512xf32>
    %c0_49 = arith.constant 0 : index
    %c2_50 = arith.constant 2 : index
    %c1_51 = arith.constant 1 : index
    %c0_52 = arith.constant 0 : index
    %43 = vector.load %arg1[%c0_49, %c2_50, %c1_51, %c0_52] : memref<1x6x6x512xbf16, #tpu.memory_space<vmem>>, vector<1x4x4x512xbf16>
    %44 = vector.shape_cast %43 : vector<1x4x4x512xbf16> to vector<16x512xbf16>
    %c7 = arith.constant 7 : index
    %c0_53 = arith.constant 0 : index
    %c0_54 = arith.constant 0 : index
    %45 = vector.load %arg2[%c7, %c0_53, %c0_54] : memref<9x512x512xbf16, #tpu.memory_space<vmem>>, vector<1x512x512xbf16>
    %46 = vector.shape_cast %45 : vector<1x512x512xbf16> to vector<512x512xbf16>
    %cst_55 = arith.constant dense<0.000000e+00> : vector<16x512xf32>
    %47 = tpu.matmul %44, %46, %cst_55 {dimension_numbers = #tpu.dot_dimension_numbers<[1], [0], [0], [1], [0, 0, 1, 1], [], []>} : vector<16x512xbf16>, vector<512x512xbf16>, vector<16x512xf32> -> vector<16x512xf32>
    %48 = arith.addf %42, %47 : vector<16x512xf32>
    %c0_56 = arith.constant 0 : index
    %c2_57 = arith.constant 2 : index
    %c2_58 = arith.constant 2 : index
    %c0_59 = arith.constant 0 : index
    %49 = vector.load %arg1[%c0_56, %c2_57, %c2_58, %c0_59] : memref<1x6x6x512xbf16, #tpu.memory_space<vmem>>, vector<1x4x4x512xbf16>
    %50 = vector.shape_cast %49 : vector<1x4x4x512xbf16> to vector<16x512xbf16>
    %c8 = arith.constant 8 : index
    %c0_60 = arith.constant 0 : index
    %c0_61 = arith.constant 0 : index
    %51 = vector.load %arg2[%c8, %c0_60, %c0_61] : memref<9x512x512xbf16, #tpu.memory_space<vmem>>, vector<1x512x512xbf16>
    %52 = vector.shape_cast %51 : vector<1x512x512xbf16> to vector<512x512xbf16>
    %cst_62 = arith.constant dense<0.000000e+00> : vector<16x512xf32>
    %53 = tpu.matmul %50, %52, %cst_62 {dimension_numbers = #tpu.dot_dimension_numbers<[1], [0], [0], [1], [0, 0, 1, 1], [], []>} : vector<16x512xbf16>, vector<512x512xbf16>, vector<16x512xf32> -> vector<16x512xf32>
    %54 = arith.addf %48, %53 : vector<16x512xf32>
    %c0_63 = arith.constant 0 : index
    %c0_64 = arith.constant 0 : index
    %55 = vector.load %arg3[%c0_63, %c0_64] : memref<1x512xf32, #tpu.memory_space<vmem>>, vector<1x512xf32>
    %56 = vector.broadcast %55 : vector<1x512xf32> to vector<16x512xf32>
    %57 = arith.addf %54, %56 : vector<16x512xf32>
    %cst_65 = arith.constant 0.000000e+00 : f32
    %58 = vector.broadcast %cst_65 : f32 to vector<16x512xf32>
    %59 = arith.maximumf %57, %58 : vector<16x512xf32>
    %60 = arith.truncf %59 : vector<16x512xf32> to vector<16x512xbf16>
    %61 = vector.shape_cast %60 : vector<16x512xbf16> to vector<1x16x512xbf16>
    %c0_66 = arith.constant 0 : index
    %c0_67 = arith.constant 0 : index
    %c0_68 = arith.constant 0 : index
    %62 = vector.load %arg4[%c0_66, %c0_67, %c0_68] : memref<1x16x512xbf16, #tpu.memory_space<vmem>>, vector<1x16x512xbf16>
    tpu.vector_store %arg4[%c0_66, %c0_67, %c0_68], %61 {strides = array<i32>} : memref<1x16x512xbf16, #tpu.memory_space<vmem>>, vector<1x16x512xbf16>,
    return
  }
  func.func @transform_0(%arg0: i32) -> (i32, i32, i32, i32) {
    %c0_i32 = arith.constant 0 : i32
    %c0_i32_0 = arith.constant 0 : i32
    %c0_i32_1 = arith.constant 0 : i32
    %c0_i32_2 = arith.constant 0 : i32
    return %arg0, %c0_i32, %c0_i32_0, %c0_i32_1 : i32, i32, i32, i32
  }
  func.func @transform_1(%arg0: i32) -> (i32, i32, i32) {
    %c0_i32 = arith.constant 0 : i32
    %c0_i32_0 = arith.constant 0 : i32
    %c0_i32_1 = arith.constant 0 : i32
    %c0_i32_2 = arith.constant 0 : i32
    return %c0_i32, %c0_i32_0, %c0_i32_1 : i32, i32, i32
  }
  func.func @transform_2(%arg0: i32) -> (i32, i32) {
    %c0_i32 = arith.constant 0 : i32
    %c0_i32_0 = arith.constant 0 : i32
    %c0_i32_1 = arith.constant 0 : i32
    return %c0_i32, %c0_i32_0 : i32, i32
  }
  func.func @transform_3(%arg0: i32) -> (i32, i32, i32) {
    %c0_i32 = arith.constant 0 : i32
    %c0_i32_0 = arith.constant 0 : i32
    %c0_i32_1 = arith.constant 0 : i32
    return %arg0, %c0_i32, %c0_i32_0 : i32, i32, i32
  }
}

</mosaic_0001>

<llo_original>
// kernel: tpu_custom_call.1
$region0: #{tpu_custom_call.1}
  #allocation0 [shape = 'u32[]', space=smem, size = 0x4, offset = 0x4, fixed_abs, tag = 'smem constant byte address 0x4 - core index']
  #allocation1 [shape = 'u32[144,128]{1,0:T(1,128)}', space=vmem, size = 0x12000, scoped, tag = 'internal scratch']
  %s0 = inlined_call_operand.vmem [shape: bf16[2,6,6,512], index: 0, kind: input, shape index: {}]
  %s1 = inlined_call_operand.hbm [shape: bf16[9,512,512], index: 1, kind: input, shape index: {}]
  %s2 = inlined_call_operand.hbm [shape: f32[1,512], index: 2, kind: input, shape index: {}]
  %s3 = inlined_call_operand.hbm [shape: bf16[2,16,512], index: 3, kind: output, shape index: {}]
  %s4 = sld [smem:[#allocation0]]
  $region53: #{tpu_custom_call.1} parent=0
    _
  %s6 = ssub.s32 1, %s4
  %s7 = scalar_select 0, %s6, %s4
  $region1: #{tpu_custom_call.1} parent=0
    #allocation2 [shape = 'u8[4718592]{0}', space=vmem, size = 0x480000, scoped, tag = 'input window, operand 1, single buffered']
    #allocation3 [shape = 's32[2]{0}', space=sflag, size = 0x8, scoped, tag = 'scoped memory for tpu_custom_call.1']
    #allocation4 [shape = 's32[2]{0}', space=sflag, size = 0x8, scoped, tag = 'scoped memory for tpu_custom_call.1']
    #allocation5 [shape = 'u8[2048]{0}', space=vmem, size = 0x800, scoped, tag = 'input window, operand 2, single buffered']
    #allocation6 [shape = 's32[1]{0}', space=sflag, size = 0x4, scoped, tag = 'scoped memory for tpu_custom_call.1']
    #allocation7 [shape = 'u8[32768]{0}', space=vmem, size = 0x8000, scoped, tag = 'output window, operand 0']
    %8 = vsyncpa [#allocation3], 0
    %9 = vsyncpa [#allocation6], 0
    %10 = vsyncpa [#allocation4], 0
    %s11 = scalar_lea.sflag [#allocation4], 1
    %12 = vsyncpa %s11, 0
    loop: start=0, step=1, limit=4
    $region2: #{tpu_custom_call.1} parent=1 // loop_pre_header
      _
    $region3: #{tpu_custom_call.1} parent=1 // loop_header
      %s14 = sphi 0, %s18
      %p15 = scmp.ge.s32.totalorder %s14, 4
      %s24 = sphi 0, %s26
      %s27 = sphi 0, %s24
      %s28 = sphi 0, %s27
      %s44 = sphi 0, %s28
      %s48 = sphi 0, %s48
      %s50 = sphi 0, %s48
      %s51 = sphi 0, %s50
      %s65 = sphi 0, %s51
      %s69 = sphi 0, %s69
      %s71 = sphi 0, %s69
      %s72 = sphi 0, %s71
      %s86 = sphi 0, %s72
      %s92 = sphi 0, %s94
      %s95 = sphi 0, %s92
      %s96 = sphi 0, %s95
      %s112 = sphi 0, %s96
    $region4: #{tpu_custom_call.1} parent=1 // loop_header_branch
      %17 = sbr.rel (%p15) target = $region8
    $region5: #{tpu_custom_call.1} parent=1 // loop_body
      %s19 = ssub.s32 %s14, 1
      %s20 = ssub.s32 %s14, 2
      %s21 = sadd.s32 %s14, 1
      %s22 = ssub.s32 %s14, %s21
      %p23 = scmp.eq.s32.totalorder %s22, 0
      %s25 = sadd.s32 %s24, 1
      %s26 = scalar_select %p23, %s24, %s25
      %p29 = pneg %p23
      %p30 = scmp.eq.s32.totalorder %s14, 1
      %p31 = por %p29, %p30
      %p32 = scmp.ne.s32.totalorder %s24, %s27
      %p33 = scmp.eq.s32.totalorder %s14, 0
      %p34 = por %p32, %p33
      %p35 = scmp.ne.s32.totalorder %s24, %s27
      %p36 = scmp.eq.s32.totalorder %s19, 1
      %p37 = por %p35, %p36
      %p38 = scmp.ne.s32.totalorder %s27, %s28
      %p39 = scmp.eq.s32.totalorder %s19, 0
      %p40 = por %p38, %p39
      %p41 = scmp.ne.s32.totalorder %s27, %s28
      %p42 = scmp.eq.s32.totalorder %s20, 1
      %p43 = por %p41, %p42
      %p45 = scmp.ne.s32.totalorder %s28, %s44
      %p46 = scmp.eq.s32.totalorder %s20, 0
      %p47 = por %p45, %p46
      %s49 = sadd.s32 %s48, 1
      %p52 = scmp.eq.s32.totalorder %s14, 1
      %p53 = scmp.ne.s32.totalorder %s48, %s50
      %p54 = scmp.eq.s32.totalorder %s14, 0
      %p55 = por %p53, %p54
      %p56 = scmp.ne.s32.totalorder %s48, %s50
      %p57 = scmp.eq.s32.totalorder %s19, 1
      %p58 = por %p56, %p57
      %p59 = scmp.ne.s32.totalorder %s50, %s51
      %p60 = scmp.eq.s32.totalorder %s19, 0
      %p61 = por %p59, %p60
      %p62 = scmp.ne.s32.totalorder %s50, %s51
      %p63 = scmp.eq.s32.totalorder %s20, 1
      %p64 = por %p62, %p63
      %p66 = scmp.ne.s32.totalorder %s51, %s65
      %p67 = scmp.eq.s32.totalorder %s20, 0
      %p68 = por %p66, %p67
      %s70 = sadd.s32 %s69, 1
      %p73 = scmp.eq.s32.totalorder %s14, 1
      %p74 = scmp.ne.s32.totalorder %s69, %s71
      %p75 = scmp.eq.s32.totalorder %s14, 0
      %p76 = por %p74, %p75
      %p77 = scmp.ne.s32.totalorder %s69, %s71
      %p78 = scmp.eq.s32.totalorder %s19, 1
      %p79 = por %p77, %p78
      %p80 = scmp.ne.s32.totalorder %s71, %s72
      %p81 = scmp.eq.s32.totalorder %s19, 0
      %p82 = por %p80, %p81
      %p83 = scmp.ne.s32.totalorder %s71, %s72
      %p84 = scmp.eq.s32.totalorder %s20, 1
      %p85 = por %p83, %p84
      %p87 = scmp.ne.s32.totalorder %s72, %s86
      %p88 = scmp.eq.s32.totalorder %s20, 0
      %p89 = por %p87, %p88
      %s90 = ssub.s32 %s14, %s21
      %p91 = scmp.eq.s32.totalorder %s90, 0
      %s93 = sadd.s32 %s92, 1
      %s94 = scalar_select %p91, %s92, %s93
      %p97 = pneg %p91
      %p98 = scmp.eq.s32.totalorder %s14, 1
      %p99 = por %p97, %p98
      %p100 = scmp.ne.s32.totalorder %s92, %s95
      %p101 = scmp.eq.s32.totalorder %s14, 0
      %p102 = por %p100, %p101
      %p103 = scmp.ne.s32.totalorder %s92, %s95
      %p104 = scmp.eq.s32.totalorder %s19, 1
      %p105 = por %p103, %p104
      %p106 = scmp.ne.s32.totalorder %s95, %s96
      %p107 = scmp.eq.s32.totalorder %s19, 0
      %p108 = por %p106, %p107
      %p109 = scmp.ne.s32.totalorder %s95, %s96
      %p110 = scmp.eq.s32.totalorder %s20, 1
      %p111 = por %p109, %p110
      %p113 = scmp.ne.s32.totalorder %s96, %s112
      %p114 = scmp.eq.s32.totalorder %s20, 0
      %p115 = por %p113, %p114
      %p116 = scmp.le.s32.totalorder 1, %s14
      %p117 = scmp.lt.s32.totalorder %s14, 3
      %p118 = pnand %p116, %p117
      %p119 = pneg %p118
      // Predicated region
      $region9: #{tpu_custom_call.1} parent=5 // pred_check
        _
      $region10: #{tpu_custom_call.1} parent=5 // pred_check_branch
        %121 = sbr.rel (%p118) target = $region12
      $region11: #{tpu_custom_call.1} parent=5 // pred_region
        %s122 = ssub.s32 %s14, 1
        // Predicated region
        $region13: #{tpu_custom_call.1} parent=11 // pred_check
          %p123 = pneg %p61
        $region14: #{tpu_custom_call.1} parent=11 // pred_check_branch
          %125 = sbr.rel (%p123) target = $region16
        $region15: #{tpu_custom_call.1} parent=11 // pred_region
          %s127 = ssub.s32 147456, 147456
          %128 = vsyncadd [#allocation3], %s127
          %s129 = sshll.u32 [#allocation2], 4
          %s130 = int_to_ptr.vmem [resolvable:$true] %s129
          %135 = dma.hbm_to_vmem [thread:$0]  %s1, 147456, %s130, [#allocation3], 256, 256, 16
        $region16: #{tpu_custom_call.1} parent=11 // pred_fallthru
          _
        // Predicated region
        $region17: #{tpu_custom_call.1} parent=11 // pred_check
          %p136 = pneg %p82
        $region18: #{tpu_custom_call.1} parent=11 // pred_check_branch
          %138 = sbr.rel (%p136) target = $region20
        $region19: #{tpu_custom_call.1} parent=11 // pred_region
          %s140 = ssub.s32 64, 64
          %141 = vsyncadd [#allocation6], %s140
          %s143 = sshll.u32 [#allocation5], 4
          %s144 = int_to_ptr.vmem [resolvable:$true] %s143
          %146 = dma.hbm_to_vmem [thread:$0]  %s2, 64, %s144, [#allocation6]
        $region20: #{tpu_custom_call.1} parent=11 // pred_fallthru
          _
      $region12: #{tpu_custom_call.1} parent=5 // pred_fallthru
        _
      %p147 = scmp.lt.s32.totalorder %s14, 2
      // Predicated region
      $region21: #{tpu_custom_call.1} parent=5 // pred_check
        %p148 = pneg %p147
      $region22: #{tpu_custom_call.1} parent=5 // pred_check_branch
        %150 = sbr.rel (%p148) target = $region24
      $region23: #{tpu_custom_call.1} parent=5 // pred_region
        // Predicated region
        $region25: #{tpu_custom_call.1} parent=23 // pred_check
          %p151 = pneg %p34
        $region26: #{tpu_custom_call.1} parent=23 // pred_check_branch
          %153 = sbr.rel (%p151) target = $region28
        $region27: #{tpu_custom_call.1} parent=23 // pred_region
          %p154 = scmp.lt.s32.totalorder %s14, 1
          %s155 = scalar_select %p154, %s14, 1
          %s156 = smul.addr %s155, 24
          %s157 = smul.addr %s156, 4
          %s158 = scalar_lea.vmem %s0, %s157
        $region28: #{tpu_custom_call.1} parent=23 // pred_fallthru
          _
      $region24: #{tpu_custom_call.1} parent=5 // pred_fallthru
        _
      %p159 = scmp.le.s32.totalorder 1, %s14
      %p160 = scmp.lt.s32.totalorder %s14, 3
      %p161 = pnand %p159, %p160
      %p162 = pneg %p161
      // Predicated region
      $region29: #{tpu_custom_call.1} parent=5 // pred_check
        _
      $region30: #{tpu_custom_call.1} parent=5 // pred_check_branch
        %164 = sbr.rel (%p161) target = $region32
      $region31: #{tpu_custom_call.1} parent=5 // pred_region
        %s165 = ssub.s32 %s14, 1
        // Predicated region
        $region33: #{tpu_custom_call.1} parent=31 // pred_check
          %p166 = pneg %p61
        $region34: #{tpu_custom_call.1} parent=31 // pred_check_branch
          %168 = sbr.rel (%p166) target = $region36
        $region35: #{tpu_custom_call.1} parent=31 // pred_region
          %169 = dma.done [#allocation3], 147456
        $region36: #{tpu_custom_call.1} parent=31 // pred_fallthru
          _
        // Predicated region
        $region37: #{tpu_custom_call.1} parent=31 // pred_check
          %p170 = pneg %p82
        $region38: #{tpu_custom_call.1} parent=31 // pred_check_branch
          %172 = sbr.rel (%p170) target = $region40
        $region39: #{tpu_custom_call.1} parent=31 // pred_region
          %173 = dma.done [#allocation6], 64
        $region40: #{tpu_custom_call.1} parent=31 // pred_fallthru
          _
        %p174 = scmp.lt.s32.totalorder %s19, 1
        %s175 = scalar_select %p174, %s19, 1
        %s176 = smul.addr %s175, 24
        %s177 = smul.addr %s176, 4
        %s178 = scalar_lea.vmem %s0, %s177
        %p179 = pneg %p40
        %p180 = pneg %p37
        %p181 = pneg %p61
        %p182 = pneg %p58
        %p183 = pneg %p82
        %p184 = pneg %p79
        %p185 = pneg %p108
        %p186 = pneg %p105
        %s187 = sand.u32 %s95, 1
        %s188 = scalar_lea.sflag [#allocation4], %s187
        %s189 = sand.u32 %s95, 1
        %s190 = smul.addr %s189, 32
        %s191 = scalar_lea.vmem [#allocation7], %s190
        %p192 = scmp.lt.s32.totalorder %s19, 1
        %s193 = scalar_select %p192, %s19, 1
        %s194 = smul.addr %s193, 24
        %s195 = smul.addr %s194, 4
        %s196 = scalar_lea.vmem %s0, %s195
        %v197 = vld [vmem:[%s196] sm:$0x33]
        %v198 = vld [vmem:[%s196 + $0x8] sm:$0x33]
        %v199 = vld [vmem:[%s196 + $0x10] sm:$0x33]
        %v200 = vld [vmem:[%s196 + $0x18] sm:$0x33]
        %v201 = vld [vmem:[%s196 + $0x20] sm:$0x33]
        %v202 = vld [vmem:[%s196 + $0x28] sm:$0x33]
        %v203 = vld [vmem:[%s196 + $0x30] sm:$0x33]
        %v204 = vld [vmem:[%s196 + $0x38] sm:$0x33]
        %v214 = vunpack.c.l.s4 1983009808
        %v215 = vunpack.c.0.s8 %v214
        %v216 = vlaneseq
        %v217 = vshrl.u32 %v216, 7
        %v218 = vsub.s32 %v215, %v217
        %v219 = vrot.slane %v197, %v218
        %v221 = vunpack.c.l.s4 1983009808
        %v222 = vunpack.c.0.s8 %v221
        %v223 = vlaneseq
        %v224 = vshrl.u32 %v223, 7
        %v225 = vsub.s32 %v222, %v224
        %v226 = vrot.slane %v198, %v225
        %v227 = vcombine.low %v219, %v226
        %v229 = vunpack.c.l.s4 1983009808
        %v230 = vunpack.c.0.s8 %v229
        %v231 = vlaneseq
        %v232 = vshrl.u32 %v231, 7
        %v233 = vsub.s32 %v230, %v232
        %v234 = vrot.slane %v199, %v233
        %v236 = vunpack.c.l.s4 1983009808
        %v237 = vunpack.c.0.s8 %v236
        %v238 = vlaneseq
        %v239 = vshrl.u32 %v238, 7
        %v240 = vsub.s32 %v237, %v239
        %v241 = vrot.slane %v200, %v240
        %v242 = vcombine.low %v234, %v241
        %v244 = vunpack.c.l.s4 1983009808
        %v245 = vunpack.c.0.s8 %v244
        %v246 = vlaneseq
        %v247 = vshrl.u32 %v246, 7
        %v248 = vsub.s32 %v245, %v247
        %v249 = vrot.slane %v201, %v248
        %v251 = vunpack.c.l.s4 1983009808
        %v252 = vunpack.c.0.s8 %v251
        %v253 = vlaneseq
        %v254 = vshrl.u32 %v253, 7
        %v255 = vsub.s32 %v252, %v254
        %v256 = vrot.slane %v202, %v255
        %v257 = vcombine.low %v249, %v256
        %v259 = vunpack.c.l.s4 1983009808
        %v260 = vunpack.c.0.s8 %v259
        %v261 = vlaneseq
        %v262 = vshrl.u32 %v261, 7
        %v263 = vsub.s32 %v260, %v262
        %v264 = vrot.slane %v203, %v263
        %v266 = vunpack.c.l.s4 1983009808
        %v267 = vunpack.c.0.s8 %v266
        %v268 = vlaneseq
        %v269 = vshrl.u32 %v268, 7
        %v270 = vsub.s32 %v267, %v269
        %v271 = vrot.slane %v204, %v270
        %v272 = vcombine.low %v264, %v271
        %v273 = vld [vmem:[#allocation2] sm:$0xff]
        %v274 = vld [vmem:[#allocation2 + $0x8] sm:$0xff]
        %v275 = vld [vmem:[#allocation2 + $0x10] sm:$0xff]
        %v276 = vld [vmem:[#allocation2 + $0x18] sm:$0xff]
        %v277 = vld [vmem:[#allocation2 + $0x20] sm:$0xff]
        %v278 = vld [vmem:[#allocation2 + $0x28] sm:$0xff]
        %v279 = vld [vmem:[#allocation2 + $0x30] sm:$0xff]
        %v280 = vld [vmem:[#allocation2 + $0x38] sm:$0xff]
        %v281 = vld [vmem:[#allocation2 + $0x40] sm:$0xff]
        %v282 = vld [vmem:[#allocation2 + $0x48] sm:$0xff]
        %v283 = vld [vmem:[#allocation2 + $0x50] sm:$0xff]
        %v284 = vld [vmem:[#allocation2 + $0x58] sm:$0xff]
        %v285 = vld [vmem:[#allocation2 + $0x60] sm:$0xff]
        %v286 = vld [vmem:[#allocation2 + $0x68] sm:$0xff]
        %v287 = vld [vmem:[#allocation2 + $0x70] sm:$0xff]
        %v288 = vld [vmem:[#allocation2 + $0x78] sm:$0xff]
        %v289 = vld [vmem:[#allocation2 + $0x80] sm:$0xff]
        %v290 = vld [vmem:[#allocation2 + $0x88] sm:$0xff]
        %v291 = vld [vmem:[#allocation2 + $0x90] sm:$0xff]
        %v292 = vld [vmem:[#allocation2 + $0x98] sm:$0xff]
        %v293 = vld [vmem:[#allocation2 + $0xa0] sm:$0xff]
        %v294 = vld [vmem:[#allocation2 + $0xa8] sm:$0xff]
        %v295 = vld [vmem:[#allocation2 + $0xb0] sm:$0xff]
        %v296 = vld [vmem:[#allocation2 + $0xb8] sm:$0xff]
        %v297 = vld [vmem:[#allocation2 + $0xc0] sm:$0xff]
        %v298 = vld [vmem:[#allocation2 + $0xc8] sm:$0xff]
        %v299 = vld [vmem:[#allocation2 + $0xd0] sm:$0xff]
        %v300 = vld [vmem:[#allocation2 + $0xd8] sm:$0xff]
        %v301 = vld [vmem:[#allocation2 + $0xe0] sm:$0xff]
        %v302 = vld [vmem:[#allocation2 + $0xe8] sm:$0xff]
        %v303 = vld [vmem:[#allocation2 + $0xf0] sm:$0xff]
        %v304 = vld [vmem:[#allocation2 + $0xf8] sm:$0xff]
        %v305 = vld [vmem:[#allocation2 + $0x100] sm:$0xff]
        %v306 = vld [vmem:[#allocation2 + $0x108] sm:$0xff]
        %v307 = vld [vmem:[#allocation2 + $0x110] sm:$0xff]
        %v308 = vld [vmem:[#allocation2 + $0x118] sm:$0xff]
        %v309 = vld [vmem:[#allocation2 + $0x120] sm:$0xff]
        %v310 = vld [vmem:[#allocation2 + $0x128] sm:$0xff]
        %v311 = vld [vmem:[#allocation2 + $0x130] sm:$0xff]
        %v312 = vld [vmem:[#allocation2 + $0x138] sm:$0xff]
        %v313 = vld [vmem:[#allocation2 + $0x140] sm:$0xff]
        %v314 = vld [vmem:[#allocation2 + $0x148] sm:$0xff]
        %v315 = vld [vmem:[#allocation2 + $0x150] sm:$0xff]
        %v316 = vld [vmem:[#allocation2 + $0x158] sm:$0xff]
        %v317 = vld [vmem:[#allocation2 + $0x160] sm:$0xff]
        %v318 = vld [vmem:[#allocation2 + $0x168] sm:$0xff]
        %v319 = vld [vmem:[#allocation2 + $0x170] sm:$0xff]
        %v320 = vld [vmem:[#allocation2 + $0x178] sm:$0xff]
        %v321 = vld [vmem:[#allocation2 + $0x180] sm:$0xff]
        %v322 = vld [vmem:[#allocation2 + $0x188] sm:$0xff]
        %v323 = vld [vmem:[#allocation2 + $0x190] sm:$0xff]
        %v324 = vld [vmem:[#allocation2 + $0x198] sm:$0xff]
        %v325 = vld [vmem:[#allocation2 + $0x1a0] sm:$0xff]
        %v326 = vld [vmem:[#allocation2 + $0x1a8] sm:$0xff]
        %v327 = vld [vmem:[#allocation2 + $0x1b0] sm:$0xff]
        %v328 = vld [vmem:[#allocation2 + $0x1b8] sm:$0xff]
        %v329 = vld [vmem:[#allocation2 + $0x1c0] sm:$0xff]
        %v330 = vld [vmem:[#allocation2 + $0x1c8] sm:$0xff]
        %v331 = vld [vmem:[#allocation2 + $0x1d0] sm:$0xff]
        %v332 = vld [vmem:[#allocation2 + $0x1d8] sm:$0xff]
        %v333 = vld [vmem:[#allocation2 + $0x1e0] sm:$0xff]
        %v334 = vld [vmem:[#allocation2 + $0x1e8] sm:$0xff]
        %v335 = vld [vmem:[#allocation2 + $0x1f0] sm:$0xff]
        %v336 = vld [vmem:[#allocation2 + $0x1f8] sm:$0xff]
        %v337 = vld [vmem:[#allocation2 + $0x200] sm:$0xff]
        %v338 = vld [vmem:[#allocation2 + $0x208] sm:$0xff]
        %v339 = vld [vmem:[#allocation2 + $0x210] sm:$0xff]
        %v340 = vld [vmem:[#allocation2 + $0x218] sm:$0xff]
        %v341 = vld [vmem:[#allocation2 + $0x220] sm:$0xff]
        %v342 = vld [vmem:[#allocation2 + $0x228] sm:$0xff]
        %v343 = vld [vmem:[#allocation2 + $0x230] sm:$0xff]
        %v344 = vld [vmem:[#allocation2 + $0x238] sm:$0xff]
        %v345 = vld [vmem:[#allocation2 + $0x240] sm:$0xff]
        %v346 = vld [vmem:[#allocation2 + $0x248] sm:$0xff]
        %v347 = vld [vmem:[#allocation2 + $0x250] sm:$0xff]
        %v348 = vld [vmem:[#allocation2 + $0x258] sm:$0xff]
        %v349 = vld [vmem:[#allocation2 + $0x260] sm:$0xff]
        %v350 = vld [vmem:[#allocation2 + $0x268] sm:$0xff]
        %v351 = vld [vmem:[#allocation2 + $0x270] sm:$0xff]
        %v352 = vld [vmem:[#allocation2 + $0x278] sm:$0xff]
        %v353 = vld [vmem:[#allocation2 + $0x280] sm:$0xff]
        %v354 = vld [vmem:[#allocation2 + $0x288] sm:$0xff]
        %v355 = vld [vmem:[#allocation2 + $0x290] sm:$0xff]
        %v356 = vld [vmem:[#allocation2 + $0x298] sm:$0xff]
        %v357 = vld [vmem:[#allocation2 + $0x2a0] sm:$0xff]
        %v358 = vld [vmem:[#allocation2 + $0x2a8] sm:$0xff]
        %v359 = vld [vmem:[#allocation2 + $0x2b0] sm:$0xff]
        %v360 = vld [vmem:[#allocation2 + $0x2b8] sm:$0xff]
        %v361 = vld [vmem:[#allocation2 + $0x2c0] sm:$0xff]
        %v362 = vld [vmem:[#allocation2 + $0x2c8] sm:$0xff]
        %v363 = vld [vmem:[#allocation2 + $0x2d0] sm:$0xff]
        %v364 = vld [vmem:[#allocation2 + $0x2d8] sm:$0xff]
        %v365 = vld [vmem:[#allocation2 + $0x2e0] sm:$0xff]
        %v366 = vld [vmem:[#allocation2 + $0x2e8] sm:$0xff]
        %v367 = vld [vmem:[#allocation2 + $0x2f0] sm:$0xff]
        %v368 = vld [vmem:[#allocation2 + $0x2f8] sm:$0xff]
        %v369 = vld [vmem:[#allocation2 + $0x300] sm:$0xff]
        %v370 = vld [vmem:[#allocation2 + $0x308] sm:$0xff]
        %v371 = vld [vmem:[#allocation2 + $0x310] sm:$0xff]
        %v372 = vld [vmem:[#allocation2 + $0x318] sm:$0xff]
        %v373 = vld [vmem:[#allocation2 + $0x320] sm:$0xff]
        %v374 = vld [vmem:[#allocation2 + $0x328] sm:$0xff]
        %v375 = vld [vmem:[#allocation2 + $0x330] sm:$0xff]
        %v376 = vld [vmem:[#allocation2 + $0x338] sm:$0xff]
        %v377 = vld [vmem:[#allocation2 + $0x340] sm:$0xff]
        %v378 = vld [vmem:[#allocation2 + $0x348] sm:$0xff]
        %v379 = vld [vmem:[#allocation2 + $0x350] sm:$0xff]
        %v380 = vld [vmem:[#allocation2 + $0x358] sm:$0xff]
        %v381 = vld [vmem:[#allocation2 + $0x360] sm:$0xff]
        %v382 = vld [vmem:[#allocation2 + $0x368] sm:$0xff]
        %v383 = vld [vmem:[#allocation2 + $0x370] sm:$0xff]
        %v384 = vld [vmem:[#allocation2 + $0x378] sm:$0xff]
        %v385 = vld [vmem:[#allocation2 + $0x380] sm:$0xff]
        %v386 = vld [vmem:[#allocation2 + $0x388] sm:$0xff]
        %v387 = vld [vmem:[#allocation2 + $0x390] sm:$0xff]
        %v388 = vld [vmem:[#allocation2 + $0x398] sm:$0xff]
        %v389 = vld [vmem:[#allocation2 + $0x3a0] sm:$0xff]
        %v390 = vld [vmem:[#allocation2 + $0x3a8] sm:$0xff]
        %v391 = vld [vmem:[#allocation2 + $0x3b0] sm:$0xff]
        %v392 = vld [vmem:[#allocation2 + $0x3b8] sm:$0xff]
        %v393 = vld [vmem:[#allocation2 + $0x3c0] sm:$0xff]
        %v394 = vld [vmem:[#allocation2 + $0x3c8] sm:$0xff]
        %v395 = vld [vmem:[#allocation2 + $0x3d0] sm:$0xff]
        %v396 = vld [vmem:[#allocation2 + $0x3d8] sm:$0xff]
        %v397 = vld [vmem:[#allocation2 + $0x3e0] sm:$0xff]
        %v398 = vld [vmem:[#allocation2 + $0x3e8] sm:$0xff]
        %v399 = vld [vmem:[#allocation2 + $0x3f0] sm:$0xff]
        %v400 = vld [vmem:[#allocation2 + $0x3f8] sm:$0xff]
        %v401 = vld [vmem:[%s196] sm:$0x77]
        %v402 = vld [vmem:[%s196 + $0x8] sm:$0x77]
        %v403 = vld [vmem:[%s196 + $0x10] sm:$0x77]
        %v404 = vld [vmem:[%s196 + $0x18] sm:$0x77]
        %v405 = vld [vmem:[%s196 + $0x20] sm:$0x77]
        %v406 = vld [vmem:[%s196 + $0x28] sm:$0x77]
        %v407 = vld [vmem:[%s196 + $0x30] sm:$0x77]
        %v408 = vld [vmem:[%s196 + $0x38] sm:$0x77]
        %v418 = vunpack.c.l.s4 1983009808
        %v419 = vunpack.c.0.s8 %v418
        %v420 = vlaneseq
        %v421 = vshrl.u32 %v420, 7
        %v422 = vsub.s32 %v419, %v421
        %v423 = vrot.slane %v401, %v422
        %v425 = vunpack.c.l.s4 1983009808
        %v426 = vunpack.c.0.s8 %v425
        %v427 = vlaneseq
        %v428 = vshrl.u32 %v427, 7
        %v429 = vsub.s32 %v426, %v428
        %v430 = vrot.slane %v402, %v429
        %v431 = vcombine.low %v423, %v430
        %v432 = vcombine.high %v423, %v430
        %v434 = vunpack.c.l.s4 1983009808
        %v435 = vunpack.c.0.s8 %v434
        %v436 = vlaneseq
        %v437 = vshrl.u32 %v436, 7
        %v438 = vsub.s32 %v435, %v437
        %v439 = vrot.slane %v403, %v438
        %v441 = vunpack.c.l.s4 1983009808
        %v442 = vunpack.c.0.s8 %v441
        %v443 = vlaneseq
        %v444 = vshrl.u32 %v443, 7
        %v445 = vsub.s32 %v442, %v444
        %v446 = vrot.slane %v404, %v445
        %v447 = vcombine.low %v439, %v446
        %v448 = vcombine.high %v439, %v446
        %v450 = vunpack.c.l.s4 1983009808
        %v451 = vunpack.c.0.s8 %v450
        %v452 = vlaneseq
        %v453 = vshrl.u32 %v452, 7
        %v454 = vsub.s32 %v451, %v453
        %v455 = vrot.slane %v405, %v454
        %v457 = vunpack.c.l.s4 1983009808
        %v458 = vunpack.c.0.s8 %v457
        %v459 = vlaneseq
        %v460 = vshrl.u32 %v459, 7
        %v461 = vsub.s32 %v458, %v460
        %v462 = vrot.slane %v406, %v461
        %v463 = vcombine.low %v455, %v462
        %v464 = vcombine.high %v455, %v462
        %v466 = vunpack.c.l.s4 1983009808
        %v467 = vunpack.c.0.s8 %v466
        %v468 = vlaneseq
        %v469 = vshrl.u32 %v468, 7
        %v470 = vsub.s32 %v467, %v469
        %v471 = vrot.slane %v407, %v470
        %v473 = vunpack.c.l.s4 1983009808
        %v474 = vunpack.c.0.s8 %v473
        %v475 = vlaneseq
        %v476 = vshrl.u32 %v475, 7
        %v477 = vsub.s32 %v474, %v476
        %v478 = vrot.slane %v408, %v477
        %v479 = vcombine.low %v471, %v478
        %v480 = vcombine.high %v471, %v478
        %vm481 = vsmask.f32 1280
        %vm482 = vsmask.f32 3336
        %vm483 = vmor %vm481, %vm482
        %vm484 = vsmask.f32 5392
        %vm485 = vmor %vm483, %vm484
        %vm486 = vsmask.f32 7448
        %vm487 = vmor %vm485, %vm486
        %v489 = vshrl.u32 %v431, 16
        %v491 = vrot.slane %v489, 6
        %v492 = vshll.u32 %v431, 16
        %v494 = vrot.slane %v492, 7
        %v495 = vor.u32 %v491, %v494
        %v496 = vrot.slane %v495, 2
        %v498 = vshll.u32 %v432, 16
        %v500 = vrot.slane %v498, 7
        %v501 = vsel %vm487, %v496, %v500
        %v503 = vshrl.u32 %v447, 16
        %v505 = vrot.slane %v503, 6
        %v506 = vshll.u32 %v447, 16
        %v508 = vrot.slane %v506, 7
        %v509 = vor.u32 %v505, %v508
        %v510 = vrot.slane %v509, 2
        %v512 = vshll.u32 %v448, 16
        %v514 = vrot.slane %v512, 7
        %v515 = vsel %vm487, %v510, %v514
        %v517 = vshrl.u32 %v463, 16
        %v519 = vrot.slane %v517, 6
        %v520 = vshll.u32 %v463, 16
        %v522 = vrot.slane %v520, 7
        %v523 = vor.u32 %v519, %v522
        %v524 = vrot.slane %v523, 2
        %v526 = vshll.u32 %v464, 16
        %v528 = vrot.slane %v526, 7
        %v529 = vsel %vm487, %v524, %v528
        %v531 = vshrl.u32 %v479, 16
        %v533 = vrot.slane %v531, 6
        %v534 = vshll.u32 %v479, 16
        %v536 = vrot.slane %v534, 7
        %v537 = vor.u32 %v533, %v536
        %v538 = vrot.slane %v537, 2
        %v540 = vshll.u32 %v480, 16
        %v542 = vrot.slane %v540, 7
        %v543 = vsel %vm487, %v538, %v542
        %s544 = scalar_lea.vmem [#allocation2], 1024
        %v545 = vld [vmem:[%s544] sm:$0xff]
        %v546 = vld [vmem:[%s544 + $0x8] sm:$0xff]
        %v547 = vld [vmem:[%s544 + $0x10] sm:$0xff]
        %v548 = vld [vmem:[%s544 + $0x18] sm:$0xff]
        %v549 = vld [vmem:[%s544 + $0x20] sm:$0xff]
        %v550 = vld [vmem:[%s544 + $0x28] sm:$0xff]
        %v551 = vld [vmem:[%s544 + $0x30] sm:$0xff]
        %v552 = vld [vmem:[%s544 + $0x38] sm:$0xff]
        %v553 = vld [vmem:[%s544 + $0x40] sm:$0xff]
        %v554 = vld [vmem:[%s544 + $0x48] sm:$0xff]
        %v555 = vld [vmem:[%s544 + $0x50] sm:$0xff]
        %v556 = vld [vmem:[%s544 + $0x58] sm:$0xff]
        %v557 = vld [vmem:[%s544 + $0x60] sm:$0xff]
        %v558 = vld [vmem:[%s544 + $0x68] sm:$0xff]
        %v559 = vld [vmem:[%s544 + $0x70] sm:$0xff]
        %v560 = vld [vmem:[%s544 + $0x78] sm:$0xff]
        %v561 = vld [vmem:[%s544 + $0x80] sm:$0xff]
        %v562 = vld [vmem:[%s544 + $0x88] sm:$0xff]
        %v563 = vld [vmem:[%s544 + $0x90] sm:$0xff]
        %v564 = vld [vmem:[%s544 + $0x98] sm:$0xff]
        %v565 = vld [vmem:[%s544 + $0xa0] sm:$0xff]
        %v566 = vld [vmem:[%s544 + $0xa8] sm:$0xff]
        %v567 = vld [vmem:[%s544 + $0xb0] sm:$0xff]
        %v568 = vld [vmem:[%s544 + $0xb8] sm:$0xff]
        %v569 = vld [vmem:[%s544 + $0xc0] sm:$0xff]
        %v570 = vld [vmem:[%s544 + $0xc8] sm:$0xff]
        %v571 = vld [vmem:[%s544 + $0xd0] sm:$0xff]
        %v572 = vld [vmem:[%s544 + $0xd8] sm:$0xff]
        %v573 = vld [vmem:[%s544 + $0xe0] sm:$0xff]
        %v574 = vld [vmem:[%s544 + $0xe8] sm:$0xff]
        %v575 = vld [vmem:[%s544 + $0xf0] sm:$0xff]
        %v576 = vld [vmem:[%s544 + $0xf8] sm:$0xff]
        %v577 = vld [vmem:[%s544 + $0x100] sm:$0xff]
        %v578 = vld [vmem:[%s544 + $0x108] sm:$0xff]
        %v579 = vld [vmem:[%s544 + $0x110] sm:$0xff]
        %v580 = vld [vmem:[%s544 + $0x118] sm:$0xff]
        %v581 = vld [vmem:[%s544 + $0x120] sm:$0xff]
        %v582 = vld [vmem:[%s544 + $0x128] sm:$0xff]
        %v583 = vld [vmem:[%s544 + $0x130] sm:$0xff]
        %v584 = vld [vmem:[%s544 + $0x138] sm:$0xff]
        %v585 = vld [vmem:[%s544 + $0x140] sm:$0xff]
        %v586 = vld [vmem:[%s544 + $0x148] sm:$0xff]
        %v587 = vld [vmem:[%s544 + $0x150] sm:$0xff]
        %v588 = vld [vmem:[%s544 + $0x158] sm:$0xff]
        %v589 = vld [vmem:[%s544 + $0x160] sm:$0xff]
        %v590 = vld [vmem:[%s544 + $0x168] sm:$0xff]
        %v591 = vld [vmem:[%s544 + $0x170] sm:$0xff]
        %v592 = vld [vmem:[%s544 + $0x178] sm:$0xff]
        %v593 = vld [vmem:[%s544 + $0x180] sm:$0xff]
        %v594 = vld [vmem:[%s544 + $0x188] sm:$0xff]
        %v595 = vld [vmem:[%s544 + $0x190] sm:$0xff]
        %v596 = vld [vmem:[%s544 + $0x198] sm:$0xff]
        %v597 = vld [vmem:[%s544 + $0x1a0] sm:$0xff]
        %v598 = vld [vmem:[%s544 + $0x1a8] sm:$0xff]
        %v599 = vld [vmem:[%s544 + $0x1b0] sm:$0xff]
        %v600 = vld [vmem:[%s544 + $0x1b8] sm:$0xff]
        %v601 = vld [vmem:[%s544 + $0x1c0] sm:$0xff]
        %v602 = vld [vmem:[%s544 + $0x1c8] sm:$0xff]
        %v603 = vld [vmem:[%s544 + $0x1d0] sm:$0xff]
        %v604 = vld [vmem:[%s544 + $0x1d8] sm:$0xff]
        %v605 = vld [vmem:[%s544 + $0x1e0] sm:$0xff]
        %v606 = vld [vmem:[%s544 + $0x1e8] sm:$0xff]
        %v607 = vld [vmem:[%s544 + $0x1f0] sm:$0xff]
        %v608 = vld [vmem:[%s544 + $0x1f8] sm:$0xff]
        %v609 = vld [vmem:[%s544 + $0x200] sm:$0xff]
        %v610 = vld [vmem:[%s544 + $0x208] sm:$0xff]
        %v611 = vld [vmem:[%s544 + $0x210] sm:$0xff]
        %v612 = vld [vmem:[%s544 + $0x218] sm:$0xff]
        %v613 = vld [vmem:[%s544 + $0x220] sm:$0xff]
        %v614 = vld [vmem:[%s544 + $0x228] sm:$0xff]
        %v615 = vld [vmem:[%s544 + $0x230] sm:$0xff]
        %v616 = vld [vmem:[%s544 + $0x238] sm:$0xff]
        %v617 = vld [vmem:[%s544 + $0x240] sm:$0xff]
        %v618 = vld [vmem:[%s544 + $0x248] sm:$0xff]
        %v619 = vld [vmem:[%s544 + $0x250] sm:$0xff]
        %v620 = vld [vmem:[%s544 + $0x258] sm:$0xff]
        %v621 = vld [vmem:[%s544 + $0x260] sm:$0xff]
        %v622 = vld [vmem:[%s544 + $0x268] sm:$0xff]
        %v623 = vld [vmem:[%s544 + $0x270] sm:$0xff]
        %v624 = vld [vmem:[%s544 + $0x278] sm:$0xff]
        %v625 = vld [vmem:[%s544 + $0x280] sm:$0xff]
        %v626 = vld [vmem:[%s544 + $0x288] sm:$0xff]
        %v627 = vld [vmem:[%s544 + $0x290] sm:$0xff]
        %v628 = vld [vmem:[%s544 + $0x298] sm:$0xff]
        %v629 = vld [vmem:[%s544 + $0x2a0] sm:$0xff]
        %v630 = vld [vmem:[%s544 + $0x2a8] sm:$0xff]
        %v631 = vld [vmem:[%s544 + $0x2b0] sm:$0xff]
        %v632 = vld [vmem:[%s544 + $0x2b8] sm:$0xff]
        %v633 = vld [vmem:[%s544 + $0x2c0] sm:$0xff]
        %v634 = vld [vmem:[%s544 + $0x2c8] sm:$0xff]
        %v635 = vld [vmem:[%s544 + $0x2d0] sm:$0xff]
        %v636 = vld [vmem:[%s544 + $0x2d8] sm:$0xff]
        %v637 = vld [vmem:[%s544 + $0x2e0] sm:$0xff]
        %v638 = vld [vmem:[%s544 + $0x2e8] sm:$0xff]
        %v639 = vld [vmem:[%s544 + $0x2f0] sm:$0xff]
        %v640 = vld [vmem:[%s544 + $0x2f8] sm:$0xff]
        %v641 = vld [vmem:[%s544 + $0x300] sm:$0xff]
        %v642 = vld [vmem:[%s544 + $0x308] sm:$0xff]
        %v643 = vld [vmem:[%s544 + $0x310] sm:$0xff]
        %v644 = vld [vmem:[%s544 + $0x318] sm:$0xff]
        %v645 = vld [vmem:[%s544 + $0x320] sm:$0xff]
        %v646 = vld [vmem:[%s544 + $0x328] sm:$0xff]
        %v647 = vld [vmem:[%s544 + $0x330] sm:$0xff]
        %v648 = vld [vmem:[%s544 + $0x338] sm:$0xff]
        %v649 = vld [vmem:[%s544 + $0x340] sm:$0xff]
        %v650 = vld [vmem:[%s544 + $0x348] sm:$0xff]
        %v651 = vld [vmem:[%s544 + $0x350] sm:$0xff]
        %v652 = vld [vmem:[%s544 + $0x358] sm:$0xff]
        %v653 = vld [vmem:[%s544 + $0x360] sm:$0xff]
        %v654 = vld [vmem:[%s544 + $0x368] sm:$0xff]
        %v655 = vld [vmem:[%s544 + $0x370] sm:$0xff]
        %v656 = vld [vmem:[%s544 + $0x378] sm:$0xff]
        %v657 = vld [vmem:[%s544 + $0x380] sm:$0xff]
        %v658 = vld [vmem:[%s544 + $0x388] sm:$0xff]
        %v659 = vld [vmem:[%s544 + $0x390] sm:$0xff]
        %v660 = vld [vmem:[%s544 + $0x398] sm:$0xff]
        %v661 = vld [vmem:[%s544 + $0x3a0] sm:$0xff]
        %v662 = vld [vmem:[%s544 + $0x3a8] sm:$0xff]
        %v663 = vld [vmem:[%s544 + $0x3b0] sm:$0xff]
        %v664 = vld [vmem:[%s544 + $0x3b8] sm:$0xff]
        %v665 = vld [vmem:[%s544 + $0x3c0] sm:$0xff]
        %v666 = vld [vmem:[%s544 + $0x3c8] sm:$0xff]
        %v667 = vld [vmem:[%s544 + $0x3d0] sm:$0xff]
        %v668 = vld [vmem:[%s544 + $0x3d8] sm:$0xff]
        %v669 = vld [vmem:[%s544 + $0x3e0] sm:$0xff]
        %v670 = vld [vmem:[%s544 + $0x3e8] sm:$0xff]
        %v671 = vld [vmem:[%s544 + $0x3f0] sm:$0xff]
        %v672 = vld [vmem:[%s544 + $0x3f8] sm:$0xff]
        %v673 = vcombine.low %v501, %v515
        %v674 = vcombine.high %v501, %v515
        %v675 = vcombine.low %v529, %v543
        %v676 = vcombine.high %v529, %v543
        %v678 = vunpack.c.l.s4 1983009808
        %v679 = vunpack.c.0.s8 %v678
        %v680 = vlaneseq
        %v681 = vshrl.u32 %v680, 7
        %v682 = vsub.s32 %v679, %v681
        %v683 = vrot.slane %v673, %v682
        %v685 = vunpack.c.l.s4 1983009808
        %v686 = vunpack.c.0.s8 %v685
        %v687 = vlaneseq
        %v688 = vshrl.u32 %v687, 7
        %v689 = vsub.s32 %v686, %v688
        %v690 = vrot.slane %v674, %v689
        %v692 = vunpack.c.l.s4 1983009808
        %v693 = vunpack.c.0.s8 %v692
        %v694 = vlaneseq
        %v695 = vshrl.u32 %v694, 7
        %v696 = vsub.s32 %v693, %v695
        %v697 = vrot.slane %v675, %v696
        %v699 = vunpack.c.l.s4 1983009808
        %v700 = vunpack.c.0.s8 %v699
        %v701 = vlaneseq
        %v702 = vshrl.u32 %v701, 7
        %v703 = vsub.s32 %v700, %v702
        %v704 = vrot.slane %v676, %v703
        %v705 = vcombine.low %v683, %v697
        %v706 = vcombine.high %v683, %v697
        %v707 = vcombine.low %v690, %v704
        %v708 = vcombine.high %v690, %v704
        %v841 = vunpack.c.l.b16 %v545
        %v842 = vunpack.c.h.b16 %v545
        %v843 = vunpack.c.l.b16 %v546
        %v844 = vunpack.c.h.b16 %v546
        %v845 = vunpack.c.l.b16 %v547
        %v846 = vunpack.c.h.b16 %v547
        %v847 = vunpack.c.l.b16 %v548
        %v848 = vunpack.c.h.b16 %v548
        %v849 = vunpack.c.l.b16 %v549
        %v850 = vunpack.c.h.b16 %v549
        %v851 = vunpack.c.l.b16 %v550
        %v852 = vunpack.c.h.b16 %v550
        %v853 = vunpack.c.l.b16 %v551
        %v854 = vunpack.c.h.b16 %v551
        %v855 = vunpack.c.l.b16 %v552
        %v856 = vunpack.c.h.b16 %v552
        %v857 = vunpack.c.l.b16 %v553
        %v858 = vunpack.c.h.b16 %v553
        %v859 = vunpack.c.l.b16 %v554
        %v860 = vunpack.c.h.b16 %v554
        %v861 = vunpack.c.l.b16 %v555
        %v862 = vunpack.c.h.b16 %v555
        %v863 = vunpack.c.l.b16 %v556
        %v864 = vunpack.c.h.b16 %v556
        %v865 = vunpack.c.l.b16 %v557
        %v866 = vunpack.c.h.b16 %v557
        %v867 = vunpack.c.l.b16 %v558
        %v868 = vunpack.c.h.b16 %v558
        %v869 = vunpack.c.l.b16 %v559
        %v870 = vunpack.c.h.b16 %v559
        %v871 = vunpack.c.l.b16 %v560
        %v872 = vunpack.c.h.b16 %v560
        %v873 = vunpack.c.l.b16 %v561
        %v874 = vunpack.c.h.b16 %v561
        %v875 = vunpack.c.l.b16 %v562
        %v876 = vunpack.c.h.b16 %v562
        %v877 = vunpack.c.l.b16 %v563
        %v878 = vunpack.c.h.b16 %v563
        %v879 = vunpack.c.l.b16 %v564
        %v880 = vunpack.c.h.b16 %v564
        %v881 = vunpack.c.l.b16 %v565
        %v882 = vunpack.c.h.b16 %v565
        %v883 = vunpack.c.l.b16 %v566
        %v884 = vunpack.c.h.b16 %v566
        %v885 = vunpack.c.l.b16 %v567
        %v886 = vunpack.c.h.b16 %v567
        %v887 = vunpack.c.l.b16 %v568
        %v888 = vunpack.c.h.b16 %v568
        %v889 = vunpack.c.l.b16 %v569
        %v890 = vunpack.c.h.b16 %v569
        %v891 = vunpack.c.l.b16 %v570
        %v892 = vunpack.c.h.b16 %v570
        %v893 = vunpack.c.l.b16 %v571
        %v894 = vunpack.c.h.b16 %v571
        %v895 = vunpack.c.l.b16 %v572
        %v896 = vunpack.c.h.b16 %v572
        %v897 = vunpack.c.l.b16 %v573
        %v898 = vunpack.c.h.b16 %v573
        %v899 = vunpack.c.l.b16 %v574
        %v900 = vunpack.c.h.b16 %v574
        %v901 = vunpack.c.l.b16 %v575
        %v902 = vunpack.c.h.b16 %v575
        %v903 = vunpack.c.l.b16 %v576
        %v904 = vunpack.c.h.b16 %v576
        %v905 = vunpack.c.l.b16 %v577
        %v906 = vunpack.c.h.b16 %v577
        %v907 = vunpack.c.l.b16 %v578
        %v908 = vunpack.c.h.b16 %v578
        %v909 = vunpack.c.l.b16 %v579
        %v910 = vunpack.c.h.b16 %v579
        %v911 = vunpack.c.l.b16 %v580
        %v912 = vunpack.c.h.b16 %v580
        %v913 = vunpack.c.l.b16 %v581
        %v914 = vunpack.c.h.b16 %v581
        %v915 = vunpack.c.l.b16 %v582
        %v916 = vunpack.c.h.b16 %v582
        %v917 = vunpack.c.l.b16 %v583
        %v918 = vunpack.c.h.b16 %v583
        %v919 = vunpack.c.l.b16 %v584
        %v920 = vunpack.c.h.b16 %v584
        %v921 = vunpack.c.l.b16 %v585
        %v922 = vunpack.c.h.b16 %v585
        %v923 = vunpack.c.l.b16 %v586
        %v924 = vunpack.c.h.b16 %v586
        %v925 = vunpack.c.l.b16 %v587
        %v926 = vunpack.c.h.b16 %v587
        %v927 = vunpack.c.l.b16 %v588
        %v928 = vunpack.c.h.b16 %v588
        %v929 = vunpack.c.l.b16 %v589
        %v930 = vunpack.c.h.b16 %v589
        %v931 = vunpack.c.l.b16 %v590
        %v932 = vunpack.c.h.b16 %v590
        %v933 = vunpack.c.l.b16 %v591
        %v934 = vunpack.c.h.b16 %v591
        %v935 = vunpack.c.l.b16 %v592
        %v936 = vunpack.c.h.b16 %v592
        %v937 = vunpack.c.l.b16 %v593
        %v938 = vunpack.c.h.b16 %v593
        %v939 = vunpack.c.l.b16 %v594
        %v940 = vunpack.c.h.b16 %v594
        %v941 = vunpack.c.l.b16 %v595
        %v942 = vunpack.c.h.b16 %v595
        %v943 = vunpack.c.l.b16 %v596
        %v944 = vunpack.c.h.b16 %v596
        %v945 = vunpack.c.l.b16 %v597
        %v946 = vunpack.c.h.b16 %v597
        %v947 = vunpack.c.l.b16 %v598
        %v948 = vunpack.c.h.b16 %v598
        %v949 = vunpack.c.l.b16 %v599
        %v950 = vunpack.c.h.b16 %v599
        %v951 = vunpack.c.l.b16 %v600
        %v952 = vunpack.c.h.b16 %v600
        %v953 = vunpack.c.l.b16 %v601
        %v954 = vunpack.c.h.b16 %v601
        %v955 = vunpack.c.l.b16 %v602
        %v956 = vunpack.c.h.b16 %v602
        %v957 = vunpack.c.l.b16 %v603
        %v958 = vunpack.c.h.b16 %v603
        %v959 = vunpack.c.l.b16 %v604
        %v960 = vunpack.c.h.b16 %v604
        %v961 = vunpack.c.l.b16 %v605
        %v962 = vunpack.c.h.b16 %v605
        %v963 = vunpack.c.l.b16 %v606
        %v964 = vunpack.c.h.b16 %v606
        %v965 = vunpack.c.l.b16 %v607
        %v966 = vunpack.c.h.b16 %v607
        %v967 = vunpack.c.l.b16 %v608
        %v968 = vunpack.c.h.b16 %v608
        %v969 = vunpack.c.l.b16 %v609
        %v970 = vunpack.c.h.b16 %v609
        %v971 = vunpack.c.l.b16 %v610
        %v972 = vunpack.c.h.b16 %v610
        %v973 = vunpack.c.l.b16 %v611
        %v974 = vunpack.c.h.b16 %v611
        %v975 = vunpack.c.l.b16 %v612
        %v976 = vunpack.c.h.b16 %v612
        %v977 = vunpack.c.l.b16 %v613
        %v978 = vunpack.c.h.b16 %v613
        %v979 = vunpack.c.l.b16 %v614
        %v980 = vunpack.c.h.b16 %v614
        %v981 = vunpack.c.l.b16 %v615
        %v982 = vunpack.c.h.b16 %v615
        %v983 = vunpack.c.l.b16 %v616
        %v984 = vunpack.c.h.b16 %v616
        %v985 = vunpack.c.l.b16 %v617
        %v986 = vunpack.c.h.b16 %v617
        %v987 = vunpack.c.l.b16 %v618
        %v988 = vunpack.c.h.b16 %v618
        %v989 = vunpack.c.l.b16 %v619
        %v990 = vunpack.c.h.b16 %v619
        %v991 = vunpack.c.l.b16 %v620
        %v992 = vunpack.c.h.b16 %v620
        %v993 = vunpack.c.l.b16 %v621
        %v994 = vunpack.c.h.b16 %v621
        %v995 = vunpack.c.l.b16 %v622
        %v996 = vunpack.c.h.b16 %v622
        %v997 = vunpack.c.l.b16 %v623
        %v998 = vunpack.c.h.b16 %v623
        %v999 = vunpack.c.l.b16 %v624
        %v1000 = vunpack.c.h.b16 %v624
        %v1001 = vunpack.c.l.b16 %v625
        %v1002 = vunpack.c.h.b16 %v625
        %v1003 = vunpack.c.l.b16 %v626
        %v1004 = vunpack.c.h.b16 %v626
        %v1005 = vunpack.c.l.b16 %v627
        %v1006 = vunpack.c.h.b16 %v627
        %v1007 = vunpack.c.l.b16 %v628
        %v1008 = vunpack.c.h.b16 %v628
        %v1009 = vunpack.c.l.b16 %v629
        %v1010 = vunpack.c.h.b16 %v629
        %v1011 = vunpack.c.l.b16 %v630
        %v1012 = vunpack.c.h.b16 %v630
        %v1013 = vunpack.c.l.b16 %v631
        %v1014 = vunpack.c.h.b16 %v631
        %v1015 = vunpack.c.l.b16 %v632
        %v1016 = vunpack.c.h.b16 %v632
        %v1017 = vunpack.c.l.b16 %v633
        %v1018 = vunpack.c.h.b16 %v633
        %v1019 = vunpack.c.l.b16 %v634
        %v1020 = vunpack.c.h.b16 %v634
        %v1021 = vunpack.c.l.b16 %v635
        %v1022 = vunpack.c.h.b16 %v635
        %v1023 = vunpack.c.l.b16 %v636
        %v1024 = vunpack.c.h.b16 %v636
        %v1025 = vunpack.c.l.b16 %v637
        %v1026 = vunpack.c.h.b16 %v637
        %v1027 = vunpack.c.l.b16 %v638
        %v1028 = vunpack.c.h.b16 %v638
        %v1029 = vunpack.c.l.b16 %v639
        %v1030 = vunpack.c.h.b16 %v639
        %v1031 = vunpack.c.l.b16 %v640
        %v1032 = vunpack.c.h.b16 %v640
        %v1033 = vunpack.c.l.b16 %v641
        %v1034 = vunpack.c.h.b16 %v641
        %v1035 = vunpack.c.l.b16 %v642
        %v1036 = vunpack.c.h.b16 %v642
        %v1037 = vunpack.c.l.b16 %v643
        %v1038 = vunpack.c.h.b16 %v643
        %v1039 = vunpack.c.l.b16 %v644
        %v1040 = vunpack.c.h.b16 %v644
        %v1041 = vunpack.c.l.b16 %v645
        %v1042 = vunpack.c.h.b16 %v645
        %v1043 = vunpack.c.l.b16 %v646
        %v1044 = vunpack.c.h.b16 %v646
        %v1045 = vunpack.c.l.b16 %v647
        %v1046 = vunpack.c.h.b16 %v647
        %v1047 = vunpack.c.l.b16 %v648
        %v1048 = vunpack.c.h.b16 %v648
        %v1049 = vunpack.c.l.b16 %v649
        %v1050 = vunpack.c.h.b16 %v649
        %v1051 = vunpack.c.l.b16 %v650
        %v1052 = vunpack.c.h.b16 %v650
        %v1053 = vunpack.c.l.b16 %v651
        %v1054 = vunpack.c.h.b16 %v651
        %v1055 = vunpack.c.l.b16 %v652
        %v1056 = vunpack.c.h.b16 %v652
        %v1057 = vunpack.c.l.b16 %v653
        %v1058 = vunpack.c.h.b16 %v653
        %v1059 = vunpack.c.l.b16 %v654
        %v1060 = vunpack.c.h.b16 %v654
        %v1061 = vunpack.c.l.b16 %v655
        %v1062 = vunpack.c.h.b16 %v655
        %v1063 = vunpack.c.l.b16 %v656
        %v1064 = vunpack.c.h.b16 %v656
        %v1065 = vunpack.c.l.b16 %v657
        %v1066 = vunpack.c.h.b16 %v657
        %v1067 = vunpack.c.l.b16 %v658
        %v1068 = vunpack.c.h.b16 %v658
        %v1069 = vunpack.c.l.b16 %v659
        %v1070 = vunpack.c.h.b16 %v659
        %v1071 = vunpack.c.l.b16 %v660
        %v1072 = vunpack.c.h.b16 %v660
        %v1073 = vunpack.c.l.b16 %v661
        %v1074 = vunpack.c.h.b16 %v661
        %v1075 = vunpack.c.l.b16 %v662
        %v1076 = vunpack.c.h.b16 %v662
        %v1077 = vunpack.c.l.b16 %v663
        %v1078 = vunpack.c.h.b16 %v663
        %v1079 = vunpack.c.l.b16 %v664
        %v1080 = vunpack.c.h.b16 %v664
        %v1081 = vunpack.c.l.b16 %v665
        %v1082 = vunpack.c.h.b16 %v665
        %v1083 = vunpack.c.l.b16 %v666
        %v1084 = vunpack.c.h.b16 %v666
        %v1085 = vunpack.c.l.b16 %v667
        %v1086 = vunpack.c.h.b16 %v667
        %v1087 = vunpack.c.l.b16 %v668
        %v1088 = vunpack.c.h.b16 %v668
        %v1089 = vunpack.c.l.b16 %v669
        %v1090 = vunpack.c.h.b16 %v669
        %v1091 = vunpack.c.l.b16 %v670
        %v1092 = vunpack.c.h.b16 %v670
        %v1093 = vunpack.c.l.b16 %v671
        %v1094 = vunpack.c.h.b16 %v671
        %v1095 = vunpack.c.l.b16 %v672
        %v1096 = vunpack.c.h.b16 %v672
        %v1097 = vpack.c.b16 %v845, %v841
        %v1098 = vpack.c.b16 %v846, %v842
        %v1099 = vpack.c.b16 %v847, %v843
        %v1100 = vpack.c.b16 %v848, %v844
        %v1101 = vpack.c.b16 %v853, %v849
        %v1102 = vpack.c.b16 %v854, %v850
        %v1103 = vpack.c.b16 %v855, %v851
        %v1104 = vpack.c.b16 %v856, %v852
        %v1105 = vpack.c.b16 %v861, %v857
        %v1106 = vpack.c.b16 %v862, %v858
        %v1107 = vpack.c.b16 %v863, %v859
        %v1108 = vpack.c.b16 %v864, %v860
        %v1109 = vpack.c.b16 %v869, %v865
        %v1110 = vpack.c.b16 %v870, %v866
        %v1111 = vpack.c.b16 %v871, %v867
        %v1112 = vpack.c.b16 %v872, %v868
        %v1113 = vpack.c.b16 %v877, %v873
        %v1114 = vpack.c.b16 %v878, %v874
        %v1115 = vpack.c.b16 %v879, %v875
        %v1116 = vpack.c.b16 %v880, %v876
        %v1117 = vpack.c.b16 %v885, %v881
        %v1118 = vpack.c.b16 %v886, %v882
        %v1119 = vpack.c.b16 %v887, %v883
        %v1120 = vpack.c.b16 %v888, %v884
        %v1121 = vpack.c.b16 %v893, %v889
        %v1122 = vpack.c.b16 %v894, %v890
        %v1123 = vpack.c.b16 %v895, %v891
        %v1124 = vpack.c.b16 %v896, %v892
        %v1125 = vpack.c.b16 %v901, %v897
        %v1126 = vpack.c.b16 %v902, %v898
        %v1127 = vpack.c.b16 %v903, %v899
        %v1128 = vpack.c.b16 %v904, %v900
        %v1129 = vpack.c.b16 %v909, %v905
        %v1130 = vpack.c.b16 %v910, %v906
        %v1131 = vpack.c.b16 %v911, %v907
        %v1132 = vpack.c.b16 %v912, %v908
        %v1133 = vpack.c.b16 %v917, %v913
        %v1134 = vpack.c.b16 %v918, %v914
        %v1135 = vpack.c.b16 %v919, %v915
        %v1136 = vpack.c.b16 %v920, %v916
        %v1137 = vpack.c.b16 %v925, %v921
        %v1138 = vpack.c.b16 %v926, %v922
        %v1139 = vpack.c.b16 %v927, %v923
        %v1140 = vpack.c.b16 %v928, %v924
        %v1141 = vpack.c.b16 %v933, %v929
        %v1142 = vpack.c.b16 %v934, %v930
        %v1143 = vpack.c.b16 %v935, %v931
        %v1144 = vpack.c.b16 %v936, %v932
        %v1145 = vpack.c.b16 %v941, %v937
        %v1146 = vpack.c.b16 %v942, %v938
        %v1147 = vpack.c.b16 %v943, %v939
        %v1148 = vpack.c.b16 %v944, %v940
        %v1149 = vpack.c.b16 %v949, %v945
        %v1150 = vpack.c.b16 %v950, %v946
        %v1151 = vpack.c.b16 %v951, %v947
        %v1152 = vpack.c.b16 %v952, %v948
        %v1153 = vpack.c.b16 %v957, %v953
        %v1154 = vpack.c.b16 %v958, %v954
        %v1155 = vpack.c.b16 %v959, %v955
        %v1156 = vpack.c.b16 %v960, %v956
        %v1157 = vpack.c.b16 %v965, %v961
        %v1158 = vpack.c.b16 %v966, %v962
        %v1159 = vpack.c.b16 %v967, %v963
        %v1160 = vpack.c.b16 %v968, %v964
        %v1161 = vpack.c.b16 %v973, %v969
        %v1162 = vpack.c.b16 %v974, %v970
        %v1163 = vpack.c.b16 %v975, %v971
        %v1164 = vpack.c.b16 %v976, %v972
        %v1165 = vpack.c.b16 %v981, %v977
        %v1166 = vpack.c.b16 %v982, %v978
        %v1167 = vpack.c.b16 %v983, %v979
        %v1168 = vpack.c.b16 %v984, %v980
        %v1169 = vpack.c.b16 %v989, %v985
        %v1170 = vpack.c.b16 %v990, %v986
        %v1171 = vpack.c.b16 %v991, %v987
        %v1172 = vpack.c.b16 %v992, %v988
        %v1173 = vpack.c.b16 %v997, %v993
        %v1174 = vpack.c.b16 %v998, %v994
        %v1175 = vpack.c.b16 %v999, %v995
        %v1176 = vpack.c.b16 %v1000, %v996
        %v1177 = vpack.c.b16 %v1005, %v1001
        %v1178 = vpack.c.b16 %v1006, %v1002
        %v1179 = vpack.c.b16 %v1007, %v1003
        %v1180 = vpack.c.b16 %v1008, %v1004
        %v1181 = vpack.c.b16 %v1013, %v1009
        %v1182 = vpack.c.b16 %v1014, %v1010
        %v1183 = vpack.c.b16 %v1015, %v1011
        %v1184 = vpack.c.b16 %v1016, %v1012
        %v1185 = vpack.c.b16 %v1021, %v1017
        %v1186 = vpack.c.b16 %v1022, %v1018
        %v1187 = vpack.c.b16 %v1023, %v1019
        %v1188 = vpack.c.b16 %v1024, %v1020
        %v1189 = vpack.c.b16 %v1029, %v1025
        %v1190 = vpack.c.b16 %v1030, %v1026
        %v1191 = vpack.c.b16 %v1031, %v1027
        %v1192 = vpack.c.b16 %v1032, %v1028
        %v1193 = vpack.c.b16 %v1037, %v1033
        %v1194 = vpack.c.b16 %v1038, %v1034
        %v1195 = vpack.c.b16 %v1039, %v1035
        %v1196 = vpack.c.b16 %v1040, %v1036
        %v1197 = vpack.c.b16 %v1045, %v1041
        %v1198 = vpack.c.b16 %v1046, %v1042
        %v1199 = vpack.c.b16 %v1047, %v1043
        %v1200 = vpack.c.b16 %v1048, %v1044
        %v1201 = vpack.c.b16 %v1053, %v1049
        %v1202 = vpack.c.b16 %v1054, %v1050
        %v1203 = vpack.c.b16 %v1055, %v1051
        %v1204 = vpack.c.b16 %v1056, %v1052
        %v1205 = vpack.c.b16 %v1061, %v1057
        %v1206 = vpack.c.b16 %v1062, %v1058
        %v1207 = vpack.c.b16 %v1063, %v1059
        %v1208 = vpack.c.b16 %v1064, %v1060
        %v1209 = vpack.c.b16 %v1069, %v1065
        %v1210 = vpack.c.b16 %v1070, %v1066
        %v1211 = vpack.c.b16 %v1071, %v1067
        %v1212 = vpack.c.b16 %v1072, %v1068
        %v1213 = vpack.c.b16 %v1077, %v1073
        %v1214 = vpack.c.b16 %v1078, %v1074
        %v1215 = vpack.c.b16 %v1079, %v1075
        %v1216 = vpack.c.b16 %v1080, %v1076
        %v1217 = vpack.c.b16 %v1085, %v1081
        %v1218 = vpack.c.b16 %v1086, %v1082
        %v1219 = vpack.c.b16 %v1087, %v1083
        %v1220 = vpack.c.b16 %v1088, %v1084
        %v1221 = vpack.c.b16 %v1093, %v1089
        %v1222 = vpack.c.b16 %v1094, %v1090
        %v1223 = vpack.c.b16 %v1095, %v1091
        %v1224 = vpack.c.b16 %v1096, %v1092
        %1353 = vmatprep.subr.bf16.mxu0 %v1126
        %1354 = vmatpush1.bf16.msra.mxu0 %v1125
        %1355 = vmatprep.subr.bf16.mxu0 %v1122
        %1356 = vmatpush1.bf16.msra.mxu0 %v1121
        %1357 = vmatprep.subr.bf16.mxu0 %v1118
        %1358 = vmatpush1.bf16.msra.mxu0 %v1117
        %1359 = vmatprep.subr.bf16.mxu0 %v1114
        %1360 = vmatpush1.bf16.msra.mxu0 %v1113
        %1361 = vmatprep.subr.bf16.mxu0 %v1110
        %1362 = vmatpush1.bf16.msra.mxu0 %v1109
        %1363 = vmatprep.subr.bf16.mxu0 %v1106
        %1364 = vmatpush1.bf16.msra.mxu0 %v1105
        %1365 = vmatprep.subr.bf16.mxu0 %v1102
        %1366 = vmatpush1.bf16.msra.mxu0 %v1101
        %1367 = vmatprep.subr.bf16.mxu0 %v1098
        %1368 = vmatpush1.bf16.msra.mxu0 %v1097
        %1369 = vmatprep.subr.bf16.mxu0 %v1158
        %1370 = vmatpush2.bf16.msra.mxu0 %v1157
        %1371 = vmatprep.subr.bf16.mxu0 %v1154
        %1372 = vmatpush2.bf16.msra.mxu0 %v1153
        %1373 = vmatprep.subr.bf16.mxu0 %v1150
        %1374 = vmatpush2.bf16.msra.mxu0 %v1149
        %1375 = vmatprep.subr.bf16.mxu0 %v1146
        %1376 = vmatpush2.bf16.msra.mxu0 %v1145
        %1377 = vmatprep.subr.bf16.mxu0 %v1142
        %1378 = vmatpush2.bf16.msra.mxu0 %v1141
        %1379 = vmatprep.subr.bf16.mxu0 %v1138
        %1380 = vmatpush2.bf16.msra.mxu0 %v1137
        %1381 = vmatprep.subr.bf16.mxu0 %v1134
        %1382 = vmatpush2.bf16.msra.mxu0 %v1133
        %1383 = vmatprep.subr.bf16.mxu0 %v1130
        %1384 = vmatpush2.bf16.msra.mxu0 %v1129
        %1385 = vmatprep.mubr.bf16.mxu0 %v706
        %1386 = vmatmul.mubr.bf16.gmra.mxu0 %v705
        %v1387 = vpop.f32.mrf.mxu0
        %v1388 = vadd.f32 0.0, %v1387
        %v1389 = vpop.f32.mrf.mxu0
        %v1390 = vadd.f32 0.0, %v1389
        %v1391 = vpop.f32.mrf.mxu0
        %v1392 = vadd.f32 0.0, %v1391
        %v1393 = vpop.f32.mrf.mxu0
        %v1394 = vadd.f32 0.0, %v1393
        %1395 = vdwg.mxu0
        %1396 = vmatprep.subr.bf16.mxu0 %v1190
        %1397 = vmatpush1.bf16.msra.mxu0 %v1189
        %1398 = vmatprep.subr.bf16.mxu0 %v1186
        %1399 = vmatpush1.bf16.msra.mxu0 %v1185
        %1400 = vmatprep.subr.bf16.mxu0 %v1182
        %1401 = vmatpush1.bf16.msra.mxu0 %v1181
        %1402 = vmatprep.subr.bf16.mxu0 %v1178
        %1403 = vmatpush1.bf16.msra.mxu0 %v1177
        %1404 = vmatprep.subr.bf16.mxu0 %v1174
        %1405 = vmatpush1.bf16.msra.mxu0 %v1173
        %1406 = vmatprep.subr.bf16.mxu0 %v1170
        %1407 = vmatpush1.bf16.msra.mxu0 %v1169
        %1408 = vmatprep.subr.bf16.mxu0 %v1166
        %1409 = vmatpush1.bf16.msra.mxu0 %v1165
        %1410 = vmatprep.subr.bf16.mxu0 %v1162
        %1411 = vmatpush1.bf16.msra.mxu0 %v1161
        %1412 = vmatprep.subr.bf16.mxu0 %v1222
        %1413 = vmatpush2.bf16.msra.mxu0 %v1221
        %1414 = vmatprep.subr.bf16.mxu0 %v1218
        %1415 = vmatpush2.bf16.msra.mxu0 %v1217
        %1416 = vmatprep.subr.bf16.mxu0 %v1214
        %1417 = vmatpush2.bf16.msra.mxu0 %v1213
        %1418 = vmatprep.subr.bf16.mxu0 %v1210
        %1419 = vmatpush2.bf16.msra.mxu0 %v1209
        %1420 = vmatprep.subr.bf16.mxu0 %v1206
        %1421 = vmatpush2.bf16.msra.mxu0 %v1205
        %1422 = vmatprep.subr.bf16.mxu0 %v1202
        %1423 = vmatpush2.bf16.msra.mxu0 %v1201
        %1424 = vmatprep.subr.bf16.mxu0 %v1198
        %1425 = vmatpush2.bf16.msra.mxu0 %v1197
        %1426 = vmatprep.subr.bf16.mxu0 %v1194
        %1427 = vmatpush2.bf16.msra.mxu0 %v1193
        %1428 = vmatprep.mubr.bf16.mxu0 %v708
        %1429 = vmatmul.mubr.bf16.gmra.mxu0 %v707
        %v1430 = vpop.f32.mrf.mxu0
        %v1431 = vadd.f32 %v1388, %v1430
        %v1432 = vpop.f32.mrf.mxu0
        %v1433 = vadd.f32 %v1390, %v1432
        %v1434 = vpop.f32.mrf.mxu0
        %v1435 = vadd.f32 %v1392, %v1434
        %v1436 = vpop.f32.mrf.mxu0
        %v1437 = vadd.f32 %v1394, %v1436
        %1438 = vdwg.mxu0
        %1439 = vmatprep.subr.bf16.mxu0 %v1128
        %1440 = vmatpush1.bf16.msra.mxu0 %v1127
        %1441 = vmatprep.subr.bf16.mxu0 %v1124
        %1442 = vmatpush1.bf16.msra.mxu0 %v1123
        %1443 = vmatprep.subr.bf16.mxu0 %v1120
        %1444 = vmatpush1.bf16.msra.mxu0 %v1119
        %1445 = vmatprep.subr.bf16.mxu0 %v1116
        %1446 = vmatpush1.bf16.msra.mxu0 %v1115
        %1447 = vmatprep.subr.bf16.mxu0 %v1112
        %1448 = vmatpush1.bf16.msra.mxu0 %v1111
        %1449 = vmatprep.subr.bf16.mxu0 %v1108
        %1450 = vmatpush1.bf16.msra.mxu0 %v1107
        %1451 = vmatprep.subr.bf16.mxu0 %v1104
        %1452 = vmatpush1.bf16.msra.mxu0 %v1103
        %1453 = vmatprep.subr.bf16.mxu0 %v1100
        %1454 = vmatpush1.bf16.msra.mxu0 %v1099
        %1455 = vmatprep.subr.bf16.mxu0 %v1160
        %1456 = vmatpush2.bf16.msra.mxu0 %v1159
        %1457 = vmatprep.subr.bf16.mxu0 %v1156
        %1458 = vmatpush2.bf16.msra.mxu0 %v1155
        %1459 = vmatprep.subr.bf16.mxu0 %v1152
        %1460 = vmatpush2.bf16.msra.mxu0 %v1151
        %1461 = vmatprep.subr.bf16.mxu0 %v1148
        %1462 = vmatpush2.bf16.msra.mxu0 %v1147
        %1463 = vmatprep.subr.bf16.mxu0 %v1144
        %1464 = vmatpush2.bf16.msra.mxu0 %v1143
        %1465 = vmatprep.subr.bf16.mxu0 %v1140
        %1466 = vmatpush2.bf16.msra.mxu0 %v1139
        %1467 = vmatprep.subr.bf16.mxu0 %v1136
        %1468 = vmatpush2.bf16.msra.mxu0 %v1135
        %1469 = vmatprep.subr.bf16.mxu0 %v1132
        %1470 = vmatpush2.bf16.msra.mxu0 %v1131
        %1471 = vmatprep.mubr.bf16.mxu0 %v706
        %1472 = vmatmul.mubr.bf16.gmra.mxu0 %v705
        %v1473 = vpop.f32.mrf.mxu0
        %v1474 = vadd.f32 0.0, %v1473
        %v1475 = vpop.f32.mrf.mxu0
        %v1476 = vadd.f32 0.0, %v1475
        %v1477 = vpop.f32.mrf.mxu0
        %v1478 = vadd.f32 0.0, %v1477
        %v1479 = vpop.f32.mrf.mxu0
        %v1480 = vadd.f32 0.0, %v1479
        %1481 = vdwg.mxu0
        %1482 = vmatprep.subr.bf16.mxu0 %v1192
        %1483 = vmatpush1.bf16.msra.mxu0 %v1191
        %1484 = vmatprep.subr.bf16.mxu0 %v1188
        %1485 = vmatpush1.bf16.msra.mxu0 %v1187
        %1486 = vmatprep.subr.bf16.mxu0 %v1184
        %1487 = vmatpush1.bf16.msra.mxu0 %v1183
        %1488 = vmatprep.subr.bf16.mxu0 %v1180
        %1489 = vmatpush1.bf16.msra.mxu0 %v1179
        %1490 = vmatprep.subr.bf16.mxu0 %v1176
        %1491 = vmatpush1.bf16.msra.mxu0 %v1175
        %1492 = vmatprep.subr.bf16.mxu0 %v1172
        %1493 = vmatpush1.bf16.msra.mxu0 %v1171
        %1494 = vmatprep.subr.bf16.mxu0 %v1168
        %1495 = vmatpush1.bf16.msra.mxu0 %v1167
        %1496 = vmatprep.subr.bf16.mxu0 %v1164
        %1497 = vmatpush1.bf16.msra.mxu0 %v1163
        %1498 = vmatprep.subr.bf16.mxu0 %v1224
        %1499 = vmatpush2.bf16.msra.mxu0 %v1223
        %1500 = vmatprep.subr.bf16.mxu0 %v1220
        %1501 = vmatpush2.bf16.msra.mxu0 %v1219
        %1502 = vmatprep.subr.bf16.mxu0 %v1216
        %1503 = vmatpush2.bf16.msra.mxu0 %v1215
        %1504 = vmatprep.subr.bf16.mxu0 %v1212
        %1505 = vmatpush2.bf16.msra.mxu0 %v1211
        %1506 = vmatprep.subr.bf16.mxu0 %v1208
        %1507 = vmatpush2.bf16.msra.mxu0 %v1207
        %1508 = vmatprep.subr.bf16.mxu0 %v1204
        %1509 = vmatpush2.bf16.msra.mxu0 %v1203
        %1510 = vmatprep.subr.bf16.mxu0 %v1200
        %1511 = vmatpush2.bf16.msra.mxu0 %v1199
        %1512 = vmatprep.subr.bf16.mxu0 %v1196
        %1513 = vmatpush2.bf16.msra.mxu0 %v1195
        %1514 = vmatprep.mubr.bf16.mxu0 %v708
        %1515 = vmatmul.mubr.bf16.gmra.mxu0 %v707
        %v1516 = vpop.f32.mrf.mxu0
        %v1517 = vadd.f32 %v1474, %v1516
        %v1518 = vpop.f32.mrf.mxu0
        %v1519 = vadd.f32 %v1476, %v1518
        %v1520 = vpop.f32.mrf.mxu0
        %v1521 = vadd.f32 %v1478, %v1520
        %v1522 = vpop.f32.mrf.mxu0
        %v1523 = vadd.f32 %v1480, %v1522
        %1524 = vdwg.mxu0
        %v1525 = vcombine.low %v227, %v242
        %v1526 = vcombine.high %v227, %v242
        %v1527 = vcombine.low %v257, %v272
        %v1528 = vcombine.high %v257, %v272
        %v1530 = vunpack.c.l.s4 1983009808
        %v1531 = vunpack.c.0.s8 %v1530
        %v1532 = vlaneseq
        %v1533 = vshrl.u32 %v1532, 7
        %v1534 = vsub.s32 %v1531, %v1533
        %v1535 = vrot.slane %v1525, %v1534
        %v1537 = vunpack.c.l.s4 1983009808
        %v1538 = vunpack.c.0.s8 %v1537
        %v1539 = vlaneseq
        %v1540 = vshrl.u32 %v1539, 7
        %v1541 = vsub.s32 %v1538, %v1540
        %v1542 = vrot.slane %v1526, %v1541
        %v1544 = vunpack.c.l.s4 1983009808
        %v1545 = vunpack.c.0.s8 %v1544
        %v1546 = vlaneseq
        %v1547 = vshrl.u32 %v1546, 7
        %v1548 = vsub.s32 %v1545, %v1547
        %v1549 = vrot.slane %v1527, %v1548
        %v1551 = vunpack.c.l.s4 1983009808
        %v1552 = vunpack.c.0.s8 %v1551
        %v1553 = vlaneseq
        %v1554 = vshrl.u32 %v1553, 7
        %v1555 = vsub.s32 %v1552, %v1554
        %v1556 = vrot.slane %v1528, %v1555
        %v1557 = vcombine.low %v1535, %v1549
        %v1558 = vcombine.high %v1535, %v1549
        %v1559 = vcombine.low %v1542, %v1556
        %v1560 = vcombine.high %v1542, %v1556
        %v1693 = vunpack.c.l.b16 %v273
        %v1694 = vunpack.c.h.b16 %v273
        %v1695 = vunpack.c.l.b16 %v274
        %v1696 = vunpack.c.h.b16 %v274
        %v1697 = vunpack.c.l.b16 %v275
        %v1698 = vunpack.c.h.b16 %v275
        %v1699 = vunpack.c.l.b16 %v276
        %v1700 = vunpack.c.h.b16 %v276
        %v1701 = vunpack.c.l.b16 %v277
        %v1702 = vunpack.c.h.b16 %v277
        %v1703 = vunpack.c.l.b16 %v278
        %v1704 = vunpack.c.h.b16 %v278
        %v1705 = vunpack.c.l.b16 %v279
        %v1706 = vunpack.c.h.b16 %v279
        %v1707 = vunpack.c.l.b16 %v280
        %v1708 = vunpack.c.h.b16 %v280
        %v1709 = vunpack.c.l.b16 %v281
        %v1710 = vunpack.c.h.b16 %v281
        %v1711 = vunpack.c.l.b16 %v282
        %v1712 = vunpack.c.h.b16 %v282
        %v1713 = vunpack.c.l.b16 %v283
        %v1714 = vunpack.c.h.b16 %v283
        %v1715 = vunpack.c.l.b16 %v284
        %v1716 = vunpack.c.h.b16 %v284
        %v1717 = vunpack.c.l.b16 %v285
        %v1718 = vunpack.c.h.b16 %v285
        %v1719 = vunpack.c.l.b16 %v286
        %v1720 = vunpack.c.h.b16 %v286
        %v1721 = vunpack.c.l.b16 %v287
        %v1722 = vunpack.c.h.b16 %v287
        %v1723 = vunpack.c.l.b16 %v288
        %v1724 = vunpack.c.h.b16 %v288
        %v1725 = vunpack.c.l.b16 %v289
        %v1726 = vunpack.c.h.b16 %v289
        %v1727 = vunpack.c.l.b16 %v290
        %v1728 = vunpack.c.h.b16 %v290
        %v1729 = vunpack.c.l.b16 %v291
        %v1730 = vunpack.c.h.b16 %v291
        %v1731 = vunpack.c.l.b16 %v292
        %v1732 = vunpack.c.h.b16 %v292
        %v1733 = vunpack.c.l.b16 %v293
        %v1734 = vunpack.c.h.b16 %v293
        %v1735 = vunpack.c.l.b16 %v294
        %v1736 = vunpack.c.h.b16 %v294
        %v1737 = vunpack.c.l.b16 %v295
        %v1738 = vunpack.c.h.b16 %v295
        %v1739 = vunpack.c.l.b16 %v296
        %v1740 = vunpack.c.h.b16 %v296
        %v1741 = vunpack.c.l.b16 %v297
        %v1742 = vunpack.c.h.b16 %v297
        %v1743 = vunpack.c.l.b16 %v298
        %v1744 = vunpack.c.h.b16 %v298
        %v1745 = vunpack.c.l.b16 %v299
        %v1746 = vunpack.c.h.b16 %v299
        %v1747 = vunpack.c.l.b16 %v300
        %v1748 = vunpack.c.h.b16 %v300
        %v1749 = vunpack.c.l.b16 %v301
        %v1750 = vunpack.c.h.b16 %v301
        %v1751 = vunpack.c.l.b16 %v302
        %v1752 = vunpack.c.h.b16 %v302
        %v1753 = vunpack.c.l.b16 %v303
        %v1754 = vunpack.c.h.b16 %v303
        %v1755 = vunpack.c.l.b16 %v304
        %v1756 = vunpack.c.h.b16 %v304
        %v1757 = vunpack.c.l.b16 %v305
        %v1758 = vunpack.c.h.b16 %v305
        %v1759 = vunpack.c.l.b16 %v306
        %v1760 = vunpack.c.h.b16 %v306
        %v1761 = vunpack.c.l.b16 %v307
        %v1762 = vunpack.c.h.b16 %v307
        %v1763 = vunpack.c.l.b16 %v308
        %v1764 = vunpack.c.h.b16 %v308
        %v1765 = vunpack.c.l.b16 %v309
        %v1766 = vunpack.c.h.b16 %v309
        %v1767 = vunpack.c.l.b16 %v310
        %v1768 = vunpack.c.h.b16 %v310
        %v1769 = vunpack.c.l.b16 %v311
        %v1770 = vunpack.c.h.b16 %v311
        %v1771 = vunpack.c.l.b16 %v312
        %v1772 = vunpack.c.h.b16 %v312
        %v1773 = vunpack.c.l.b16 %v313
        %v1774 = vunpack.c.h.b16 %v313
        %v1775 = vunpack.c.l.b16 %v314
        %v1776 = vunpack.c.h.b16 %v314
        %v1777 = vunpack.c.l.b16 %v315
        %v1778 = vunpack.c.h.b16 %v315
        %v1779 = vunpack.c.l.b16 %v316
        %v1780 = vunpack.c.h.b16 %v316
        %v1781 = vunpack.c.l.b16 %v317
        %v1782 = vunpack.c.h.b16 %v317
        %v1783 = vunpack.c.l.b16 %v318
        %v1784 = vunpack.c.h.b16 %v318
        %v1785 = vunpack.c.l.b16 %v319
        %v1786 = vunpack.c.h.b16 %v319
        %v1787 = vunpack.c.l.b16 %v320
        %v1788 = vunpack.c.h.b16 %v320
        %v1789 = vunpack.c.l.b16 %v321
        %v1790 = vunpack.c.h.b16 %v321
        %v1791 = vunpack.c.l.b16 %v322
        %v1792 = vunpack.c.h.b16 %v322
        %v1793 = vunpack.c.l.b16 %v323
        %v1794 = vunpack.c.h.b16 %v323
        %v1795 = vunpack.c.l.b16 %v324
        %v1796 = vunpack.c.h.b16 %v324
        %v1797 = vunpack.c.l.b16 %v325
        %v1798 = vunpack.c.h.b16 %v325
        %v1799 = vunpack.c.l.b16 %v326
        %v1800 = vunpack.c.h.b16 %v326
        %v1801 = vunpack.c.l.b16 %v327
        %v1802 = vunpack.c.h.b16 %v327
        %v1803 = vunpack.c.l.b16 %v328
        %v1804 = vunpack.c.h.b16 %v328
        %v1805 = vunpack.c.l.b16 %v329
        %v1806 = vunpack.c.h.b16 %v329
        %v1807 = vunpack.c.l.b16 %v330
        %v1808 = vunpack.c.h.b16 %v330
        %v1809 = vunpack.c.l.b16 %v331
        %v1810 = vunpack.c.h.b16 %v331
        %v1811 = vunpack.c.l.b16 %v332
        %v1812 = vunpack.c.h.b16 %v332
        %v1813 = vunpack.c.l.b16 %v333
        %v1814 = vunpack.c.h.b16 %v333
        %v1815 = vunpack.c.l.b16 %v334
        %v1816 = vunpack.c.h.b16 %v334
        %v1817 = vunpack.c.l.b16 %v335
        %v1818 = vunpack.c.h.b16 %v335
        %v1819 = vunpack.c.l.b16 %v336
        %v1820 = vunpack.c.h.b16 %v336
        %v1821 = vunpack.c.l.b16 %v337
        %v1822 = vunpack.c.h.b16 %v337
        %v1823 = vunpack.c.l.b16 %v338
        %v1824 = vunpack.c.h.b16 %v338
        %v1825 = vunpack.c.l.b16 %v339
        %v1826 = vunpack.c.h.b16 %v339
        %v1827 = vunpack.c.l.b16 %v340
        %v1828 = vunpack.c.h.b16 %v340
        %v1829 = vunpack.c.l.b16 %v341
        %v1830 = vunpack.c.h.b16 %v341
        %v1831 = vunpack.c.l.b16 %v342
        %v1832 = vunpack.c.h.b16 %v342
        %v1833 = vunpack.c.l.b16 %v343
        %v1834 = vunpack.c.h.b16 %v343
        %v1835 = vunpack.c.l.b16 %v344
        %v1836 = vunpack.c.h.b16 %v344
        %v1837 = vunpack.c.l.b16 %v345
        %v1838 = vunpack.c.h.b16 %v345
        %v1839 = vunpack.c.l.b16 %v346
        %v1840 = vunpack.c.h.b16 %v346
        %v1841 = vunpack.c.l.b16 %v347
        %v1842 = vunpack.c.h.b16 %v347
        %v1843 = vunpack.c.l.b16 %v348
        %v1844 = vunpack.c.h.b16 %v348
        %v1845 = vunpack.c.l.b16 %v349
        %v1846 = vunpack.c.h.b16 %v349
        %v1847 = vunpack.c.l.b16 %v350
        %v1848 = vunpack.c.h.b16 %v350
        %v1849 = vunpack.c.l.b16 %v351
        %v1850 = vunpack.c.h.b16 %v351
        %v1851 = vunpack.c.l.b16 %v352
        %v1852 = vunpack.c.h.b16 %v352
        %v1853 = vunpack.c.l.b16 %v353
        %v1854 = vunpack.c.h.b16 %v353
        %v1855 = vunpack.c.l.b16 %v354
        %v1856 = vunpack.c.h.b16 %v354
        %v1857 = vunpack.c.l.b16 %v355
        %v1858 = vunpack.c.h.b16 %v355
        %v1859 = vunpack.c.l.b16 %v356
        %v1860 = vunpack.c.h.b16 %v356
        %v1861 = vunpack.c.l.b16 %v357
        %v1862 = vunpack.c.h.b16 %v357
        %v1863 = vunpack.c.l.b16 %v358
        %v1864 = vunpack.c.h.b16 %v358
        %v1865 = vunpack.c.l.b16 %v359
        %v1866 = vunpack.c.h.b16 %v359
        %v1867 = vunpack.c.l.b16 %v360
        %v1868 = vunpack.c.h.b16 %v360
        %v1869 = vunpack.c.l.b16 %v361
        %v1870 = vunpack.c.h.b16 %v361
        %v1871 = vunpack.c.l.b16 %v362
        %v1872 = vunpack.c.h.b16 %v362
        %v1873 = vunpack.c.l.b16 %v363
        %v1874 = vunpack.c.h.b16 %v363
        %v1875 = vunpack.c.l.b16 %v364
        %v1876 = vunpack.c.h.b16 %v364
        %v1877 = vunpack.c.l.b16 %v365
        %v1878 = vunpack.c.h.b16 %v365
        %v1879 = vunpack.c.l.b16 %v366
        %v1880 = vunpack.c.h.b16 %v366
        %v1881 = vunpack.c.l.b16 %v367
        %v1882 = vunpack.c.h.b16 %v367
        %v1883 = vunpack.c.l.b16 %v368
        %v1884 = vunpack.c.h.b16 %v368
        %v1885 = vunpack.c.l.b16 %v369
        %v1886 = vunpack.c.h.b16 %v369
        %v1887 = vunpack.c.l.b16 %v370
        %v1888 = vunpack.c.h.b16 %v370
        %v1889 = vunpack.c.l.b16 %v371
        %v1890 = vunpack.c.h.b16 %v371
        %v1891 = vunpack.c.l.b16 %v372
        %v1892 = vunpack.c.h.b16 %v372
        %v1893 = vunpack.c.l.b16 %v373
        %v1894 = vunpack.c.h.b16 %v373
        %v1895 = vunpack.c.l.b16 %v374
        %v1896 = vunpack.c.h.b16 %v374
        %v1897 = vunpack.c.l.b16 %v375
        %v1898 = vunpack.c.h.b16 %v375
        %v1899 = vunpack.c.l.b16 %v376
        %v1900 = vunpack.c.h.b16 %v376
        %v1901 = vunpack.c.l.b16 %v377
        %v1902 = vunpack.c.h.b16 %v377
        %v1903 = vunpack.c.l.b16 %v378
        %v1904 = vunpack.c.h.b16 %v378
        %v1905 = vunpack.c.l.b16 %v379
        %v1906 = vunpack.c.h.b16 %v379
        %v1907 = vunpack.c.l.b16 %v380
        %v1908 = vunpack.c.h.b16 %v380
        %v1909 = vunpack.c.l.b16 %v381
        %v1910 = vunpack.c.h.b16 %v381
        %v1911 = vunpack.c.l.b16 %v382
        %v1912 = vunpack.c.h.b16 %v382
        %v1913 = vunpack.c.l.b16 %v383
        %v1914 = vunpack.c.h.b16 %v383
        %v1915 = vunpack.c.l.b16 %v384
        %v1916 = vunpack.c.h.b16 %v384
        %v1917 = vunpack.c.l.b16 %v385
        %v1918 = vunpack.c.h.b16 %v385
        %v1919 = vunpack.c.l.b16 %v386
        %v1920 = vunpack.c.h.b16 %v386
        %v1921 = vunpack.c.l.b16 %v387
        %v1922 = vunpack.c.h.b16 %v387
        %v1923 = vunpack.c.l.b16 %v388
        %v1924 = vunpack.c.h.b16 %v388
        %v1925 = vunpack.c.l.b16 %v389
        %v1926 = vunpack.c.h.b16 %v389
        %v1927 = vunpack.c.l.b16 %v390
        %v1928 = vunpack.c.h.b16 %v390
        %v1929 = vunpack.c.l.b16 %v391
        %v1930 = vunpack.c.h.b16 %v391
        %v1931 = vunpack.c.l.b16 %v392
        %v1932 = vunpack.c.h.b16 %v392
        %v1933 = vunpack.c.l.b16 %v393
        %v1934 = vunpack.c.h.b16 %v393
        %v1935 = vunpack.c.l.b16 %v394
        %v1936 = vunpack.c.h.b16 %v394
        %v1937 = vunpack.c.l.b16 %v395
        %v1938 = vunpack.c.h.b16 %v395
        %v1939 = vunpack.c.l.b16 %v396
        %v1940 = vunpack.c.h.b16 %v396
        %v1941 = vunpack.c.l.b16 %v397
        %v1942 = vunpack.c.h.b16 %v397
        %v1943 = vunpack.c.l.b16 %v398
        %v1944 = vunpack.c.h.b16 %v398
        %v1945 = vunpack.c.l.b16 %v399
        %v1946 = vunpack.c.h.b16 %v399
        %v1947 = vunpack.c.l.b16 %v400
        %v1948 = vunpack.c.h.b16 %v400
        %v1949 = vpack.c.b16 %v1697, %v1693
        %v1950 = vpack.c.b16 %v1698, %v1694
        %v1951 = vpack.c.b16 %v1699, %v1695
        %v1952 = vpack.c.b16 %v1700, %v1696
        %v1953 = vpack.c.b16 %v1705, %v1701
        %v1954 = vpack.c.b16 %v1706, %v1702
        %v1955 = vpack.c.b16 %v1707, %v1703
        %v1956 = vpack.c.b16 %v1708, %v1704
        %v1957 = vpack.c.b16 %v1713, %v1709
        %v1958 = vpack.c.b16 %v1714, %v1710
        %v1959 = vpack.c.b16 %v1715, %v1711
        %v1960 = vpack.c.b16 %v1716, %v1712
        %v1961 = vpack.c.b16 %v1721, %v1717
        %v1962 = vpack.c.b16 %v1722, %v1718
        %v1963 = vpack.c.b16 %v1723, %v1719
        %v1964 = vpack.c.b16 %v1724, %v1720
        %v1965 = vpack.c.b16 %v1729, %v1725
        %v1966 = vpack.c.b16 %v1730, %v1726
        %v1967 = vpack.c.b16 %v1731, %v1727
        %v1968 = vpack.c.b16 %v1732, %v1728
        %v1969 = vpack.c.b16 %v1737, %v1733
        %v1970 = vpack.c.b16 %v1738, %v1734
        %v1971 = vpack.c.b16 %v1739, %v1735
        %v1972 = vpack.c.b16 %v1740, %v1736
        %v1973 = vpack.c.b16 %v1745, %v1741
        %v1974 = vpack.c.b16 %v1746, %v1742
        %v1975 = vpack.c.b16 %v1747, %v1743
        %v1976 = vpack.c.b16 %v1748, %v1744
        %v1977 = vpack.c.b16 %v1753, %v1749
        %v1978 = vpack.c.b16 %v1754, %v1750
        %v1979 = vpack.c.b16 %v1755, %v1751
        %v1980 = vpack.c.b16 %v1756, %v1752
        %v1981 = vpack.c.b16 %v1761, %v1757
        %v1982 = vpack.c.b16 %v1762, %v1758
        %v1983 = vpack.c.b16 %v1763, %v1759
        %v1984 = vpack.c.b16 %v1764, %v1760
        %v1985 = vpack.c.b16 %v1769, %v1765
        %v1986 = vpack.c.b16 %v1770, %v1766
        %v1987 = vpack.c.b16 %v1771, %v1767
        %v1988 = vpack.c.b16 %v1772, %v1768
        %v1989 = vpack.c.b16 %v1777, %v1773
        %v1990 = vpack.c.b16 %v1778, %v1774
        %v1991 = vpack.c.b16 %v1779, %v1775
        %v1992 = vpack.c.b16 %v1780, %v1776
        %v1993 = vpack.c.b16 %v1785, %v1781
        %v1994 = vpack.c.b16 %v1786, %v1782
        %v1995 = vpack.c.b16 %v1787, %v1783
        %v1996 = vpack.c.b16 %v1788, %v1784
        %v1997 = vpack.c.b16 %v1793, %v1789
        %v1998 = vpack.c.b16 %v1794, %v1790
        %v1999 = vpack.c.b16 %v1795, %v1791
        %v2000 = vpack.c.b16 %v1796, %v1792
        %v2001 = vpack.c.b16 %v1801, %v1797
        %v2002 = vpack.c.b16 %v1802, %v1798
        %v2003 = vpack.c.b16 %v1803, %v1799
        %v2004 = vpack.c.b16 %v1804, %v1800
        %v2005 = vpack.c.b16 %v1809, %v1805
        %v2006 = vpack.c.b16 %v1810, %v1806
        %v2007 = vpack.c.b16 %v1811, %v1807
        %v2008 = vpack.c.b16 %v1812, %v1808
        %v2009 = vpack.c.b16 %v1817, %v1813
        %v2010 = vpack.c.b16 %v1818, %v1814
        %v2011 = vpack.c.b16 %v1819, %v1815
        %v2012 = vpack.c.b16 %v1820, %v1816
        %v2013 = vpack.c.b16 %v1825, %v1821
        %v2014 = vpack.c.b16 %v1826, %v1822
        %v2015 = vpack.c.b16 %v1827, %v1823
        %v2016 = vpack.c.b16 %v1828, %v1824
        %v2017 = vpack.c.b16 %v1833, %v1829
        %v2018 = vpack.c.b16 %v1834, %v1830
        %v2019 = vpack.c.b16 %v1835, %v1831
        %v2020 = vpack.c.b16 %v1836, %v1832
        %v2021 = vpack.c.b16 %v1841, %v1837
        %v2022 = vpack.c.b16 %v1842, %v1838
        %v2023 = vpack.c.b16 %v1843, %v1839
        %v2024 = vpack.c.b16 %v1844, %v1840
        %v2025 = vpack.c.b16 %v1849, %v1845
        %v2026 = vpack.c.b16 %v1850, %v1846
        %v2027 = vpack.c.b16 %v1851, %v1847
        %v2028 = vpack.c.b16 %v1852, %v1848
        %v2029 = vpack.c.b16 %v1857, %v1853
        %v2030 = vpack.c.b16 %v1858, %v1854
        %v2031 = vpack.c.b16 %v1859, %v1855
        %v2032 = vpack.c.b16 %v1860, %v1856
        %v2033 = vpack.c.b16 %v1865, %v1861
        %v2034 = vpack.c.b16 %v1866, %v1862
        %v2035 = vpack.c.b16 %v1867, %v1863
        %v2036 = vpack.c.b16 %v1868, %v1864
        %v2037 = vpack.c.b16 %v1873, %v1869
        %v2038 = vpack.c.b16 %v1874, %v1870
        %v2039 = vpack.c.b16 %v1875, %v1871
        %v2040 = vpack.c.b16 %v1876, %v1872
        %v2041 = vpack.c.b16 %v1881, %v1877
        %v2042 = vpack.c.b16 %v1882, %v1878
        %v2043 = vpack.c.b16 %v1883, %v1879
        %v2044 = vpack.c.b16 %v1884, %v1880
        %v2045 = vpack.c.b16 %v1889, %v1885
        %v2046 = vpack.c.b16 %v1890, %v1886
        %v2047 = vpack.c.b16 %v1891, %v1887
        %v2048 = vpack.c.b16 %v1892, %v1888
        %v2049 = vpack.c.b16 %v1897, %v1893
        %v2050 = vpack.c.b16 %v1898, %v1894
        %v2051 = vpack.c.b16 %v1899, %v1895
        %v2052 = vpack.c.b16 %v1900, %v1896
        %v2053 = vpack.c.b16 %v1905, %v1901
        %v2054 = vpack.c.b16 %v1906, %v1902
        %v2055 = vpack.c.b16 %v1907, %v1903
        %v2056 = vpack.c.b16 %v1908, %v1904
        %v2057 = vpack.c.b16 %v1913, %v1909
        %v2058 = vpack.c.b16 %v1914, %v1910
        %v2059 = vpack.c.b16 %v1915, %v1911
        %v2060 = vpack.c.b16 %v1916, %v1912
        %v2061 = vpack.c.b16 %v1921, %v1917
        %v2062 = vpack.c.b16 %v1922, %v1918
        %v2063 = vpack.c.b16 %v1923, %v1919
        %v2064 = vpack.c.b16 %v1924, %v1920
        %v2065 = vpack.c.b16 %v1929, %v1925
        %v2066 = vpack.c.b16 %v1930, %v1926
        %v2067 = vpack.c.b16 %v1931, %v1927
        %v2068 = vpack.c.b16 %v1932, %v1928
        %v2069 = vpack.c.b16 %v1937, %v1933
        %v2070 = vpack.c.b16 %v1938, %v1934
        %v2071 = vpack.c.b16 %v1939, %v1935
        %v2072 = vpack.c.b16 %v1940, %v1936
        %v2073 = vpack.c.b16 %v1945, %v1941
        %v2074 = vpack.c.b16 %v1946, %v1942
        %v2075 = vpack.c.b16 %v1947, %v1943
        %v2076 = vpack.c.b16 %v1948, %v1944
        %2205 = vmatprep.subr.bf16.mxu0 %v1978
        %2206 = vmatpush1.bf16.msra.mxu0 %v1977
        %2207 = vmatprep.subr.bf16.mxu0 %v1974
        %2208 = vmatpush1.bf16.msra.mxu0 %v1973
        %2209 = vmatprep.subr.bf16.mxu0 %v1970
        %2210 = vmatpush1.bf16.msra.mxu0 %v1969
        %2211 = vmatprep.subr.bf16.mxu0 %v1966
        %2212 = vmatpush1.bf16.msra.mxu0 %v1965
        %2213 = vmatprep.subr.bf16.mxu0 %v1962
        %2214 = vmatpush1.bf16.msra.mxu0 %v1961
        %2215 = vmatprep.subr.bf16.mxu0 %v1958
        %2216 = vmatpush1.bf16.msra.mxu0 %v1957
        %2217 = vmatprep.subr.bf16.mxu0 %v1954
        %2218 = vmatpush1.bf16.msra.mxu0 %v1953
        %2219 = vmatprep.subr.bf16.mxu0 %v1950
        %2220 = vmatpush1.bf16.msra.mxu0 %v1949
        %2221 = vmatprep.subr.bf16.mxu0 %v2010
        %2222 = vmatpush2.bf16.msra.mxu0 %v2009
        %2223 = vmatprep.subr.bf16.mxu0 %v2006
        %2224 = vmatpush2.bf16.msra.mxu0 %v2005
        %2225 = vmatprep.subr.bf16.mxu0 %v2002
        %2226 = vmatpush2.bf16.msra.mxu0 %v2001
        %2227 = vmatprep.subr.bf16.mxu0 %v1998
        %2228 = vmatpush2.bf16.msra.mxu0 %v1997
        %2229 = vmatprep.subr.bf16.mxu0 %v1994
        %2230 = vmatpush2.bf16.msra.mxu0 %v1993
        %2231 = vmatprep.subr.bf16.mxu0 %v1990
        %2232 = vmatpush2.bf16.msra.mxu0 %v1989
        %2233 = vmatprep.subr.bf16.mxu0 %v1986
        %2234 = vmatpush2.bf16.msra.mxu0 %v1985
        %2235 = vmatprep.subr.bf16.mxu0 %v1982
        %2236 = vmatpush2.bf16.msra.mxu0 %v1981
        %2237 = vmatprep.mubr.bf16.mxu0 %v1558
        %2238 = vmatmul.mubr.bf16.gmra.mxu0 %v1557
        %v2239 = vpop.f32.mrf.mxu0
        %v2240 = vadd.f32 %v1431, %v2239
        %v2241 = vpop.f32.mrf.mxu0
        %v2242 = vadd.f32 %v1433, %v2241
        %v2243 = vpop.f32.mrf.mxu0
        %v2244 = vadd.f32 %v1435, %v2243
        %v2245 = vpop.f32.mrf.mxu0
        %v2246 = vadd.f32 %v1437, %v2245
        %2247 = vdwg.mxu0
        %2248 = vmatprep.subr.bf16.mxu0 %v2042
        %2249 = vmatpush1.bf16.msra.mxu0 %v2041
        %2250 = vmatprep.subr.bf16.mxu0 %v2038
        %2251 = vmatpush1.bf16.msra.mxu0 %v2037
        %2252 = vmatprep.subr.bf16.mxu0 %v2034
        %2253 = vmatpush1.bf16.msra.mxu0 %v2033
        %2254 = vmatprep.subr.bf16.mxu0 %v2030
        %2255 = vmatpush1.bf16.msra.mxu0 %v2029
        %2256 = vmatprep.subr.bf16.mxu0 %v2026
        %2257 = vmatpush1.bf16.msra.mxu0 %v2025
        %2258 = vmatprep.subr.bf16.mxu0 %v2022
        %2259 = vmatpush1.bf16.msra.mxu0 %v2021
        %2260 = vmatprep.subr.bf16.mxu0 %v2018
        %2261 = vmatpush1.bf16.msra.mxu0 %v2017
        %2262 = vmatprep.subr.bf16.mxu0 %v2014
        %2263 = vmatpush1.bf16.msra.mxu0 %v2013
        %2264 = vmatprep.subr.bf16.mxu0 %v2074
        %2265 = vmatpush2.bf16.msra.mxu0 %v2073
        %2266 = vmatprep.subr.bf16.mxu0 %v2070
        %2267 = vmatpush2.bf16.msra.mxu0 %v2069
        %2268 = vmatprep.subr.bf16.mxu0 %v2066
        %2269 = vmatpush2.bf16.msra.mxu0 %v2065
        %2270 = vmatprep.subr.bf16.mxu0 %v2062
        %2271 = vmatpush2.bf16.msra.mxu0 %v2061
        %2272 = vmatprep.subr.bf16.mxu0 %v2058
        %2273 = vmatpush2.bf16.msra.mxu0 %v2057
        %2274 = vmatprep.subr.bf16.mxu0 %v2054
        %2275 = vmatpush2.bf16.msra.mxu0 %v2053
        %2276 = vmatprep.subr.bf16.mxu0 %v2050
        %2277 = vmatpush2.bf16.msra.mxu0 %v2049
        %2278 = vmatprep.subr.bf16.mxu0 %v2046
        %2279 = vmatpush2.bf16.msra.mxu0 %v2045
        %2280 = vmatprep.mubr.bf16.mxu0 %v1560
        %2281 = vmatmul.mubr.bf16.gmra.mxu0 %v1559
        %v2282 = vpop.f32.mrf.mxu0
        %v2283 = vadd.f32 %v2240, %v2282
        %v2284 = vpop.f32.mrf.mxu0
        %v2285 = vadd.f32 %v2242, %v2284
        %v2286 = vpop.f32.mrf.mxu0
        %v2287 = vadd.f32 %v2244, %v2286
        %v2288 = vpop.f32.mrf.mxu0
        %v2289 = vadd.f32 %v2246, %v2288
        %2290 = vdwg.mxu0
        %2291 = vmatprep.subr.bf16.mxu0 %v1980
        %2292 = vmatpush1.bf16.msra.mxu0 %v1979
        %2293 = vmatprep.subr.bf16.mxu0 %v1976
        %2294 = vmatpush1.bf16.msra.mxu0 %v1975
        %2295 = vmatprep.subr.bf16.mxu0 %v1972
        %2296 = vmatpush1.bf16.msra.mxu0 %v1971
        %2297 = vmatprep.subr.bf16.mxu0 %v1968
        %2298 = vmatpush1.bf16.msra.mxu0 %v1967
        %2299 = vmatprep.subr.bf16.mxu0 %v1964
        %2300 = vmatpush1.bf16.msra.mxu0 %v1963
        %2301 = vmatprep.subr.bf16.mxu0 %v1960
        %2302 = vmatpush1.bf16.msra.mxu0 %v1959
        %2303 = vmatprep.subr.bf16.mxu0 %v1956
        %2304 = vmatpush1.bf16.msra.mxu0 %v1955
        %2305 = vmatprep.subr.bf16.mxu0 %v1952
        %2306 = vmatpush1.bf16.msra.mxu0 %v1951
        %2307 = vmatprep.subr.bf16.mxu0 %v2012
        %2308 = vmatpush2.bf16.msra.mxu0 %v2011
        %2309 = vmatprep.subr.bf16.mxu0 %v2008
        %2310 = vmatpush2.bf16.msra.mxu0 %v2007
        %2311 = vmatprep.subr.bf16.mxu0 %v2004
        %2312 = vmatpush2.bf16.msra.mxu0 %v2003
        %2313 = vmatprep.subr.bf16.mxu0 %v2000
        %2314 = vmatpush2.bf16.msra.mxu0 %v1999
        %2315 = vmatprep.subr.bf16.mxu0 %v1996
        %2316 = vmatpush2.bf16.msra.mxu0 %v1995
        %2317 = vmatprep.subr.bf16.mxu0 %v1992
        %2318 = vmatpush2.bf16.msra.mxu0 %v1991
        %2319 = vmatprep.subr.bf16.mxu0 %v1988
        %2320 = vmatpush2.bf16.msra.mxu0 %v1987
        %2321 = vmatprep.subr.bf16.mxu0 %v1984
        %2322 = vmatpush2.bf16.msra.mxu0 %v1983
        %2323 = vmatprep.mubr.bf16.mxu0 %v1558
        %2324 = vmatmul.mubr.bf16.gmra.mxu0 %v1557
        %v2325 = vpop.f32.mrf.mxu0
        %v2326 = vadd.f32 %v1517, %v2325
        %v2327 = vpop.f32.mrf.mxu0
        %v2328 = vadd.f32 %v1519, %v2327
        %v2329 = vpop.f32.mrf.mxu0
        %v2330 = vadd.f32 %v1521, %v2329
        %v2331 = vpop.f32.mrf.mxu0
        %v2332 = vadd.f32 %v1523, %v2331
        %2333 = vdwg.mxu0
        %2334 = vmatprep.subr.bf16.mxu0 %v2044
        %2335 = vmatpush1.bf16.msra.mxu0 %v2043
        %2336 = vmatprep.subr.bf16.mxu0 %v2040
        %2337 = vmatpush1.bf16.msra.mxu0 %v2039
        %2338 = vmatprep.subr.bf16.mxu0 %v2036
        %2339 = vmatpush1.bf16.msra.mxu0 %v2035
        %2340 = vmatprep.subr.bf16.mxu0 %v2032
        %2341 = vmatpush1.bf16.msra.mxu0 %v2031
        %2342 = vmatprep.subr.bf16.mxu0 %v2028
        %2343 = vmatpush1.bf16.msra.mxu0 %v2027
        %2344 = vmatprep.subr.bf16.mxu0 %v2024
        %2345 = vmatpush1.bf16.msra.mxu0 %v2023
        %2346 = vmatprep.subr.bf16.mxu0 %v2020
        %2347 = vmatpush1.bf16.msra.mxu0 %v2019
        %2348 = vmatprep.subr.bf16.mxu0 %v2016
        %2349 = vmatpush1.bf16.msra.mxu0 %v2015
        %2350 = vmatprep.subr.bf16.mxu0 %v2076
        %2351 = vmatpush2.bf16.msra.mxu0 %v2075
        %2352 = vmatprep.subr.bf16.mxu0 %v2072
        %2353 = vmatpush2.bf16.msra.mxu0 %v2071
        %2354 = vmatprep.subr.bf16.mxu0 %v2068
        %2355 = vmatpush2.bf16.msra.mxu0 %v2067
        %2356 = vmatprep.subr.bf16.mxu0 %v2064
        %2357 = vmatpush2.bf16.msra.mxu0 %v2063
        %2358 = vmatprep.subr.bf16.mxu0 %v2060
        %2359 = vmatpush2.bf16.msra.mxu0 %v2059
        %2360 = vmatprep.subr.bf16.mxu0 %v2056
        %2361 = vmatpush2.bf16.msra.mxu0 %v2055
        %2362 = vmatprep.subr.bf16.mxu0 %v2052
        %2363 = vmatpush2.bf16.msra.mxu0 %v2051
        %2364 = vmatprep.subr.bf16.mxu0 %v2048
        %2365 = vmatpush2.bf16.msra.mxu0 %v2047
        %2366 = vmatprep.mubr.bf16.mxu0 %v1560
        %2367 = vmatmul.mubr.bf16.gmra.mxu0 %v1559
        %v2368 = vpop.f32.mrf.mxu0
        %v2369 = vadd.f32 %v2326, %v2368
        %v2370 = vpop.f32.mrf.mxu0
        %v2371 = vadd.f32 %v2328, %v2370
        %v2372 = vpop.f32.mrf.mxu0
        %v2373 = vadd.f32 %v2330, %v2372
        %v2374 = vpop.f32.mrf.mxu0
        %v2375 = vadd.f32 %v2332, %v2374
        %2376 = vdwg.mxu0
        %v2377 = vld [vmem:[%s196] sm:$0x66]
        %v2378 = vld [vmem:[%s196 + $0x8] sm:$0x66]
        %v2379 = vld [vmem:[%s196 + $0x10] sm:$0x66]
        %v2380 = vld [vmem:[%s196 + $0x18] sm:$0x66]
        %v2381 = vld [vmem:[%s196 + $0x20] sm:$0x66]
        %v2382 = vld [vmem:[%s196 + $0x28] sm:$0x66]
        %v2383 = vld [vmem:[%s196 + $0x30] sm:$0x66]
        %v2384 = vld [vmem:[%s196 + $0x38] sm:$0x66]
        %v2394 = vunpack.c.l.s4 1983009808
        %v2395 = vunpack.c.0.s8 %v2394
        %v2396 = vlaneseq
        %v2397 = vshrl.u32 %v2396, 7
        %v2398 = vsub.s32 %v2395, %v2397
        %v2399 = vrot.slane %v2377, %v2398
        %v2401 = vunpack.c.l.s4 1983009808
        %v2402 = vunpack.c.0.s8 %v2401
        %v2403 = vlaneseq
        %v2404 = vshrl.u32 %v2403, 7
        %v2405 = vsub.s32 %v2402, %v2404
        %v2406 = vrot.slane %v2378, %v2405
        %v2407 = vcombine.low %v2399, %v2406
        %v2408 = vcombine.high %v2399, %v2406
        %v2410 = vunpack.c.l.s4 1983009808
        %v2411 = vunpack.c.0.s8 %v2410
        %v2412 = vlaneseq
        %v2413 = vshrl.u32 %v2412, 7
        %v2414 = vsub.s32 %v2411, %v2413
        %v2415 = vrot.slane %v2379, %v2414
        %v2417 = vunpack.c.l.s4 1983009808
        %v2418 = vunpack.c.0.s8 %v2417
        %v2419 = vlaneseq
        %v2420 = vshrl.u32 %v2419, 7
        %v2421 = vsub.s32 %v2418, %v2420
        %v2422 = vrot.slane %v2380, %v2421
        %v2423 = vcombine.low %v2415, %v2422
        %v2424 = vcombine.high %v2415, %v2422
        %v2426 = vunpack.c.l.s4 1983009808
        %v2427 = vunpack.c.0.s8 %v2426
        %v2428 = vlaneseq
        %v2429 = vshrl.u32 %v2428, 7
        %v2430 = vsub.s32 %v2427, %v2429
        %v2431 = vrot.slane %v2381, %v2430
        %v2433 = vunpack.c.l.s4 1983009808
        %v2434 = vunpack.c.0.s8 %v2433
        %v2435 = vlaneseq
        %v2436 = vshrl.u32 %v2435, 7
        %v2437 = vsub.s32 %v2434, %v2436
        %v2438 = vrot.slane %v2382, %v2437
        %v2439 = vcombine.low %v2431, %v2438
        %v2440 = vcombine.high %v2431, %v2438
        %v2442 = vunpack.c.l.s4 1983009808
        %v2443 = vunpack.c.0.s8 %v2442
        %v2444 = vlaneseq
        %v2445 = vshrl.u32 %v2444, 7
        %v2446 = vsub.s32 %v2443, %v2445
        %v2447 = vrot.slane %v2383, %v2446
        %v2449 = vunpack.c.l.s4 1983009808
        %v2450 = vunpack.c.0.s8 %v2449
        %v2451 = vlaneseq
        %v2452 = vshrl.u32 %v2451, 7
        %v2453 = vsub.s32 %v2450, %v2452
        %v2454 = vrot.slane %v2384, %v2453
        %v2455 = vcombine.low %v2447, %v2454
        %v2456 = vcombine.high %v2447, %v2454
        %vm2457 = vcmask 1040384
        %vm2458 = vcmask 1042434
        %vm2459 = vmor %vm2457, %vm2458
        %vm2460 = vcmask 1044484
        %vm2461 = vmor %vm2459, %vm2460
        %vm2462 = vcmask 1046534
        %vm2463 = vmor %vm2461, %vm2462
        %v2464 = vrot.slane %v2407, 7
        %v2465 = vrot.slane %v2464, 2
        %v2466 = vrot.slane %v2408, 7
        %v2467 = vsel %vm2463, %v2465, %v2466
        %v2468 = vrot.slane %v2423, 7
        %v2469 = vrot.slane %v2468, 2
        %v2470 = vrot.slane %v2424, 7
        %v2471 = vsel %vm2463, %v2469, %v2470
        %v2472 = vrot.slane %v2439, 7
        %v2473 = vrot.slane %v2472, 2
        %v2474 = vrot.slane %v2440, 7
        %v2475 = vsel %vm2463, %v2473, %v2474
        %v2476 = vrot.slane %v2455, 7
        %v2477 = vrot.slane %v2476, 2
        %v2478 = vrot.slane %v2456, 7
        %v2479 = vsel %vm2463, %v2477, %v2478
        %s2480 = scalar_lea.vmem [#allocation2], 2048
        %v2481 = vld [vmem:[%s2480] sm:$0xff]
        %v2482 = vld [vmem:[%s2480 + $0x8] sm:$0xff]
        %v2483 = vld [vmem:[%s2480 + $0x10] sm:$0xff]
        %v2484 = vld [vmem:[%s2480 + $0x18] sm:$0xff]
        %v2485 = vld [vmem:[%s2480 + $0x20] sm:$0xff]
        %v2486 = vld [vmem:[%s2480 + $0x28] sm:$0xff]
        %v2487 = vld [vmem:[%s2480 + $0x30] sm:$0xff]
        %v2488 = vld [vmem:[%s2480 + $0x38] sm:$0xff]
        %v2489 = vld [vmem:[%s2480 + $0x40] sm:$0xff]
        %v2490 = vld [vmem:[%s2480 + $0x48] sm:$0xff]
        %v2491 = vld [vmem:[%s2480 + $0x50] sm:$0xff]
        %v2492 = vld [vmem:[%s2480 + $0x58] sm:$0xff]
        %v2493 = vld [vmem:[%s2480 + $0x60] sm:$0xff]
        %v2494 = vld [vmem:[%s2480 + $0x68] sm:$0xff]
        %v2495 = vld [vmem:[%s2480 + $0x70] sm:$0xff]
        %v2496 = vld [vmem:[%s2480 + $0x78] sm:$0xff]
        %v2497 = vld [vmem:[%s2480 + $0x80] sm:$0xff]
        %v2498 = vld [vmem:[%s2480 + $0x88] sm:$0xff]
        %v2499 = vld [vmem:[%s2480 + $0x90] sm:$0xff]
        %v2500 = vld [vmem:[%s2480 + $0x98] sm:$0xff]
        %v2501 = vld [vmem:[%s2480 + $0xa0] sm:$0xff]
        %v2502 = vld [vmem:[%s2480 + $0xa8] sm:$0xff]
        %v2503 = vld [vmem:[%s2480 + $0xb0] sm:$0xff]
        %v2504 = vld [vmem:[%s2480 + $0xb8] sm:$0xff]
        %v2505 = vld [vmem:[%s2480 + $0xc0] sm:$0xff]
        %v2506 = vld [vmem:[%s2480 + $0xc8] sm:$0xff]
        %v2507 = vld [vmem:[%s2480 + $0xd0] sm:$0xff]
        %v2508 = vld [vmem:[%s2480 + $0xd8] sm:$0xff]
        %v2509 = vld [vmem:[%s2480 + $0xe0] sm:$0xff]
        %v2510 = vld [vmem:[%s2480 + $0xe8] sm:$0xff]
        %v2511 = vld [vmem:[%s2480 + $0xf0] sm:$0xff]
        %v2512 = vld [vmem:[%s2480 + $0xf8] sm:$0xff]
        %v2513 = vld [vmem:[%s2480 + $0x100] sm:$0xff]
        %v2514 = vld [vmem:[%s2480 + $0x108] sm:$0xff]
        %v2515 = vld [vmem:[%s2480 + $0x110] sm:$0xff]
        %v2516 = vld [vmem:[%s2480 + $0x118] sm:$0xff]
        %v2517 = vld [vmem:[%s2480 + $0x120] sm:$0xff]
        %v2518 = vld [vmem:[%s2480 + $0x128] sm:$0xff]
        %v2519 = vld [vmem:[%s2480 + $0x130] sm:$0xff]
        %v2520 = vld [vmem:[%s2480 + $0x138] sm:$0xff]
        %v2521 = vld [vmem:[%s2480 + $0x140] sm:$0xff]
        %v2522 = vld [vmem:[%s2480 + $0x148] sm:$0xff]
        %v2523 = vld [vmem:[%s2480 + $0x150] sm:$0xff]
        %v2524 = vld [vmem:[%s2480 + $0x158] sm:$0xff]
        %v2525 = vld [vmem:[%s2480 + $0x160] sm:$0xff]
        %v2526 = vld [vmem:[%s2480 + $0x168] sm:$0xff]
        %v2527 = vld [vmem:[%s2480 + $0x170] sm:$0xff]
        %v2528 = vld [vmem:[%s2480 + $0x178] sm:$0xff]
        %v2529 = vld [vmem:[%s2480 + $0x180] sm:$0xff]
        %v2530 = vld [vmem:[%s2480 + $0x188] sm:$0xff]
        %v2531 = vld [vmem:[%s2480 + $0x190] sm:$0xff]
        %v2532 = vld [vmem:[%s2480 + $0x198] sm:$0xff]
        %v2533 = vld [vmem:[%s2480 + $0x1a0] sm:$0xff]
        %v2534 = vld [vmem:[%s2480 + $0x1a8] sm:$0xff]
        %v2535 = vld [vmem:[%s2480 + $0x1b0] sm:$0xff]
        %v2536 = vld [vmem:[%s2480 + $0x1b8] sm:$0xff]
        %v2537 = vld [vmem:[%s2480 + $0x1c0] sm:$0xff]
        %v2538 = vld [vmem:[%s2480 + $0x1c8] sm:$0xff]
        %v2539 = vld [vmem:[%s2480 + $0x1d0] sm:$0xff]
        %v2540 = vld [vmem:[%s2480 + $0x1d8] sm:$0xff]
        %v2541 = vld [vmem:[%s2480 + $0x1e0] sm:$0xff]
        %v2542 = vld [vmem:[%s2480 + $0x1e8] sm:$0xff]
        %v2543 = vld [vmem:[%s2480 + $0x1f0] sm:$0xff]
        %v2544 = vld [vmem:[%s2480 + $0x1f8] sm:$0xff]
        %v2545 = vld [vmem:[%s2480 + $0x200] sm:$0xff]
        %v2546 = vld [vmem:[%s2480 + $0x208] sm:$0xff]
        %v2547 = vld [vmem:[%s2480 + $0x210] sm:$0xff]
        %v2548 = vld [vmem:[%s2480 + $0x218] sm:$0xff]
        %v2549 = vld [vmem:[%s2480 + $0x220] sm:$0xff]
        %v2550 = vld [vmem:[%s2480 + $0x228] sm:$0xff]
        %v2551 = vld [vmem:[%s2480 + $0x230] sm:$0xff]
        %v2552 = vld [vmem:[%s2480 + $0x238] sm:$0xff]
        %v2553 = vld [vmem:[%s2480 + $0x240] sm:$0xff]
        %v2554 = vld [vmem:[%s2480 + $0x248] sm:$0xff]
        %v2555 = vld [vmem:[%s2480 + $0x250] sm:$0xff]
        %v2556 = vld [vmem:[%s2480 + $0x258] sm:$0xff]
        %v2557 = vld [vmem:[%s2480 + $0x260] sm:$0xff]
        %v2558 = vld [vmem:[%s2480 + $0x268] sm:$0xff]
        %v2559 = vld [vmem:[%s2480 + $0x270] sm:$0xff]
        %v2560 = vld [vmem:[%s2480 + $0x278] sm:$0xff]
        %v2561 = vld [vmem:[%s2480 + $0x280] sm:$0xff]
        %v2562 = vld [vmem:[%s2480 + $0x288] sm:$0xff]
        %v2563 = vld [vmem:[%s2480 + $0x290] sm:$0xff]
        %v2564 = vld [vmem:[%s2480 + $0x298] sm:$0xff]
        %v2565 = vld [vmem:[%s2480 + $0x2a0] sm:$0xff]
        %v2566 = vld [vmem:[%s2480 + $0x2a8] sm:$0xff]
        %v2567 = vld [vmem:[%s2480 + $0x2b0] sm:$0xff]
        %v2568 = vld [vmem:[%s2480 + $0x2b8] sm:$0xff]
        %v2569 = vld [vmem:[%s2480 + $0x2c0] sm:$0xff]
        %v2570 = vld [vmem:[%s2480 + $0x2c8] sm:$0xff]
        %v2571 = vld [vmem:[%s2480 + $0x2d0] sm:$0xff]
        %v2572 = vld [vmem:[%s2480 + $0x2d8] sm:$0xff]
        %v2573 = vld [vmem:[%s2480 + $0x2e0] sm:$0xff]
        %v2574 = vld [vmem:[%s2480 + $0x2e8] sm:$0xff]
        %v2575 = vld [vmem:[%s2480 + $0x2f0] sm:$0xff]
        %v2576 = vld [vmem:[%s2480 + $0x2f8] sm:$0xff]
        %v2577 = vld [vmem:[%s2480 + $0x300] sm:$0xff]
        %v2578 = vld [vmem:[%s2480 + $0x308] sm:$0xff]
        %v2579 = vld [vmem:[%s2480 + $0x310] sm:$0xff]
        %v2580 = vld [vmem:[%s2480 + $0x318] sm:$0xff]
        %v2581 = vld [vmem:[%s2480 + $0x320] sm:$0xff]
        %v2582 = vld [vmem:[%s2480 + $0x328] sm:$0xff]
        %v2583 = vld [vmem:[%s2480 + $0x330] sm:$0xff]
        %v2584 = vld [vmem:[%s2480 + $0x338] sm:$0xff]
        %v2585 = vld [vmem:[%s2480 + $0x340] sm:$0xff]
        %v2586 = vld [vmem:[%s2480 + $0x348] sm:$0xff]
        %v2587 = vld [vmem:[%s2480 + $0x350] sm:$0xff]
        %v2588 = vld [vmem:[%s2480 + $0x358] sm:$0xff]
        %v2589 = vld [vmem:[%s2480 + $0x360] sm:$0xff]
        %v2590 = vld [vmem:[%s2480 + $0x368] sm:$0xff]
        %v2591 = vld [vmem:[%s2480 + $0x370] sm:$0xff]
        %v2592 = vld [vmem:[%s2480 + $0x378] sm:$0xff]
        %v2593 = vld [vmem:[%s2480 + $0x380] sm:$0xff]
        %v2594 = vld [vmem:[%s2480 + $0x388] sm:$0xff]
        %v2595 = vld [vmem:[%s2480 + $0x390] sm:$0xff]
        %v2596 = vld [vmem:[%s2480 + $0x398] sm:$0xff]
        %v2597 = vld [vmem:[%s2480 + $0x3a0] sm:$0xff]
        %v2598 = vld [vmem:[%s2480 + $0x3a8] sm:$0xff]
        %v2599 = vld [vmem:[%s2480 + $0x3b0] sm:$0xff]
        %v2600 = vld [vmem:[%s2480 + $0x3b8] sm:$0xff]
        %v2601 = vld [vmem:[%s2480 + $0x3c0] sm:$0xff]
        %v2602 = vld [vmem:[%s2480 + $0x3c8] sm:$0xff]
        %v2603 = vld [vmem:[%s2480 + $0x3d0] sm:$0xff]
        %v2604 = vld [vmem:[%s2480 + $0x3d8] sm:$0xff]
        %v2605 = vld [vmem:[%s2480 + $0x3e0] sm:$0xff]
        %v2606 = vld [vmem:[%s2480 + $0x3e8] sm:$0xff]
        %v2607 = vld [vmem:[%s2480 + $0x3f0] sm:$0xff]
        %v2608 = vld [vmem:[%s2480 + $0x3f8] sm:$0xff]
        %v2609 = vcombine.low %v2467, %v2471
        %v2610 = vcombine.high %v2467, %v2471
        %v2611 = vcombine.low %v2475, %v2479
        %v2612 = vcombine.high %v2475, %v2479
        %v2614 = vunpack.c.l.s4 1983009808
        %v2615 = vunpack.c.0.s8 %v2614
        %v2616 = vlaneseq
        %v2617 = vshrl.u32 %v2616, 7
        %v2618 = vsub.s32 %v2615, %v2617
        %v2619 = vrot.slane %v2609, %v2618
        %v2621 = vunpack.c.l.s4 1983009808
        %v2622 = vunpack.c.0.s8 %v2621
        %v2623 = vlaneseq
        %v2624 = vshrl.u32 %v2623, 7
        %v2625 = vsub.s32 %v2622, %v2624
        %v2626 = vrot.slane %v2610, %v2625
        %v2628 = vunpack.c.l.s4 1983009808
        %v2629 = vunpack.c.0.s8 %v2628
        %v2630 = vlaneseq
        %v2631 = vshrl.u32 %v2630, 7
        %v2632 = vsub.s32 %v2629, %v2631
        %v2633 = vrot.slane %v2611, %v2632
        %v2635 = vunpack.c.l.s4 1983009808
        %v2636 = vunpack.c.0.s8 %v2635
        %v2637 = vlaneseq
        %v2638 = vshrl.u32 %v2637, 7
        %v2639 = vsub.s32 %v2636, %v2638
        %v2640 = vrot.slane %v2612, %v2639
        %v2641 = vcombine.low %v2619, %v2633
        %v2642 = vcombine.high %v2619, %v2633
        %v2643 = vcombine.low %v2626, %v2640
        %v2644 = vcombine.high %v2626, %v2640
        %v2777 = vunpack.c.l.b16 %v2481
        %v2778 = vunpack.c.h.b16 %v2481
        %v2779 = vunpack.c.l.b16 %v2482
        %v2780 = vunpack.c.h.b16 %v2482
        %v2781 = vunpack.c.l.b16 %v2483
        %v2782 = vunpack.c.h.b16 %v2483
        %v2783 = vunpack.c.l.b16 %v2484
        %v2784 = vunpack.c.h.b16 %v2484
        %v2785 = vunpack.c.l.b16 %v2485
        %v2786 = vunpack.c.h.b16 %v2485
        %v2787 = vunpack.c.l.b16 %v2486
        %v2788 = vunpack.c.h.b16 %v2486
        %v2789 = vunpack.c.l.b16 %v2487
        %v2790 = vunpack.c.h.b16 %v2487
        %v2791 = vunpack.c.l.b16 %v2488
        %v2792 = vunpack.c.h.b16 %v2488
        %v2793 = vunpack.c.l.b16 %v2489
        %v2794 = vunpack.c.h.b16 %v2489
        %v2795 = vunpack.c.l.b16 %v2490
        %v2796 = vunpack.c.h.b16 %v2490
        %v2797 = vunpack.c.l.b16 %v2491
        %v2798 = vunpack.c.h.b16 %v2491
        %v2799 = vunpack.c.l.b16 %v2492
        %v2800 = vunpack.c.h.b16 %v2492
        %v2801 = vunpack.c.l.b16 %v2493
        %v2802 = vunpack.c.h.b16 %v2493
        %v2803 = vunpack.c.l.b16 %v2494
        %v2804 = vunpack.c.h.b16 %v2494
        %v2805 = vunpack.c.l.b16 %v2495
        %v2806 = vunpack.c.h.b16 %v2495
        %v2807 = vunpack.c.l.b16 %v2496
        %v2808 = vunpack.c.h.b16 %v2496
        %v2809 = vunpack.c.l.b16 %v2497
        %v2810 = vunpack.c.h.b16 %v2497
        %v2811 = vunpack.c.l.b16 %v2498
        %v2812 = vunpack.c.h.b16 %v2498
        %v2813 = vunpack.c.l.b16 %v2499
        %v2814 = vunpack.c.h.b16 %v2499
        %v2815 = vunpack.c.l.b16 %v2500
        %v2816 = vunpack.c.h.b16 %v2500
        %v2817 = vunpack.c.l.b16 %v2501
        %v2818 = vunpack.c.h.b16 %v2501
        %v2819 = vunpack.c.l.b16 %v2502
        %v2820 = vunpack.c.h.b16 %v2502
        %v2821 = vunpack.c.l.b16 %v2503
        %v2822 = vunpack.c.h.b16 %v2503
        %v2823 = vunpack.c.l.b16 %v2504
        %v2824 = vunpack.c.h.b16 %v2504
        %v2825 = vunpack.c.l.b16 %v2505
        %v2826 = vunpack.c.h.b16 %v2505
        %v2827 = vunpack.c.l.b16 %v2506
        %v2828 = vunpack.c.h.b16 %v2506
        %v2829 = vunpack.c.l.b16 %v2507
        %v2830 = vunpack.c.h.b16 %v2507
        %v2831 = vunpack.c.l.b16 %v2508
        %v2832 = vunpack.c.h.b16 %v2508
        %v2833 = vunpack.c.l.b16 %v2509
        %v2834 = vunpack.c.h.b16 %v2509
        %v2835 = vunpack.c.l.b16 %v2510
        %v2836 = vunpack.c.h.b16 %v2510
        %v2837 = vunpack.c.l.b16 %v2511
        %v2838 = vunpack.c.h.b16 %v2511
        %v2839 = vunpack.c.l.b16 %v2512
        %v2840 = vunpack.c.h.b16 %v2512
        %v2841 = vunpack.c.l.b16 %v2513
        %v2842 = vunpack.c.h.b16 %v2513
        %v2843 = vunpack.c.l.b16 %v2514
        %v2844 = vunpack.c.h.b16 %v2514
        %v2845 = vunpack.c.l.b16 %v2515
        %v2846 = vunpack.c.h.b16 %v2515
        %v2847 = vunpack.c.l.b16 %v2516
        %v2848 = vunpack.c.h.b16 %v2516
        %v2849 = vunpack.c.l.b16 %v2517
        %v2850 = vunpack.c.h.b16 %v2517
        %v2851 = vunpack.c.l.b16 %v2518
        %v2852 = vunpack.c.h.b16 %v2518
        %v2853 = vunpack.c.l.b16 %v2519
        %v2854 = vunpack.c.h.b16 %v2519
        %v2855 = vunpack.c.l.b16 %v2520
        %v2856 = vunpack.c.h.b16 %v2520
        %v2857 = vunpack.c.l.b16 %v2521
        %v2858 = vunpack.c.h.b16 %v2521
        %v2859 = vunpack.c.l.b16 %v2522
        %v2860 = vunpack.c.h.b16 %v2522
        %v2861 = vunpack.c.l.b16 %v2523
        %v2862 = vunpack.c.h.b16 %v2523
        %v2863 = vunpack.c.l.b16 %v2524
        %v2864 = vunpack.c.h.b16 %v2524
        %v2865 = vunpack.c.l.b16 %v2525
        %v2866 = vunpack.c.h.b16 %v2525
        %v2867 = vunpack.c.l.b16 %v2526
        %v2868 = vunpack.c.h.b16 %v2526
        %v2869 = vunpack.c.l.b16 %v2527
        %v2870 = vunpack.c.h.b16 %v2527
        %v2871 = vunpack.c.l.b16 %v2528
        %v2872 = vunpack.c.h.b16 %v2528
        %v2873 = vunpack.c.l.b16 %v2529
        %v2874 = vunpack.c.h.b16 %v2529
        %v2875 = vunpack.c.l.b16 %v2530
        %v2876 = vunpack.c.h.b16 %v2530
        %v2877 = vunpack.c.l.b16 %v2531
        %v2878 = vunpack.c.h.b16 %v2531
        %v2879 = vunpack.c.l.b16 %v2532
        %v2880 = vunpack.c.h.b16 %v2532
        %v2881 = vunpack.c.l.b16 %v2533
        %v2882 = vunpack.c.h.b16 %v2533
        %v2883 = vunpack.c.l.b16 %v2534
        %v2884 = vunpack.c.h.b16 %v2534
        %v2885 = vunpack.c.l.b16 %v2535
        %v2886 = vunpack.c.h.b16 %v2535
        %v2887 = vunpack.c.l.b16 %v2536
        %v2888 = vunpack.c.h.b16 %v2536
        %v2889 = vunpack.c.l.b16 %v2537
        %v2890 = vunpack.c.h.b16 %v2537
        %v2891 = vunpack.c.l.b16 %v2538
        %v2892 = vunpack.c.h.b16 %v2538
        %v2893 = vunpack.c.l.b16 %v2539
        %v2894 = vunpack.c.h.b16 %v2539
        %v2895 = vunpack.c.l.b16 %v2540
        %v2896 = vunpack.c.h.b16 %v2540
        %v2897 = vunpack.c.l.b16 %v2541
        %v2898 = vunpack.c.h.b16 %v2541
        %v2899 = vunpack.c.l.b16 %v2542
        %v2900 = vunpack.c.h.b16 %v2542
        %v2901 = vunpack.c.l.b16 %v2543
        %v2902 = vunpack.c.h.b16 %v2543
        %v2903 = vunpack.c.l.b16 %v2544
        %v2904 = vunpack.c.h.b16 %v2544
        %v2905 = vunpack.c.l.b16 %v2545
        %v2906 = vunpack.c.h.b16 %v2545
        %v2907 = vunpack.c.l.b16 %v2546
        %v2908 = vunpack.c.h.b16 %v2546
        %v2909 = vunpack.c.l.b16 %v2547
        %v2910 = vunpack.c.h.b16 %v2547
        %v2911 = vunpack.c.l.b16 %v2548
        %v2912 = vunpack.c.h.b16 %v2548
        %v2913 = vunpack.c.l.b16 %v2549
        %v2914 = vunpack.c.h.b16 %v2549
        %v2915 = vunpack.c.l.b16 %v2550
        %v2916 = vunpack.c.h.b16 %v2550
        %v2917 = vunpack.c.l.b16 %v2551
        %v2918 = vunpack.c.h.b16 %v2551
        %v2919 = vunpack.c.l.b16 %v2552
        %v2920 = vunpack.c.h.b16 %v2552
        %v2921 = vunpack.c.l.b16 %v2553
        %v2922 = vunpack.c.h.b16 %v2553
        %v2923 = vunpack.c.l.b16 %v2554
        %v2924 = vunpack.c.h.b16 %v2554
        %v2925 = vunpack.c.l.b16 %v2555
        %v2926 = vunpack.c.h.b16 %v2555
        %v2927 = vunpack.c.l.b16 %v2556
        %v2928 = vunpack.c.h.b16 %v2556
        %v2929 = vunpack.c.l.b16 %v2557
        %v2930 = vunpack.c.h.b16 %v2557
        %v2931 = vunpack.c.l.b16 %v2558
        %v2932 = vunpack.c.h.b16 %v2558
        %v2933 = vunpack.c.l.b16 %v2559
        %v2934 = vunpack.c.h.b16 %v2559
        %v2935 = vunpack.c.l.b16 %v2560
        %v2936 = vunpack.c.h.b16 %v2560
        %v2937 = vunpack.c.l.b16 %v2561
        %v2938 = vunpack.c.h.b16 %v2561
        %v2939 = vunpack.c.l.b16 %v2562
        %v2940 = vunpack.c.h.b16 %v2562
        %v2941 = vunpack.c.l.b16 %v2563
        %v2942 = vunpack.c.h.b16 %v2563
        %v2943 = vunpack.c.l.b16 %v2564
        %v2944 = vunpack.c.h.b16 %v2564
        %v2945 = vunpack.c.l.b16 %v2565
        %v2946 = vunpack.c.h.b16 %v2565
        %v2947 = vunpack.c.l.b16 %v2566
        %v2948 = vunpack.c.h.b16 %v2566
        %v2949 = vunpack.c.l.b16 %v2567
        %v2950 = vunpack.c.h.b16 %v2567
        %v2951 = vunpack.c.l.b16 %v2568
        %v2952 = vunpack.c.h.b16 %v2568
        %v2953 = vunpack.c.l.b16 %v2569
        %v2954 = vunpack.c.h.b16 %v2569
        %v2955 = vunpack.c.l.b16 %v2570
        %v2956 = vunpack.c.h.b16 %v2570
        %v2957 = vunpack.c.l.b16 %v2571
        %v2958 = vunpack.c.h.b16 %v2571
        %v2959 = vunpack.c.l.b16 %v2572
        %v2960 = vunpack.c.h.b16 %v2572
        %v2961 = vunpack.c.l.b16 %v2573
        %v2962 = vunpack.c.h.b16 %v2573
        %v2963 = vunpack.c.l.b16 %v2574
        %v2964 = vunpack.c.h.b16 %v2574
        %v2965 = vunpack.c.l.b16 %v2575
        %v2966 = vunpack.c.h.b16 %v2575
        %v2967 = vunpack.c.l.b16 %v2576
        %v2968 = vunpack.c.h.b16 %v2576
        %v2969 = vunpack.c.l.b16 %v2577
        %v2970 = vunpack.c.h.b16 %v2577
        %v2971 = vunpack.c.l.b16 %v2578
        %v2972 = vunpack.c.h.b16 %v2578
        %v2973 = vunpack.c.l.b16 %v2579
        %v2974 = vunpack.c.h.b16 %v2579
        %v2975 = vunpack.c.l.b16 %v2580
        %v2976 = vunpack.c.h.b16 %v2580
        %v2977 = vunpack.c.l.b16 %v2581
        %v2978 = vunpack.c.h.b16 %v2581
        %v2979 = vunpack.c.l.b16 %v2582
        %v2980 = vunpack.c.h.b16 %v2582
        %v2981 = vunpack.c.l.b16 %v2583
        %v2982 = vunpack.c.h.b16 %v2583
        %v2983 = vunpack.c.l.b16 %v2584
        %v2984 = vunpack.c.h.b16 %v2584
        %v2985 = vunpack.c.l.b16 %v2585
        %v2986 = vunpack.c.h.b16 %v2585
        %v2987 = vunpack.c.l.b16 %v2586
        %v2988 = vunpack.c.h.b16 %v2586
        %v2989 = vunpack.c.l.b16 %v2587
        %v2990 = vunpack.c.h.b16 %v2587
        %v2991 = vunpack.c.l.b16 %v2588
        %v2992 = vunpack.c.h.b16 %v2588
        %v2993 = vunpack.c.l.b16 %v2589
        %v2994 = vunpack.c.h.b16 %v2589
        %v2995 = vunpack.c.l.b16 %v2590
        %v2996 = vunpack.c.h.b16 %v2590
        %v2997 = vunpack.c.l.b16 %v2591
        %v2998 = vunpack.c.h.b16 %v2591
        %v2999 = vunpack.c.l.b16 %v2592
        %v3000 = vunpack.c.h.b16 %v2592
        %v3001 = vunpack.c.l.b16 %v2593
        %v3002 = vunpack.c.h.b16 %v2593
        %v3003 = vunpack.c.l.b16 %v2594
        %v3004 = vunpack.c.h.b16 %v2594
        %v3005 = vunpack.c.l.b16 %v2595
        %v3006 = vunpack.c.h.b16 %v2595
        %v3007 = vunpack.c.l.b16 %v2596
        %v3008 = vunpack.c.h.b16 %v2596
        %v3009 = vunpack.c.l.b16 %v2597
        %v3010 = vunpack.c.h.b16 %v2597
        %v3011 = vunpack.c.l.b16 %v2598
        %v3012 = vunpack.c.h.b16 %v2598
        %v3013 = vunpack.c.l.b16 %v2599
        %v3014 = vunpack.c.h.b16 %v2599
        %v3015 = vunpack.c.l.b16 %v2600
        %v3016 = vunpack.c.h.b16 %v2600
        %v3017 = vunpack.c.l.b16 %v2601
        %v3018 = vunpack.c.h.b16 %v2601
        %v3019 = vunpack.c.l.b16 %v2602
        %v3020 = vunpack.c.h.b16 %v2602
        %v3021 = vunpack.c.l.b16 %v2603
        %v3022 = vunpack.c.h.b16 %v2603
        %v3023 = vunpack.c.l.b16 %v2604
        %v3024 = vunpack.c.h.b16 %v2604
        %v3025 = vunpack.c.l.b16 %v2605
        %v3026 = vunpack.c.h.b16 %v2605
        %v3027 = vunpack.c.l.b16 %v2606
        %v3028 = vunpack.c.h.b16 %v2606
        %v3029 = vunpack.c.l.b16 %v2607
        %v3030 = vunpack.c.h.b16 %v2607
        %v3031 = vunpack.c.l.b16 %v2608
        %v3032 = vunpack.c.h.b16 %v2608
        %v3033 = vpack.c.b16 %v2781, %v2777
        %v3034 = vpack.c.b16 %v2782, %v2778
        %v3035 = vpack.c.b16 %v2783, %v2779
        %v3036 = vpack.c.b16 %v2784, %v2780
        %v3037 = vpack.c.b16 %v2789, %v2785
        %v3038 = vpack.c.b16 %v2790, %v2786
        %v3039 = vpack.c.b16 %v2791, %v2787
        %v3040 = vpack.c.b16 %v2792, %v2788
        %v3041 = vpack.c.b16 %v2797, %v2793
        %v3042 = vpack.c.b16 %v2798, %v2794
        %v3043 = vpack.c.b16 %v2799, %v2795
        %v3044 = vpack.c.b16 %v2800, %v2796
        %v3045 = vpack.c.b16 %v2805, %v2801
        %v3046 = vpack.c.b16 %v2806, %v2802
        %v3047 = vpack.c.b16 %v2807, %v2803
        %v3048 = vpack.c.b16 %v2808, %v2804
        %v3049 = vpack.c.b16 %v2813, %v2809
        %v3050 = vpack.c.b16 %v2814, %v2810
        %v3051 = vpack.c.b16 %v2815, %v2811
        %v3052 = vpack.c.b16 %v2816, %v2812
        %v3053 = vpack.c.b16 %v2821, %v2817
        %v3054 = vpack.c.b16 %v2822, %v2818
        %v3055 = vpack.c.b16 %v2823, %v2819
        %v3056 = vpack.c.b16 %v2824, %v2820
        %v3057 = vpack.c.b16 %v2829, %v2825
        %v3058 = vpack.c.b16 %v2830, %v2826
        %v3059 = vpack.c.b16 %v2831, %v2827
        %v3060 = vpack.c.b16 %v2832, %v2828
        %v3061 = vpack.c.b16 %v2837, %v2833
        %v3062 = vpack.c.b16 %v2838, %v2834
        %v3063 = vpack.c.b16 %v2839, %v2835
        %v3064 = vpack.c.b16 %v2840, %v2836
        %v3065 = vpack.c.b16 %v2845, %v2841
        %v3066 = vpack.c.b16 %v2846, %v2842
        %v3067 = vpack.c.b16 %v2847, %v2843
        %v3068 = vpack.c.b16 %v2848, %v2844
        %v3069 = vpack.c.b16 %v2853, %v2849
        %v3070 = vpack.c.b16 %v2854, %v2850
        %v3071 = vpack.c.b16 %v2855, %v2851
        %v3072 = vpack.c.b16 %v2856, %v2852
        %v3073 = vpack.c.b16 %v2861, %v2857
        %v3074 = vpack.c.b16 %v2862, %v2858
        %v3075 = vpack.c.b16 %v2863, %v2859
        %v3076 = vpack.c.b16 %v2864, %v2860
        %v3077 = vpack.c.b16 %v2869, %v2865
        %v3078 = vpack.c.b16 %v2870, %v2866
        %v3079 = vpack.c.b16 %v2871, %v2867
        %v3080 = vpack.c.b16 %v2872, %v2868
        %v3081 = vpack.c.b16 %v2877, %v2873
        %v3082 = vpack.c.b16 %v2878, %v2874
        %v3083 = vpack.c.b16 %v2879, %v2875
        %v3084 = vpack.c.b16 %v2880, %v2876
        %v3085 = vpack.c.b16 %v2885, %v2881
        %v3086 = vpack.c.b16 %v2886, %v2882
        %v3087 = vpack.c.b16 %v2887, %v2883
        %v3088 = vpack.c.b16 %v2888, %v2884
        %v3089 = vpack.c.b16 %v2893, %v2889
        %v3090 = vpack.c.b16 %v2894, %v2890
        %v3091 = vpack.c.b16 %v2895, %v2891
        %v3092 = vpack.c.b16 %v2896, %v2892
        %v3093 = vpack.c.b16 %v2901, %v2897
        %v3094 = vpack.c.b16 %v2902, %v2898
        %v3095 = vpack.c.b16 %v2903, %v2899
        %v3096 = vpack.c.b16 %v2904, %v2900
        %v3097 = vpack.c.b16 %v2909, %v2905
        %v3098 = vpack.c.b16 %v2910, %v2906
        %v3099 = vpack.c.b16 %v2911, %v2907
        %v3100 = vpack.c.b16 %v2912, %v2908
        %v3101 = vpack.c.b16 %v2917, %v2913
        %v3102 = vpack.c.b16 %v2918, %v2914
        %v3103 = vpack.c.b16 %v2919, %v2915
        %v3104 = vpack.c.b16 %v2920, %v2916
        %v3105 = vpack.c.b16 %v2925, %v2921
        %v3106 = vpack.c.b16 %v2926, %v2922
        %v3107 = vpack.c.b16 %v2927, %v2923
        %v3108 = vpack.c.b16 %v2928, %v2924
        %v3109 = vpack.c.b16 %v2933, %v2929
        %v3110 = vpack.c.b16 %v2934, %v2930
        %v3111 = vpack.c.b16 %v2935, %v2931
        %v3112 = vpack.c.b16 %v2936, %v2932
        %v3113 = vpack.c.b16 %v2941, %v2937
        %v3114 = vpack.c.b16 %v2942, %v2938
        %v3115 = vpack.c.b16 %v2943, %v2939
        %v3116 = vpack.c.b16 %v2944, %v2940
        %v3117 = vpack.c.b16 %v2949, %v2945
        %v3118 = vpack.c.b16 %v2950, %v2946
        %v3119 = vpack.c.b16 %v2951, %v2947
        %v3120 = vpack.c.b16 %v2952, %v2948
        %v3121 = vpack.c.b16 %v2957, %v2953
        %v3122 = vpack.c.b16 %v2958, %v2954
        %v3123 = vpack.c.b16 %v2959, %v2955
        %v3124 = vpack.c.b16 %v2960, %v2956
        %v3125 = vpack.c.b16 %v2965, %v2961
        %v3126 = vpack.c.b16 %v2966, %v2962
        %v3127 = vpack.c.b16 %v2967, %v2963
        %v3128 = vpack.c.b16 %v2968, %v2964
        %v3129 = vpack.c.b16 %v2973, %v2969
        %v3130 = vpack.c.b16 %v2974, %v2970
        %v3131 = vpack.c.b16 %v2975, %v2971
        %v3132 = vpack.c.b16 %v2976, %v2972
        %v3133 = vpack.c.b16 %v2981, %v2977
        %v3134 = vpack.c.b16 %v2982, %v2978
        %v3135 = vpack.c.b16 %v2983, %v2979
        %v3136 = vpack.c.b16 %v2984, %v2980
        %v3137 = vpack.c.b16 %v2989, %v2985
        %v3138 = vpack.c.b16 %v2990, %v2986
        %v3139 = vpack.c.b16 %v2991, %v2987
        %v3140 = vpack.c.b16 %v2992, %v2988
        %v3141 = vpack.c.b16 %v2997, %v2993
        %v3142 = vpack.c.b16 %v2998, %v2994
        %v3143 = vpack.c.b16 %v2999, %v2995
        %v3144 = vpack.c.b16 %v3000, %v2996
        %v3145 = vpack.c.b16 %v3005, %v3001
        %v3146 = vpack.c.b16 %v3006, %v3002
        %v3147 = vpack.c.b16 %v3007, %v3003
        %v3148 = vpack.c.b16 %v3008, %v3004
        %v3149 = vpack.c.b16 %v3013, %v3009
        %v3150 = vpack.c.b16 %v3014, %v3010
        %v3151 = vpack.c.b16 %v3015, %v3011
        %v3152 = vpack.c.b16 %v3016, %v3012
        %v3153 = vpack.c.b16 %v3021, %v3017
        %v3154 = vpack.c.b16 %v3022, %v3018
        %v3155 = vpack.c.b16 %v3023, %v3019
        %v3156 = vpack.c.b16 %v3024, %v3020
        %v3157 = vpack.c.b16 %v3029, %v3025
        %v3158 = vpack.c.b16 %v3030, %v3026
        %v3159 = vpack.c.b16 %v3031, %v3027
        %v3160 = vpack.c.b16 %v3032, %v3028
        %3289 = vmatprep.subr.bf16.mxu0 %v3062
        %3290 = vmatpush1.bf16.msra.mxu0 %v3061
        %3291 = vmatprep.subr.bf16.mxu0 %v3058
        %3292 = vmatpush1.bf16.msra.mxu0 %v3057
        %3293 = vmatprep.subr.bf16.mxu0 %v3054
        %3294 = vmatpush1.bf16.msra.mxu0 %v3053
        %3295 = vmatprep.subr.bf16.mxu0 %v3050
        %3296 = vmatpush1.bf16.msra.mxu0 %v3049
        %3297 = vmatprep.subr.bf16.mxu0 %v3046
        %3298 = vmatpush1.bf16.msra.mxu0 %v3045
        %3299 = vmatprep.subr.bf16.mxu0 %v3042
        %3300 = vmatpush1.bf16.msra.mxu0 %v3041
        %3301 = vmatprep.subr.bf16.mxu0 %v3038
        %3302 = vmatpush1.bf16.msra.mxu0 %v3037
        %3303 = vmatprep.subr.bf16.mxu0 %v3034
        %3304 = vmatpush1.bf16.msra.mxu0 %v3033
        %3305 = vmatprep.subr.bf16.mxu0 %v3094
        %3306 = vmatpush2.bf16.msra.mxu0 %v3093
        %3307 = vmatprep.subr.bf16.mxu0 %v3090
        %3308 = vmatpush2.bf16.msra.mxu0 %v3089
        %3309 = vmatprep.subr.bf16.mxu0 %v3086
        %3310 = vmatpush2.bf16.msra.mxu0 %v3085
        %3311 = vmatprep.subr.bf16.mxu0 %v3082
        %3312 = vmatpush2.bf16.msra.mxu0 %v3081
        %3313 = vmatprep.subr.bf16.mxu0 %v3078
        %3314 = vmatpush2.bf16.msra.mxu0 %v3077
        %3315 = vmatprep.subr.bf16.mxu0 %v3074
        %3316 = vmatpush2.bf16.msra.mxu0 %v3073
        %3317 = vmatprep.subr.bf16.mxu0 %v3070
        %3318 = vmatpush2.bf16.msra.mxu0 %v3069
        %3319 = vmatprep.subr.bf16.mxu0 %v3066
        %3320 = vmatpush2.bf16.msra.mxu0 %v3065
        %3321 = vmatprep.mubr.bf16.mxu0 %v2642
        %3322 = vmatmul.mubr.bf16.gmra.mxu0 %v2641
        %v3323 = vpop.f32.mrf.mxu0
        %v3324 = vadd.f32 0.0, %v3323
        %v3325 = vpop.f32.mrf.mxu0
        %v3326 = vadd.f32 0.0, %v3325
        %v3327 = vpop.f32.mrf.mxu0
        %v3328 = vadd.f32 0.0, %v3327
        %v3329 = vpop.f32.mrf.mxu0
        %v3330 = vadd.f32 0.0, %v3329
        %3331 = vdwg.mxu0
        %3332 = vmatprep.subr.bf16.mxu0 %v3126
        %3333 = vmatpush1.bf16.msra.mxu0 %v3125
        %3334 = vmatprep.subr.bf16.mxu0 %v3122
        %3335 = vmatpush1.bf16.msra.mxu0 %v3121
        %3336 = vmatprep.subr.bf16.mxu0 %v3118
        %3337 = vmatpush1.bf16.msra.mxu0 %v3117
        %3338 = vmatprep.subr.bf16.mxu0 %v3114
        %3339 = vmatpush1.bf16.msra.mxu0 %v3113
        %3340 = vmatprep.subr.bf16.mxu0 %v3110
        %3341 = vmatpush1.bf16.msra.mxu0 %v3109
        %3342 = vmatprep.subr.bf16.mxu0 %v3106
        %3343 = vmatpush1.bf16.msra.mxu0 %v3105
        %3344 = vmatprep.subr.bf16.mxu0 %v3102
        %3345 = vmatpush1.bf16.msra.mxu0 %v3101
        %3346 = vmatprep.subr.bf16.mxu0 %v3098
        %3347 = vmatpush1.bf16.msra.mxu0 %v3097
        %3348 = vmatprep.subr.bf16.mxu0 %v3158
        %3349 = vmatpush2.bf16.msra.mxu0 %v3157
        %3350 = vmatprep.subr.bf16.mxu0 %v3154
        %3351 = vmatpush2.bf16.msra.mxu0 %v3153
        %3352 = vmatprep.subr.bf16.mxu0 %v3150
        %3353 = vmatpush2.bf16.msra.mxu0 %v3149
        %3354 = vmatprep.subr.bf16.mxu0 %v3146
        %3355 = vmatpush2.bf16.msra.mxu0 %v3145
        %3356 = vmatprep.subr.bf16.mxu0 %v3142
        %3357 = vmatpush2.bf16.msra.mxu0 %v3141
        %3358 = vmatprep.subr.bf16.mxu0 %v3138
        %3359 = vmatpush2.bf16.msra.mxu0 %v3137
        %3360 = vmatprep.subr.bf16.mxu0 %v3134
        %3361 = vmatpush2.bf16.msra.mxu0 %v3133
        %3362 = vmatprep.subr.bf16.mxu0 %v3130
        %3363 = vmatpush2.bf16.msra.mxu0 %v3129
        %3364 = vmatprep.mubr.bf16.mxu0 %v2644
        %3365 = vmatmul.mubr.bf16.gmra.mxu0 %v2643
        %v3366 = vpop.f32.mrf.mxu0
        %v3367 = vadd.f32 %v3324, %v3366
        %v3368 = vpop.f32.mrf.mxu0
        %v3369 = vadd.f32 %v3326, %v3368
        %v3370 = vpop.f32.mrf.mxu0
        %v3371 = vadd.f32 %v3328, %v3370
        %v3372 = vpop.f32.mrf.mxu0
        %v3373 = vadd.f32 %v3330, %v3372
        %3374 = vdwg.mxu0
        %3375 = vmatprep.subr.bf16.mxu0 %v3064
        %3376 = vmatpush1.bf16.msra.mxu0 %v3063
        %3377 = vmatprep.subr.bf16.mxu0 %v3060
        %3378 = vmatpush1.bf16.msra.mxu0 %v3059
        %3379 = vmatprep.subr.bf16.mxu0 %v3056
        %3380 = vmatpush1.bf16.msra.mxu0 %v3055
        %3381 = vmatprep.subr.bf16.mxu0 %v3052
        %3382 = vmatpush1.bf16.msra.mxu0 %v3051
        %3383 = vmatprep.subr.bf16.mxu0 %v3048
        %3384 = vmatpush1.bf16.msra.mxu0 %v3047
        %3385 = vmatprep.subr.bf16.mxu0 %v3044
        %3386 = vmatpush1.bf16.msra.mxu0 %v3043
        %3387 = vmatprep.subr.bf16.mxu0 %v3040
        %3388 = vmatpush1.bf16.msra.mxu0 %v3039
        %3389 = vmatprep.subr.bf16.mxu0 %v3036
        %3390 = vmatpush1.bf16.msra.mxu0 %v3035
        %3391 = vmatprep.subr.bf16.mxu0 %v3096
        %3392 = vmatpush2.bf16.msra.mxu0 %v3095
        %3393 = vmatprep.subr.bf16.mxu0 %v3092
        %3394 = vmatpush2.bf16.msra.mxu0 %v3091
        %3395 = vmatprep.subr.bf16.mxu0 %v3088
        %3396 = vmatpush2.bf16.msra.mxu0 %v3087
        %3397 = vmatprep.subr.bf16.mxu0 %v3084
        %3398 = vmatpush2.bf16.msra.mxu0 %v3083
        %3399 = vmatprep.subr.bf16.mxu0 %v3080
        %3400 = vmatpush2.bf16.msra.mxu0 %v3079
        %3401 = vmatprep.subr.bf16.mxu0 %v3076
        %3402 = vmatpush2.bf16.msra.mxu0 %v3075
        %3403 = vmatprep.subr.bf16.mxu0 %v3072
        %3404 = vmatpush2.bf16.msra.mxu0 %v3071
        %3405 = vmatprep.subr.bf16.mxu0 %v3068
        %3406 = vmatpush2.bf16.msra.mxu0 %v3067
        %3407 = vmatprep.mubr.bf16.mxu0 %v2642
        %3408 = vmatmul.mubr.bf16.gmra.mxu0 %v2641
        %v3409 = vpop.f32.mrf.mxu0
        %v3410 = vadd.f32 0.0, %v3409
        %v3411 = vpop.f32.mrf.mxu0
        %v3412 = vadd.f32 0.0, %v3411
        %v3413 = vpop.f32.mrf.mxu0
        %v3414 = vadd.f32 0.0, %v3413
        %v3415 = vpop.f32.mrf.mxu0
        %v3416 = vadd.f32 0.0, %v3415
        %3417 = vdwg.mxu0
        %3418 = vmatprep.subr.bf16.mxu0 %v3128
        %3419 = vmatpush1.bf16.msra.mxu0 %v3127
        %3420 = vmatprep.subr.bf16.mxu0 %v3124
        %3421 = vmatpush1.bf16.msra.mxu0 %v3123
        %3422 = vmatprep.subr.bf16.mxu0 %v3120
        %3423 = vmatpush1.bf16.msra.mxu0 %v3119
        %3424 = vmatprep.subr.bf16.mxu0 %v3116
        %3425 = vmatpush1.bf16.msra.mxu0 %v3115
        %3426 = vmatprep.subr.bf16.mxu0 %v3112
        %3427 = vmatpush1.bf16.msra.mxu0 %v3111
        %3428 = vmatprep.subr.bf16.mxu0 %v3108
        %3429 = vmatpush1.bf16.msra.mxu0 %v3107
        %3430 = vmatprep.subr.bf16.mxu0 %v3104
        %3431 = vmatpush1.bf16.msra.mxu0 %v3103
        %3432 = vmatprep.subr.bf16.mxu0 %v3100
        %3433 = vmatpush1.bf16.msra.mxu0 %v3099
        %3434 = vmatprep.subr.bf16.mxu0 %v3160
        %3435 = vmatpush2.bf16.msra.mxu0 %v3159
        %3436 = vmatprep.subr.bf16.mxu0 %v3156
        %3437 = vmatpush2.bf16.msra.mxu0 %v3155
        %3438 = vmatprep.subr.bf16.mxu0 %v3152
        %3439 = vmatpush2.bf16.msra.mxu0 %v3151
        %3440 = vmatprep.subr.bf16.mxu0 %v3148
        %3441 = vmatpush2.bf16.msra.mxu0 %v3147
        %3442 = vmatprep.subr.bf16.mxu0 %v3144
        %3443 = vmatpush2.bf16.msra.mxu0 %v3143
        %3444 = vmatprep.subr.bf16.mxu0 %v3140
        %3445 = vmatpush2.bf16.msra.mxu0 %v3139
        %3446 = vmatprep.subr.bf16.mxu0 %v3136
        %3447 = vmatpush2.bf16.msra.mxu0 %v3135
        %3448 = vmatprep.subr.bf16.mxu0 %v3132
        %3449 = vmatpush2.bf16.msra.mxu0 %v3131
        %3450 = vmatprep.mubr.bf16.mxu0 %v2644
        %3451 = vmatmul.mubr.bf16.gmra.mxu0 %v2643
        %v3452 = vpop.f32.mrf.mxu0
        %v3453 = vadd.f32 %v3410, %v3452
        %v3454 = vpop.f32.mrf.mxu0
        %v3455 = vadd.f32 %v3412, %v3454
        %v3456 = vpop.f32.mrf.mxu0
        %v3457 = vadd.f32 %v3414, %v3456
        %v3458 = vpop.f32.mrf.mxu0
        %v3459 = vadd.f32 %v3416, %v3458
        %3460 = vdwg.mxu0
        %v3461 = vadd.f32 %v2283, %v3367
        %v3462 = vadd.f32 %v2285, %v3369
        %v3463 = vadd.f32 %v2369, %v3453
        %v3464 = vadd.f32 %v2371, %v3455
        %v3465 = vadd.f32 %v2287, %v3371
        %v3466 = vadd.f32 %v2289, %v3373
        %v3467 = vadd.f32 %v2373, %v3457
        %v3468 = vadd.f32 %v2375, %v3459
        %s3469 = scalar_lea.vmem %s196, 16
        %v3470 = vld [vmem:[%s3469] sm:$0x33]
        %v3471 = vld [vmem:[%s3469 + $0x8] sm:$0x33]
        %v3472 = vld [vmem:[%s3469 + $0x10] sm:$0x33]
        %v3473 = vld [vmem:[%s3469 + $0x18] sm:$0x33]
        %v3474 = vld [vmem:[%s3469 + $0x20] sm:$0x33]
        %v3475 = vld [vmem:[%s3469 + $0x28] sm:$0x33]
        %v3476 = vld [vmem:[%s3469 + $0x30] sm:$0x33]
        %v3477 = vld [vmem:[%s3469 + $0x38] sm:$0x33]
        %v3487 = vunpack.c.l.s4 1983009808
        %v3488 = vunpack.c.0.s8 %v3487
        %v3489 = vlaneseq
        %v3490 = vshrl.u32 %v3489, 7
        %v3491 = vsub.s32 %v3488, %v3490
        %v3492 = vrot.slane %v3470, %v3491
        %v3494 = vunpack.c.l.s4 1983009808
        %v3495 = vunpack.c.0.s8 %v3494
        %v3496 = vlaneseq
        %v3497 = vshrl.u32 %v3496, 7
        %v3498 = vsub.s32 %v3495, %v3497
        %v3499 = vrot.slane %v3471, %v3498
        %v3500 = vcombine.low %v3492, %v3499
        %v3502 = vunpack.c.l.s4 1983009808
        %v3503 = vunpack.c.0.s8 %v3502
        %v3504 = vlaneseq
        %v3505 = vshrl.u32 %v3504, 7
        %v3506 = vsub.s32 %v3503, %v3505
        %v3507 = vrot.slane %v3472, %v3506
        %v3509 = vunpack.c.l.s4 1983009808
        %v3510 = vunpack.c.0.s8 %v3509
        %v3511 = vlaneseq
        %v3512 = vshrl.u32 %v3511, 7
        %v3513 = vsub.s32 %v3510, %v3512
        %v3514 = vrot.slane %v3473, %v3513
        %v3515 = vcombine.low %v3507, %v3514
        %v3517 = vunpack.c.l.s4 1983009808
        %v3518 = vunpack.c.0.s8 %v3517
        %v3519 = vlaneseq
        %v3520 = vshrl.u32 %v3519, 7
        %v3521 = vsub.s32 %v3518, %v3520
        %v3522 = vrot.slane %v3474, %v3521
        %v3524 = vunpack.c.l.s4 1983009808
        %v3525 = vunpack.c.0.s8 %v3524
        %v3526 = vlaneseq
        %v3527 = vshrl.u32 %v3526, 7
        %v3528 = vsub.s32 %v3525, %v3527
        %v3529 = vrot.slane %v3475, %v3528
        %v3530 = vcombine.low %v3522, %v3529
        %v3532 = vunpack.c.l.s4 1983009808
        %v3533 = vunpack.c.0.s8 %v3532
        %v3534 = vlaneseq
        %v3535 = vshrl.u32 %v3534, 7
        %v3536 = vsub.s32 %v3533, %v3535
        %v3537 = vrot.slane %v3476, %v3536
        %v3539 = vunpack.c.l.s4 1983009808
        %v3540 = vunpack.c.0.s8 %v3539
        %v3541 = vlaneseq
        %v3542 = vshrl.u32 %v3541, 7
        %v3543 = vsub.s32 %v3540, %v3542
        %v3544 = vrot.slane %v3477, %v3543
        %v3545 = vcombine.low %v3537, %v3544
        %s3546 = scalar_lea.vmem [#allocation2], 3072
        %v3547 = vld [vmem:[%s3546] sm:$0xff]
        %v3548 = vld [vmem:[%s3546 + $0x8] sm:$0xff]
        %v3549 = vld [vmem:[%s3546 + $0x10] sm:$0xff]
        %v3550 = vld [vmem:[%s3546 + $0x18] sm:$0xff]
        %v3551 = vld [vmem:[%s3546 + $0x20] sm:$0xff]
        %v3552 = vld [vmem:[%s3546 + $0x28] sm:$0xff]
        %v3553 = vld [vmem:[%s3546 + $0x30] sm:$0xff]
        %v3554 = vld [vmem:[%s3546 + $0x38] sm:$0xff]
        %v3555 = vld [vmem:[%s3546 + $0x40] sm:$0xff]
        %v3556 = vld [vmem:[%s3546 + $0x48] sm:$0xff]
        %v3557 = vld [vmem:[%s3546 + $0x50] sm:$0xff]
        %v3558 = vld [vmem:[%s3546 + $0x58] sm:$0xff]
        %v3559 = vld [vmem:[%s3546 + $0x60] sm:$0xff]
        %v3560 = vld [vmem:[%s3546 + $0x68] sm:$0xff]
        %v3561 = vld [vmem:[%s3546 + $0x70] sm:$0xff]
        %v3562 = vld [vmem:[%s3546 + $0x78] sm:$0xff]
        %v3563 = vld [vmem:[%s3546 + $0x80] sm:$0xff]
        %v3564 = vld [vmem:[%s3546 + $0x88] sm:$0xff]
        %v3565 = vld [vmem:[%s3546 + $0x90] sm:$0xff]
        %v3566 = vld [vmem:[%s3546 + $0x98] sm:$0xff]
        %v3567 = vld [vmem:[%s3546 + $0xa0] sm:$0xff]
        %v3568 = vld [vmem:[%s3546 + $0xa8] sm:$0xff]
        %v3569 = vld [vmem:[%s3546 + $0xb0] sm:$0xff]
        %v3570 = vld [vmem:[%s3546 + $0xb8] sm:$0xff]
        %v3571 = vld [vmem:[%s3546 + $0xc0] sm:$0xff]
        %v3572 = vld [vmem:[%s3546 + $0xc8] sm:$0xff]
        %v3573 = vld [vmem:[%s3546 + $0xd0] sm:$0xff]
        %v3574 = vld [vmem:[%s3546 + $0xd8] sm:$0xff]
        %v3575 = vld [vmem:[%s3546 + $0xe0] sm:$0xff]
        %v3576 = vld [vmem:[%s3546 + $0xe8] sm:$0xff]
        %v3577 = vld [vmem:[%s3546 + $0xf0] sm:$0xff]
        %v3578 = vld [vmem:[%s3546 + $0xf8] sm:$0xff]
        %v3579 = vld [vmem:[%s3546 + $0x100] sm:$0xff]
        %v3580 = vld [vmem:[%s3546 + $0x108] sm:$0xff]
        %v3581 = vld [vmem:[%s3546 + $0x110] sm:$0xff]
        %v3582 = vld [vmem:[%s3546 + $0x118] sm:$0xff]
        %v3583 = vld [vmem:[%s3546 + $0x120] sm:$0xff]
        %v3584 = vld [vmem:[%s3546 + $0x128] sm:$0xff]
        %v3585 = vld [vmem:[%s3546 + $0x130] sm:$0xff]
        %v3586 = vld [vmem:[%s3546 + $0x138] sm:$0xff]
        %v3587 = vld [vmem:[%s3546 + $0x140] sm:$0xff]
        %v3588 = vld [vmem:[%s3546 + $0x148] sm:$0xff]
        %v3589 = vld [vmem:[%s3546 + $0x150] sm:$0xff]
        %v3590 = vld [vmem:[%s3546 + $0x158] sm:$0xff]
        %v3591 = vld [vmem:[%s3546 + $0x160] sm:$0xff]
        %v3592 = vld [vmem:[%s3546 + $0x168] sm:$0xff]
        %v3593 = vld [vmem:[%s3546 + $0x170] sm:$0xff]
        %v3594 = vld [vmem:[%s3546 + $0x178] sm:$0xff]
        %v3595 = vld [vmem:[%s3546 + $0x180] sm:$0xff]
        %v3596 = vld [vmem:[%s3546 + $0x188] sm:$0xff]
        %v3597 = vld [vmem:[%s3546 + $0x190] sm:$0xff]
        %v3598 = vld [vmem:[%s3546 + $0x198] sm:$0xff]
        %v3599 = vld [vmem:[%s3546 + $0x1a0] sm:$0xff]
        %v3600 = vld [vmem:[%s3546 + $0x1a8] sm:$0xff]
        %v3601 = vld [vmem:[%s3546 + $0x1b0] sm:$0xff]
        %v3602 = vld [vmem:[%s3546 + $0x1b8] sm:$0xff]
        %v3603 = vld [vmem:[%s3546 + $0x1c0] sm:$0xff]
        %v3604 = vld [vmem:[%s3546 + $0x1c8] sm:$0xff]
        %v3605 = vld [vmem:[%s3546 + $0x1d0] sm:$0xff]
        %v3606 = vld [vmem:[%s3546 + $0x1d8] sm:$0xff]
        %v3607 = vld [vmem:[%s3546 + $0x1e0] sm:$0xff]
        %v3608 = vld [vmem:[%s3546 + $0x1e8] sm:$0xff]
        %v3609 = vld [vmem:[%s3546 + $0x1f0] sm:$0xff]
        %v3610 = vld [vmem:[%s3546 + $0x1f8] sm:$0xff]
        %v3611 = vld [vmem:[%s3546 + $0x200] sm:$0xff]
        %v3612 = vld [vmem:[%s3546 + $0x208] sm:$0xff]
        %v3613 = vld [vmem:[%s3546 + $0x210] sm:$0xff]
        %v3614 = vld [vmem:[%s3546 + $0x218] sm:$0xff]
        %v3615 = vld [vmem:[%s3546 + $0x220] sm:$0xff]
        %v3616 = vld [vmem:[%s3546 + $0x228] sm:$0xff]
        %v3617 = vld [vmem:[%s3546 + $0x230] sm:$0xff]
        %v3618 = vld [vmem:[%s3546 + $0x238] sm:$0xff]
        %v3619 = vld [vmem:[%s3546 + $0x240] sm:$0xff]
        %v3620 = vld [vmem:[%s3546 + $0x248] sm:$0xff]
        %v3621 = vld [vmem:[%s3546 + $0x250] sm:$0xff]
        %v3622 = vld [vmem:[%s3546 + $0x258] sm:$0xff]
        %v3623 = vld [vmem:[%s3546 + $0x260] sm:$0xff]
        %v3624 = vld [vmem:[%s3546 + $0x268] sm:$0xff]
        %v3625 = vld [vmem:[%s3546 + $0x270] sm:$0xff]
        %v3626 = vld [vmem:[%s3546 + $0x278] sm:$0xff]
        %v3627 = vld [vmem:[%s3546 + $0x280] sm:$0xff]
        %v3628 = vld [vmem:[%s3546 + $0x288] sm:$0xff]
        %v3629 = vld [vmem:[%s3546 + $0x290] sm:$0xff]
        %v3630 = vld [vmem:[%s3546 + $0x298] sm:$0xff]
        %v3631 = vld [vmem:[%s3546 + $0x2a0] sm:$0xff]
        %v3632 = vld [vmem:[%s3546 + $0x2a8] sm:$0xff]
        %v3633 = vld [vmem:[%s3546 + $0x2b0] sm:$0xff]
        %v3634 = vld [vmem:[%s3546 + $0x2b8] sm:$0xff]
        %v3635 = vld [vmem:[%s3546 + $0x2c0] sm:$0xff]
        %v3636 = vld [vmem:[%s3546 + $0x2c8] sm:$0xff]
        %v3637 = vld [vmem:[%s3546 + $0x2d0] sm:$0xff]
        %v3638 = vld [vmem:[%s3546 + $0x2d8] sm:$0xff]
        %v3639 = vld [vmem:[%s3546 + $0x2e0] sm:$0xff]
        %v3640 = vld [vmem:[%s3546 + $0x2e8] sm:$0xff]
        %v3641 = vld [vmem:[%s3546 + $0x2f0] sm:$0xff]
        %v3642 = vld [vmem:[%s3546 + $0x2f8] sm:$0xff]
        %v3643 = vld [vmem:[%s3546 + $0x300] sm:$0xff]
        %v3644 = vld [vmem:[%s3546 + $0x308] sm:$0xff]
        %v3645 = vld [vmem:[%s3546 + $0x310] sm:$0xff]
        %v3646 = vld [vmem:[%s3546 + $0x318] sm:$0xff]
        %v3647 = vld [vmem:[%s3546 + $0x320] sm:$0xff]
        %v3648 = vld [vmem:[%s3546 + $0x328] sm:$0xff]
        %v3649 = vld [vmem:[%s3546 + $0x330] sm:$0xff]
        %v3650 = vld [vmem:[%s3546 + $0x338] sm:$0xff]
        %v3651 = vld [vmem:[%s3546 + $0x340] sm:$0xff]
        %v3652 = vld [vmem:[%s3546 + $0x348] sm:$0xff]
        %v3653 = vld [vmem:[%s3546 + $0x350] sm:$0xff]
        %v3654 = vld [vmem:[%s3546 + $0x358] sm:$0xff]
        %v3655 = vld [vmem:[%s3546 + $0x360] sm:$0xff]
        %v3656 = vld [vmem:[%s3546 + $0x368] sm:$0xff]
        %v3657 = vld [vmem:[%s3546 + $0x370] sm:$0xff]
        %v3658 = vld [vmem:[%s3546 + $0x378] sm:$0xff]
        %v3659 = vld [vmem:[%s3546 + $0x380] sm:$0xff]
        %v3660 = vld [vmem:[%s3546 + $0x388] sm:$0xff]
        %v3661 = vld [vmem:[%s3546 + $0x390] sm:$0xff]
        %v3662 = vld [vmem:[%s3546 + $0x398] sm:$0xff]
        %v3663 = vld [vmem:[%s3546 + $0x3a0] sm:$0xff]
        %v3664 = vld [vmem:[%s3546 + $0x3a8] sm:$0xff]
        %v3665 = vld [vmem:[%s3546 + $0x3b0] sm:$0xff]
        %v3666 = vld [vmem:[%s3546 + $0x3b8] sm:$0xff]
        %v3667 = vld [vmem:[%s3546 + $0x3c0] sm:$0xff]
        %v3668 = vld [vmem:[%s3546 + $0x3c8] sm:$0xff]
        %v3669 = vld [vmem:[%s3546 + $0x3d0] sm:$0xff]
        %v3670 = vld [vmem:[%s3546 + $0x3d8] sm:$0xff]
        %v3671 = vld [vmem:[%s3546 + $0x3e0] sm:$0xff]
        %v3672 = vld [vmem:[%s3546 + $0x3e8] sm:$0xff]
        %v3673 = vld [vmem:[%s3546 + $0x3f0] sm:$0xff]
        %v3674 = vld [vmem:[%s3546 + $0x3f8] sm:$0xff]
        %v3675 = vcombine.low %v3500, %v3515
        %v3676 = vcombine.high %v3500, %v3515
        %v3677 = vcombine.low %v3530, %v3545
        %v3678 = vcombine.high %v3530, %v3545
        %v3680 = vunpack.c.l.s4 1983009808
        %v3681 = vunpack.c.0.s8 %v3680
        %v3682 = vlaneseq
        %v3683 = vshrl.u32 %v3682, 7
        %v3684 = vsub.s32 %v3681, %v3683
        %v3685 = vrot.slane %v3675, %v3684
        %v3687 = vunpack.c.l.s4 1983009808
        %v3688 = vunpack.c.0.s8 %v3687
        %v3689 = vlaneseq
        %v3690 = vshrl.u32 %v3689, 7
        %v3691 = vsub.s32 %v3688, %v3690
        %v3692 = vrot.slane %v3676, %v3691
        %v3694 = vunpack.c.l.s4 1983009808
        %v3695 = vunpack.c.0.s8 %v3694
        %v3696 = vlaneseq
        %v3697 = vshrl.u32 %v3696, 7
        %v3698 = vsub.s32 %v3695, %v3697
        %v3699 = vrot.slane %v3677, %v3698
        %v3701 = vunpack.c.l.s4 1983009808
        %v3702 = vunpack.c.0.s8 %v3701
        %v3703 = vlaneseq
        %v3704 = vshrl.u32 %v3703, 7
        %v3705 = vsub.s32 %v3702, %v3704
        %v3706 = vrot.slane %v3678, %v3705
        %v3707 = vcombine.low %v3685, %v3699
        %v3708 = vcombine.high %v3685, %v3699
        %v3709 = vcombine.low %v3692, %v3706
        %v3710 = vcombine.high %v3692, %v3706
        %v3843 = vunpack.c.l.b16 %v3547
        %v3844 = vunpack.c.h.b16 %v3547
        %v3845 = vunpack.c.l.b16 %v3548
        %v3846 = vunpack.c.h.b16 %v3548
        %v3847 = vunpack.c.l.b16 %v3549
        %v3848 = vunpack.c.h.b16 %v3549
        %v3849 = vunpack.c.l.b16 %v3550
        %v3850 = vunpack.c.h.b16 %v3550
        %v3851 = vunpack.c.l.b16 %v3551
        %v3852 = vunpack.c.h.b16 %v3551
        %v3853 = vunpack.c.l.b16 %v3552
        %v3854 = vunpack.c.h.b16 %v3552
        %v3855 = vunpack.c.l.b16 %v3553
        %v3856 = vunpack.c.h.b16 %v3553
        %v3857 = vunpack.c.l.b16 %v3554
        %v3858 = vunpack.c.h.b16 %v3554
        %v3859 = vunpack.c.l.b16 %v3555
        %v3860 = vunpack.c.h.b16 %v3555
        %v3861 = vunpack.c.l.b16 %v3556
        %v3862 = vunpack.c.h.b16 %v3556
        %v3863 = vunpack.c.l.b16 %v3557
        %v3864 = vunpack.c.h.b16 %v3557
        %v3865 = vunpack.c.l.b16 %v3558
        %v3866 = vunpack.c.h.b16 %v3558
        %v3867 = vunpack.c.l.b16 %v3559
        %v3868 = vunpack.c.h.b16 %v3559
        %v3869 = vunpack.c.l.b16 %v3560
        %v3870 = vunpack.c.h.b16 %v3560
        %v3871 = vunpack.c.l.b16 %v3561
        %v3872 = vunpack.c.h.b16 %v3561
        %v3873 = vunpack.c.l.b16 %v3562
        %v3874 = vunpack.c.h.b16 %v3562
        %v3875 = vunpack.c.l.b16 %v3563
        %v3876 = vunpack.c.h.b16 %v3563
        %v3877 = vunpack.c.l.b16 %v3564
        %v3878 = vunpack.c.h.b16 %v3564
        %v3879 = vunpack.c.l.b16 %v3565
        %v3880 = vunpack.c.h.b16 %v3565
        %v3881 = vunpack.c.l.b16 %v3566
        %v3882 = vunpack.c.h.b16 %v3566
        %v3883 = vunpack.c.l.b16 %v3567
        %v3884 = vunpack.c.h.b16 %v3567
        %v3885 = vunpack.c.l.b16 %v3568
        %v3886 = vunpack.c.h.b16 %v3568
        %v3887 = vunpack.c.l.b16 %v3569
        %v3888 = vunpack.c.h.b16 %v3569
        %v3889 = vunpack.c.l.b16 %v3570
        %v3890 = vunpack.c.h.b16 %v3570
        %v3891 = vunpack.c.l.b16 %v3571
        %v3892 = vunpack.c.h.b16 %v3571
        %v3893 = vunpack.c.l.b16 %v3572
        %v3894 = vunpack.c.h.b16 %v3572
        %v3895 = vunpack.c.l.b16 %v3573
        %v3896 = vunpack.c.h.b16 %v3573
        %v3897 = vunpack.c.l.b16 %v3574
        %v3898 = vunpack.c.h.b16 %v3574
        %v3899 = vunpack.c.l.b16 %v3575
        %v3900 = vunpack.c.h.b16 %v3575
        %v3901 = vunpack.c.l.b16 %v3576
        %v3902 = vunpack.c.h.b16 %v3576
        %v3903 = vunpack.c.l.b16 %v3577
        %v3904 = vunpack.c.h.b16 %v3577
        %v3905 = vunpack.c.l.b16 %v3578
        %v3906 = vunpack.c.h.b16 %v3578
        %v3907 = vunpack.c.l.b16 %v3579
        %v3908 = vunpack.c.h.b16 %v3579
        %v3909 = vunpack.c.l.b16 %v3580
        %v3910 = vunpack.c.h.b16 %v3580
        %v3911 = vunpack.c.l.b16 %v3581
        %v3912 = vunpack.c.h.b16 %v3581
        %v3913 = vunpack.c.l.b16 %v3582
        %v3914 = vunpack.c.h.b16 %v3582
        %v3915 = vunpack.c.l.b16 %v3583
        %v3916 = vunpack.c.h.b16 %v3583
        %v3917 = vunpack.c.l.b16 %v3584
        %v3918 = vunpack.c.h.b16 %v3584
        %v3919 = vunpack.c.l.b16 %v3585
        %v3920 = vunpack.c.h.b16 %v3585
        %v3921 = vunpack.c.l.b16 %v3586
        %v3922 = vunpack.c.h.b16 %v3586
        %v3923 = vunpack.c.l.b16 %v3587
        %v3924 = vunpack.c.h.b16 %v3587
        %v3925 = vunpack.c.l.b16 %v3588
        %v3926 = vunpack.c.h.b16 %v3588
        %v3927 = vunpack.c.l.b16 %v3589
        %v3928 = vunpack.c.h.b16 %v3589
        %v3929 = vunpack.c.l.b16 %v3590
        %v3930 = vunpack.c.h.b16 %v3590
        %v3931 = vunpack.c.l.b16 %v3591
        %v3932 = vunpack.c.h.b16 %v3591
        %v3933 = vunpack.c.l.b16 %v3592
        %v3934 = vunpack.c.h.b16 %v3592
        %v3935 = vunpack.c.l.b16 %v3593
        %v3936 = vunpack.c.h.b16 %v3593
        %v3937 = vunpack.c.l.b16 %v3594
        %v3938 = vunpack.c.h.b16 %v3594
        %v3939 = vunpack.c.l.b16 %v3595
        %v3940 = vunpack.c.h.b16 %v3595
        %v3941 = vunpack.c.l.b16 %v3596
        %v3942 = vunpack.c.h.b16 %v3596
        %v3943 = vunpack.c.l.b16 %v3597
        %v3944 = vunpack.c.h.b16 %v3597
        %v3945 = vunpack.c.l.b16 %v3598
        %v3946 = vunpack.c.h.b16 %v3598
        %v3947 = vunpack.c.l.b16 %v3599
        %v3948 = vunpack.c.h.b16 %v3599
        %v3949 = vunpack.c.l.b16 %v3600
        %v3950 = vunpack.c.h.b16 %v3600
        %v3951 = vunpack.c.l.b16 %v3601
        %v3952 = vunpack.c.h.b16 %v3601
        %v3953 = vunpack.c.l.b16 %v3602
        %v3954 = vunpack.c.h.b16 %v3602
        %v3955 = vunpack.c.l.b16 %v3603
        %v3956 = vunpack.c.h.b16 %v3603
        %v3957 = vunpack.c.l.b16 %v3604
        %v3958 = vunpack.c.h.b16 %v3604
        %v3959 = vunpack.c.l.b16 %v3605
        %v3960 = vunpack.c.h.b16 %v3605
        %v3961 = vunpack.c.l.b16 %v3606
        %v3962 = vunpack.c.h.b16 %v3606
        %v3963 = vunpack.c.l.b16 %v3607
        %v3964 = vunpack.c.h.b16 %v3607
        %v3965 = vunpack.c.l.b16 %v3608
        %v3966 = vunpack.c.h.b16 %v3608
        %v3967 = vunpack.c.l.b16 %v3609
        %v3968 = vunpack.c.h.b16 %v3609
        %v3969 = vunpack.c.l.b16 %v3610
        %v3970 = vunpack.c.h.b16 %v3610
        %v3971 = vunpack.c.l.b16 %v3611
        %v3972 = vunpack.c.h.b16 %v3611
        %v3973 = vunpack.c.l.b16 %v3612
        %v3974 = vunpack.c.h.b16 %v3612
        %v3975 = vunpack.c.l.b16 %v3613
        %v3976 = vunpack.c.h.b16 %v3613
        %v3977 = vunpack.c.l.b16 %v3614
        %v3978 = vunpack.c.h.b16 %v3614
        %v3979 = vunpack.c.l.b16 %v3615
        %v3980 = vunpack.c.h.b16 %v3615
        %v3981 = vunpack.c.l.b16 %v3616
        %v3982 = vunpack.c.h.b16 %v3616
        %v3983 = vunpack.c.l.b16 %v3617
        %v3984 = vunpack.c.h.b16 %v3617
        %v3985 = vunpack.c.l.b16 %v3618
        %v3986 = vunpack.c.h.b16 %v3618
        %v3987 = vunpack.c.l.b16 %v3619
        %v3988 = vunpack.c.h.b16 %v3619
        %v3989 = vunpack.c.l.b16 %v3620
        %v3990 = vunpack.c.h.b16 %v3620
        %v3991 = vunpack.c.l.b16 %v3621
        %v3992 = vunpack.c.h.b16 %v3621
        %v3993 = vunpack.c.l.b16 %v3622
        %v3994 = vunpack.c.h.b16 %v3622
        %v3995 = vunpack.c.l.b16 %v3623
        %v3996 = vunpack.c.h.b16 %v3623
        %v3997 = vunpack.c.l.b16 %v3624
        %v3998 = vunpack.c.h.b16 %v3624
        %v3999 = vunpack.c.l.b16 %v3625
        %v4000 = vunpack.c.h.b16 %v3625
        %v4001 = vunpack.c.l.b16 %v3626
        %v4002 = vunpack.c.h.b16 %v3626
        %v4003 = vunpack.c.l.b16 %v3627
        %v4004 = vunpack.c.h.b16 %v3627
        %v4005 = vunpack.c.l.b16 %v3628
        %v4006 = vunpack.c.h.b16 %v3628
        %v4007 = vunpack.c.l.b16 %v3629
        %v4008 = vunpack.c.h.b16 %v3629
        %v4009 = vunpack.c.l.b16 %v3630
        %v4010 = vunpack.c.h.b16 %v3630
        %v4011 = vunpack.c.l.b16 %v3631
        %v4012 = vunpack.c.h.b16 %v3631
        %v4013 = vunpack.c.l.b16 %v3632
        %v4014 = vunpack.c.h.b16 %v3632
        %v4015 = vunpack.c.l.b16 %v3633
        %v4016 = vunpack.c.h.b16 %v3633
        %v4017 = vunpack.c.l.b16 %v3634
        %v4018 = vunpack.c.h.b16 %v3634
        %v4019 = vunpack.c.l.b16 %v3635
        %v4020 = vunpack.c.h.b16 %v3635
        %v4021 = vunpack.c.l.b16 %v3636
        %v4022 = vunpack.c.h.b16 %v3636
        %v4023 = vunpack.c.l.b16 %v3637
        %v4024 = vunpack.c.h.b16 %v3637
        %v4025 = vunpack.c.l.b16 %v3638
        %v4026 = vunpack.c.h.b16 %v3638
        %v4027 = vunpack.c.l.b16 %v3639
        %v4028 = vunpack.c.h.b16 %v3639
        %v4029 = vunpack.c.l.b16 %v3640
        %v4030 = vunpack.c.h.b16 %v3640
        %v4031 = vunpack.c.l.b16 %v3641
        %v4032 = vunpack.c.h.b16 %v3641
        %v4033 = vunpack.c.l.b16 %v3642
        %v4034 = vunpack.c.h.b16 %v3642
        %v4035 = vunpack.c.l.b16 %v3643
        %v4036 = vunpack.c.h.b16 %v3643
        %v4037 = vunpack.c.l.b16 %v3644
        %v4038 = vunpack.c.h.b16 %v3644
        %v4039 = vunpack.c.l.b16 %v3645
        %v4040 = vunpack.c.h.b16 %v3645
        %v4041 = vunpack.c.l.b16 %v3646
        %v4042 = vunpack.c.h.b16 %v3646
        %v4043 = vunpack.c.l.b16 %v3647
        %v4044 = vunpack.c.h.b16 %v3647
        %v4045 = vunpack.c.l.b16 %v3648
        %v4046 = vunpack.c.h.b16 %v3648
        %v4047 = vunpack.c.l.b16 %v3649
        %v4048 = vunpack.c.h.b16 %v3649
        %v4049 = vunpack.c.l.b16 %v3650
        %v4050 = vunpack.c.h.b16 %v3650
        %v4051 = vunpack.c.l.b16 %v3651
        %v4052 = vunpack.c.h.b16 %v3651
        %v4053 = vunpack.c.l.b16 %v3652
        %v4054 = vunpack.c.h.b16 %v3652
        %v4055 = vunpack.c.l.b16 %v3653
        %v4056 = vunpack.c.h.b16 %v3653
        %v4057 = vunpack.c.l.b16 %v3654
        %v4058 = vunpack.c.h.b16 %v3654
        %v4059 = vunpack.c.l.b16 %v3655
        %v4060 = vunpack.c.h.b16 %v3655
        %v4061 = vunpack.c.l.b16 %v3656
        %v4062 = vunpack.c.h.b16 %v3656
        %v4063 = vunpack.c.l.b16 %v3657
        %v4064 = vunpack.c.h.b16 %v3657
        %v4065 = vunpack.c.l.b16 %v3658
        %v4066 = vunpack.c.h.b16 %v3658
        %v4067 = vunpack.c.l.b16 %v3659
        %v4068 = vunpack.c.h.b16 %v3659
        %v4069 = vunpack.c.l.b16 %v3660
        %v4070 = vunpack.c.h.b16 %v3660
        %v4071 = vunpack.c.l.b16 %v3661
        %v4072 = vunpack.c.h.b16 %v3661
        %v4073 = vunpack.c.l.b16 %v3662
        %v4074 = vunpack.c.h.b16 %v3662
        %v4075 = vunpack.c.l.b16 %v3663
        %v4076 = vunpack.c.h.b16 %v3663
        %v4077 = vunpack.c.l.b16 %v3664
        %v4078 = vunpack.c.h.b16 %v3664
        %v4079 = vunpack.c.l.b16 %v3665
        %v4080 = vunpack.c.h.b16 %v3665
        %v4081 = vunpack.c.l.b16 %v3666
        %v4082 = vunpack.c.h.b16 %v3666
        %v4083 = vunpack.c.l.b16 %v3667
        %v4084 = vunpack.c.h.b16 %v3667
        %v4085 = vunpack.c.l.b16 %v3668
        %v4086 = vunpack.c.h.b16 %v3668
        %v4087 = vunpack.c.l.b16 %v3669
        %v4088 = vunpack.c.h.b16 %v3669
        %v4089 = vunpack.c.l.b16 %v3670
        %v4090 = vunpack.c.h.b16 %v3670
        %v4091 = vunpack.c.l.b16 %v3671
        %v4092 = vunpack.c.h.b16 %v3671
        %v4093 = vunpack.c.l.b16 %v3672
        %v4094 = vunpack.c.h.b16 %v3672
        %v4095 = vunpack.c.l.b16 %v3673
        %v4096 = vunpack.c.h.b16 %v3673
        %v4097 = vunpack.c.l.b16 %v3674
        %v4098 = vunpack.c.h.b16 %v3674
        %v4099 = vpack.c.b16 %v3847, %v3843
        %v4100 = vpack.c.b16 %v3848, %v3844
        %v4101 = vpack.c.b16 %v3849, %v3845
        %v4102 = vpack.c.b16 %v3850, %v3846
        %v4103 = vpack.c.b16 %v3855, %v3851
        %v4104 = vpack.c.b16 %v3856, %v3852
        %v4105 = vpack.c.b16 %v3857, %v3853
        %v4106 = vpack.c.b16 %v3858, %v3854
        %v4107 = vpack.c.b16 %v3863, %v3859
        %v4108 = vpack.c.b16 %v3864, %v3860
        %v4109 = vpack.c.b16 %v3865, %v3861
        %v4110 = vpack.c.b16 %v3866, %v3862
        %v4111 = vpack.c.b16 %v3871, %v3867
        %v4112 = vpack.c.b16 %v3872, %v3868
        %v4113 = vpack.c.b16 %v3873, %v3869
        %v4114 = vpack.c.b16 %v3874, %v3870
        %v4115 = vpack.c.b16 %v3879, %v3875
        %v4116 = vpack.c.b16 %v3880, %v3876
        %v4117 = vpack.c.b16 %v3881, %v3877
        %v4118 = vpack.c.b16 %v3882, %v3878
        %v4119 = vpack.c.b16 %v3887, %v3883
        %v4120 = vpack.c.b16 %v3888, %v3884
        %v4121 = vpack.c.b16 %v3889, %v3885
        %v4122 = vpack.c.b16 %v3890, %v3886
        %v4123 = vpack.c.b16 %v3895, %v3891
        %v4124 = vpack.c.b16 %v3896, %v3892
        %v4125 = vpack.c.b16 %v3897, %v3893
        %v4126 = vpack.c.b16 %v3898, %v3894
        %v4127 = vpack.c.b16 %v3903, %v3899
        %v4128 = vpack.c.b16 %v3904, %v3900
        %v4129 = vpack.c.b16 %v3905, %v3901
        %v4130 = vpack.c.b16 %v3906, %v3902
        %v4131 = vpack.c.b16 %v3911, %v3907
        %v4132 = vpack.c.b16 %v3912, %v3908
        %v4133 = vpack.c.b16 %v3913, %v3909
        %v4134 = vpack.c.b16 %v3914, %v3910
        %v4135 = vpack.c.b16 %v3919, %v3915
        %v4136 = vpack.c.b16 %v3920, %v3916
        %v4137 = vpack.c.b16 %v3921, %v3917
        %v4138 = vpack.c.b16 %v3922, %v3918
        %v4139 = vpack.c.b16 %v3927, %v3923
        %v4140 = vpack.c.b16 %v3928, %v3924
        %v4141 = vpack.c.b16 %v3929, %v3925
        %v4142 = vpack.c.b16 %v3930, %v3926
        %v4143 = vpack.c.b16 %v3935, %v3931
        %v4144 = vpack.c.b16 %v3936, %v3932
        %v4145 = vpack.c.b16 %v3937, %v3933
        %v4146 = vpack.c.b16 %v3938, %v3934
        %v4147 = vpack.c.b16 %v3943, %v3939
        %v4148 = vpack.c.b16 %v3944, %v3940
        %v4149 = vpack.c.b16 %v3945, %v3941
        %v4150 = vpack.c.b16 %v3946, %v3942
        %v4151 = vpack.c.b16 %v3951, %v3947
        %v4152 = vpack.c.b16 %v3952, %v3948
        %v4153 = vpack.c.b16 %v3953, %v3949
        %v4154 = vpack.c.b16 %v3954, %v3950
        %v4155 = vpack.c.b16 %v3959, %v3955
        %v4156 = vpack.c.b16 %v3960, %v3956
        %v4157 = vpack.c.b16 %v3961, %v3957
        %v4158 = vpack.c.b16 %v3962, %v3958
        %v4159 = vpack.c.b16 %v3967, %v3963
        %v4160 = vpack.c.b16 %v3968, %v3964
        %v4161 = vpack.c.b16 %v3969, %v3965
        %v4162 = vpack.c.b16 %v3970, %v3966
        %v4163 = vpack.c.b16 %v3975, %v3971
        %v4164 = vpack.c.b16 %v3976, %v3972
        %v4165 = vpack.c.b16 %v3977, %v3973
        %v4166 = vpack.c.b16 %v3978, %v3974
        %v4167 = vpack.c.b16 %v3983, %v3979
        %v4168 = vpack.c.b16 %v3984, %v3980
        %v4169 = vpack.c.b16 %v3985, %v3981
        %v4170 = vpack.c.b16 %v3986, %v3982
        %v4171 = vpack.c.b16 %v3991, %v3987
        %v4172 = vpack.c.b16 %v3992, %v3988
        %v4173 = vpack.c.b16 %v3993, %v3989
        %v4174 = vpack.c.b16 %v3994, %v3990
        %v4175 = vpack.c.b16 %v3999, %v3995
        %v4176 = vpack.c.b16 %v4000, %v3996
        %v4177 = vpack.c.b16 %v4001, %v3997
        %v4178 = vpack.c.b16 %v4002, %v3998
        %v4179 = vpack.c.b16 %v4007, %v4003
        %v4180 = vpack.c.b16 %v4008, %v4004
        %v4181 = vpack.c.b16 %v4009, %v4005
        %v4182 = vpack.c.b16 %v4010, %v4006
        %v4183 = vpack.c.b16 %v4015, %v4011
        %v4184 = vpack.c.b16 %v4016, %v4012
        %v4185 = vpack.c.b16 %v4017, %v4013
        %v4186 = vpack.c.b16 %v4018, %v4014
        %v4187 = vpack.c.b16 %v4023, %v4019
        %v4188 = vpack.c.b16 %v4024, %v4020
        %v4189 = vpack.c.b16 %v4025, %v4021
        %v4190 = vpack.c.b16 %v4026, %v4022
        %v4191 = vpack.c.b16 %v4031, %v4027
        %v4192 = vpack.c.b16 %v4032, %v4028
        %v4193 = vpack.c.b16 %v4033, %v4029
        %v4194 = vpack.c.b16 %v4034, %v4030
        %v4195 = vpack.c.b16 %v4039, %v4035
        %v4196 = vpack.c.b16 %v4040, %v4036
        %v4197 = vpack.c.b16 %v4041, %v4037
        %v4198 = vpack.c.b16 %v4042, %v4038
        %v4199 = vpack.c.b16 %v4047, %v4043
        %v4200 = vpack.c.b16 %v4048, %v4044
        %v4201 = vpack.c.b16 %v4049, %v4045
        %v4202 = vpack.c.b16 %v4050, %v4046
        %v4203 = vpack.c.b16 %v4055, %v4051
        %v4204 = vpack.c.b16 %v4056, %v4052
        %v4205 = vpack.c.b16 %v4057, %v4053
        %v4206 = vpack.c.b16 %v4058, %v4054
        %v4207 = vpack.c.b16 %v4063, %v4059
        %v4208 = vpack.c.b16 %v4064, %v4060
        %v4209 = vpack.c.b16 %v4065, %v4061
        %v4210 = vpack.c.b16 %v4066, %v4062
        %v4211 = vpack.c.b16 %v4071, %v4067
        %v4212 = vpack.c.b16 %v4072, %v4068
        %v4213 = vpack.c.b16 %v4073, %v4069
        %v4214 = vpack.c.b16 %v4074, %v4070
        %v4215 = vpack.c.b16 %v4079, %v4075
        %v4216 = vpack.c.b16 %v4080, %v4076
        %v4217 = vpack.c.b16 %v4081, %v4077
        %v4218 = vpack.c.b16 %v4082, %v4078
        %v4219 = vpack.c.b16 %v4087, %v4083
        %v4220 = vpack.c.b16 %v4088, %v4084
        %v4221 = vpack.c.b16 %v4089, %v4085
        %v4222 = vpack.c.b16 %v4090, %v4086
        %v4223 = vpack.c.b16 %v4095, %v4091
        %v4224 = vpack.c.b16 %v4096, %v4092
        %v4225 = vpack.c.b16 %v4097, %v4093
        %v4226 = vpack.c.b16 %v4098, %v4094
        %4355 = vmatprep.subr.bf16.mxu0 %v4128
        %4356 = vmatpush1.bf16.msra.mxu0 %v4127
        %4357 = vmatprep.subr.bf16.mxu0 %v4124
        %4358 = vmatpush1.bf16.msra.mxu0 %v4123
        %4359 = vmatprep.subr.bf16.mxu0 %v4120
        %4360 = vmatpush1.bf16.msra.mxu0 %v4119
        %4361 = vmatprep.subr.bf16.mxu0 %v4116
        %4362 = vmatpush1.bf16.msra.mxu0 %v4115
        %4363 = vmatprep.subr.bf16.mxu0 %v4112
        %4364 = vmatpush1.bf16.msra.mxu0 %v4111
        %4365 = vmatprep.subr.bf16.mxu0 %v4108
        %4366 = vmatpush1.bf16.msra.mxu0 %v4107
        %4367 = vmatprep.subr.bf16.mxu0 %v4104
        %4368 = vmatpush1.bf16.msra.mxu0 %v4103
        %4369 = vmatprep.subr.bf16.mxu0 %v4100
        %4370 = vmatpush1.bf16.msra.mxu0 %v4099
        %4371 = vmatprep.subr.bf16.mxu0 %v4160
        %4372 = vmatpush2.bf16.msra.mxu0 %v4159
        %4373 = vmatprep.subr.bf16.mxu0 %v4156
        %4374 = vmatpush2.bf16.msra.mxu0 %v4155
        %4375 = vmatprep.subr.bf16.mxu0 %v4152
        %4376 = vmatpush2.bf16.msra.mxu0 %v4151
        %4377 = vmatprep.subr.bf16.mxu0 %v4148
        %4378 = vmatpush2.bf16.msra.mxu0 %v4147
        %4379 = vmatprep.subr.bf16.mxu0 %v4144
        %4380 = vmatpush2.bf16.msra.mxu0 %v4143
        %4381 = vmatprep.subr.bf16.mxu0 %v4140
        %4382 = vmatpush2.bf16.msra.mxu0 %v4139
        %4383 = vmatprep.subr.bf16.mxu0 %v4136
        %4384 = vmatpush2.bf16.msra.mxu0 %v4135
        %4385 = vmatprep.subr.bf16.mxu0 %v4132
        %4386 = vmatpush2.bf16.msra.mxu0 %v4131
        %4387 = vmatprep.mubr.bf16.mxu0 %v3708
        %4388 = vmatmul.mubr.bf16.gmra.mxu0 %v3707
        %v4389 = vpop.f32.mrf.mxu0
        %v4390 = vadd.f32 0.0, %v4389
        %v4391 = vpop.f32.mrf.mxu0
        %v4392 = vadd.f32 0.0, %v4391
        %v4393 = vpop.f32.mrf.mxu0
        %v4394 = vadd.f32 0.0, %v4393
        %v4395 = vpop.f32.mrf.mxu0
        %v4396 = vadd.f32 0.0, %v4395
        %4397 = vdwg.mxu0
        %4398 = vmatprep.subr.bf16.mxu0 %v4192
        %4399 = vmatpush1.bf16.msra.mxu0 %v4191
        %4400 = vmatprep.subr.bf16.mxu0 %v4188
        %4401 = vmatpush1.bf16.msra.mxu0 %v4187
        %4402 = vmatprep.subr.bf16.mxu0 %v4184
        %4403 = vmatpush1.bf16.msra.mxu0 %v4183
        %4404 = vmatprep.subr.bf16.mxu0 %v4180
        %4405 = vmatpush1.bf16.msra.mxu0 %v4179
        %4406 = vmatprep.subr.bf16.mxu0 %v4176
        %4407 = vmatpush1.bf16.msra.mxu0 %v4175
        %4408 = vmatprep.subr.bf16.mxu0 %v4172
        %4409 = vmatpush1.bf16.msra.mxu0 %v4171
        %4410 = vmatprep.subr.bf16.mxu0 %v4168
        %4411 = vmatpush1.bf16.msra.mxu0 %v4167
        %4412 = vmatprep.subr.bf16.mxu0 %v4164
        %4413 = vmatpush1.bf16.msra.mxu0 %v4163
        %4414 = vmatprep.subr.bf16.mxu0 %v4224
        %4415 = vmatpush2.bf16.msra.mxu0 %v4223
        %4416 = vmatprep.subr.bf16.mxu0 %v4220
        %4417 = vmatpush2.bf16.msra.mxu0 %v4219
        %4418 = vmatprep.subr.bf16.mxu0 %v4216
        %4419 = vmatpush2.bf16.msra.mxu0 %v4215
        %4420 = vmatprep.subr.bf16.mxu0 %v4212
        %4421 = vmatpush2.bf16.msra.mxu0 %v4211
        %4422 = vmatprep.subr.bf16.mxu0 %v4208
        %4423 = vmatpush2.bf16.msra.mxu0 %v4207
        %4424 = vmatprep.subr.bf16.mxu0 %v4204
        %4425 = vmatpush2.bf16.msra.mxu0 %v4203
        %4426 = vmatprep.subr.bf16.mxu0 %v4200
        %4427 = vmatpush2.bf16.msra.mxu0 %v4199
        %4428 = vmatprep.subr.bf16.mxu0 %v4196
        %4429 = vmatpush2.bf16.msra.mxu0 %v4195
        %4430 = vmatprep.mubr.bf16.mxu0 %v3710
        %4431 = vmatmul.mubr.bf16.gmra.mxu0 %v3709
        %v4432 = vpop.f32.mrf.mxu0
        %v4433 = vadd.f32 %v4390, %v4432
        %v4434 = vpop.f32.mrf.mxu0
        %v4435 = vadd.f32 %v4392, %v4434
        %v4436 = vpop.f32.mrf.mxu0
        %v4437 = vadd.f32 %v4394, %v4436
        %v4438 = vpop.f32.mrf.mxu0
        %v4439 = vadd.f32 %v4396, %v4438
        %4440 = vdwg.mxu0
        %4441 = vmatprep.subr.bf16.mxu0 %v4130
        %4442 = vmatpush1.bf16.msra.mxu0 %v4129
        %4443 = vmatprep.subr.bf16.mxu0 %v4126
        %4444 = vmatpush1.bf16.msra.mxu0 %v4125
        %4445 = vmatprep.subr.bf16.mxu0 %v4122
        %4446 = vmatpush1.bf16.msra.mxu0 %v4121
        %4447 = vmatprep.subr.bf16.mxu0 %v4118
        %4448 = vmatpush1.bf16.msra.mxu0 %v4117
        %4449 = vmatprep.subr.bf16.mxu0 %v4114
        %4450 = vmatpush1.bf16.msra.mxu0 %v4113
        %4451 = vmatprep.subr.bf16.mxu0 %v4110
        %4452 = vmatpush1.bf16.msra.mxu0 %v4109
        %4453 = vmatprep.subr.bf16.mxu0 %v4106
        %4454 = vmatpush1.bf16.msra.mxu0 %v4105
        %4455 = vmatprep.subr.bf16.mxu0 %v4102
        %4456 = vmatpush1.bf16.msra.mxu0 %v4101
        %4457 = vmatprep.subr.bf16.mxu0 %v4162
        %4458 = vmatpush2.bf16.msra.mxu0 %v4161
        %4459 = vmatprep.subr.bf16.mxu0 %v4158
        %4460 = vmatpush2.bf16.msra.mxu0 %v4157
        %4461 = vmatprep.subr.bf16.mxu0 %v4154
        %4462 = vmatpush2.bf16.msra.mxu0 %v4153
        %4463 = vmatprep.subr.bf16.mxu0 %v4150
        %4464 = vmatpush2.bf16.msra.mxu0 %v4149
        %4465 = vmatprep.subr.bf16.mxu0 %v4146
        %4466 = vmatpush2.bf16.msra.mxu0 %v4145
        %4467 = vmatprep.subr.bf16.mxu0 %v4142
        %4468 = vmatpush2.bf16.msra.mxu0 %v4141
        %4469 = vmatprep.subr.bf16.mxu0 %v4138
        %4470 = vmatpush2.bf16.msra.mxu0 %v4137
        %4471 = vmatprep.subr.bf16.mxu0 %v4134
        %4472 = vmatpush2.bf16.msra.mxu0 %v4133
        %4473 = vmatprep.mubr.bf16.mxu0 %v3708
        %4474 = vmatmul.mubr.bf16.gmra.mxu0 %v3707
        %v4475 = vpop.f32.mrf.mxu0
        %v4476 = vadd.f32 0.0, %v4475
        %v4477 = vpop.f32.mrf.mxu0
        %v4478 = vadd.f32 0.0, %v4477
        %v4479 = vpop.f32.mrf.mxu0
        %v4480 = vadd.f32 0.0, %v4479
        %v4481 = vpop.f32.mrf.mxu0
        %v4482 = vadd.f32 0.0, %v4481
        %4483 = vdwg.mxu0
        %4484 = vmatprep.subr.bf16.mxu0 %v4194
        %4485 = vmatpush1.bf16.msra.mxu0 %v4193
        %4486 = vmatprep.subr.bf16.mxu0 %v4190
        %4487 = vmatpush1.bf16.msra.mxu0 %v4189
        %4488 = vmatprep.subr.bf16.mxu0 %v4186
        %4489 = vmatpush1.bf16.msra.mxu0 %v4185
        %4490 = vmatprep.subr.bf16.mxu0 %v4182
        %4491 = vmatpush1.bf16.msra.mxu0 %v4181
        %4492 = vmatprep.subr.bf16.mxu0 %v4178
        %4493 = vmatpush1.bf16.msra.mxu0 %v4177
        %4494 = vmatprep.subr.bf16.mxu0 %v4174
        %4495 = vmatpush1.bf16.msra.mxu0 %v4173
        %4496 = vmatprep.subr.bf16.mxu0 %v4170
        %4497 = vmatpush1.bf16.msra.mxu0 %v4169
        %4498 = vmatprep.subr.bf16.mxu0 %v4166
        %4499 = vmatpush1.bf16.msra.mxu0 %v4165
        %4500 = vmatprep.subr.bf16.mxu0 %v4226
        %4501 = vmatpush2.bf16.msra.mxu0 %v4225
        %4502 = vmatprep.subr.bf16.mxu0 %v4222
        %4503 = vmatpush2.bf16.msra.mxu0 %v4221
        %4504 = vmatprep.subr.bf16.mxu0 %v4218
        %4505 = vmatpush2.bf16.msra.mxu0 %v4217
        %4506 = vmatprep.subr.bf16.mxu0 %v4214
        %4507 = vmatpush2.bf16.msra.mxu0 %v4213
        %4508 = vmatprep.subr.bf16.mxu0 %v4210
        %4509 = vmatpush2.bf16.msra.mxu0 %v4209
        %4510 = vmatprep.subr.bf16.mxu0 %v4206
        %4511 = vmatpush2.bf16.msra.mxu0 %v4205
        %4512 = vmatprep.subr.bf16.mxu0 %v4202
        %4513 = vmatpush2.bf16.msra.mxu0 %v4201
        %4514 = vmatprep.subr.bf16.mxu0 %v4198
        %4515 = vmatpush2.bf16.msra.mxu0 %v4197
        %4516 = vmatprep.mubr.bf16.mxu0 %v3710
        %4517 = vmatmul.mubr.bf16.gmra.mxu0 %v3709
        %v4518 = vpop.f32.mrf.mxu0
        %v4519 = vadd.f32 %v4476, %v4518
        %v4520 = vpop.f32.mrf.mxu0
        %v4521 = vadd.f32 %v4478, %v4520
        %v4522 = vpop.f32.mrf.mxu0
        %v4523 = vadd.f32 %v4480, %v4522
        %v4524 = vpop.f32.mrf.mxu0
        %v4525 = vadd.f32 %v4482, %v4524
        %4526 = vdwg.mxu0
        %v4527 = vadd.f32 %v3461, %v4433
        %v4528 = vadd.f32 %v3462, %v4435
        %v4529 = vadd.f32 %v3463, %v4519
        %v4530 = vadd.f32 %v3464, %v4521
        %v4531 = vadd.f32 %v3465, %v4437
        %v4532 = vadd.f32 %v3466, %v4439
        %v4533 = vadd.f32 %v3467, %v4523
        %v4534 = vadd.f32 %v3468, %v4525
        %v4535 = vld [vmem:[%s3469] sm:$0x77]
        %v4536 = vld [vmem:[%s3469 + $0x8] sm:$0x77]
        %v4537 = vld [vmem:[%s3469 + $0x10] sm:$0x77]
        %v4538 = vld [vmem:[%s3469 + $0x18] sm:$0x77]
        %v4539 = vld [vmem:[%s3469 + $0x20] sm:$0x77]
        %v4540 = vld [vmem:[%s3469 + $0x28] sm:$0x77]
        %v4541 = vld [vmem:[%s3469 + $0x30] sm:$0x77]
        %v4542 = vld [vmem:[%s3469 + $0x38] sm:$0x77]
        %v4552 = vunpack.c.l.s4 1983009808
        %v4553 = vunpack.c.0.s8 %v4552
        %v4554 = vlaneseq
        %v4555 = vshrl.u32 %v4554, 7
        %v4556 = vsub.s32 %v4553, %v4555
        %v4557 = vrot.slane %v4535, %v4556
        %v4559 = vunpack.c.l.s4 1983009808
        %v4560 = vunpack.c.0.s8 %v4559
        %v4561 = vlaneseq
        %v4562 = vshrl.u32 %v4561, 7
        %v4563 = vsub.s32 %v4560, %v4562
        %v4564 = vrot.slane %v4536, %v4563
        %v4565 = vcombine.low %v4557, %v4564
        %v4566 = vcombine.high %v4557, %v4564
        %v4568 = vunpack.c.l.s4 1983009808
        %v4569 = vunpack.c.0.s8 %v4568
        %v4570 = vlaneseq
        %v4571 = vshrl.u32 %v4570, 7
        %v4572 = vsub.s32 %v4569, %v4571
        %v4573 = vrot.slane %v4537, %v4572
        %v4575 = vunpack.c.l.s4 1983009808
        %v4576 = vunpack.c.0.s8 %v4575
        %v4577 = vlaneseq
        %v4578 = vshrl.u32 %v4577, 7
        %v4579 = vsub.s32 %v4576, %v4578
        %v4580 = vrot.slane %v4538, %v4579
        %v4581 = vcombine.low %v4573, %v4580
        %v4582 = vcombine.high %v4573, %v4580
        %v4584 = vunpack.c.l.s4 1983009808
        %v4585 = vunpack.c.0.s8 %v4584
        %v4586 = vlaneseq
        %v4587 = vshrl.u32 %v4586, 7
        %v4588 = vsub.s32 %v4585, %v4587
        %v4589 = vrot.slane %v4539, %v4588
        %v4591 = vunpack.c.l.s4 1983009808
        %v4592 = vunpack.c.0.s8 %v4591
        %v4593 = vlaneseq
        %v4594 = vshrl.u32 %v4593, 7
        %v4595 = vsub.s32 %v4592, %v4594
        %v4596 = vrot.slane %v4540, %v4595
        %v4597 = vcombine.low %v4589, %v4596
        %v4598 = vcombine.high %v4589, %v4596
        %v4600 = vunpack.c.l.s4 1983009808
        %v4601 = vunpack.c.0.s8 %v4600
        %v4602 = vlaneseq
        %v4603 = vshrl.u32 %v4602, 7
        %v4604 = vsub.s32 %v4601, %v4603
        %v4605 = vrot.slane %v4541, %v4604
        %v4607 = vunpack.c.l.s4 1983009808
        %v4608 = vunpack.c.0.s8 %v4607
        %v4609 = vlaneseq
        %v4610 = vshrl.u32 %v4609, 7
        %v4611 = vsub.s32 %v4608, %v4610
        %v4612 = vrot.slane %v4542, %v4611
        %v4613 = vcombine.low %v4605, %v4612
        %v4614 = vcombine.high %v4605, %v4612
        %v4616 = vshrl.u32 %v4565, 16
        %v4618 = vrot.slane %v4616, 6
        %v4619 = vshll.u32 %v4565, 16
        %v4621 = vrot.slane %v4619, 7
        %v4622 = vor.u32 %v4618, %v4621
        %v4623 = vrot.slane %v4622, 2
        %v4625 = vshll.u32 %v4566, 16
        %v4627 = vrot.slane %v4625, 7
        %v4628 = vsel %vm487, %v4623, %v4627
        %v4630 = vshrl.u32 %v4581, 16
        %v4632 = vrot.slane %v4630, 6
        %v4633 = vshll.u32 %v4581, 16
        %v4635 = vrot.slane %v4633, 7
        %v4636 = vor.u32 %v4632, %v4635
        %v4637 = vrot.slane %v4636, 2
        %v4639 = vshll.u32 %v4582, 16
        %v4641 = vrot.slane %v4639, 7
        %v4642 = vsel %vm487, %v4637, %v4641
        %v4644 = vshrl.u32 %v4597, 16
        %v4646 = vrot.slane %v4644, 6
        %v4647 = vshll.u32 %v4597, 16
        %v4649 = vrot.slane %v4647, 7
        %v4650 = vor.u32 %v4646, %v4649
        %v4651 = vrot.slane %v4650, 2
        %v4653 = vshll.u32 %v4598, 16
        %v4655 = vrot.slane %v4653, 7
        %v4656 = vsel %vm487, %v4651, %v4655
        %v4658 = vshrl.u32 %v4613, 16
        %v4660 = vrot.slane %v4658, 6
        %v4661 = vshll.u32 %v4613, 16
        %v4663 = vrot.slane %v4661, 7
        %v4664 = vor.u32 %v4660, %v4663
        %v4665 = vrot.slane %v4664, 2
        %v4667 = vshll.u32 %v4614, 16
        %v4669 = vrot.slane %v4667, 7
        %v4670 = vsel %vm487, %v4665, %v4669
        %s4671 = scalar_lea.vmem [#allocation2], 4096
        %v4672 = vld [vmem:[%s4671] sm:$0xff]
        %v4673 = vld [vmem:[%s4671 + $0x8] sm:$0xff]
        %v4674 = vld [vmem:[%s4671 + $0x10] sm:$0xff]
        %v4675 = vld [vmem:[%s4671 + $0x18] sm:$0xff]
        %v4676 = vld [vmem:[%s4671 + $0x20] sm:$0xff]
        %v4677 = vld [vmem:[%s4671 + $0x28] sm:$0xff]
        %v4678 = vld [vmem:[%s4671 + $0x30] sm:$0xff]
        %v4679 = vld [vmem:[%s4671 + $0x38] sm:$0xff]
        %v4680 = vld [vmem:[%s4671 + $0x40] sm:$0xff]
        %v4681 = vld [vmem:[%s4671 + $0x48] sm:$0xff]
        %v4682 = vld [vmem:[%s4671 + $0x50] sm:$0xff]
        %v4683 = vld [vmem:[%s4671 + $0x58] sm:$0xff]
        %v4684 = vld [vmem:[%s4671 + $0x60] sm:$0xff]
        %v4685 = vld [vmem:[%s4671 + $0x68] sm:$0xff]
        %v4686 = vld [vmem:[%s4671 + $0x70] sm:$0xff]
        %v4687 = vld [vmem:[%s4671 + $0x78] sm:$0xff]
        %v4688 = vld [vmem:[%s4671 + $0x80] sm:$0xff]
        %v4689 = vld [vmem:[%s4671 + $0x88] sm:$0xff]
        %v4690 = vld [vmem:[%s4671 + $0x90] sm:$0xff]
        %v4691 = vld [vmem:[%s4671 + $0x98] sm:$0xff]
        %v4692 = vld [vmem:[%s4671 + $0xa0] sm:$0xff]
        %v4693 = vld [vmem:[%s4671 + $0xa8] sm:$0xff]
        %v4694 = vld [vmem:[%s4671 + $0xb0] sm:$0xff]
        %v4695 = vld [vmem:[%s4671 + $0xb8] sm:$0xff]
        %v4696 = vld [vmem:[%s4671 + $0xc0] sm:$0xff]
        %v4697 = vld [vmem:[%s4671 + $0xc8] sm:$0xff]
        %v4698 = vld [vmem:[%s4671 + $0xd0] sm:$0xff]
        %v4699 = vld [vmem:[%s4671 + $0xd8] sm:$0xff]
        %v4700 = vld [vmem:[%s4671 + $0xe0] sm:$0xff]
        %v4701 = vld [vmem:[%s4671 + $0xe8] sm:$0xff]
        %v4702 = vld [vmem:[%s4671 + $0xf0] sm:$0xff]
        %v4703 = vld [vmem:[%s4671 + $0xf8] sm:$0xff]
        %v4704 = vld [vmem:[%s4671 + $0x100] sm:$0xff]
        %v4705 = vld [vmem:[%s4671 + $0x108] sm:$0xff]
        %v4706 = vld [vmem:[%s4671 + $0x110] sm:$0xff]
        %v4707 = vld [vmem:[%s4671 + $0x118] sm:$0xff]
        %v4708 = vld [vmem:[%s4671 + $0x120] sm:$0xff]
        %v4709 = vld [vmem:[%s4671 + $0x128] sm:$0xff]
        %v4710 = vld [vmem:[%s4671 + $0x130] sm:$0xff]
        %v4711 = vld [vmem:[%s4671 + $0x138] sm:$0xff]
        %v4712 = vld [vmem:[%s4671 + $0x140] sm:$0xff]
        %v4713 = vld [vmem:[%s4671 + $0x148] sm:$0xff]
        %v4714 = vld [vmem:[%s4671 + $0x150] sm:$0xff]
        %v4715 = vld [vmem:[%s4671 + $0x158] sm:$0xff]
        %v4716 = vld [vmem:[%s4671 + $0x160] sm:$0xff]
        %v4717 = vld [vmem:[%s4671 + $0x168] sm:$0xff]
        %v4718 = vld [vmem:[%s4671 + $0x170] sm:$0xff]
        %v4719 = vld [vmem:[%s4671 + $0x178] sm:$0xff]
        %v4720 = vld [vmem:[%s4671 + $0x180] sm:$0xff]
        %v4721 = vld [vmem:[%s4671 + $0x188] sm:$0xff]
        %v4722 = vld [vmem:[%s4671 + $0x190] sm:$0xff]
        %v4723 = vld [vmem:[%s4671 + $0x198] sm:$0xff]
        %v4724 = vld [vmem:[%s4671 + $0x1a0] sm:$0xff]
        %v4725 = vld [vmem:[%s4671 + $0x1a8] sm:$0xff]
        %v4726 = vld [vmem:[%s4671 + $0x1b0] sm:$0xff]
        %v4727 = vld [vmem:[%s4671 + $0x1b8] sm:$0xff]
        %v4728 = vld [vmem:[%s4671 + $0x1c0] sm:$0xff]
        %v4729 = vld [vmem:[%s4671 + $0x1c8] sm:$0xff]
        %v4730 = vld [vmem:[%s4671 + $0x1d0] sm:$0xff]
        %v4731 = vld [vmem:[%s4671 + $0x1d8] sm:$0xff]
        %v4732 = vld [vmem:[%s4671 + $0x1e0] sm:$0xff]
        %v4733 = vld [vmem:[%s4671 + $0x1e8] sm:$0xff]
        %v4734 = vld [vmem:[%s4671 + $0x1f0] sm:$0xff]
        %v4735 = vld [vmem:[%s4671 + $0x1f8] sm:$0xff]
        %v4736 = vld [vmem:[%s4671 + $0x200] sm:$0xff]
        %v4737 = vld [vmem:[%s4671 + $0x208] sm:$0xff]
        %v4738 = vld [vmem:[%s4671 + $0x210] sm:$0xff]
        %v4739 = vld [vmem:[%s4671 + $0x218] sm:$0xff]
        %v4740 = vld [vmem:[%s4671 + $0x220] sm:$0xff]
        %v4741 = vld [vmem:[%s4671 + $0x228] sm:$0xff]
        %v4742 = vld [vmem:[%s4671 + $0x230] sm:$0xff]
        %v4743 = vld [vmem:[%s4671 + $0x238] sm:$0xff]
        %v4744 = vld [vmem:[%s4671 + $0x240] sm:$0xff]
        %v4745 = vld [vmem:[%s4671 + $0x248] sm:$0xff]
        %v4746 = vld [vmem:[%s4671 + $0x250] sm:$0xff]
        %v4747 = vld [vmem:[%s4671 + $0x258] sm:$0xff]
        %v4748 = vld [vmem:[%s4671 + $0x260] sm:$0xff]
        %v4749 = vld [vmem:[%s4671 + $0x268] sm:$0xff]
        %v4750 = vld [vmem:[%s4671 + $0x270] sm:$0xff]
        %v4751 = vld [vmem:[%s4671 + $0x278] sm:$0xff]
        %v4752 = vld [vmem:[%s4671 + $0x280] sm:$0xff]
        %v4753 = vld [vmem:[%s4671 + $0x288] sm:$0xff]
        %v4754 = vld [vmem:[%s4671 + $0x290] sm:$0xff]
        %v4755 = vld [vmem:[%s4671 + $0x298] sm:$0xff]
        %v4756 = vld [vmem:[%s4671 + $0x2a0] sm:$0xff]
        %v4757 = vld [vmem:[%s4671 + $0x2a8] sm:$0xff]
        %v4758 = vld [vmem:[%s4671 + $0x2b0] sm:$0xff]
        %v4759 = vld [vmem:[%s4671 + $0x2b8] sm:$0xff]
        %v4760 = vld [vmem:[%s4671 + $0x2c0] sm:$0xff]
        %v4761 = vld [vmem:[%s4671 + $0x2c8] sm:$0xff]
        %v4762 = vld [vmem:[%s4671 + $0x2d0] sm:$0xff]
        %v4763 = vld [vmem:[%s4671 + $0x2d8] sm:$0xff]
        %v4764 = vld [vmem:[%s4671 + $0x2e0] sm:$0xff]
        %v4765 = vld [vmem:[%s4671 + $0x2e8] sm:$0xff]
        %v4766 = vld [vmem:[%s4671 + $0x2f0] sm:$0xff]
        %v4767 = vld [vmem:[%s4671 + $0x2f8] sm:$0xff]
        %v4768 = vld [vmem:[%s4671 + $0x300] sm:$0xff]
        %v4769 = vld [vmem:[%s4671 + $0x308] sm:$0xff]
        %v4770 = vld [vmem:[%s4671 + $0x310] sm:$0xff]
        %v4771 = vld [vmem:[%s4671 + $0x318] sm:$0xff]
        %v4772 = vld [vmem:[%s4671 + $0x320] sm:$0xff]
        %v4773 = vld [vmem:[%s4671 + $0x328] sm:$0xff]
        %v4774 = vld [vmem:[%s4671 + $0x330] sm:$0xff]
        %v4775 = vld [vmem:[%s4671 + $0x338] sm:$0xff]
        %v4776 = vld [vmem:[%s4671 + $0x340] sm:$0xff]
        %v4777 = vld [vmem:[%s4671 + $0x348] sm:$0xff]
        %v4778 = vld [vmem:[%s4671 + $0x350] sm:$0xff]
        %v4779 = vld [vmem:[%s4671 + $0x358] sm:$0xff]
        %v4780 = vld [vmem:[%s4671 + $0x360] sm:$0xff]
        %v4781 = vld [vmem:[%s4671 + $0x368] sm:$0xff]
        %v4782 = vld [vmem:[%s4671 + $0x370] sm:$0xff]
        %v4783 = vld [vmem:[%s4671 + $0x378] sm:$0xff]
        %v4784 = vld [vmem:[%s4671 + $0x380] sm:$0xff]
        %v4785 = vld [vmem:[%s4671 + $0x388] sm:$0xff]
        %v4786 = vld [vmem:[%s4671 + $0x390] sm:$0xff]
        %v4787 = vld [vmem:[%s4671 + $0x398] sm:$0xff]
        %v4788 = vld [vmem:[%s4671 + $0x3a0] sm:$0xff]
        %v4789 = vld [vmem:[%s4671 + $0x3a8] sm:$0xff]
        %v4790 = vld [vmem:[%s4671 + $0x3b0] sm:$0xff]
        %v4791 = vld [vmem:[%s4671 + $0x3b8] sm:$0xff]
        %v4792 = vld [vmem:[%s4671 + $0x3c0] sm:$0xff]
        %v4793 = vld [vmem:[%s4671 + $0x3c8] sm:$0xff]
        %v4794 = vld [vmem:[%s4671 + $0x3d0] sm:$0xff]
        %v4795 = vld [vmem:[%s4671 + $0x3d8] sm:$0xff]
        %v4796 = vld [vmem:[%s4671 + $0x3e0] sm:$0xff]
        %v4797 = vld [vmem:[%s4671 + $0x3e8] sm:$0xff]
        %v4798 = vld [vmem:[%s4671 + $0x3f0] sm:$0xff]
        %v4799 = vld [vmem:[%s4671 + $0x3f8] sm:$0xff]
        %v4800 = vcombine.low %v4628, %v4642
        %v4801 = vcombine.high %v4628, %v4642
        %v4802 = vcombine.low %v4656, %v4670
        %v4803 = vcombine.high %v4656, %v4670
        %v4805 = vunpack.c.l.s4 1983009808
        %v4806 = vunpack.c.0.s8 %v4805
        %v4807 = vlaneseq
        %v4808 = vshrl.u32 %v4807, 7
        %v4809 = vsub.s32 %v4806, %v4808
        %v4810 = vrot.slane %v4800, %v4809
        %v4812 = vunpack.c.l.s4 1983009808
        %v4813 = vunpack.c.0.s8 %v4812
        %v4814 = vlaneseq
        %v4815 = vshrl.u32 %v4814, 7
        %v4816 = vsub.s32 %v4813, %v4815
        %v4817 = vrot.slane %v4801, %v4816
        %v4819 = vunpack.c.l.s4 1983009808
        %v4820 = vunpack.c.0.s8 %v4819
        %v4821 = vlaneseq
        %v4822 = vshrl.u32 %v4821, 7
        %v4823 = vsub.s32 %v4820, %v4822
        %v4824 = vrot.slane %v4802, %v4823
        %v4826 = vunpack.c.l.s4 1983009808
        %v4827 = vunpack.c.0.s8 %v4826
        %v4828 = vlaneseq
        %v4829 = vshrl.u32 %v4828, 7
        %v4830 = vsub.s32 %v4827, %v4829
        %v4831 = vrot.slane %v4803, %v4830
        %v4832 = vcombine.low %v4810, %v4824
        %v4833 = vcombine.high %v4810, %v4824
        %v4834 = vcombine.low %v4817, %v4831
        %v4835 = vcombine.high %v4817, %v4831
        %v4968 = vunpack.c.l.b16 %v4672
        %v4969 = vunpack.c.h.b16 %v4672
        %v4970 = vunpack.c.l.b16 %v4673
        %v4971 = vunpack.c.h.b16 %v4673
        %v4972 = vunpack.c.l.b16 %v4674
        %v4973 = vunpack.c.h.b16 %v4674
        %v4974 = vunpack.c.l.b16 %v4675
        %v4975 = vunpack.c.h.b16 %v4675
        %v4976 = vunpack.c.l.b16 %v4676
        %v4977 = vunpack.c.h.b16 %v4676
        %v4978 = vunpack.c.l.b16 %v4677
        %v4979 = vunpack.c.h.b16 %v4677
        %v4980 = vunpack.c.l.b16 %v4678
        %v4981 = vunpack.c.h.b16 %v4678
        %v4982 = vunpack.c.l.b16 %v4679
        %v4983 = vunpack.c.h.b16 %v4679
        %v4984 = vunpack.c.l.b16 %v4680
        %v4985 = vunpack.c.h.b16 %v4680
        %v4986 = vunpack.c.l.b16 %v4681
        %v4987 = vunpack.c.h.b16 %v4681
        %v4988 = vunpack.c.l.b16 %v4682
        %v4989 = vunpack.c.h.b16 %v4682
        %v4990 = vunpack.c.l.b16 %v4683
        %v4991 = vunpack.c.h.b16 %v4683
        %v4992 = vunpack.c.l.b16 %v4684
        %v4993 = vunpack.c.h.b16 %v4684
        %v4994 = vunpack.c.l.b16 %v4685
        %v4995 = vunpack.c.h.b16 %v4685
        %v4996 = vunpack.c.l.b16 %v4686
        %v4997 = vunpack.c.h.b16 %v4686
        %v4998 = vunpack.c.l.b16 %v4687
        %v4999 = vunpack.c.h.b16 %v4687
        %v5000 = vunpack.c.l.b16 %v4688
        %v5001 = vunpack.c.h.b16 %v4688
        %v5002 = vunpack.c.l.b16 %v4689
        %v5003 = vunpack.c.h.b16 %v4689
        %v5004 = vunpack.c.l.b16 %v4690
        %v5005 = vunpack.c.h.b16 %v4690
        %v5006 = vunpack.c.l.b16 %v4691
        %v5007 = vunpack.c.h.b16 %v4691
        %v5008 = vunpack.c.l.b16 %v4692
        %v5009 = vunpack.c.h.b16 %v4692
        %v5010 = vunpack.c.l.b16 %v4693
        %v5011 = vunpack.c.h.b16 %v4693
        %v5012 = vunpack.c.l.b16 %v4694
        %v5013 = vunpack.c.h.b16 %v4694
        %v5014 = vunpack.c.l.b16 %v4695
        %v5015 = vunpack.c.h.b16 %v4695
        %v5016 = vunpack.c.l.b16 %v4696
        %v5017 = vunpack.c.h.b16 %v4696
        %v5018 = vunpack.c.l.b16 %v4697
        %v5019 = vunpack.c.h.b16 %v4697
        %v5020 = vunpack.c.l.b16 %v4698
        %v5021 = vunpack.c.h.b16 %v4698
        %v5022 = vunpack.c.l.b16 %v4699
        %v5023 = vunpack.c.h.b16 %v4699
        %v5024 = vunpack.c.l.b16 %v4700
        %v5025 = vunpack.c.h.b16 %v4700
        %v5026 = vunpack.c.l.b16 %v4701
        %v5027 = vunpack.c.h.b16 %v4701
        %v5028 = vunpack.c.l.b16 %v4702
        %v5029 = vunpack.c.h.b16 %v4702
        %v5030 = vunpack.c.l.b16 %v4703
        %v5031 = vunpack.c.h.b16 %v4703
        %v5032 = vunpack.c.l.b16 %v4704
        %v5033 = vunpack.c.h.b16 %v4704
        %v5034 = vunpack.c.l.b16 %v4705
        %v5035 = vunpack.c.h.b16 %v4705
        %v5036 = vunpack.c.l.b16 %v4706
        %v5037 = vunpack.c.h.b16 %v4706
        %v5038 = vunpack.c.l.b16 %v4707
        %v5039 = vunpack.c.h.b16 %v4707
        %v5040 = vunpack.c.l.b16 %v4708
        %v5041 = vunpack.c.h.b16 %v4708
        %v5042 = vunpack.c.l.b16 %v4709
        %v5043 = vunpack.c.h.b16 %v4709
        %v5044 = vunpack.c.l.b16 %v4710
        %v5045 = vunpack.c.h.b16 %v4710
        %v5046 = vunpack.c.l.b16 %v4711
        %v5047 = vunpack.c.h.b16 %v4711
        %v5048 = vunpack.c.l.b16 %v4712
        %v5049 = vunpack.c.h.b16 %v4712
        %v5050 = vunpack.c.l.b16 %v4713
        %v5051 = vunpack.c.h.b16 %v4713
        %v5052 = vunpack.c.l.b16 %v4714
        %v5053 = vunpack.c.h.b16 %v4714
        %v5054 = vunpack.c.l.b16 %v4715
        %v5055 = vunpack.c.h.b16 %v4715
        %v5056 = vunpack.c.l.b16 %v4716
        %v5057 = vunpack.c.h.b16 %v4716
        %v5058 = vunpack.c.l.b16 %v4717
        %v5059 = vunpack.c.h.b16 %v4717
        %v5060 = vunpack.c.l.b16 %v4718
        %v5061 = vunpack.c.h.b16 %v4718
        %v5062 = vunpack.c.l.b16 %v4719
        %v5063 = vunpack.c.h.b16 %v4719
        %v5064 = vunpack.c.l.b16 %v4720
        %v5065 = vunpack.c.h.b16 %v4720
        %v5066 = vunpack.c.l.b16 %v4721
        %v5067 = vunpack.c.h.b16 %v4721
        %v5068 = vunpack.c.l.b16 %v4722
        %v5069 = vunpack.c.h.b16 %v4722
        %v5070 = vunpack.c.l.b16 %v4723
        %v5071 = vunpack.c.h.b16 %v4723
        %v5072 = vunpack.c.l.b16 %v4724
        %v5073 = vunpack.c.h.b16 %v4724
        %v5074 = vunpack.c.l.b16 %v4725
        %v5075 = vunpack.c.h.b16 %v4725
        %v5076 = vunpack.c.l.b16 %v4726
        %v5077 = vunpack.c.h.b16 %v4726
        %v5078 = vunpack.c.l.b16 %v4727
        %v5079 = vunpack.c.h.b16 %v4727
        %v5080 = vunpack.c.l.b16 %v4728
        %v5081 = vunpack.c.h.b16 %v4728
        %v5082 = vunpack.c.l.b16 %v4729
        %v5083 = vunpack.c.h.b16 %v4729
        %v5084 = vunpack.c.l.b16 %v4730
        %v5085 = vunpack.c.h.b16 %v4730
        %v5086 = vunpack.c.l.b16 %v4731
        %v5087 = vunpack.c.h.b16 %v4731
        %v5088 = vunpack.c.l.b16 %v4732
        %v5089 = vunpack.c.h.b16 %v4732
        %v5090 = vunpack.c.l.b16 %v4733
        %v5091 = vunpack.c.h.b16 %v4733
        %v5092 = vunpack.c.l.b16 %v4734
        %v5093 = vunpack.c.h.b16 %v4734
        %v5094 = vunpack.c.l.b16 %v4735
        %v5095 = vunpack.c.h.b16 %v4735
        %v5096 = vunpack.c.l.b16 %v4736
        %v5097 = vunpack.c.h.b16 %v4736
        %v5098 = vunpack.c.l.b16 %v4737
        %v5099 = vunpack.c.h.b16 %v4737
        %v5100 = vunpack.c.l.b16 %v4738
        %v5101 = vunpack.c.h.b16 %v4738
        %v5102 = vunpack.c.l.b16 %v4739
        %v5103 = vunpack.c.h.b16 %v4739
        %v5104 = vunpack.c.l.b16 %v4740
        %v5105 = vunpack.c.h.b16 %v4740
        %v5106 = vunpack.c.l.b16 %v4741
        %v5107 = vunpack.c.h.b16 %v4741
        %v5108 = vunpack.c.l.b16 %v4742
        %v5109 = vunpack.c.h.b16 %v4742
        %v5110 = vunpack.c.l.b16 %v4743
        %v5111 = vunpack.c.h.b16 %v4743
        %v5112 = vunpack.c.l.b16 %v4744
        %v5113 = vunpack.c.h.b16 %v4744
        %v5114 = vunpack.c.l.b16 %v4745
        %v5115 = vunpack.c.h.b16 %v4745
        %v5116 = vunpack.c.l.b16 %v4746
        %v5117 = vunpack.c.h.b16 %v4746
        %v5118 = vunpack.c.l.b16 %v4747
        %v5119 = vunpack.c.h.b16 %v4747
        %v5120 = vunpack.c.l.b16 %v4748
        %v5121 = vunpack.c.h.b16 %v4748
        %v5122 = vunpack.c.l.b16 %v4749
        %v5123 = vunpack.c.h.b16 %v4749
        %v5124 = vunpack.c.l.b16 %v4750
        %v5125 = vunpack.c.h.b16 %v4750
        %v5126 = vunpack.c.l.b16 %v4751
        %v5127 = vunpack.c.h.b16 %v4751
        %v5128 = vunpack.c.l.b16 %v4752
        %v5129 = vunpack.c.h.b16 %v4752
        %v5130 = vunpack.c.l.b16 %v4753
        %v5131 = vunpack.c.h.b16 %v4753
        %v5132 = vunpack.c.l.b16 %v4754
        %v5133 = vunpack.c.h.b16 %v4754
        %v5134 = vunpack.c.l.b16 %v4755
        %v5135 = vunpack.c.h.b16 %v4755
        %v5136 = vunpack.c.l.b16 %v4756
        %v5137 = vunpack.c.h.b16 %v4756
        %v5138 = vunpack.c.l.b16 %v4757
        %v5139 = vunpack.c.h.b16 %v4757
        %v5140 = vunpack.c.l.b16 %v4758
        %v5141 = vunpack.c.h.b16 %v4758
        %v5142 = vunpack.c.l.b16 %v4759
        %v5143 = vunpack.c.h.b16 %v4759
        %v5144 = vunpack.c.l.b16 %v4760
        %v5145 = vunpack.c.h.b16 %v4760
        %v5146 = vunpack.c.l.b16 %v4761
        %v5147 = vunpack.c.h.b16 %v4761
        %v5148 = vunpack.c.l.b16 %v4762
        %v5149 = vunpack.c.h.b16 %v4762
        %v5150 = vunpack.c.l.b16 %v4763
        %v5151 = vunpack.c.h.b16 %v4763
        %v5152 = vunpack.c.l.b16 %v4764
        %v5153 = vunpack.c.h.b16 %v4764
        %v5154 = vunpack.c.l.b16 %v4765
        %v5155 = vunpack.c.h.b16 %v4765
        %v5156 = vunpack.c.l.b16 %v4766
        %v5157 = vunpack.c.h.b16 %v4766
        %v5158 = vunpack.c.l.b16 %v4767
        %v5159 = vunpack.c.h.b16 %v4767
        %v5160 = vunpack.c.l.b16 %v4768
        %v5161 = vunpack.c.h.b16 %v4768
        %v5162 = vunpack.c.l.b16 %v4769
        %v5163 = vunpack.c.h.b16 %v4769
        %v5164 = vunpack.c.l.b16 %v4770
        %v5165 = vunpack.c.h.b16 %v4770
        %v5166 = vunpack.c.l.b16 %v4771
        %v5167 = vunpack.c.h.b16 %v4771
        %v5168 = vunpack.c.l.b16 %v4772
        %v5169 = vunpack.c.h.b16 %v4772
        %v5170 = vunpack.c.l.b16 %v4773
        %v5171 = vunpack.c.h.b16 %v4773
        %v5172 = vunpack.c.l.b16 %v4774
        %v5173 = vunpack.c.h.b16 %v4774
        %v5174 = vunpack.c.l.b16 %v4775
        %v5175 = vunpack.c.h.b16 %v4775
        %v5176 = vunpack.c.l.b16 %v4776
        %v5177 = vunpack.c.h.b16 %v4776
        %v5178 = vunpack.c.l.b16 %v4777
        %v5179 = vunpack.c.h.b16 %v4777
        %v5180 = vunpack.c.l.b16 %v4778
        %v5181 = vunpack.c.h.b16 %v4778
        %v5182 = vunpack.c.l.b16 %v4779
        %v5183 = vunpack.c.h.b16 %v4779
        %v5184 = vunpack.c.l.b16 %v4780
        %v5185 = vunpack.c.h.b16 %v4780
        %v5186 = vunpack.c.l.b16 %v4781
        %v5187 = vunpack.c.h.b16 %v4781
        %v5188 = vunpack.c.l.b16 %v4782
        %v5189 = vunpack.c.h.b16 %v4782
        %v5190 = vunpack.c.l.b16 %v4783
        %v5191 = vunpack.c.h.b16 %v4783
        %v5192 = vunpack.c.l.b16 %v4784
        %v5193 = vunpack.c.h.b16 %v4784
        %v5194 = vunpack.c.l.b16 %v4785
        %v5195 = vunpack.c.h.b16 %v4785
        %v5196 = vunpack.c.l.b16 %v4786
        %v5197 = vunpack.c.h.b16 %v4786
        %v5198 = vunpack.c.l.b16 %v4787
        %v5199 = vunpack.c.h.b16 %v4787
        %v5200 = vunpack.c.l.b16 %v4788
        %v5201 = vunpack.c.h.b16 %v4788
        %v5202 = vunpack.c.l.b16 %v4789
        %v5203 = vunpack.c.h.b16 %v4789
        %v5204 = vunpack.c.l.b16 %v4790
        %v5205 = vunpack.c.h.b16 %v4790
        %v5206 = vunpack.c.l.b16 %v4791
        %v5207 = vunpack.c.h.b16 %v4791
        %v5208 = vunpack.c.l.b16 %v4792
        %v5209 = vunpack.c.h.b16 %v4792
        %v5210 = vunpack.c.l.b16 %v4793
        %v5211 = vunpack.c.h.b16 %v4793
        %v5212 = vunpack.c.l.b16 %v4794
        %v5213 = vunpack.c.h.b16 %v4794
        %v5214 = vunpack.c.l.b16 %v4795
        %v5215 = vunpack.c.h.b16 %v4795
        %v5216 = vunpack.c.l.b16 %v4796
        %v5217 = vunpack.c.h.b16 %v4796
        %v5218 = vunpack.c.l.b16 %v4797
        %v5219 = vunpack.c.h.b16 %v4797
        %v5220 = vunpack.c.l.b16 %v4798
        %v5221 = vunpack.c.h.b16 %v4798
        %v5222 = vunpack.c.l.b16 %v4799
        %v5223 = vunpack.c.h.b16 %v4799
        %v5224 = vpack.c.b16 %v4972, %v4968
        %v5225 = vpack.c.b16 %v4973, %v4969
        %v5226 = vpack.c.b16 %v4974, %v4970
        %v5227 = vpack.c.b16 %v4975, %v4971
        %v5228 = vpack.c.b16 %v4980, %v4976
        %v5229 = vpack.c.b16 %v4981, %v4977
        %v5230 = vpack.c.b16 %v4982, %v4978
        %v5231 = vpack.c.b16 %v4983, %v4979
        %v5232 = vpack.c.b16 %v4988, %v4984
        %v5233 = vpack.c.b16 %v4989, %v4985
        %v5234 = vpack.c.b16 %v4990, %v4986
        %v5235 = vpack.c.b16 %v4991, %v4987
        %v5236 = vpack.c.b16 %v4996, %v4992
        %v5237 = vpack.c.b16 %v4997, %v4993
        %v5238 = vpack.c.b16 %v4998, %v4994
        %v5239 = vpack.c.b16 %v4999, %v4995
        %v5240 = vpack.c.b16 %v5004, %v5000
        %v5241 = vpack.c.b16 %v5005, %v5001
        %v5242 = vpack.c.b16 %v5006, %v5002
        %v5243 = vpack.c.b16 %v5007, %v5003
        %v5244 = vpack.c.b16 %v5012, %v5008
        %v5245 = vpack.c.b16 %v5013, %v5009
        %v5246 = vpack.c.b16 %v5014, %v5010
        %v5247 = vpack.c.b16 %v5015, %v5011
        %v5248 = vpack.c.b16 %v5020, %v5016
        %v5249 = vpack.c.b16 %v5021, %v5017
        %v5250 = vpack.c.b16 %v5022, %v5018
        %v5251 = vpack.c.b16 %v5023, %v5019
        %v5252 = vpack.c.b16 %v5028, %v5024
        %v5253 = vpack.c.b16 %v5029, %v5025
        %v5254 = vpack.c.b16 %v5030, %v5026
        %v5255 = vpack.c.b16 %v5031, %v5027
        %v5256 = vpack.c.b16 %v5036, %v5032
        %v5257 = vpack.c.b16 %v5037, %v5033
        %v5258 = vpack.c.b16 %v5038, %v5034
        %v5259 = vpack.c.b16 %v5039, %v5035
        %v5260 = vpack.c.b16 %v5044, %v5040
        %v5261 = vpack.c.b16 %v5045, %v5041
        %v5262 = vpack.c.b16 %v5046, %v5042
        %v5263 = vpack.c.b16 %v5047, %v5043
        %v5264 = vpack.c.b16 %v5052, %v5048
        %v5265 = vpack.c.b16 %v5053, %v5049
        %v5266 = vpack.c.b16 %v5054, %v5050
        %v5267 = vpack.c.b16 %v5055, %v5051
        %v5268 = vpack.c.b16 %v5060, %v5056
        %v5269 = vpack.c.b16 %v5061, %v5057
        %v5270 = vpack.c.b16 %v5062, %v5058
        %v5271 = vpack.c.b16 %v5063, %v5059
        %v5272 = vpack.c.b16 %v5068, %v5064
        %v5273 = vpack.c.b16 %v5069, %v5065
        %v5274 = vpack.c.b16 %v5070, %v5066
        %v5275 = vpack.c.b16 %v5071, %v5067
        %v5276 = vpack.c.b16 %v5076, %v5072
        %v5277 = vpack.c.b16 %v5077, %v5073
        %v5278 = vpack.c.b16 %v5078, %v5074
        %v5279 = vpack.c.b16 %v5079, %v5075
        %v5280 = vpack.c.b16 %v5084, %v5080
        %v5281 = vpack.c.b16 %v5085, %v5081
        %v5282 = vpack.c.b16 %v5086, %v5082
        %v5283 = vpack.c.b16 %v5087, %v5083
        %v5284 = vpack.c.b16 %v5092, %v5088
        %v5285 = vpack.c.b16 %v5093, %v5089
        %v5286 = vpack.c.b16 %v5094, %v5090
        %v5287 = vpack.c.b16 %v5095, %v5091
        %v5288 = vpack.c.b16 %v5100, %v5096
        %v5289 = vpack.c.b16 %v5101, %v5097
        %v5290 = vpack.c.b16 %v5102, %v5098
        %v5291 = vpack.c.b16 %v5103, %v5099
        %v5292 = vpack.c.b16 %v5108, %v5104
        %v5293 = vpack.c.b16 %v5109, %v5105
        %v5294 = vpack.c.b16 %v5110, %v5106
        %v5295 = vpack.c.b16 %v5111, %v5107
        %v5296 = vpack.c.b16 %v5116, %v5112
        %v5297 = vpack.c.b16 %v5117, %v5113
        %v5298 = vpack.c.b16 %v5118, %v5114
        %v5299 = vpack.c.b16 %v5119, %v5115
        %v5300 = vpack.c.b16 %v5124, %v5120
        %v5301 = vpack.c.b16 %v5125, %v5121
        %v5302 = vpack.c.b16 %v5126, %v5122
        %v5303 = vpack.c.b16 %v5127, %v5123
        %v5304 = vpack.c.b16 %v5132, %v5128
        %v5305 = vpack.c.b16 %v5133, %v5129
        %v5306 = vpack.c.b16 %v5134, %v5130
        %v5307 = vpack.c.b16 %v5135, %v5131
        %v5308 = vpack.c.b16 %v5140, %v5136
        %v5309 = vpack.c.b16 %v5141, %v5137
        %v5310 = vpack.c.b16 %v5142, %v5138
        %v5311 = vpack.c.b16 %v5143, %v5139
        %v5312 = vpack.c.b16 %v5148, %v5144
        %v5313 = vpack.c.b16 %v5149, %v5145
        %v5314 = vpack.c.b16 %v5150, %v5146
        %v5315 = vpack.c.b16 %v5151, %v5147
        %v5316 = vpack.c.b16 %v5156, %v5152
        %v5317 = vpack.c.b16 %v5157, %v5153
        %v5318 = vpack.c.b16 %v5158, %v5154
        %v5319 = vpack.c.b16 %v5159, %v5155
        %v5320 = vpack.c.b16 %v5164, %v5160
        %v5321 = vpack.c.b16 %v5165, %v5161
        %v5322 = vpack.c.b16 %v5166, %v5162
        %v5323 = vpack.c.b16 %v5167, %v5163
        %v5324 = vpack.c.b16 %v5172, %v5168
        %v5325 = vpack.c.b16 %v5173, %v5169
        %v5326 = vpack.c.b16 %v5174, %v5170
        %v5327 = vpack.c.b16 %v5175, %v5171
        %v5328 = vpack.c.b16 %v5180, %v5176
        %v5329 = vpack.c.b16 %v5181, %v5177
        %v5330 = vpack.c.b16 %v5182, %v5178
        %v5331 = vpack.c.b16 %v5183, %v5179
        %v5332 = vpack.c.b16 %v5188, %v5184
        %v5333 = vpack.c.b16 %v5189, %v5185
        %v5334 = vpack.c.b16 %v5190, %v5186
        %v5335 = vpack.c.b16 %v5191, %v5187
        %v5336 = vpack.c.b16 %v5196, %v5192
        %v5337 = vpack.c.b16 %v5197, %v5193
        %v5338 = vpack.c.b16 %v5198, %v5194
        %v5339 = vpack.c.b16 %v5199, %v5195
        %v5340 = vpack.c.b16 %v5204, %v5200
        %v5341 = vpack.c.b16 %v5205, %v5201
        %v5342 = vpack.c.b16 %v5206, %v5202
        %v5343 = vpack.c.b16 %v5207, %v5203
        %v5344 = vpack.c.b16 %v5212, %v5208
        %v5345 = vpack.c.b16 %v5213, %v5209
        %v5346 = vpack.c.b16 %v5214, %v5210
        %v5347 = vpack.c.b16 %v5215, %v5211
        %v5348 = vpack.c.b16 %v5220, %v5216
        %v5349 = vpack.c.b16 %v5221, %v5217
        %v5350 = vpack.c.b16 %v5222, %v5218
        %v5351 = vpack.c.b16 %v5223, %v5219
        %5480 = vmatprep.subr.bf16.mxu0 %v5253
        %5481 = vmatpush1.bf16.msra.mxu0 %v5252
        %5482 = vmatprep.subr.bf16.mxu0 %v5249
        %5483 = vmatpush1.bf16.msra.mxu0 %v5248
        %5484 = vmatprep.subr.bf16.mxu0 %v5245
        %5485 = vmatpush1.bf16.msra.mxu0 %v5244
        %5486 = vmatprep.subr.bf16.mxu0 %v5241
        %5487 = vmatpush1.bf16.msra.mxu0 %v5240
        %5488 = vmatprep.subr.bf16.mxu0 %v5237
        %5489 = vmatpush1.bf16.msra.mxu0 %v5236
        %5490 = vmatprep.subr.bf16.mxu0 %v5233
        %5491 = vmatpush1.bf16.msra.mxu0 %v5232
        %5492 = vmatprep.subr.bf16.mxu0 %v5229
        %5493 = vmatpush1.bf16.msra.mxu0 %v5228
        %5494 = vmatprep.subr.bf16.mxu0 %v5225
        %5495 = vmatpush1.bf16.msra.mxu0 %v5224
        %5496 = vmatprep.subr.bf16.mxu0 %v5285
        %5497 = vmatpush2.bf16.msra.mxu0 %v5284
        %5498 = vmatprep.subr.bf16.mxu0 %v5281
        %5499 = vmatpush2.bf16.msra.mxu0 %v5280
        %5500 = vmatprep.subr.bf16.mxu0 %v5277
        %5501 = vmatpush2.bf16.msra.mxu0 %v5276
        %5502 = vmatprep.subr.bf16.mxu0 %v5273
        %5503 = vmatpush2.bf16.msra.mxu0 %v5272
        %5504 = vmatprep.subr.bf16.mxu0 %v5269
        %5505 = vmatpush2.bf16.msra.mxu0 %v5268
        %5506 = vmatprep.subr.bf16.mxu0 %v5265
        %5507 = vmatpush2.bf16.msra.mxu0 %v5264
        %5508 = vmatprep.subr.bf16.mxu0 %v5261
        %5509 = vmatpush2.bf16.msra.mxu0 %v5260
        %5510 = vmatprep.subr.bf16.mxu0 %v5257
        %5511 = vmatpush2.bf16.msra.mxu0 %v5256
        %5512 = vmatprep.mubr.bf16.mxu0 %v4833
        %5513 = vmatmul.mubr.bf16.gmra.mxu0 %v4832
        %v5514 = vpop.f32.mrf.mxu0
        %v5515 = vadd.f32 0.0, %v5514
        %v5516 = vpop.f32.mrf.mxu0
        %v5517 = vadd.f32 0.0, %v5516
        %v5518 = vpop.f32.mrf.mxu0
        %v5519 = vadd.f32 0.0, %v5518
        %v5520 = vpop.f32.mrf.mxu0
        %v5521 = vadd.f32 0.0, %v5520
        %5522 = vdwg.mxu0
        %5523 = vmatprep.subr.bf16.mxu0 %v5317
        %5524 = vmatpush1.bf16.msra.mxu0 %v5316
        %5525 = vmatprep.subr.bf16.mxu0 %v5313
        %5526 = vmatpush1.bf16.msra.mxu0 %v5312
        %5527 = vmatprep.subr.bf16.mxu0 %v5309
        %5528 = vmatpush1.bf16.msra.mxu0 %v5308
        %5529 = vmatprep.subr.bf16.mxu0 %v5305
        %5530 = vmatpush1.bf16.msra.mxu0 %v5304
        %5531 = vmatprep.subr.bf16.mxu0 %v5301
        %5532 = vmatpush1.bf16.msra.mxu0 %v5300
        %5533 = vmatprep.subr.bf16.mxu0 %v5297
        %5534 = vmatpush1.bf16.msra.mxu0 %v5296
        %5535 = vmatprep.subr.bf16.mxu0 %v5293
        %5536 = vmatpush1.bf16.msra.mxu0 %v5292
        %5537 = vmatprep.subr.bf16.mxu0 %v5289
        %5538 = vmatpush1.bf16.msra.mxu0 %v5288
        %5539 = vmatprep.subr.bf16.mxu0 %v5349
        %5540 = vmatpush2.bf16.msra.mxu0 %v5348
        %5541 = vmatprep.subr.bf16.mxu0 %v5345
        %5542 = vmatpush2.bf16.msra.mxu0 %v5344
        %5543 = vmatprep.subr.bf16.mxu0 %v5341
        %5544 = vmatpush2.bf16.msra.mxu0 %v5340
        %5545 = vmatprep.subr.bf16.mxu0 %v5337
        %5546 = vmatpush2.bf16.msra.mxu0 %v5336
        %5547 = vmatprep.subr.bf16.mxu0 %v5333
        %5548 = vmatpush2.bf16.msra.mxu0 %v5332
        %5549 = vmatprep.subr.bf16.mxu0 %v5329
        %5550 = vmatpush2.bf16.msra.mxu0 %v5328
        %5551 = vmatprep.subr.bf16.mxu0 %v5325
        %5552 = vmatpush2.bf16.msra.mxu0 %v5324
        %5553 = vmatprep.subr.bf16.mxu0 %v5321
        %5554 = vmatpush2.bf16.msra.mxu0 %v5320
        %5555 = vmatprep.mubr.bf16.mxu0 %v4835
        %5556 = vmatmul.mubr.bf16.gmra.mxu0 %v4834
        %v5557 = vpop.f32.mrf.mxu0
        %v5558 = vadd.f32 %v5515, %v5557
        %v5559 = vpop.f32.mrf.mxu0
        %v5560 = vadd.f32 %v5517, %v5559
        %v5561 = vpop.f32.mrf.mxu0
        %v5562 = vadd.f32 %v5519, %v5561
        %v5563 = vpop.f32.mrf.mxu0
        %v5564 = vadd.f32 %v5521, %v5563
        %5565 = vdwg.mxu0
        %5566 = vmatprep.subr.bf16.mxu0 %v5255
        %5567 = vmatpush1.bf16.msra.mxu0 %v5254
        %5568 = vmatprep.subr.bf16.mxu0 %v5251
        %5569 = vmatpush1.bf16.msra.mxu0 %v5250
        %5570 = vmatprep.subr.bf16.mxu0 %v5247
        %5571 = vmatpush1.bf16.msra.mxu0 %v5246
        %5572 = vmatprep.subr.bf16.mxu0 %v5243
        %5573 = vmatpush1.bf16.msra.mxu0 %v5242
        %5574 = vmatprep.subr.bf16.mxu0 %v5239
        %5575 = vmatpush1.bf16.msra.mxu0 %v5238
        %5576 = vmatprep.subr.bf16.mxu0 %v5235
        %5577 = vmatpush1.bf16.msra.mxu0 %v5234
        %5578 = vmatprep.subr.bf16.mxu0 %v5231
        %5579 = vmatpush1.bf16.msra.mxu0 %v5230
        %5580 = vmatprep.subr.bf16.mxu0 %v5227
        %5581 = vmatpush1.bf16.msra.mxu0 %v5226
        %5582 = vmatprep.subr.bf16.mxu0 %v5287
        %5583 = vmatpush2.bf16.msra.mxu0 %v5286
        %5584 = vmatprep.subr.bf16.mxu0 %v5283
        %5585 = vmatpush2.bf16.msra.mxu0 %v5282
        %5586 = vmatprep.subr.bf16.mxu0 %v5279
        %5587 = vmatpush2.bf16.msra.mxu0 %v5278
        %5588 = vmatprep.subr.bf16.mxu0 %v5275
        %5589 = vmatpush2.bf16.msra.mxu0 %v5274
        %5590 = vmatprep.subr.bf16.mxu0 %v5271
        %5591 = vmatpush2.bf16.msra.mxu0 %v5270
        %5592 = vmatprep.subr.bf16.mxu0 %v5267
        %5593 = vmatpush2.bf16.msra.mxu0 %v5266
        %5594 = vmatprep.subr.bf16.mxu0 %v5263
        %5595 = vmatpush2.bf16.msra.mxu0 %v5262
        %5596 = vmatprep.subr.bf16.mxu0 %v5259
        %5597 = vmatpush2.bf16.msra.mxu0 %v5258
        %5598 = vmatprep.mubr.bf16.mxu0 %v4833
        %5599 = vmatmul.mubr.bf16.gmra.mxu0 %v4832
        %v5600 = vpop.f32.mrf.mxu0
        %v5601 = vadd.f32 0.0, %v5600
        %v5602 = vpop.f32.mrf.mxu0
        %v5603 = vadd.f32 0.0, %v5602
        %v5604 = vpop.f32.mrf.mxu0
        %v5605 = vadd.f32 0.0, %v5604
        %v5606 = vpop.f32.mrf.mxu0
        %v5607 = vadd.f32 0.0, %v5606
        %5608 = vdwg.mxu0
        %5609 = vmatprep.subr.bf16.mxu0 %v5319
        %5610 = vmatpush1.bf16.msra.mxu0 %v5318
        %5611 = vmatprep.subr.bf16.mxu0 %v5315
        %5612 = vmatpush1.bf16.msra.mxu0 %v5314
        %5613 = vmatprep.subr.bf16.mxu0 %v5311
        %5614 = vmatpush1.bf16.msra.mxu0 %v5310
        %5615 = vmatprep.subr.bf16.mxu0 %v5307
        %5616 = vmatpush1.bf16.msra.mxu0 %v5306
        %5617 = vmatprep.subr.bf16.mxu0 %v5303
        %5618 = vmatpush1.bf16.msra.mxu0 %v5302
        %5619 = vmatprep.subr.bf16.mxu0 %v5299
        %5620 = vmatpush1.bf16.msra.mxu0 %v5298
        %5621 = vmatprep.subr.bf16.mxu0 %v5295
        %5622 = vmatpush1.bf16.msra.mxu0 %v5294
        %5623 = vmatprep.subr.bf16.mxu0 %v5291
        %5624 = vmatpush1.bf16.msra.mxu0 %v5290
        %5625 = vmatprep.subr.bf16.mxu0 %v5351
        %5626 = vmatpush2.bf16.msra.mxu0 %v5350
        %5627 = vmatprep.subr.bf16.mxu0 %v5347
        %5628 = vmatpush2.bf16.msra.mxu0 %v5346
        %5629 = vmatprep.subr.bf16.mxu0 %v5343
        %5630 = vmatpush2.bf16.msra.mxu0 %v5342
        %5631 = vmatprep.subr.bf16.mxu0 %v5339
        %5632 = vmatpush2.bf16.msra.mxu0 %v5338
        %5633 = vmatprep.subr.bf16.mxu0 %v5335
        %5634 = vmatpush2.bf16.msra.mxu0 %v5334
        %5635 = vmatprep.subr.bf16.mxu0 %v5331
        %5636 = vmatpush2.bf16.msra.mxu0 %v5330
        %5637 = vmatprep.subr.bf16.mxu0 %v5327
        %5638 = vmatpush2.bf16.msra.mxu0 %v5326
        %5639 = vmatprep.subr.bf16.mxu0 %v5323
        %5640 = vmatpush2.bf16.msra.mxu0 %v5322
        %5641 = vmatprep.mubr.bf16.mxu0 %v4835
        %5642 = vmatmul.mubr.bf16.gmra.mxu0 %v4834
        %v5643 = vpop.f32.mrf.mxu0
        %v5644 = vadd.f32 %v5601, %v5643
        %v5645 = vpop.f32.mrf.mxu0
        %v5646 = vadd.f32 %v5603, %v5645
        %v5647 = vpop.f32.mrf.mxu0
        %v5648 = vadd.f32 %v5605, %v5647
        %v5649 = vpop.f32.mrf.mxu0
        %v5650 = vadd.f32 %v5607, %v5649
        %5651 = vdwg.mxu0
        %v5652 = vadd.f32 %v4527, %v5558
        %v5653 = vadd.f32 %v4528, %v5560
        %v5654 = vadd.f32 %v4529, %v5644
        %v5655 = vadd.f32 %v4530, %v5646
        %v5656 = vadd.f32 %v4531, %v5562
        %v5657 = vadd.f32 %v4532, %v5564
        %v5658 = vadd.f32 %v4533, %v5648
        %v5659 = vadd.f32 %v4534, %v5650
        %v5660 = vld [vmem:[%s3469] sm:$0x66]
        %v5661 = vld [vmem:[%s3469 + $0x8] sm:$0x66]
        %v5662 = vld [vmem:[%s3469 + $0x10] sm:$0x66]
        %v5663 = vld [vmem:[%s3469 + $0x18] sm:$0x66]
        %v5664 = vld [vmem:[%s3469 + $0x20] sm:$0x66]
        %v5665 = vld [vmem:[%s3469 + $0x28] sm:$0x66]
        %v5666 = vld [vmem:[%s3469 + $0x30] sm:$0x66]
        %v5667 = vld [vmem:[%s3469 + $0x38] sm:$0x66]
        %v5677 = vunpack.c.l.s4 1983009808
        %v5678 = vunpack.c.0.s8 %v5677
        %v5679 = vlaneseq
        %v5680 = vshrl.u32 %v5679, 7
        %v5681 = vsub.s32 %v5678, %v5680
        %v5682 = vrot.slane %v5660, %v5681
        %v5684 = vunpack.c.l.s4 1983009808
        %v5685 = vunpack.c.0.s8 %v5684
        %v5686 = vlaneseq
        %v5687 = vshrl.u32 %v5686, 7
        %v5688 = vsub.s32 %v5685, %v5687
        %v5689 = vrot.slane %v5661, %v5688
        %v5690 = vcombine.low %v5682, %v5689
        %v5691 = vcombine.high %v5682, %v5689
        %v5693 = vunpack.c.l.s4 1983009808
        %v5694 = vunpack.c.0.s8 %v5693
        %v5695 = vlaneseq
        %v5696 = vshrl.u32 %v5695, 7
        %v5697 = vsub.s32 %v5694, %v5696
        %v5698 = vrot.slane %v5662, %v5697
        %v5700 = vunpack.c.l.s4 1983009808
        %v5701 = vunpack.c.0.s8 %v5700
        %v5702 = vlaneseq
        %v5703 = vshrl.u32 %v5702, 7
        %v5704 = vsub.s32 %v5701, %v5703
        %v5705 = vrot.slane %v5663, %v5704
        %v5706 = vcombine.low %v5698, %v5705
        %v5707 = vcombine.high %v5698, %v5705
        %v5709 = vunpack.c.l.s4 1983009808
        %v5710 = vunpack.c.0.s8 %v5709
        %v5711 = vlaneseq
        %v5712 = vshrl.u32 %v5711, 7
        %v5713 = vsub.s32 %v5710, %v5712
        %v5714 = vrot.slane %v5664, %v5713
        %v5716 = vunpack.c.l.s4 1983009808
        %v5717 = vunpack.c.0.s8 %v5716
        %v5718 = vlaneseq
        %v5719 = vshrl.u32 %v5718, 7
        %v5720 = vsub.s32 %v5717, %v5719
        %v5721 = vrot.slane %v5665, %v5720
        %v5722 = vcombine.low %v5714, %v5721
        %v5723 = vcombine.high %v5714, %v5721
        %v5725 = vunpack.c.l.s4 1983009808
        %v5726 = vunpack.c.0.s8 %v5725
        %v5727 = vlaneseq
        %v5728 = vshrl.u32 %v5727, 7
        %v5729 = vsub.s32 %v5726, %v5728
        %v5730 = vrot.slane %v5666, %v5729
        %v5732 = vunpack.c.l.s4 1983009808
        %v5733 = vunpack.c.0.s8 %v5732
        %v5734 = vlaneseq
        %v5735 = vshrl.u32 %v5734, 7
        %v5736 = vsub.s32 %v5733, %v5735
        %v5737 = vrot.slane %v5667, %v5736
        %v5738 = vcombine.low %v5730, %v5737
        %v5739 = vcombine.high %v5730, %v5737
        %v5740 = vrot.slane %v5690, 7
        %v5741 = vrot.slane %v5740, 2
        %v5742 = vrot.slane %v5691, 7
        %v5743 = vsel %vm2463, %v5741, %v5742
        %v5744 = vrot.slane %v5706, 7
        %v5745 = vrot.slane %v5744, 2
        %v5746 = vrot.slane %v5707, 7
        %v5747 = vsel %vm2463, %v5745, %v5746
        %v5748 = vrot.slane %v5722, 7
        %v5749 = vrot.slane %v5748, 2
        %v5750 = vrot.slane %v5723, 7
        %v5751 = vsel %vm2463, %v5749, %v5750
        %v5752 = vrot.slane %v5738, 7
        %v5753 = vrot.slane %v5752, 2
        %v5754 = vrot.slane %v5739, 7
        %v5755 = vsel %vm2463, %v5753, %v5754
        %s5756 = scalar_lea.vmem [#allocation2], 5120
        %v5757 = vld [vmem:[%s5756] sm:$0xff]
        %v5758 = vld [vmem:[%s5756 + $0x8] sm:$0xff]
        %v5759 = vld [vmem:[%s5756 + $0x10] sm:$0xff]
        %v5760 = vld [vmem:[%s5756 + $0x18] sm:$0xff]
        %v5761 = vld [vmem:[%s5756 + $0x20] sm:$0xff]
        %v5762 = vld [vmem:[%s5756 + $0x28] sm:$0xff]
        %v5763 = vld [vmem:[%s5756 + $0x30] sm:$0xff]
        %v5764 = vld [vmem:[%s5756 + $0x38] sm:$0xff]
        %v5765 = vld [vmem:[%s5756 + $0x40] sm:$0xff]
        %v5766 = vld [vmem:[%s5756 + $0x48] sm:$0xff]
        %v5767 = vld [vmem:[%s5756 + $0x50] sm:$0xff]
        %v5768 = vld [vmem:[%s5756 + $0x58] sm:$0xff]
        %v5769 = vld [vmem:[%s5756 + $0x60] sm:$0xff]
        %v5770 = vld [vmem:[%s5756 + $0x68] sm:$0xff]
        %v5771 = vld [vmem:[%s5756 + $0x70] sm:$0xff]
        %v5772 = vld [vmem:[%s5756 + $0x78] sm:$0xff]
        %v5773 = vld [vmem:[%s5756 + $0x80] sm:$0xff]
        %v5774 = vld [vmem:[%s5756 + $0x88] sm:$0xff]
        %v5775 = vld [vmem:[%s5756 + $0x90] sm:$0xff]
        %v5776 = vld [vmem:[%s5756 + $0x98] sm:$0xff]
        %v5777 = vld [vmem:[%s5756 + $0xa0] sm:$0xff]
        %v5778 = vld [vmem:[%s5756 + $0xa8] sm:$0xff]
        %v5779 = vld [vmem:[%s5756 + $0xb0] sm:$0xff]
        %v5780 = vld [vmem:[%s5756 + $0xb8] sm:$0xff]
        %v5781 = vld [vmem:[%s5756 + $0xc0] sm:$0xff]
        %v5782 = vld [vmem:[%s5756 + $0xc8] sm:$0xff]
        %v5783 = vld [vmem:[%s5756 + $0xd0] sm:$0xff]
        %v5784 = vld [vmem:[%s5756 + $0xd8] sm:$0xff]
        %v5785 = vld [vmem:[%s5756 + $0xe0] sm:$0xff]
        %v5786 = vld [vmem:[%s5756 + $0xe8] sm:$0xff]
        %v5787 = vld [vmem:[%s5756 + $0xf0] sm:$0xff]
        %v5788 = vld [vmem:[%s5756 + $0xf8] sm:$0xff]
        %v5789 = vld [vmem:[%s5756 + $0x100] sm:$0xff]
        %v5790 = vld [vmem:[%s5756 + $0x108] sm:$0xff]
        %v5791 = vld [vmem:[%s5756 + $0x110] sm:$0xff]
        %v5792 = vld [vmem:[%s5756 + $0x118] sm:$0xff]
        %v5793 = vld [vmem:[%s5756 + $0x120] sm:$0xff]
        %v5794 = vld [vmem:[%s5756 + $0x128] sm:$0xff]
        %v5795 = vld [vmem:[%s5756 + $0x130] sm:$0xff]
        %v5796 = vld [vmem:[%s5756 + $0x138] sm:$0xff]
        %v5797 = vld [vmem:[%s5756 + $0x140] sm:$0xff]
        %v5798 = vld [vmem:[%s5756 + $0x148] sm:$0xff]
        %v5799 = vld [vmem:[%s5756 + $0x150] sm:$0xff]
        %v5800 = vld [vmem:[%s5756 + $0x158] sm:$0xff]
        %v5801 = vld [vmem:[%s5756 + $0x160] sm:$0xff]
        %v5802 = vld [vmem:[%s5756 + $0x168] sm:$0xff]
        %v5803 = vld [vmem:[%s5756 + $0x170] sm:$0xff]
        %v5804 = vld [vmem:[%s5756 + $0x178] sm:$0xff]
        %v5805 = vld [vmem:[%s5756 + $0x180] sm:$0xff]
        %v5806 = vld [vmem:[%s5756 + $0x188] sm:$0xff]
        %v5807 = vld [vmem:[%s5756 + $0x190] sm:$0xff]
        %v5808 = vld [vmem:[%s5756 + $0x198] sm:$0xff]
        %v5809 = vld [vmem:[%s5756 + $0x1a0] sm:$0xff]
        %v5810 = vld [vmem:[%s5756 + $0x1a8] sm:$0xff]
        %v5811 = vld [vmem:[%s5756 + $0x1b0] sm:$0xff]
        %v5812 = vld [vmem:[%s5756 + $0x1b8] sm:$0xff]
        %v5813 = vld [vmem:[%s5756 + $0x1c0] sm:$0xff]
        %v5814 = vld [vmem:[%s5756 + $0x1c8] sm:$0xff]
        %v5815 = vld [vmem:[%s5756 + $0x1d0] sm:$0xff]
        %v5816 = vld [vmem:[%s5756 + $0x1d8] sm:$0xff]
        %v5817 = vld [vmem:[%s5756 + $0x1e0] sm:$0xff]
        %v5818 = vld [vmem:[%s5756 + $0x1e8] sm:$0xff]
        %v5819 = vld [vmem:[%s5756 + $0x1f0] sm:$0xff]
        %v5820 = vld [vmem:[%s5756 + $0x1f8] sm:$0xff]
        %v5821 = vld [vmem:[%s5756 + $0x200] sm:$0xff]
        %v5822 = vld [vmem:[%s5756 + $0x208] sm:$0xff]
        %v5823 = vld [vmem:[%s5756 + $0x210] sm:$0xff]
        %v5824 = vld [vmem:[%s5756 + $0x218] sm:$0xff]
        %v5825 = vld [vmem:[%s5756 + $0x220] sm:$0xff]
        %v5826 = vld [vmem:[%s5756 + $0x228] sm:$0xff]
        %v5827 = vld [vmem:[%s5756 + $0x230] sm:$0xff]
        %v5828 = vld [vmem:[%s5756 + $0x238] sm:$0xff]
        %v5829 = vld [vmem:[%s5756 + $0x240] sm:$0xff]
        %v5830 = vld [vmem:[%s5756 + $0x248] sm:$0xff]
        %v5831 = vld [vmem:[%s5756 + $0x250] sm:$0xff]
        %v5832 = vld [vmem:[%s5756 + $0x258] sm:$0xff]
        %v5833 = vld [vmem:[%s5756 + $0x260] sm:$0xff]
        %v5834 = vld [vmem:[%s5756 + $0x268] sm:$0xff]
        %v5835 = vld [vmem:[%s5756 + $0x270] sm:$0xff]
        %v5836 = vld [vmem:[%s5756 + $0x278] sm:$0xff]
        %v5837 = vld [vmem:[%s5756 + $0x280] sm:$0xff]
        %v5838 = vld [vmem:[%s5756 + $0x288] sm:$0xff]
        %v5839 = vld [vmem:[%s5756 + $0x290] sm:$0xff]
        %v5840 = vld [vmem:[%s5756 + $0x298] sm:$0xff]
        %v5841 = vld [vmem:[%s5756 + $0x2a0] sm:$0xff]
        %v5842 = vld [vmem:[%s5756 + $0x2a8] sm:$0xff]
        %v5843 = vld [vmem:[%s5756 + $0x2b0] sm:$0xff]
        %v5844 = vld [vmem:[%s5756 + $0x2b8] sm:$0xff]
        %v5845 = vld [vmem:[%s5756 + $0x2c0] sm:$0xff]
        %v5846 = vld [vmem:[%s5756 + $0x2c8] sm:$0xff]
        %v5847 = vld [vmem:[%s5756 + $0x2d0] sm:$0xff]
        %v5848 = vld [vmem:[%s5756 + $0x2d8] sm:$0xff]
        %v5849 = vld [vmem:[%s5756 + $0x2e0] sm:$0xff]
        %v5850 = vld [vmem:[%s5756 + $0x2e8] sm:$0xff]
        %v5851 = vld [vmem:[%s5756 + $0x2f0] sm:$0xff]
        %v5852 = vld [vmem:[%s5756 + $0x2f8] sm:$0xff]
        %v5853 = vld [vmem:[%s5756 + $0x300] sm:$0xff]
        %v5854 = vld [vmem:[%s5756 + $0x308] sm:$0xff]
        %v5855 = vld [vmem:[%s5756 + $0x310] sm:$0xff]
        %v5856 = vld [vmem:[%s5756 + $0x318] sm:$0xff]
        %v5857 = vld [vmem:[%s5756 + $0x320] sm:$0xff]
        %v5858 = vld [vmem:[%s5756 + $0x328] sm:$0xff]
        %v5859 = vld [vmem:[%s5756 + $0x330] sm:$0xff]
        %v5860 = vld [vmem:[%s5756 + $0x338] sm:$0xff]
        %v5861 = vld [vmem:[%s5756 + $0x340] sm:$0xff]
        %v5862 = vld [vmem:[%s5756 + $0x348] sm:$0xff]
        %v5863 = vld [vmem:[%s5756 + $0x350] sm:$0xff]
        %v5864 = vld [vmem:[%s5756 + $0x358] sm:$0xff]
        %v5865 = vld [vmem:[%s5756 + $0x360] sm:$0xff]
        %v5866 = vld [vmem:[%s5756 + $0x368] sm:$0xff]
        %v5867 = vld [vmem:[%s5756 + $0x370] sm:$0xff]
        %v5868 = vld [vmem:[%s5756 + $0x378] sm:$0xff]
        %v5869 = vld [vmem:[%s5756 + $0x380] sm:$0xff]
        %v5870 = vld [vmem:[%s5756 + $0x388] sm:$0xff]
        %v5871 = vld [vmem:[%s5756 + $0x390] sm:$0xff]
        %v5872 = vld [vmem:[%s5756 + $0x398] sm:$0xff]
        %v5873 = vld [vmem:[%s5756 + $0x3a0] sm:$0xff]
        %v5874 = vld [vmem:[%s5756 + $0x3a8] sm:$0xff]
        %v5875 = vld [vmem:[%s5756 + $0x3b0] sm:$0xff]
        %v5876 = vld [vmem:[%s5756 + $0x3b8] sm:$0xff]
        %v5877 = vld [vmem:[%s5756 + $0x3c0] sm:$0xff]
        %v5878 = vld [vmem:[%s5756 + $0x3c8] sm:$0xff]
        %v5879 = vld [vmem:[%s5756 + $0x3d0] sm:$0xff]
        %v5880 = vld [vmem:[%s5756 + $0x3d8] sm:$0xff]
        %v5881 = vld [vmem:[%s5756 + $0x3e0] sm:$0xff]
        %v5882 = vld [vmem:[%s5756 + $0x3e8] sm:$0xff]
        %v5883 = vld [vmem:[%s5756 + $0x3f0] sm:$0xff]
        %v5884 = vld [vmem:[%s5756 + $0x3f8] sm:$0xff]
        %v5885 = vcombine.low %v5743, %v5747
        %v5886 = vcombine.high %v5743, %v5747
        %v5887 = vcombine.low %v5751, %v5755
        %v5888 = vcombine.high %v5751, %v5755
        %v5890 = vunpack.c.l.s4 1983009808
        %v5891 = vunpack.c.0.s8 %v5890
        %v5892 = vlaneseq
        %v5893 = vshrl.u32 %v5892, 7
        %v5894 = vsub.s32 %v5891, %v5893
        %v5895 = vrot.slane %v5885, %v5894
        %v5897 = vunpack.c.l.s4 1983009808
        %v5898 = vunpack.c.0.s8 %v5897
        %v5899 = vlaneseq
        %v5900 = vshrl.u32 %v5899, 7
        %v5901 = vsub.s32 %v5898, %v5900
        %v5902 = vrot.slane %v5886, %v5901
        %v5904 = vunpack.c.l.s4 1983009808
        %v5905 = vunpack.c.0.s8 %v5904
        %v5906 = vlaneseq
        %v5907 = vshrl.u32 %v5906, 7
        %v5908 = vsub.s32 %v5905, %v5907
        %v5909 = vrot.slane %v5887, %v5908
        %v5911 = vunpack.c.l.s4 1983009808
        %v5912 = vunpack.c.0.s8 %v5911
        %v5913 = vlaneseq
        %v5914 = vshrl.u32 %v5913, 7
        %v5915 = vsub.s32 %v5912, %v5914
        %v5916 = vrot.slane %v5888, %v5915
        %v5917 = vcombine.low %v5895, %v5909
        %v5918 = vcombine.high %v5895, %v5909
        %v5919 = vcombine.low %v5902, %v5916
        %v5920 = vcombine.high %v5902, %v5916
        %v6053 = vunpack.c.l.b16 %v5757
        %v6054 = vunpack.c.h.b16 %v5757
        %v6055 = vunpack.c.l.b16 %v5758
        %v6056 = vunpack.c.h.b16 %v5758
        %v6057 = vunpack.c.l.b16 %v5759
        %v6058 = vunpack.c.h.b16 %v5759
        %v6059 = vunpack.c.l.b16 %v5760
        %v6060 = vunpack.c.h.b16 %v5760
        %v6061 = vunpack.c.l.b16 %v5761
        %v6062 = vunpack.c.h.b16 %v5761
        %v6063 = vunpack.c.l.b16 %v5762
        %v6064 = vunpack.c.h.b16 %v5762
        %v6065 = vunpack.c.l.b16 %v5763
        %v6066 = vunpack.c.h.b16 %v5763
        %v6067 = vunpack.c.l.b16 %v5764
        %v6068 = vunpack.c.h.b16 %v5764
        %v6069 = vunpack.c.l.b16 %v5765
        %v6070 = vunpack.c.h.b16 %v5765
        %v6071 = vunpack.c.l.b16 %v5766
        %v6072 = vunpack.c.h.b16 %v5766
        %v6073 = vunpack.c.l.b16 %v5767
        %v6074 = vunpack.c.h.b16 %v5767
        %v6075 = vunpack.c.l.b16 %v5768
        %v6076 = vunpack.c.h.b16 %v5768
        %v6077 = vunpack.c.l.b16 %v5769
        %v6078 = vunpack.c.h.b16 %v5769
        %v6079 = vunpack.c.l.b16 %v5770
        %v6080 = vunpack.c.h.b16 %v5770
        %v6081 = vunpack.c.l.b16 %v5771
        %v6082 = vunpack.c.h.b16 %v5771
        %v6083 = vunpack.c.l.b16 %v5772
        %v6084 = vunpack.c.h.b16 %v5772
        %v6085 = vunpack.c.l.b16 %v5773
        %v6086 = vunpack.c.h.b16 %v5773
        %v6087 = vunpack.c.l.b16 %v5774
        %v6088 = vunpack.c.h.b16 %v5774
        %v6089 = vunpack.c.l.b16 %v5775
        %v6090 = vunpack.c.h.b16 %v5775
        %v6091 = vunpack.c.l.b16 %v5776
        %v6092 = vunpack.c.h.b16 %v5776
        %v6093 = vunpack.c.l.b16 %v5777
        %v6094 = vunpack.c.h.b16 %v5777
        %v6095 = vunpack.c.l.b16 %v5778
        %v6096 = vunpack.c.h.b16 %v5778
        %v6097 = vunpack.c.l.b16 %v5779
        %v6098 = vunpack.c.h.b16 %v5779
        %v6099 = vunpack.c.l.b16 %v5780
        %v6100 = vunpack.c.h.b16 %v5780
        %v6101 = vunpack.c.l.b16 %v5781
        %v6102 = vunpack.c.h.b16 %v5781
        %v6103 = vunpack.c.l.b16 %v5782
        %v6104 = vunpack.c.h.b16 %v5782
        %v6105 = vunpack.c.l.b16 %v5783
        %v6106 = vunpack.c.h.b16 %v5783
        %v6107 = vunpack.c.l.b16 %v5784
        %v6108 = vunpack.c.h.b16 %v5784
        %v6109 = vunpack.c.l.b16 %v5785
        %v6110 = vunpack.c.h.b16 %v5785
        %v6111 = vunpack.c.l.b16 %v5786
        %v6112 = vunpack.c.h.b16 %v5786
        %v6113 = vunpack.c.l.b16 %v5787
        %v6114 = vunpack.c.h.b16 %v5787
        %v6115 = vunpack.c.l.b16 %v5788
        %v6116 = vunpack.c.h.b16 %v5788
        %v6117 = vunpack.c.l.b16 %v5789
        %v6118 = vunpack.c.h.b16 %v5789
        %v6119 = vunpack.c.l.b16 %v5790
        %v6120 = vunpack.c.h.b16 %v5790
        %v6121 = vunpack.c.l.b16 %v5791
        %v6122 = vunpack.c.h.b16 %v5791
        %v6123 = vunpack.c.l.b16 %v5792
        %v6124 = vunpack.c.h.b16 %v5792
        %v6125 = vunpack.c.l.b16 %v5793
        %v6126 = vunpack.c.h.b16 %v5793
        %v6127 = vunpack.c.l.b16 %v5794
        %v6128 = vunpack.c.h.b16 %v5794
        %v6129 = vunpack.c.l.b16 %v5795
        %v6130 = vunpack.c.h.b16 %v5795
        %v6131 = vunpack.c.l.b16 %v5796
        %v6132 = vunpack.c.h.b16 %v5796
        %v6133 = vunpack.c.l.b16 %v5797
        %v6134 = vunpack.c.h.b16 %v5797
        %v6135 = vunpack.c.l.b16 %v5798
        %v6136 = vunpack.c.h.b16 %v5798
        %v6137 = vunpack.c.l.b16 %v5799
        %v6138 = vunpack.c.h.b16 %v5799
        %v6139 = vunpack.c.l.b16 %v5800
        %v6140 = vunpack.c.h.b16 %v5800
        %v6141 = vunpack.c.l.b16 %v5801
        %v6142 = vunpack.c.h.b16 %v5801
        %v6143 = vunpack.c.l.b16 %v5802
        %v6144 = vunpack.c.h.b16 %v5802
        %v6145 = vunpack.c.l.b16 %v5803
        %v6146 = vunpack.c.h.b16 %v5803
        %v6147 = vunpack.c.l.b16 %v5804
        %v6148 = vunpack.c.h.b16 %v5804
        %v6149 = vunpack.c.l.b16 %v5805
        %v6150 = vunpack.c.h.b16 %v5805
        %v6151 = vunpack.c.l.b16 %v5806
        %v6152 = vunpack.c.h.b16 %v5806
        %v6153 = vunpack.c.l.b16 %v5807
        %v6154 = vunpack.c.h.b16 %v5807
        %v6155 = vunpack.c.l.b16 %v5808
        %v6156 = vunpack.c.h.b16 %v5808
        %v6157 = vunpack.c.l.b16 %v5809
        %v6158 = vunpack.c.h.b16 %v5809
        %v6159 = vunpack.c.l.b16 %v5810
        %v6160 = vunpack.c.h.b16 %v5810
        %v6161 = vunpack.c.l.b16 %v5811
        %v6162 = vunpack.c.h.b16 %v5811
        %v6163 = vunpack.c.l.b16 %v5812
        %v6164 = vunpack.c.h.b16 %v5812
        %v6165 = vunpack.c.l.b16 %v5813
        %v6166 = vunpack.c.h.b16 %v5813
        %v6167 = vunpack.c.l.b16 %v5814
        %v6168 = vunpack.c.h.b16 %v5814
        %v6169 = vunpack.c.l.b16 %v5815
        %v6170 = vunpack.c.h.b16 %v5815
        %v6171 = vunpack.c.l.b16 %v5816
        %v6172 = vunpack.c.h.b16 %v5816
        %v6173 = vunpack.c.l.b16 %v5817
        %v6174 = vunpack.c.h.b16 %v5817
        %v6175 = vunpack.c.l.b16 %v5818
        %v6176 = vunpack.c.h.b16 %v5818
        %v6177 = vunpack.c.l.b16 %v5819
        %v6178 = vunpack.c.h.b16 %v5819
        %v6179 = vunpack.c.l.b16 %v5820
        %v6180 = vunpack.c.h.b16 %v5820
        %v6181 = vunpack.c.l.b16 %v5821
        %v6182 = vunpack.c.h.b16 %v5821
        %v6183 = vunpack.c.l.b16 %v5822
        %v6184 = vunpack.c.h.b16 %v5822
        %v6185 = vunpack.c.l.b16 %v5823
        %v6186 = vunpack.c.h.b16 %v5823
        %v6187 = vunpack.c.l.b16 %v5824
        %v6188 = vunpack.c.h.b16 %v5824
        %v6189 = vunpack.c.l.b16 %v5825
        %v6190 = vunpack.c.h.b16 %v5825
        %v6191 = vunpack.c.l.b16 %v5826
        %v6192 = vunpack.c.h.b16 %v5826
        %v6193 = vunpack.c.l.b16 %v5827
        %v6194 = vunpack.c.h.b16 %v5827
        %v6195 = vunpack.c.l.b16 %v5828
        %v6196 = vunpack.c.h.b16 %v5828
        %v6197 = vunpack.c.l.b16 %v5829
        %v6198 = vunpack.c.h.b16 %v5829
        %v6199 = vunpack.c.l.b16 %v5830
        %v6200 = vunpack.c.h.b16 %v5830
        %v6201 = vunpack.c.l.b16 %v5831
        %v6202 = vunpack.c.h.b16 %v5831
        %v6203 = vunpack.c.l.b16 %v5832
        %v6204 = vunpack.c.h.b16 %v5832
        %v6205 = vunpack.c.l.b16 %v5833
        %v6206 = vunpack.c.h.b16 %v5833
        %v6207 = vunpack.c.l.b16 %v5834
        %v6208 = vunpack.c.h.b16 %v5834
        %v6209 = vunpack.c.l.b16 %v5835
        %v6210 = vunpack.c.h.b16 %v5835
        %v6211 = vunpack.c.l.b16 %v5836
        %v6212 = vunpack.c.h.b16 %v5836
        %v6213 = vunpack.c.l.b16 %v5837
        %v6214 = vunpack.c.h.b16 %v5837
        %v6215 = vunpack.c.l.b16 %v5838
        %v6216 = vunpack.c.h.b16 %v5838
        %v6217 = vunpack.c.l.b16 %v5839
        %v6218 = vunpack.c.h.b16 %v5839
        %v6219 = vunpack.c.l.b16 %v5840
        %v6220 = vunpack.c.h.b16 %v5840
        %v6221 = vunpack.c.l.b16 %v5841
        %v6222 = vunpack.c.h.b16 %v5841
        %v6223 = vunpack.c.l.b16 %v5842
        %v6224 = vunpack.c.h.b16 %v5842
        %v6225 = vunpack.c.l.b16 %v5843
        %v6226 = vunpack.c.h.b16 %v5843
        %v6227 = vunpack.c.l.b16 %v5844
        %v6228 = vunpack.c.h.b16 %v5844
        %v6229 = vunpack.c.l.b16 %v5845
        %v6230 = vunpack.c.h.b16 %v5845
        %v6231 = vunpack.c.l.b16 %v5846
        %v6232 = vunpack.c.h.b16 %v5846
        %v6233 = vunpack.c.l.b16 %v5847
        %v6234 = vunpack.c.h.b16 %v5847
        %v6235 = vunpack.c.l.b16 %v5848
        %v6236 = vunpack.c.h.b16 %v5848
        %v6237 = vunpack.c.l.b16 %v5849
        %v6238 = vunpack.c.h.b16 %v5849
        %v6239 = vunpack.c.l.b16 %v5850
        %v6240 = vunpack.c.h.b16 %v5850
        %v6241 = vunpack.c.l.b16 %v5851
        %v6242 = vunpack.c.h.b16 %v5851
        %v6243 = vunpack.c.l.b16 %v5852
        %v6244 = vunpack.c.h.b16 %v5852
        %v6245 = vunpack.c.l.b16 %v5853
        %v6246 = vunpack.c.h.b16 %v5853
        %v6247 = vunpack.c.l.b16 %v5854
        %v6248 = vunpack.c.h.b16 %v5854
        %v6249 = vunpack.c.l.b16 %v5855
        %v6250 = vunpack.c.h.b16 %v5855
        %v6251 = vunpack.c.l.b16 %v5856
        %v6252 = vunpack.c.h.b16 %v5856
        %v6253 = vunpack.c.l.b16 %v5857
        %v6254 = vunpack.c.h.b16 %v5857
        %v6255 = vunpack.c.l.b16 %v5858
        %v6256 = vunpack.c.h.b16 %v5858
        %v6257 = vunpack.c.l.b16 %v5859
        %v6258 = vunpack.c.h.b16 %v5859
        %v6259 = vunpack.c.l.b16 %v5860
        %v6260 = vunpack.c.h.b16 %v5860
        %v6261 = vunpack.c.l.b16 %v5861
        %v6262 = vunpack.c.h.b16 %v5861
        %v6263 = vunpack.c.l.b16 %v5862
        %v6264 = vunpack.c.h.b16 %v5862
        %v6265 = vunpack.c.l.b16 %v5863
        %v6266 = vunpack.c.h.b16 %v5863
        %v6267 = vunpack.c.l.b16 %v5864
        %v6268 = vunpack.c.h.b16 %v5864
        %v6269 = vunpack.c.l.b16 %v5865
        %v6270 = vunpack.c.h.b16 %v5865
        %v6271 = vunpack.c.l.b16 %v5866
        %v6272 = vunpack.c.h.b16 %v5866
        %v6273 = vunpack.c.l.b16 %v5867
        %v6274 = vunpack.c.h.b16 %v5867
        %v6275 = vunpack.c.l.b16 %v5868
        %v6276 = vunpack.c.h.b16 %v5868
        %v6277 = vunpack.c.l.b16 %v5869
        %v6278 = vunpack.c.h.b16 %v5869
        %v6279 = vunpack.c.l.b16 %v5870
        %v6280 = vunpack.c.h.b16 %v5870
        %v6281 = vunpack.c.l.b16 %v5871
        %v6282 = vunpack.c.h.b16 %v5871
        %v6283 = vunpack.c.l.b16 %v5872
        %v6284 = vunpack.c.h.b16 %v5872
        %v6285 = vunpack.c.l.b16 %v5873
        %v6286 = vunpack.c.h.b16 %v5873
        %v6287 = vunpack.c.l.b16 %v5874
        %v6288 = vunpack.c.h.b16 %v5874
        %v6289 = vunpack.c.l.b16 %v5875
        %v6290 = vunpack.c.h.b16 %v5875
        %v6291 = vunpack.c.l.b16 %v5876
        %v6292 = vunpack.c.h.b16 %v5876
        %v6293 = vunpack.c.l.b16 %v5877
        %v6294 = vunpack.c.h.b16 %v5877
        %v6295 = vunpack.c.l.b16 %v5878
        %v6296 = vunpack.c.h.b16 %v5878
        %v6297 = vunpack.c.l.b16 %v5879
        %v6298 = vunpack.c.h.b16 %v5879
        %v6299 = vunpack.c.l.b16 %v5880
        %v6300 = vunpack.c.h.b16 %v5880
        %v6301 = vunpack.c.l.b16 %v5881
        %v6302 = vunpack.c.h.b16 %v5881
        %v6303 = vunpack.c.l.b16 %v5882
        %v6304 = vunpack.c.h.b16 %v5882
        %v6305 = vunpack.c.l.b16 %v5883
        %v6306 = vunpack.c.h.b16 %v5883
        %v6307 = vunpack.c.l.b16 %v5884
        %v6308 = vunpack.c.h.b16 %v5884
        %v6309 = vpack.c.b16 %v6057, %v6053
        %v6310 = vpack.c.b16 %v6058, %v6054
        %v6311 = vpack.c.b16 %v6059, %v6055
        %v6312 = vpack.c.b16 %v6060, %v6056
        %v6313 = vpack.c.b16 %v6065, %v6061
        %v6314 = vpack.c.b16 %v6066, %v6062
        %v6315 = vpack.c.b16 %v6067, %v6063
        %v6316 = vpack.c.b16 %v6068, %v6064
        %v6317 = vpack.c.b16 %v6073, %v6069
        %v6318 = vpack.c.b16 %v6074, %v6070
        %v6319 = vpack.c.b16 %v6075, %v6071
        %v6320 = vpack.c.b16 %v6076, %v6072
        %v6321 = vpack.c.b16 %v6081, %v6077
        %v6322 = vpack.c.b16 %v6082, %v6078
        %v6323 = vpack.c.b16 %v6083, %v6079
        %v6324 = vpack.c.b16 %v6084, %v6080
        %v6325 = vpack.c.b16 %v6089, %v6085
        %v6326 = vpack.c.b16 %v6090, %v6086
        %v6327 = vpack.c.b16 %v6091, %v6087
        %v6328 = vpack.c.b16 %v6092, %v6088
        %v6329 = vpack.c.b16 %v6097, %v6093
        %v6330 = vpack.c.b16 %v6098, %v6094
        %v6331 = vpack.c.b16 %v6099, %v6095
        %v6332 = vpack.c.b16 %v6100, %v6096
        %v6333 = vpack.c.b16 %v6105, %v6101
        %v6334 = vpack.c.b16 %v6106, %v6102
        %v6335 = vpack.c.b16 %v6107, %v6103
        %v6336 = vpack.c.b16 %v6108, %v6104
        %v6337 = vpack.c.b16 %v6113, %v6109
        %v6338 = vpack.c.b16 %v6114, %v6110
        %v6339 = vpack.c.b16 %v6115, %v6111
        %v6340 = vpack.c.b16 %v6116, %v6112
        %v6341 = vpack.c.b16 %v6121, %v6117
        %v6342 = vpack.c.b16 %v6122, %v6118
        %v6343 = vpack.c.b16 %v6123, %v6119
        %v6344 = vpack.c.b16 %v6124, %v6120
        %v6345 = vpack.c.b16 %v6129, %v6125
        %v6346 = vpack.c.b16 %v6130, %v6126
        %v6347 = vpack.c.b16 %v6131, %v6127
        %v6348 = vpack.c.b16 %v6132, %v6128
        %v6349 = vpack.c.b16 %v6137, %v6133
        %v6350 = vpack.c.b16 %v6138, %v6134
        %v6351 = vpack.c.b16 %v6139, %v6135
        %v6352 = vpack.c.b16 %v6140, %v6136
        %v6353 = vpack.c.b16 %v6145, %v6141
        %v6354 = vpack.c.b16 %v6146, %v6142
        %v6355 = vpack.c.b16 %v6147, %v6143
        %v6356 = vpack.c.b16 %v6148, %v6144
        %v6357 = vpack.c.b16 %v6153, %v6149
        %v6358 = vpack.c.b16 %v6154, %v6150
        %v6359 = vpack.c.b16 %v6155, %v6151
        %v6360 = vpack.c.b16 %v6156, %v6152
        %v6361 = vpack.c.b16 %v6161, %v6157
        %v6362 = vpack.c.b16 %v6162, %v6158
        %v6363 = vpack.c.b16 %v6163, %v6159
        %v6364 = vpack.c.b16 %v6164, %v6160
        %v6365 = vpack.c.b16 %v6169, %v6165
        %v6366 = vpack.c.b16 %v6170, %v6166
        %v6367 = vpack.c.b16 %v6171, %v6167
        %v6368 = vpack.c.b16 %v6172, %v6168
        %v6369 = vpack.c.b16 %v6177, %v6173
        %v6370 = vpack.c.b16 %v6178, %v6174
        %v6371 = vpack.c.b16 %v6179, %v6175
        %v6372 = vpack.c.b16 %v6180, %v6176
        %v6373 = vpack.c.b16 %v6185, %v6181
        %v6374 = vpack.c.b16 %v6186, %v6182
        %v6375 = vpack.c.b16 %v6187, %v6183
        %v6376 = vpack.c.b16 %v6188, %v6184
        %v6377 = vpack.c.b16 %v6193, %v6189
        %v6378 = vpack.c.b16 %v6194, %v6190
        %v6379 = vpack.c.b16 %v6195, %v6191
        %v6380 = vpack.c.b16 %v6196, %v6192
        %v6381 = vpack.c.b16 %v6201, %v6197
        %v6382 = vpack.c.b16 %v6202, %v6198
        %v6383 = vpack.c.b16 %v6203, %v6199
        %v6384 = vpack.c.b16 %v6204, %v6200
        %v6385 = vpack.c.b16 %v6209, %v6205
        %v6386 = vpack.c.b16 %v6210, %v6206
        %v6387 = vpack.c.b16 %v6211, %v6207
        %v6388 = vpack.c.b16 %v6212, %v6208
        %v6389 = vpack.c.b16 %v6217, %v6213
        %v6390 = vpack.c.b16 %v6218, %v6214
        %v6391 = vpack.c.b16 %v6219, %v6215
        %v6392 = vpack.c.b16 %v6220, %v6216
        %v6393 = vpack.c.b16 %v6225, %v6221
        %v6394 = vpack.c.b16 %v6226, %v6222
        %v6395 = vpack.c.b16 %v6227, %v6223
        %v6396 = vpack.c.b16 %v6228, %v6224
        %v6397 = vpack.c.b16 %v6233, %v6229
        %v6398 = vpack.c.b16 %v6234, %v6230
        %v6399 = vpack.c.b16 %v6235, %v6231
        %v6400 = vpack.c.b16 %v6236, %v6232
        %v6401 = vpack.c.b16 %v6241, %v6237
        %v6402 = vpack.c.b16 %v6242, %v6238
        %v6403 = vpack.c.b16 %v6243, %v6239
        %v6404 = vpack.c.b16 %v6244, %v6240
        %v6405 = vpack.c.b16 %v6249, %v6245
        %v6406 = vpack.c.b16 %v6250, %v6246
        %v6407 = vpack.c.b16 %v6251, %v6247
        %v6408 = vpack.c.b16 %v6252, %v6248
        %v6409 = vpack.c.b16 %v6257, %v6253
        %v6410 = vpack.c.b16 %v6258, %v6254
        %v6411 = vpack.c.b16 %v6259, %v6255
        %v6412 = vpack.c.b16 %v6260, %v6256
        %v6413 = vpack.c.b16 %v6265, %v6261
        %v6414 = vpack.c.b16 %v6266, %v6262
        %v6415 = vpack.c.b16 %v6267, %v6263
        %v6416 = vpack.c.b16 %v6268, %v6264
        %v6417 = vpack.c.b16 %v6273, %v6269
        %v6418 = vpack.c.b16 %v6274, %v6270
        %v6419 = vpack.c.b16 %v6275, %v6271
        %v6420 = vpack.c.b16 %v6276, %v6272
        %v6421 = vpack.c.b16 %v6281, %v6277
        %v6422 = vpack.c.b16 %v6282, %v6278
        %v6423 = vpack.c.b16 %v6283, %v6279
        %v6424 = vpack.c.b16 %v6284, %v6280
        %v6425 = vpack.c.b16 %v6289, %v6285
        %v6426 = vpack.c.b16 %v6290, %v6286
        %v6427 = vpack.c.b16 %v6291, %v6287
        %v6428 = vpack.c.b16 %v6292, %v6288
        %v6429 = vpack.c.b16 %v6297, %v6293
        %v6430 = vpack.c.b16 %v6298, %v6294
        %v6431 = vpack.c.b16 %v6299, %v6295
        %v6432 = vpack.c.b16 %v6300, %v6296
        %v6433 = vpack.c.b16 %v6305, %v6301
        %v6434 = vpack.c.b16 %v6306, %v6302
        %v6435 = vpack.c.b16 %v6307, %v6303
        %v6436 = vpack.c.b16 %v6308, %v6304
        %6565 = vmatprep.subr.bf16.mxu0 %v6338
        %6566 = vmatpush1.bf16.msra.mxu0 %v6337
        %6567 = vmatprep.subr.bf16.mxu0 %v6334
        %6568 = vmatpush1.bf16.msra.mxu0 %v6333
        %6569 = vmatprep.subr.bf16.mxu0 %v6330
        %6570 = vmatpush1.bf16.msra.mxu0 %v6329
        %6571 = vmatprep.subr.bf16.mxu0 %v6326
        %6572 = vmatpush1.bf16.msra.mxu0 %v6325
        %6573 = vmatprep.subr.bf16.mxu0 %v6322
        %6574 = vmatpush1.bf16.msra.mxu0 %v6321
        %6575 = vmatprep.subr.bf16.mxu0 %v6318
        %6576 = vmatpush1.bf16.msra.mxu0 %v6317
        %6577 = vmatprep.subr.bf16.mxu0 %v6314
        %6578 = vmatpush1.bf16.msra.mxu0 %v6313
        %6579 = vmatprep.subr.bf16.mxu0 %v6310
        %6580 = vmatpush1.bf16.msra.mxu0 %v6309
        %6581 = vmatprep.subr.bf16.mxu0 %v6370
        %6582 = vmatpush2.bf16.msra.mxu0 %v6369
        %6583 = vmatprep.subr.bf16.mxu0 %v6366
        %6584 = vmatpush2.bf16.msra.mxu0 %v6365
        %6585 = vmatprep.subr.bf16.mxu0 %v6362
        %6586 = vmatpush2.bf16.msra.mxu0 %v6361
        %6587 = vmatprep.subr.bf16.mxu0 %v6358
        %6588 = vmatpush2.bf16.msra.mxu0 %v6357
        %6589 = vmatprep.subr.bf16.mxu0 %v6354
        %6590 = vmatpush2.bf16.msra.mxu0 %v6353
        %6591 = vmatprep.subr.bf16.mxu0 %v6350
        %6592 = vmatpush2.bf16.msra.mxu0 %v6349
        %6593 = vmatprep.subr.bf16.mxu0 %v6346
        %6594 = vmatpush2.bf16.msra.mxu0 %v6345
        %6595 = vmatprep.subr.bf16.mxu0 %v6342
        %6596 = vmatpush2.bf16.msra.mxu0 %v6341
        %6597 = vmatprep.mubr.bf16.mxu0 %v5918
        %6598 = vmatmul.mubr.bf16.gmra.mxu0 %v5917
        %v6599 = vpop.f32.mrf.mxu0
        %v6600 = vadd.f32 0.0, %v6599
        %v6601 = vpop.f32.mrf.mxu0
        %v6602 = vadd.f32 0.0, %v6601
        %v6603 = vpop.f32.mrf.mxu0
        %v6604 = vadd.f32 0.0, %v6603
        %v6605 = vpop.f32.mrf.mxu0
        %v6606 = vadd.f32 0.0, %v6605
        %6607 = vdwg.mxu0
        %6608 = vmatprep.subr.bf16.mxu0 %v6402
        %6609 = vmatpush1.bf16.msra.mxu0 %v6401
        %6610 = vmatprep.subr.bf16.mxu0 %v6398
        %6611 = vmatpush1.bf16.msra.mxu0 %v6397
        %6612 = vmatprep.subr.bf16.mxu0 %v6394
        %6613 = vmatpush1.bf16.msra.mxu0 %v6393
        %6614 = vmatprep.subr.bf16.mxu0 %v6390
        %6615 = vmatpush1.bf16.msra.mxu0 %v6389
        %6616 = vmatprep.subr.bf16.mxu0 %v6386
        %6617 = vmatpush1.bf16.msra.mxu0 %v6385
        %6618 = vmatprep.subr.bf16.mxu0 %v6382
        %6619 = vmatpush1.bf16.msra.mxu0 %v6381
        %6620 = vmatprep.subr.bf16.mxu0 %v6378
        %6621 = vmatpush1.bf16.msra.mxu0 %v6377
        %6622 = vmatprep.subr.bf16.mxu0 %v6374
        %6623 = vmatpush1.bf16.msra.mxu0 %v6373
        %6624 = vmatprep.subr.bf16.mxu0 %v6434
        %6625 = vmatpush2.bf16.msra.mxu0 %v6433
        %6626 = vmatprep.subr.bf16.mxu0 %v6430
        %6627 = vmatpush2.bf16.msra.mxu0 %v6429
        %6628 = vmatprep.subr.bf16.mxu0 %v6426
        %6629 = vmatpush2.bf16.msra.mxu0 %v6425
        %6630 = vmatprep.subr.bf16.mxu0 %v6422
        %6631 = vmatpush2.bf16.msra.mxu0 %v6421
        %6632 = vmatprep.subr.bf16.mxu0 %v6418
        %6633 = vmatpush2.bf16.msra.mxu0 %v6417
        %6634 = vmatprep.subr.bf16.mxu0 %v6414
        %6635 = vmatpush2.bf16.msra.mxu0 %v6413
        %6636 = vmatprep.subr.bf16.mxu0 %v6410
        %6637 = vmatpush2.bf16.msra.mxu0 %v6409
        %6638 = vmatprep.subr.bf16.mxu0 %v6406
        %6639 = vmatpush2.bf16.msra.mxu0 %v6405
        %6640 = vmatprep.mubr.bf16.mxu0 %v5920
        %6641 = vmatmul.mubr.bf16.gmra.mxu0 %v5919
        %v6642 = vpop.f32.mrf.mxu0
        %v6643 = vadd.f32 %v6600, %v6642
        %v6644 = vpop.f32.mrf.mxu0
        %v6645 = vadd.f32 %v6602, %v6644
        %v6646 = vpop.f32.mrf.mxu0
        %v6647 = vadd.f32 %v6604, %v6646
        %v6648 = vpop.f32.mrf.mxu0
        %v6649 = vadd.f32 %v6606, %v6648
        %6650 = vdwg.mxu0
        %6651 = vmatprep.subr.bf16.mxu0 %v6340
        %6652 = vmatpush1.bf16.msra.mxu0 %v6339
        %6653 = vmatprep.subr.bf16.mxu0 %v6336
        %6654 = vmatpush1.bf16.msra.mxu0 %v6335
        %6655 = vmatprep.subr.bf16.mxu0 %v6332
        %6656 = vmatpush1.bf16.msra.mxu0 %v6331
        %6657 = vmatprep.subr.bf16.mxu0 %v6328
        %6658 = vmatpush1.bf16.msra.mxu0 %v6327
        %6659 = vmatprep.subr.bf16.mxu0 %v6324
        %6660 = vmatpush1.bf16.msra.mxu0 %v6323
        %6661 = vmatprep.subr.bf16.mxu0 %v6320
        %6662 = vmatpush1.bf16.msra.mxu0 %v6319
        %6663 = vmatprep.subr.bf16.mxu0 %v6316
        %6664 = vmatpush1.bf16.msra.mxu0 %v6315
        %6665 = vmatprep.subr.bf16.mxu0 %v6312
        %6666 = vmatpush1.bf16.msra.mxu0 %v6311
        %6667 = vmatprep.subr.bf16.mxu0 %v6372
        %6668 = vmatpush2.bf16.msra.mxu0 %v6371
        %6669 = vmatprep.subr.bf16.mxu0 %v6368
        %6670 = vmatpush2.bf16.msra.mxu0 %v6367
        %6671 = vmatprep.subr.bf16.mxu0 %v6364
        %6672 = vmatpush2.bf16.msra.mxu0 %v6363
        %6673 = vmatprep.subr.bf16.mxu0 %v6360
        %6674 = vmatpush2.bf16.msra.mxu0 %v6359
        %6675 = vmatprep.subr.bf16.mxu0 %v6356
        %6676 = vmatpush2.bf16.msra.mxu0 %v6355
        %6677 = vmatprep.subr.bf16.mxu0 %v6352
        %6678 = vmatpush2.bf16.msra.mxu0 %v6351
        %6679 = vmatprep.subr.bf16.mxu0 %v6348
        %6680 = vmatpush2.bf16.msra.mxu0 %v6347
        %6681 = vmatprep.subr.bf16.mxu0 %v6344
        %6682 = vmatpush2.bf16.msra.mxu0 %v6343
        %6683 = vmatprep.mubr.bf16.mxu0 %v5918
        %6684 = vmatmul.mubr.bf16.gmra.mxu0 %v5917
        %v6685 = vpop.f32.mrf.mxu0
        %v6686 = vadd.f32 0.0, %v6685
        %v6687 = vpop.f32.mrf.mxu0
        %v6688 = vadd.f32 0.0, %v6687
        %v6689 = vpop.f32.mrf.mxu0
        %v6690 = vadd.f32 0.0, %v6689
        %v6691 = vpop.f32.mrf.mxu0
        %v6692 = vadd.f32 0.0, %v6691
        %6693 = vdwg.mxu0
        %6694 = vmatprep.subr.bf16.mxu0 %v6404
        %6695 = vmatpush1.bf16.msra.mxu0 %v6403
        %6696 = vmatprep.subr.bf16.mxu0 %v6400
        %6697 = vmatpush1.bf16.msra.mxu0 %v6399
        %6698 = vmatprep.subr.bf16.mxu0 %v6396
        %6699 = vmatpush1.bf16.msra.mxu0 %v6395
        %6700 = vmatprep.subr.bf16.mxu0 %v6392
        %6701 = vmatpush1.bf16.msra.mxu0 %v6391
        %6702 = vmatprep.subr.bf16.mxu0 %v6388
        %6703 = vmatpush1.bf16.msra.mxu0 %v6387
        %6704 = vmatprep.subr.bf16.mxu0 %v6384
        %6705 = vmatpush1.bf16.msra.mxu0 %v6383
        %6706 = vmatprep.subr.bf16.mxu0 %v6380
        %6707 = vmatpush1.bf16.msra.mxu0 %v6379
        %6708 = vmatprep.subr.bf16.mxu0 %v6376
        %6709 = vmatpush1.bf16.msra.mxu0 %v6375
        %6710 = vmatprep.subr.bf16.mxu0 %v6436
        %6711 = vmatpush2.bf16.msra.mxu0 %v6435
        %6712 = vmatprep.subr.bf16.mxu0 %v6432
        %6713 = vmatpush2.bf16.msra.mxu0 %v6431
        %6714 = vmatprep.subr.bf16.mxu0 %v6428
        %6715 = vmatpush2.bf16.msra.mxu0 %v6427
        %6716 = vmatprep.subr.bf16.mxu0 %v6424
        %6717 = vmatpush2.bf16.msra.mxu0 %v6423
        %6718 = vmatprep.subr.bf16.mxu0 %v6420
        %6719 = vmatpush2.bf16.msra.mxu0 %v6419
        %6720 = vmatprep.subr.bf16.mxu0 %v6416
        %6721 = vmatpush2.bf16.msra.mxu0 %v6415
        %6722 = vmatprep.subr.bf16.mxu0 %v6412
        %6723 = vmatpush2.bf16.msra.mxu0 %v6411
        %6724 = vmatprep.subr.bf16.mxu0 %v6408
        %6725 = vmatpush2.bf16.msra.mxu0 %v6407
        %6726 = vmatprep.mubr.bf16.mxu0 %v5920
        %6727 = vmatmul.mubr.bf16.gmra.mxu0 %v5919
        %v6728 = vpop.f32.mrf.mxu0
        %v6729 = vadd.f32 %v6686, %v6728
        %v6730 = vpop.f32.mrf.mxu0
        %v6731 = vadd.f32 %v6688, %v6730
        %v6732 = vpop.f32.mrf.mxu0
        %v6733 = vadd.f32 %v6690, %v6732
        %v6734 = vpop.f32.mrf.mxu0
        %v6735 = vadd.f32 %v6692, %v6734
        %6736 = vdwg.mxu0
        %v6737 = vadd.f32 %v5652, %v6643
        %v6738 = vadd.f32 %v5653, %v6645
        %v6739 = vadd.f32 %v5654, %v6729
        %v6740 = vadd.f32 %v5655, %v6731
        %v6741 = vadd.f32 %v5656, %v6647
        %v6742 = vadd.f32 %v5657, %v6649
        %v6743 = vadd.f32 %v5658, %v6733
        %v6744 = vadd.f32 %v5659, %v6735
        %s6745 = scalar_lea.vmem %s196, 32
        %v6746 = vld [vmem:[%s6745] sm:$0x33]
        %v6747 = vld [vmem:[%s6745 + $0x8] sm:$0x33]
        %v6748 = vld [vmem:[%s6745 + $0x10] sm:$0x33]
        %v6749 = vld [vmem:[%s6745 + $0x18] sm:$0x33]
        %v6750 = vld [vmem:[%s6745 + $0x20] sm:$0x33]
        %v6751 = vld [vmem:[%s6745 + $0x28] sm:$0x33]
        %v6752 = vld [vmem:[%s6745 + $0x30] sm:$0x33]
        %v6753 = vld [vmem:[%s6745 + $0x38] sm:$0x33]
        %v6763 = vunpack.c.l.s4 1983009808
        %v6764 = vunpack.c.0.s8 %v6763
        %v6765 = vlaneseq
        %v6766 = vshrl.u32 %v6765, 7
        %v6767 = vsub.s32 %v6764, %v6766
        %v6768 = vrot.slane %v6746, %v6767
        %v6770 = vunpack.c.l.s4 1983009808
        %v6771 = vunpack.c.0.s8 %v6770
        %v6772 = vlaneseq
        %v6773 = vshrl.u32 %v6772, 7
        %v6774 = vsub.s32 %v6771, %v6773
        %v6775 = vrot.slane %v6747, %v6774
        %v6776 = vcombine.low %v6768, %v6775
        %v6778 = vunpack.c.l.s4 1983009808
        %v6779 = vunpack.c.0.s8 %v6778
        %v6780 = vlaneseq
        %v6781 = vshrl.u32 %v6780, 7
        %v6782 = vsub.s32 %v6779, %v6781
        %v6783 = vrot.slane %v6748, %v6782
        %v6785 = vunpack.c.l.s4 1983009808
        %v6786 = vunpack.c.0.s8 %v6785
        %v6787 = vlaneseq
        %v6788 = vshrl.u32 %v6787, 7
        %v6789 = vsub.s32 %v6786, %v6788
        %v6790 = vrot.slane %v6749, %v6789
        %v6791 = vcombine.low %v6783, %v6790
        %v6793 = vunpack.c.l.s4 1983009808
        %v6794 = vunpack.c.0.s8 %v6793
        %v6795 = vlaneseq
        %v6796 = vshrl.u32 %v6795, 7
        %v6797 = vsub.s32 %v6794, %v6796
        %v6798 = vrot.slane %v6750, %v6797
        %v6800 = vunpack.c.l.s4 1983009808
        %v6801 = vunpack.c.0.s8 %v6800
        %v6802 = vlaneseq
        %v6803 = vshrl.u32 %v6802, 7
        %v6804 = vsub.s32 %v6801, %v6803
        %v6805 = vrot.slane %v6751, %v6804
        %v6806 = vcombine.low %v6798, %v6805
        %v6808 = vunpack.c.l.s4 1983009808
        %v6809 = vunpack.c.0.s8 %v6808
        %v6810 = vlaneseq
        %v6811 = vshrl.u32 %v6810, 7
        %v6812 = vsub.s32 %v6809, %v6811
        %v6813 = vrot.slane %v6752, %v6812
        %v6815 = vunpack.c.l.s4 1983009808
        %v6816 = vunpack.c.0.s8 %v6815
        %v6817 = vlaneseq
        %v6818 = vshrl.u32 %v6817, 7
        %v6819 = vsub.s32 %v6816, %v6818
        %v6820 = vrot.slane %v6753, %v6819
        %v6821 = vcombine.low %v6813, %v6820
        %s6822 = scalar_lea.vmem [#allocation2], 6144
        %v6823 = vld [vmem:[%s6822] sm:$0xff]
        %v6824 = vld [vmem:[%s6822 + $0x8] sm:$0xff]
        %v6825 = vld [vmem:[%s6822 + $0x10] sm:$0xff]
        %v6826 = vld [vmem:[%s6822 + $0x18] sm:$0xff]
        %v6827 = vld [vmem:[%s6822 + $0x20] sm:$0xff]
        %v6828 = vld [vmem:[%s6822 + $0x28] sm:$0xff]
        %v6829 = vld [vmem:[%s6822 + $0x30] sm:$0xff]
        %v6830 = vld [vmem:[%s6822 + $0x38] sm:$0xff]
        %v6831 = vld [vmem:[%s6822 + $0x40] sm:$0xff]
        %v6832 = vld [vmem:[%s6822 + $0x48] sm:$0xff]
        %v6833 = vld [vmem:[%s6822 + $0x50] sm:$0xff]
        %v6834 = vld [vmem:[%s6822 + $0x58] sm:$0xff]
        %v6835 = vld [vmem:[%s6822 + $0x60] sm:$0xff]
        %v6836 = vld [vmem:[%s6822 + $0x68] sm:$0xff]
        %v6837 = vld [vmem:[%s6822 + $0x70] sm:$0xff]
        %v6838 = vld [vmem:[%s6822 + $0x78] sm:$0xff]
        %v6839 = vld [vmem:[%s6822 + $0x80] sm:$0xff]
        %v6840 = vld [vmem:[%s6822 + $0x88] sm:$0xff]
        %v6841 = vld [vmem:[%s6822 + $0x90] sm:$0xff]
        %v6842 = vld [vmem:[%s6822 + $0x98] sm:$0xff]
        %v6843 = vld [vmem:[%s6822 + $0xa0] sm:$0xff]
        %v6844 = vld [vmem:[%s6822 + $0xa8] sm:$0xff]
        %v6845 = vld [vmem:[%s6822 + $0xb0] sm:$0xff]
        %v6846 = vld [vmem:[%s6822 + $0xb8] sm:$0xff]
        %v6847 = vld [vmem:[%s6822 + $0xc0] sm:$0xff]
        %v6848 = vld [vmem:[%s6822 + $0xc8] sm:$0xff]
        %v6849 = vld [vmem:[%s6822 + $0xd0] sm:$0xff]
        %v6850 = vld [vmem:[%s6822 + $0xd8] sm:$0xff]
        %v6851 = vld [vmem:[%s6822 + $0xe0] sm:$0xff]
        %v6852 = vld [vmem:[%s6822 + $0xe8] sm:$0xff]
        %v6853 = vld [vmem:[%s6822 + $0xf0] sm:$0xff]
        %v6854 = vld [vmem:[%s6822 + $0xf8] sm:$0xff]
        %v6855 = vld [vmem:[%s6822 + $0x100] sm:$0xff]
        %v6856 = vld [vmem:[%s6822 + $0x108] sm:$0xff]
        %v6857 = vld [vmem:[%s6822 + $0x110] sm:$0xff]
        %v6858 = vld [vmem:[%s6822 + $0x118] sm:$0xff]
        %v6859 = vld [vmem:[%s6822 + $0x120] sm:$0xff]
        %v6860 = vld [vmem:[%s6822 + $0x128] sm:$0xff]
        %v6861 = vld [vmem:[%s6822 + $0x130] sm:$0xff]
        %v6862 = vld [vmem:[%s6822 + $0x138] sm:$0xff]
        %v6863 = vld [vmem:[%s6822 + $0x140] sm:$0xff]
        %v6864 = vld [vmem:[%s6822 + $0x148] sm:$0xff]
        %v6865 = vld [vmem:[%s6822 + $0x150] sm:$0xff]
        %v6866 = vld [vmem:[%s6822 + $0x158] sm:$0xff]
        %v6867 = vld [vmem:[%s6822 + $0x160] sm:$0xff]
        %v6868 = vld [vmem:[%s6822 + $0x168] sm:$0xff]
        %v6869 = vld [vmem:[%s6822 + $0x170] sm:$0xff]
        %v6870 = vld [vmem:[%s6822 + $0x178] sm:$0xff]
        %v6871 = vld [vmem:[%s6822 + $0x180] sm:$0xff]
        %v6872 = vld [vmem:[%s6822 + $0x188] sm:$0xff]
        %v6873 = vld [vmem:[%s6822 + $0x190] sm:$0xff]
        %v6874 = vld [vmem:[%s6822 + $0x198] sm:$0xff]
        %v6875 = vld [vmem:[%s6822 + $0x1a0] sm:$0xff]
        %v6876 = vld [vmem:[%s6822 + $0x1a8] sm:$0xff]
        %v6877 = vld [vmem:[%s6822 + $0x1b0] sm:$0xff]
        %v6878 = vld [vmem:[%s6822 + $0x1b8] sm:$0xff]
        %v6879 = vld [vmem:[%s6822 + $0x1c0] sm:$0xff]
        %v6880 = vld [vmem:[%s6822 + $0x1c8] sm:$0xff]
        %v6881 = vld [vmem:[%s6822 + $0x1d0] sm:$0xff]
        %v6882 = vld [vmem:[%s6822 + $0x1d8] sm:$0xff]
        %v6883 = vld [vmem:[%s6822 + $0x1e0] sm:$0xff]
        %v6884 = vld [vmem:[%s6822 + $0x1e8] sm:$0xff]
        %v6885 = vld [vmem:[%s6822 + $0x1f0] sm:$0xff]
        %v6886 = vld [vmem:[%s6822 + $0x1f8] sm:$0xff]
        %v6887 = vld [vmem:[%s6822 + $0x200] sm:$0xff]
        %v6888 = vld [vmem:[%s6822 + $0x208] sm:$0xff]
        %v6889 = vld [vmem:[%s6822 + $0x210] sm:$0xff]
        %v6890 = vld [vmem:[%s6822 + $0x218] sm:$0xff]
        %v6891 = vld [vmem:[%s6822 + $0x220] sm:$0xff]
        %v6892 = vld [vmem:[%s6822 + $0x228] sm:$0xff]
        %v6893 = vld [vmem:[%s6822 + $0x230] sm:$0xff]
        %v6894 = vld [vmem:[%s6822 + $0x238] sm:$0xff]
        %v6895 = vld [vmem:[%s6822 + $0x240] sm:$0xff]
        %v6896 = vld [vmem:[%s6822 + $0x248] sm:$0xff]
        %v6897 = vld [vmem:[%s6822 + $0x250] sm:$0xff]
        %v6898 = vld [vmem:[%s6822 + $0x258] sm:$0xff]
        %v6899 = vld [vmem:[%s6822 + $0x260] sm:$0xff]
        %v6900 = vld [vmem:[%s6822 + $0x268] sm:$0xff]
        %v6901 = vld [vmem:[%s6822 + $0x270] sm:$0xff]
        %v6902 = vld [vmem:[%s6822 + $0x278] sm:$0xff]
        %v6903 = vld [vmem:[%s6822 + $0x280] sm:$0xff]
        %v6904 = vld [vmem:[%s6822 + $0x288] sm:$0xff]
        %v6905 = vld [vmem:[%s6822 + $0x290] sm:$0xff]
        %v6906 = vld [vmem:[%s6822 + $0x298] sm:$0xff]
        %v6907 = vld [vmem:[%s6822 + $0x2a0] sm:$0xff]
        %v6908 = vld [vmem:[%s6822 + $0x2a8] sm:$0xff]
        %v6909 = vld [vmem:[%s6822 + $0x2b0] sm:$0xff]
        %v6910 = vld [vmem:[%s6822 + $0x2b8] sm:$0xff]
        %v6911 = vld [vmem:[%s6822 + $0x2c0] sm:$0xff]
        %v6912 = vld [vmem:[%s6822 + $0x2c8] sm:$0xff]
        %v6913 = vld [vmem:[%s6822 + $0x2d0] sm:$0xff]
        %v6914 = vld [vmem:[%s6822 + $0x2d8] sm:$0xff]
        %v6915 = vld [vmem:[%s6822 + $0x2e0] sm:$0xff]
        %v6916 = vld [vmem:[%s6822 + $0x2e8] sm:$0xff]
        %v6917 = vld [vmem:[%s6822 + $0x2f0] sm:$0xff]
        %v6918 = vld [vmem:[%s6822 + $0x2f8] sm:$0xff]
        %v6919 = vld [vmem:[%s6822 + $0x300] sm:$0xff]
        %v6920 = vld [vmem:[%s6822 + $0x308] sm:$0xff]
        %v6921 = vld [vmem:[%s6822 + $0x310] sm:$0xff]
        %v6922 = vld [vmem:[%s6822 + $0x318] sm:$0xff]
        %v6923 = vld [vmem:[%s6822 + $0x320] sm:$0xff]
        %v6924 = vld [vmem:[%s6822 + $0x328] sm:$0xff]
        %v6925 = vld [vmem:[%s6822 + $0x330] sm:$0xff]
        %v6926 = vld [vmem:[%s6822 + $0x338] sm:$0xff]
        %v6927 = vld [vmem:[%s6822 + $0x340] sm:$0xff]
        %v6928 = vld [vmem:[%s6822 + $0x348] sm:$0xff]
        %v6929 = vld [vmem:[%s6822 + $0x350] sm:$0xff]
        %v6930 = vld [vmem:[%s6822 + $0x358] sm:$0xff]
        %v6931 = vld [vmem:[%s6822 + $0x360] sm:$0xff]
        %v6932 = vld [vmem:[%s6822 + $0x368] sm:$0xff]
        %v6933 = vld [vmem:[%s6822 + $0x370] sm:$0xff]
        %v6934 = vld [vmem:[%s6822 + $0x378] sm:$0xff]
        %v6935 = vld [vmem:[%s6822 + $0x380] sm:$0xff]
        %v6936 = vld [vmem:[%s6822 + $0x388] sm:$0xff]
        %v6937 = vld [vmem:[%s6822 + $0x390] sm:$0xff]
        %v6938 = vld [vmem:[%s6822 + $0x398] sm:$0xff]
        %v6939 = vld [vmem:[%s6822 + $0x3a0] sm:$0xff]
        %v6940 = vld [vmem:[%s6822 + $0x3a8] sm:$0xff]
        %v6941 = vld [vmem:[%s6822 + $0x3b0] sm:$0xff]
        %v6942 = vld [vmem:[%s6822 + $0x3b8] sm:$0xff]
        %v6943 = vld [vmem:[%s6822 + $0x3c0] sm:$0xff]
        %v6944 = vld [vmem:[%s6822 + $0x3c8] sm:$0xff]
        %v6945 = vld [vmem:[%s6822 + $0x3d0] sm:$0xff]
        %v6946 = vld [vmem:[%s6822 + $0x3d8] sm:$0xff]
        %v6947 = vld [vmem:[%s6822 + $0x3e0] sm:$0xff]
        %v6948 = vld [vmem:[%s6822 + $0x3e8] sm:$0xff]
        %v6949 = vld [vmem:[%s6822 + $0x3f0] sm:$0xff]
        %v6950 = vld [vmem:[%s6822 + $0x3f8] sm:$0xff]
        %v6951 = vcombine.low %v6776, %v6791
        %v6952 = vcombine.high %v6776, %v6791
        %v6953 = vcombine.low %v6806, %v6821
        %v6954 = vcombine.high %v6806, %v6821
        %v6956 = vunpack.c.l.s4 1983009808
        %v6957 = vunpack.c.0.s8 %v6956
        %v6958 = vlaneseq
        %v6959 = vshrl.u32 %v6958, 7
        %v6960 = vsub.s32 %v6957, %v6959
        %v6961 = vrot.slane %v6951, %v6960
        %v6963 = vunpack.c.l.s4 1983009808
        %v6964 = vunpack.c.0.s8 %v6963
        %v6965 = vlaneseq
        %v6966 = vshrl.u32 %v6965, 7
        %v6967 = vsub.s32 %v6964, %v6966
        %v6968 = vrot.slane %v6952, %v6967
        %v6970 = vunpack.c.l.s4 1983009808
        %v6971 = vunpack.c.0.s8 %v6970
        %v6972 = vlaneseq
        %v6973 = vshrl.u32 %v6972, 7
        %v6974 = vsub.s32 %v6971, %v6973
        %v6975 = vrot.slane %v6953, %v6974
        %v6977 = vunpack.c.l.s4 1983009808
        %v6978 = vunpack.c.0.s8 %v6977
        %v6979 = vlaneseq
        %v6980 = vshrl.u32 %v6979, 7
        %v6981 = vsub.s32 %v6978, %v6980
        %v6982 = vrot.slane %v6954, %v6981
        %v6983 = vcombine.low %v6961, %v6975
        %v6984 = vcombine.high %v6961, %v6975
        %v6985 = vcombine.low %v6968, %v6982
        %v6986 = vcombine.high %v6968, %v6982
        %v7119 = vunpack.c.l.b16 %v6823
        %v7120 = vunpack.c.h.b16 %v6823
        %v7121 = vunpack.c.l.b16 %v6824
        %v7122 = vunpack.c.h.b16 %v6824
        %v7123 = vunpack.c.l.b16 %v6825
        %v7124 = vunpack.c.h.b16 %v6825
        %v7125 = vunpack.c.l.b16 %v6826
        %v7126 = vunpack.c.h.b16 %v6826
        %v7127 = vunpack.c.l.b16 %v6827
        %v7128 = vunpack.c.h.b16 %v6827
        %v7129 = vunpack.c.l.b16 %v6828
        %v7130 = vunpack.c.h.b16 %v6828
        %v7131 = vunpack.c.l.b16 %v6829
        %v7132 = vunpack.c.h.b16 %v6829
        %v7133 = vunpack.c.l.b16 %v6830
        %v7134 = vunpack.c.h.b16 %v6830
        %v7135 = vunpack.c.l.b16 %v6831
        %v7136 = vunpack.c.h.b16 %v6831
        %v7137 = vunpack.c.l.b16 %v6832
        %v7138 = vunpack.c.h.b16 %v6832
        %v7139 = vunpack.c.l.b16 %v6833
        %v7140 = vunpack.c.h.b16 %v6833
        %v7141 = vunpack.c.l.b16 %v6834
        %v7142 = vunpack.c.h.b16 %v6834
        %v7143 = vunpack.c.l.b16 %v6835
        %v7144 = vunpack.c.h.b16 %v6835
        %v7145 = vunpack.c.l.b16 %v6836
        %v7146 = vunpack.c.h.b16 %v6836
        %v7147 = vunpack.c.l.b16 %v6837
        %v7148 = vunpack.c.h.b16 %v6837
        %v7149 = vunpack.c.l.b16 %v6838
        %v7150 = vunpack.c.h.b16 %v6838
        %v7151 = vunpack.c.l.b16 %v6839
        %v7152 = vunpack.c.h.b16 %v6839
        %v7153 = vunpack.c.l.b16 %v6840
        %v7154 = vunpack.c.h.b16 %v6840
        %v7155 = vunpack.c.l.b16 %v6841
        %v7156 = vunpack.c.h.b16 %v6841
        %v7157 = vunpack.c.l.b16 %v6842
        %v7158 = vunpack.c.h.b16 %v6842
        %v7159 = vunpack.c.l.b16 %v6843
        %v7160 = vunpack.c.h.b16 %v6843
        %v7161 = vunpack.c.l.b16 %v6844
        %v7162 = vunpack.c.h.b16 %v6844
        %v7163 = vunpack.c.l.b16 %v6845
        %v7164 = vunpack.c.h.b16 %v6845
        %v7165 = vunpack.c.l.b16 %v6846
        %v7166 = vunpack.c.h.b16 %v6846
        %v7167 = vunpack.c.l.b16 %v6847
        %v7168 = vunpack.c.h.b16 %v6847
        %v7169 = vunpack.c.l.b16 %v6848
        %v7170 = vunpack.c.h.b16 %v6848
        %v7171 = vunpack.c.l.b16 %v6849
        %v7172 = vunpack.c.h.b16 %v6849
        %v7173 = vunpack.c.l.b16 %v6850
        %v7174 = vunpack.c.h.b16 %v6850
        %v7175 = vunpack.c.l.b16 %v6851
        %v7176 = vunpack.c.h.b16 %v6851
        %v7177 = vunpack.c.l.b16 %v6852
        %v7178 = vunpack.c.h.b16 %v6852
        %v7179 = vunpack.c.l.b16 %v6853
        %v7180 = vunpack.c.h.b16 %v6853
        %v7181 = vunpack.c.l.b16 %v6854
        %v7182 = vunpack.c.h.b16 %v6854
        %v7183 = vunpack.c.l.b16 %v6855
        %v7184 = vunpack.c.h.b16 %v6855
        %v7185 = vunpack.c.l.b16 %v6856
        %v7186 = vunpack.c.h.b16 %v6856
        %v7187 = vunpack.c.l.b16 %v6857
        %v7188 = vunpack.c.h.b16 %v6857
        %v7189 = vunpack.c.l.b16 %v6858
        %v7190 = vunpack.c.h.b16 %v6858
        %v7191 = vunpack.c.l.b16 %v6859
        %v7192 = vunpack.c.h.b16 %v6859
        %v7193 = vunpack.c.l.b16 %v6860
        %v7194 = vunpack.c.h.b16 %v6860
        %v7195 = vunpack.c.l.b16 %v6861
        %v7196 = vunpack.c.h.b16 %v6861
        %v7197 = vunpack.c.l.b16 %v6862
        %v7198 = vunpack.c.h.b16 %v6862
        %v7199 = vunpack.c.l.b16 %v6863
        %v7200 = vunpack.c.h.b16 %v6863
        %v7201 = vunpack.c.l.b16 %v6864
        %v7202 = vunpack.c.h.b16 %v6864
        %v7203 = vunpack.c.l.b16 %v6865
        %v7204 = vunpack.c.h.b16 %v6865
        %v7205 = vunpack.c.l.b16 %v6866
        %v7206 = vunpack.c.h.b16 %v6866
        %v7207 = vunpack.c.l.b16 %v6867
        %v7208 = vunpack.c.h.b16 %v6867
        %v7209 = vunpack.c.l.b16 %v6868
        %v7210 = vunpack.c.h.b16 %v6868
        %v7211 = vunpack.c.l.b16 %v6869
        %v7212 = vunpack.c.h.b16 %v6869
        %v7213 = vunpack.c.l.b16 %v6870
        %v7214 = vunpack.c.h.b16 %v6870
        %v7215 = vunpack.c.l.b16 %v6871
        %v7216 = vunpack.c.h.b16 %v6871
        %v7217 = vunpack.c.l.b16 %v6872
        %v7218 = vunpack.c.h.b16 %v6872
        %v7219 = vunpack.c.l.b16 %v6873
        %v7220 = vunpack.c.h.b16 %v6873
        %v7221 = vunpack.c.l.b16 %v6874
        %v7222 = vunpack.c.h.b16 %v6874
        %v7223 = vunpack.c.l.b16 %v6875
        %v7224 = vunpack.c.h.b16 %v6875
        %v7225 = vunpack.c.l.b16 %v6876
        %v7226 = vunpack.c.h.b16 %v6876
        %v7227 = vunpack.c.l.b16 %v6877
        %v7228 = vunpack.c.h.b16 %v6877
        %v7229 = vunpack.c.l.b16 %v6878
        %v7230 = vunpack.c.h.b16 %v6878
        %v7231 = vunpack.c.l.b16 %v6879
        %v7232 = vunpack.c.h.b16 %v6879
        %v7233 = vunpack.c.l.b16 %v6880
        %v7234 = vunpack.c.h.b16 %v6880
        %v7235 = vunpack.c.l.b16 %v6881
        %v7236 = vunpack.c.h.b16 %v6881
        %v7237 = vunpack.c.l.b16 %v6882
        %v7238 = vunpack.c.h.b16 %v6882
        %v7239 = vunpack.c.l.b16 %v6883
        %v7240 = vunpack.c.h.b16 %v6883
        %v7241 = vunpack.c.l.b16 %v6884
        %v7242 = vunpack.c.h.b16 %v6884
        %v7243 = vunpack.c.l.b16 %v6885
        %v7244 = vunpack.c.h.b16 %v6885
        %v7245 = vunpack.c.l.b16 %v6886
        %v7246 = vunpack.c.h.b16 %v6886
        %v7247 = vunpack.c.l.b16 %v6887
        %v7248 = vunpack.c.h.b16 %v6887
        %v7249 = vunpack.c.l.b16 %v6888
        %v7250 = vunpack.c.h.b16 %v6888
        %v7251 = vunpack.c.l.b16 %v6889
        %v7252 = vunpack.c.h.b16 %v6889
        %v7253 = vunpack.c.l.b16 %v6890
        %v7254 = vunpack.c.h.b16 %v6890
        %v7255 = vunpack.c.l.b16 %v6891
        %v7256 = vunpack.c.h.b16 %v6891
        %v7257 = vunpack.c.l.b16 %v6892
        %v7258 = vunpack.c.h.b16 %v6892
        %v7259 = vunpack.c.l.b16 %v6893
        %v7260 = vunpack.c.h.b16 %v6893
        %v7261 = vunpack.c.l.b16 %v6894
        %v7262 = vunpack.c.h.b16 %v6894
        %v7263 = vunpack.c.l.b16 %v6895
        %v7264 = vunpack.c.h.b16 %v6895
        %v7265 = vunpack.c.l.b16 %v6896
        %v7266 = vunpack.c.h.b16 %v6896
        %v7267 = vunpack.c.l.b16 %v6897
        %v7268 = vunpack.c.h.b16 %v6897
        %v7269 = vunpack.c.l.b16 %v6898
        %v7270 = vunpack.c.h.b16 %v6898
        %v7271 = vunpack.c.l.b16 %v6899
        %v7272 = vunpack.c.h.b16 %v6899
        %v7273 = vunpack.c.l.b16 %v6900
        %v7274 = vunpack.c.h.b16 %v6900
        %v7275 = vunpack.c.l.b16 %v6901
        %v7276 = vunpack.c.h.b16 %v6901
        %v7277 = vunpack.c.l.b16 %v6902
        %v7278 = vunpack.c.h.b16 %v6902
        %v7279 = vunpack.c.l.b16 %v6903
        %v7280 = vunpack.c.h.b16 %v6903
        %v7281 = vunpack.c.l.b16 %v6904
        %v7282 = vunpack.c.h.b16 %v6904
        %v7283 = vunpack.c.l.b16 %v6905
        %v7284 = vunpack.c.h.b16 %v6905
        %v7285 = vunpack.c.l.b16 %v6906
        %v7286 = vunpack.c.h.b16 %v6906
        %v7287 = vunpack.c.l.b16 %v6907
        %v7288 = vunpack.c.h.b16 %v6907
        %v7289 = vunpack.c.l.b16 %v6908
        %v7290 = vunpack.c.h.b16 %v6908
        %v7291 = vunpack.c.l.b16 %v6909
        %v7292 = vunpack.c.h.b16 %v6909
        %v7293 = vunpack.c.l.b16 %v6910
        %v7294 = vunpack.c.h.b16 %v6910
        %v7295 = vunpack.c.l.b16 %v6911
        %v7296 = vunpack.c.h.b16 %v6911
        %v7297 = vunpack.c.l.b16 %v6912
        %v7298 = vunpack.c.h.b16 %v6912
        %v7299 = vunpack.c.l.b16 %v6913
        %v7300 = vunpack.c.h.b16 %v6913
        %v7301 = vunpack.c.l.b16 %v6914
        %v7302 = vunpack.c.h.b16 %v6914
        %v7303 = vunpack.c.l.b16 %v6915
        %v7304 = vunpack.c.h.b16 %v6915
        %v7305 = vunpack.c.l.b16 %v6916
        %v7306 = vunpack.c.h.b16 %v6916
        %v7307 = vunpack.c.l.b16 %v6917
        %v7308 = vunpack.c.h.b16 %v6917
        %v7309 = vunpack.c.l.b16 %v6918
        %v7310 = vunpack.c.h.b16 %v6918
        %v7311 = vunpack.c.l.b16 %v6919
        %v7312 = vunpack.c.h.b16 %v6919
        %v7313 = vunpack.c.l.b16 %v6920
        %v7314 = vunpack.c.h.b16 %v6920
        %v7315 = vunpack.c.l.b16 %v6921
        %v7316 = vunpack.c.h.b16 %v6921
        %v7317 = vunpack.c.l.b16 %v6922
        %v7318 = vunpack.c.h.b16 %v6922
        %v7319 = vunpack.c.l.b16 %v6923
        %v7320 = vunpack.c.h.b16 %v6923
        %v7321 = vunpack.c.l.b16 %v6924
        %v7322 = vunpack.c.h.b16 %v6924
        %v7323 = vunpack.c.l.b16 %v6925
        %v7324 = vunpack.c.h.b16 %v6925
        %v7325 = vunpack.c.l.b16 %v6926
        %v7326 = vunpack.c.h.b16 %v6926
        %v7327 = vunpack.c.l.b16 %v6927
        %v7328 = vunpack.c.h.b16 %v6927
        %v7329 = vunpack.c.l.b16 %v6928
        %v7330 = vunpack.c.h.b16 %v6928
        %v7331 = vunpack.c.l.b16 %v6929
        %v7332 = vunpack.c.h.b16 %v6929
        %v7333 = vunpack.c.l.b16 %v6930
        %v7334 = vunpack.c.h.b16 %v6930
        %v7335 = vunpack.c.l.b16 %v6931
        %v7336 = vunpack.c.h.b16 %v6931
        %v7337 = vunpack.c.l.b16 %v6932
        %v7338 = vunpack.c.h.b16 %v6932
        %v7339 = vunpack.c.l.b16 %v6933
        %v7340 = vunpack.c.h.b16 %v6933
        %v7341 = vunpack.c.l.b16 %v6934
        %v7342 = vunpack.c.h.b16 %v6934
        %v7343 = vunpack.c.l.b16 %v6935
        %v7344 = vunpack.c.h.b16 %v6935
        %v7345 = vunpack.c.l.b16 %v6936
        %v7346 = vunpack.c.h.b16 %v6936
        %v7347 = vunpack.c.l.b16 %v6937
        %v7348 = vunpack.c.h.b16 %v6937
        %v7349 = vunpack.c.l.b16 %v6938
        %v7350 = vunpack.c.h.b16 %v6938
        %v7351 = vunpack.c.l.b16 %v6939
        %v7352 = vunpack.c.h.b16 %v6939
        %v7353 = vunpack.c.l.b16 %v6940
        %v7354 = vunpack.c.h.b16 %v6940
        %v7355 = vunpack.c.l.b16 %v6941
        %v7356 = vunpack.c.h.b16 %v6941
        %v7357 = vunpack.c.l.b16 %v6942
        %v7358 = vunpack.c.h.b16 %v6942
        %v7359 = vunpack.c.l.b16 %v6943
        %v7360 = vunpack.c.h.b16 %v6943
        %v7361 = vunpack.c.l.b16 %v6944
        %v7362 = vunpack.c.h.b16 %v6944
        %v7363 = vunpack.c.l.b16 %v6945
        %v7364 = vunpack.c.h.b16 %v6945
        %v7365 = vunpack.c.l.b16 %v6946
        %v7366 = vunpack.c.h.b16 %v6946
        %v7367 = vunpack.c.l.b16 %v6947
        %v7368 = vunpack.c.h.b16 %v6947
        %v7369 = vunpack.c.l.b16 %v6948
        %v7370 = vunpack.c.h.b16 %v6948
        %v7371 = vunpack.c.l.b16 %v6949
        %v7372 = vunpack.c.h.b16 %v6949
        %v7373 = vunpack.c.l.b16 %v6950
        %v7374 = vunpack.c.h.b16 %v6950
        %v7375 = vpack.c.b16 %v7123, %v7119
        %v7376 = vpack.c.b16 %v7124, %v7120
        %v7377 = vpack.c.b16 %v7125, %v7121
        %v7378 = vpack.c.b16 %v7126, %v7122
        %v7379 = vpack.c.b16 %v7131, %v7127
        %v7380 = vpack.c.b16 %v7132, %v7128
        %v7381 = vpack.c.b16 %v7133, %v7129
        %v7382 = vpack.c.b16 %v7134, %v7130
        %v7383 = vpack.c.b16 %v7139, %v7135
        %v7384 = vpack.c.b16 %v7140, %v7136
        %v7385 = vpack.c.b16 %v7141, %v7137
        %v7386 = vpack.c.b16 %v7142, %v7138
        %v7387 = vpack.c.b16 %v7147, %v7143
        %v7388 = vpack.c.b16 %v7148, %v7144
        %v7389 = vpack.c.b16 %v7149, %v7145
        %v7390 = vpack.c.b16 %v7150, %v7146
        %v7391 = vpack.c.b16 %v7155, %v7151
        %v7392 = vpack.c.b16 %v7156, %v7152
        %v7393 = vpack.c.b16 %v7157, %v7153
        %v7394 = vpack.c.b16 %v7158, %v7154
        %v7395 = vpack.c.b16 %v7163, %v7159
        %v7396 = vpack.c.b16 %v7164, %v7160
        %v7397 = vpack.c.b16 %v7165, %v7161
        %v7398 = vpack.c.b16 %v7166, %v7162
        %v7399 = vpack.c.b16 %v7171, %v7167
        %v7400 = vpack.c.b16 %v7172, %v7168
        %v7401 = vpack.c.b16 %v7173, %v7169
        %v7402 = vpack.c.b16 %v7174, %v7170
        %v7403 = vpack.c.b16 %v7179, %v7175
        %v7404 = vpack.c.b16 %v7180, %v7176
        %v7405 = vpack.c.b16 %v7181, %v7177
        %v7406 = vpack.c.b16 %v7182, %v7178
        %v7407 = vpack.c.b16 %v7187, %v7183
        %v7408 = vpack.c.b16 %v7188, %v7184
        %v7409 = vpack.c.b16 %v7189, %v7185
        %v7410 = vpack.c.b16 %v7190, %v7186
        %v7411 = vpack.c.b16 %v7195, %v7191
        %v7412 = vpack.c.b16 %v7196, %v7192
        %v7413 = vpack.c.b16 %v7197, %v7193
        %v7414 = vpack.c.b16 %v7198, %v7194
        %v7415 = vpack.c.b16 %v7203, %v7199
        %v7416 = vpack.c.b16 %v7204, %v7200
        %v7417 = vpack.c.b16 %v7205, %v7201
        %v7418 = vpack.c.b16 %v7206, %v7202
        %v7419 = vpack.c.b16 %v7211, %v7207
        %v7420 = vpack.c.b16 %v7212, %v7208
        %v7421 = vpack.c.b16 %v7213, %v7209
        %v7422 = vpack.c.b16 %v7214, %v7210
        %v7423 = vpack.c.b16 %v7219, %v7215
        %v7424 = vpack.c.b16 %v7220, %v7216
        %v7425 = vpack.c.b16 %v7221, %v7217
        %v7426 = vpack.c.b16 %v7222, %v7218
        %v7427 = vpack.c.b16 %v7227, %v7223
        %v7428 = vpack.c.b16 %v7228, %v7224
        %v7429 = vpack.c.b16 %v7229, %v7225
        %v7430 = vpack.c.b16 %v7230, %v7226
        %v7431 = vpack.c.b16 %v7235, %v7231
        %v7432 = vpack.c.b16 %v7236, %v7232
        %v7433 = vpack.c.b16 %v7237, %v7233
        %v7434 = vpack.c.b16 %v7238, %v7234
        %v7435 = vpack.c.b16 %v7243, %v7239
        %v7436 = vpack.c.b16 %v7244, %v7240
        %v7437 = vpack.c.b16 %v7245, %v7241
        %v7438 = vpack.c.b16 %v7246, %v7242
        %v7439 = vpack.c.b16 %v7251, %v7247
        %v7440 = vpack.c.b16 %v7252, %v7248
        %v7441 = vpack.c.b16 %v7253, %v7249
        %v7442 = vpack.c.b16 %v7254, %v7250
        %v7443 = vpack.c.b16 %v7259, %v7255
        %v7444 = vpack.c.b16 %v7260, %v7256
        %v7445 = vpack.c.b16 %v7261, %v7257
        %v7446 = vpack.c.b16 %v7262, %v7258
        %v7447 = vpack.c.b16 %v7267, %v7263
        %v7448 = vpack.c.b16 %v7268, %v7264
        %v7449 = vpack.c.b16 %v7269, %v7265
        %v7450 = vpack.c.b16 %v7270, %v7266
        %v7451 = vpack.c.b16 %v7275, %v7271
        %v7452 = vpack.c.b16 %v7276, %v7272
        %v7453 = vpack.c.b16 %v7277, %v7273
        %v7454 = vpack.c.b16 %v7278, %v7274
        %v7455 = vpack.c.b16 %v7283, %v7279
        %v7456 = vpack.c.b16 %v7284, %v7280
        %v7457 = vpack.c.b16 %v7285, %v7281
        %v7458 = vpack.c.b16 %v7286, %v7282
        %v7459 = vpack.c.b16 %v7291, %v7287
        %v7460 = vpack.c.b16 %v7292, %v7288
        %v7461 = vpack.c.b16 %v7293, %v7289
        %v7462 = vpack.c.b16 %v7294, %v7290
        %v7463 = vpack.c.b16 %v7299, %v7295
        %v7464 = vpack.c.b16 %v7300, %v7296
        %v7465 = vpack.c.b16 %v7301, %v7297
        %v7466 = vpack.c.b16 %v7302, %v7298
        %v7467 = vpack.c.b16 %v7307, %v7303
        %v7468 = vpack.c.b16 %v7308, %v7304
        %v7469 = vpack.c.b16 %v7309, %v7305
        %v7470 = vpack.c.b16 %v7310, %v7306
        %v7471 = vpack.c.b16 %v7315, %v7311
        %v7472 = vpack.c.b16 %v7316, %v7312
        %v7473 = vpack.c.b16 %v7317, %v7313
        %v7474 = vpack.c.b16 %v7318, %v7314
        %v7475 = vpack.c.b16 %v7323, %v7319
        %v7476 = vpack.c.b16 %v7324, %v7320
        %v7477 = vpack.c.b16 %v7325, %v7321
        %v7478 = vpack.c.b16 %v7326, %v7322
        %v7479 = vpack.c.b16 %v7331, %v7327
        %v7480 = vpack.c.b16 %v7332, %v7328
        %v7481 = vpack.c.b16 %v7333, %v7329
        %v7482 = vpack.c.b16 %v7334, %v7330
        %v7483 = vpack.c.b16 %v7339, %v7335
        %v7484 = vpack.c.b16 %v7340, %v7336
        %v7485 = vpack.c.b16 %v7341, %v7337
        %v7486 = vpack.c.b16 %v7342, %v7338
        %v7487 = vpack.c.b16 %v7347, %v7343
        %v7488 = vpack.c.b16 %v7348, %v7344
        %v7489 = vpack.c.b16 %v7349, %v7345
        %v7490 = vpack.c.b16 %v7350, %v7346
        %v7491 = vpack.c.b16 %v7355, %v7351
        %v7492 = vpack.c.b16 %v7356, %v7352
        %v7493 = vpack.c.b16 %v7357, %v7353
        %v7494 = vpack.c.b16 %v7358, %v7354
        %v7495 = vpack.c.b16 %v7363, %v7359
        %v7496 = vpack.c.b16 %v7364, %v7360
        %v7497 = vpack.c.b16 %v7365, %v7361
        %v7498 = vpack.c.b16 %v7366, %v7362
        %v7499 = vpack.c.b16 %v7371, %v7367
        %v7500 = vpack.c.b16 %v7372, %v7368
        %v7501 = vpack.c.b16 %v7373, %v7369
        %v7502 = vpack.c.b16 %v7374, %v7370
        %7631 = vmatprep.subr.bf16.mxu0 %v7404
        %7632 = vmatpush1.bf16.msra.mxu0 %v7403
        %7633 = vmatprep.subr.bf16.mxu0 %v7400
        %7634 = vmatpush1.bf16.msra.mxu0 %v7399
        %7635 = vmatprep.subr.bf16.mxu0 %v7396
        %7636 = vmatpush1.bf16.msra.mxu0 %v7395
        %7637 = vmatprep.subr.bf16.mxu0 %v7392
        %7638 = vmatpush1.bf16.msra.mxu0 %v7391
        %7639 = vmatprep.subr.bf16.mxu0 %v7388
        %7640 = vmatpush1.bf16.msra.mxu0 %v7387
        %7641 = vmatprep.subr.bf16.mxu0 %v7384
        %7642 = vmatpush1.bf16.msra.mxu0 %v7383
        %7643 = vmatprep.subr.bf16.mxu0 %v7380
        %7644 = vmatpush1.bf16.msra.mxu0 %v7379
        %7645 = vmatprep.subr.bf16.mxu0 %v7376
        %7646 = vmatpush1.bf16.msra.mxu0 %v7375
        %7647 = vmatprep.subr.bf16.mxu0 %v7436
        %7648 = vmatpush2.bf16.msra.mxu0 %v7435
        %7649 = vmatprep.subr.bf16.mxu0 %v7432
        %7650 = vmatpush2.bf16.msra.mxu0 %v7431
        %7651 = vmatprep.subr.bf16.mxu0 %v7428
        %7652 = vmatpush2.bf16.msra.mxu0 %v7427
        %7653 = vmatprep.subr.bf16.mxu0 %v7424
        %7654 = vmatpush2.bf16.msra.mxu0 %v7423
        %7655 = vmatprep.subr.bf16.mxu0 %v7420
        %7656 = vmatpush2.bf16.msra.mxu0 %v7419
        %7657 = vmatprep.subr.bf16.mxu0 %v7416
        %7658 = vmatpush2.bf16.msra.mxu0 %v7415
        %7659 = vmatprep.subr.bf16.mxu0 %v7412
        %7660 = vmatpush2.bf16.msra.mxu0 %v7411
        %7661 = vmatprep.subr.bf16.mxu0 %v7408
        %7662 = vmatpush2.bf16.msra.mxu0 %v7407
        %7663 = vmatprep.mubr.bf16.mxu0 %v6984
        %7664 = vmatmul.mubr.bf16.gmra.mxu0 %v6983
        %v7665 = vpop.f32.mrf.mxu0
        %v7666 = vadd.f32 0.0, %v7665
        %v7667 = vpop.f32.mrf.mxu0
        %v7668 = vadd.f32 0.0, %v7667
        %v7669 = vpop.f32.mrf.mxu0
        %v7670 = vadd.f32 0.0, %v7669
        %v7671 = vpop.f32.mrf.mxu0
        %v7672 = vadd.f32 0.0, %v7671
        %7673 = vdwg.mxu0
        %7674 = vmatprep.subr.bf16.mxu0 %v7468
        %7675 = vmatpush1.bf16.msra.mxu0 %v7467
        %7676 = vmatprep.subr.bf16.mxu0 %v7464
        %7677 = vmatpush1.bf16.msra.mxu0 %v7463
        %7678 = vmatprep.subr.bf16.mxu0 %v7460
        %7679 = vmatpush1.bf16.msra.mxu0 %v7459
        %7680 = vmatprep.subr.bf16.mxu0 %v7456
        %7681 = vmatpush1.bf16.msra.mxu0 %v7455
        %7682 = vmatprep.subr.bf16.mxu0 %v7452
        %7683 = vmatpush1.bf16.msra.mxu0 %v7451
        %7684 = vmatprep.subr.bf16.mxu0 %v7448
        %7685 = vmatpush1.bf16.msra.mxu0 %v7447
        %7686 = vmatprep.subr.bf16.mxu0 %v7444
        %7687 = vmatpush1.bf16.msra.mxu0 %v7443
        %7688 = vmatprep.subr.bf16.mxu0 %v7440
        %7689 = vmatpush1.bf16.msra.mxu0 %v7439
        %7690 = vmatprep.subr.bf16.mxu0 %v7500
        %7691 = vmatpush2.bf16.msra.mxu0 %v7499
        %7692 = vmatprep.subr.bf16.mxu0 %v7496
        %7693 = vmatpush2.bf16.msra.mxu0 %v7495
        %7694 = vmatprep.subr.bf16.mxu0 %v7492
        %7695 = vmatpush2.bf16.msra.mxu0 %v7491
        %7696 = vmatprep.subr.bf16.mxu0 %v7488
        %7697 = vmatpush2.bf16.msra.mxu0 %v7487
        %7698 = vmatprep.subr.bf16.mxu0 %v7484
        %7699 = vmatpush2.bf16.msra.mxu0 %v7483
        %7700 = vmatprep.subr.bf16.mxu0 %v7480
        %7701 = vmatpush2.bf16.msra.mxu0 %v7479
        %7702 = vmatprep.subr.bf16.mxu0 %v7476
        %7703 = vmatpush2.bf16.msra.mxu0 %v7475
        %7704 = vmatprep.subr.bf16.mxu0 %v7472
        %7705 = vmatpush2.bf16.msra.mxu0 %v7471
        %7706 = vmatprep.mubr.bf16.mxu0 %v6986
        %7707 = vmatmul.mubr.bf16.gmra.mxu0 %v6985
        %v7708 = vpop.f32.mrf.mxu0
        %v7709 = vadd.f32 %v7666, %v7708
        %v7710 = vpop.f32.mrf.mxu0
        %v7711 = vadd.f32 %v7668, %v7710
        %v7712 = vpop.f32.mrf.mxu0
        %v7713 = vadd.f32 %v7670, %v7712
        %v7714 = vpop.f32.mrf.mxu0
        %v7715 = vadd.f32 %v7672, %v7714
        %7716 = vdwg.mxu0
        %7717 = vmatprep.subr.bf16.mxu0 %v7406
        %7718 = vmatpush1.bf16.msra.mxu0 %v7405
        %7719 = vmatprep.subr.bf16.mxu0 %v7402
        %7720 = vmatpush1.bf16.msra.mxu0 %v7401
        %7721 = vmatprep.subr.bf16.mxu0 %v7398
        %7722 = vmatpush1.bf16.msra.mxu0 %v7397
        %7723 = vmatprep.subr.bf16.mxu0 %v7394
        %7724 = vmatpush1.bf16.msra.mxu0 %v7393
        %7725 = vmatprep.subr.bf16.mxu0 %v7390
        %7726 = vmatpush1.bf16.msra.mxu0 %v7389
        %7727 = vmatprep.subr.bf16.mxu0 %v7386
        %7728 = vmatpush1.bf16.msra.mxu0 %v7385
        %7729 = vmatprep.subr.bf16.mxu0 %v7382
        %7730 = vmatpush1.bf16.msra.mxu0 %v7381
        %7731 = vmatprep.subr.bf16.mxu0 %v7378
        %7732 = vmatpush1.bf16.msra.mxu0 %v7377
        %7733 = vmatprep.subr.bf16.mxu0 %v7438
        %7734 = vmatpush2.bf16.msra.mxu0 %v7437
        %7735 = vmatprep.subr.bf16.mxu0 %v7434
        %7736 = vmatpush2.bf16.msra.mxu0 %v7433
        %7737 = vmatprep.subr.bf16.mxu0 %v7430
        %7738 = vmatpush2.bf16.msra.mxu0 %v7429
        %7739 = vmatprep.subr.bf16.mxu0 %v7426
        %7740 = vmatpush2.bf16.msra.mxu0 %v7425
        %7741 = vmatprep.subr.bf16.mxu0 %v7422
        %7742 = vmatpush2.bf16.msra.mxu0 %v7421
        %7743 = vmatprep.subr.bf16.mxu0 %v7418
        %7744 = vmatpush2.bf16.msra.mxu0 %v7417
        %7745 = vmatprep.subr.bf16.mxu0 %v7414
        %7746 = vmatpush2.bf16.msra.mxu0 %v7413
        %7747 = vmatprep.subr.bf16.mxu0 %v7410
        %7748 = vmatpush2.bf16.msra.mxu0 %v7409
        %7749 = vmatprep.mubr.bf16.mxu0 %v6984
        %7750 = vmatmul.mubr.bf16.gmra.mxu0 %v6983
        %v7751 = vpop.f32.mrf.mxu0
        %v7752 = vadd.f32 0.0, %v7751
        %v7753 = vpop.f32.mrf.mxu0
        %v7754 = vadd.f32 0.0, %v7753
        %v7755 = vpop.f32.mrf.mxu0
        %v7756 = vadd.f32 0.0, %v7755
        %v7757 = vpop.f32.mrf.mxu0
        %v7758 = vadd.f32 0.0, %v7757
        %7759 = vdwg.mxu0
        %7760 = vmatprep.subr.bf16.mxu0 %v7470
        %7761 = vmatpush1.bf16.msra.mxu0 %v7469
        %7762 = vmatprep.subr.bf16.mxu0 %v7466
        %7763 = vmatpush1.bf16.msra.mxu0 %v7465
        %7764 = vmatprep.subr.bf16.mxu0 %v7462
        %7765 = vmatpush1.bf16.msra.mxu0 %v7461
        %7766 = vmatprep.subr.bf16.mxu0 %v7458
        %7767 = vmatpush1.bf16.msra.mxu0 %v7457
        %7768 = vmatprep.subr.bf16.mxu0 %v7454
        %7769 = vmatpush1.bf16.msra.mxu0 %v7453
        %7770 = vmatprep.subr.bf16.mxu0 %v7450
        %7771 = vmatpush1.bf16.msra.mxu0 %v7449
        %7772 = vmatprep.subr.bf16.mxu0 %v7446
        %7773 = vmatpush1.bf16.msra.mxu0 %v7445
        %7774 = vmatprep.subr.bf16.mxu0 %v7442
        %7775 = vmatpush1.bf16.msra.mxu0 %v7441
        %7776 = vmatprep.subr.bf16.mxu0 %v7502
        %7777 = vmatpush2.bf16.msra.mxu0 %v7501
        %7778 = vmatprep.subr.bf16.mxu0 %v7498
        %7779 = vmatpush2.bf16.msra.mxu0 %v7497
        %7780 = vmatprep.subr.bf16.mxu0 %v7494
        %7781 = vmatpush2.bf16.msra.mxu0 %v7493
        %7782 = vmatprep.subr.bf16.mxu0 %v7490
        %7783 = vmatpush2.bf16.msra.mxu0 %v7489
        %7784 = vmatprep.subr.bf16.mxu0 %v7486
        %7785 = vmatpush2.bf16.msra.mxu0 %v7485
        %7786 = vmatprep.subr.bf16.mxu0 %v7482
        %7787 = vmatpush2.bf16.msra.mxu0 %v7481
        %7788 = vmatprep.subr.bf16.mxu0 %v7478
        %7789 = vmatpush2.bf16.msra.mxu0 %v7477
        %7790 = vmatprep.subr.bf16.mxu0 %v7474
        %7791 = vmatpush2.bf16.msra.mxu0 %v7473
        %7792 = vmatprep.mubr.bf16.mxu0 %v6986
        %7793 = vmatmul.mubr.bf16.gmra.mxu0 %v6985
        %v7794 = vpop.f32.mrf.mxu0
        %v7795 = vadd.f32 %v7752, %v7794
        %v7796 = vpop.f32.mrf.mxu0
        %v7797 = vadd.f32 %v7754, %v7796
        %v7798 = vpop.f32.mrf.mxu0
        %v7799 = vadd.f32 %v7756, %v7798
        %v7800 = vpop.f32.mrf.mxu0
        %v7801 = vadd.f32 %v7758, %v7800
        %7802 = vdwg.mxu0
        %v7803 = vadd.f32 %v6737, %v7709
        %v7804 = vadd.f32 %v6738, %v7711
        %v7805 = vadd.f32 %v6739, %v7795
        %v7806 = vadd.f32 %v6740, %v7797
        %v7807 = vadd.f32 %v6741, %v7713
        %v7808 = vadd.f32 %v6742, %v7715
        %v7809 = vadd.f32 %v6743, %v7799
        %v7810 = vadd.f32 %v6744, %v7801
        %v7811 = vld [vmem:[%s6745] sm:$0x77]
        %v7812 = vld [vmem:[%s6745 + $0x8] sm:$0x77]
        %v7813 = vld [vmem:[%s6745 + $0x10] sm:$0x77]
        %v7814 = vld [vmem:[%s6745 + $0x18] sm:$0x77]
        %v7815 = vld [vmem:[%s6745 + $0x20] sm:$0x77]
        %v7816 = vld [vmem:[%s6745 + $0x28] sm:$0x77]
        %v7817 = vld [vmem:[%s6745 + $0x30] sm:$0x77]
        %v7818 = vld [vmem:[%s6745 + $0x38] sm:$0x77]
        %v7828 = vunpack.c.l.s4 1983009808
        %v7829 = vunpack.c.0.s8 %v7828
        %v7830 = vlaneseq
        %v7831 = vshrl.u32 %v7830, 7
        %v7832 = vsub.s32 %v7829, %v7831
        %v7833 = vrot.slane %v7811, %v7832
        %v7835 = vunpack.c.l.s4 1983009808
        %v7836 = vunpack.c.0.s8 %v7835
        %v7837 = vlaneseq
        %v7838 = vshrl.u32 %v7837, 7
        %v7839 = vsub.s32 %v7836, %v7838
        %v7840 = vrot.slane %v7812, %v7839
        %v7841 = vcombine.low %v7833, %v7840
        %v7842 = vcombine.high %v7833, %v7840
        %v7844 = vunpack.c.l.s4 1983009808
        %v7845 = vunpack.c.0.s8 %v7844
        %v7846 = vlaneseq
        %v7847 = vshrl.u32 %v7846, 7
        %v7848 = vsub.s32 %v7845, %v7847
        %v7849 = vrot.slane %v7813, %v7848
        %v7851 = vunpack.c.l.s4 1983009808
        %v7852 = vunpack.c.0.s8 %v7851
        %v7853 = vlaneseq
        %v7854 = vshrl.u32 %v7853, 7
        %v7855 = vsub.s32 %v7852, %v7854
        %v7856 = vrot.slane %v7814, %v7855
        %v7857 = vcombine.low %v7849, %v7856
        %v7858 = vcombine.high %v7849, %v7856
        %v7860 = vunpack.c.l.s4 1983009808
        %v7861 = vunpack.c.0.s8 %v7860
        %v7862 = vlaneseq
        %v7863 = vshrl.u32 %v7862, 7
        %v7864 = vsub.s32 %v7861, %v7863
        %v7865 = vrot.slane %v7815, %v7864
        %v7867 = vunpack.c.l.s4 1983009808
        %v7868 = vunpack.c.0.s8 %v7867
        %v7869 = vlaneseq
        %v7870 = vshrl.u32 %v7869, 7
        %v7871 = vsub.s32 %v7868, %v7870
        %v7872 = vrot.slane %v7816, %v7871
        %v7873 = vcombine.low %v7865, %v7872
        %v7874 = vcombine.high %v7865, %v7872
        %v7876 = vunpack.c.l.s4 1983009808
        %v7877 = vunpack.c.0.s8 %v7876
        %v7878 = vlaneseq
        %v7879 = vshrl.u32 %v7878, 7
        %v7880 = vsub.s32 %v7877, %v7879
        %v7881 = vrot.slane %v7817, %v7880
        %v7883 = vunpack.c.l.s4 1983009808
        %v7884 = vunpack.c.0.s8 %v7883
        %v7885 = vlaneseq
        %v7886 = vshrl.u32 %v7885, 7
        %v7887 = vsub.s32 %v7884, %v7886
        %v7888 = vrot.slane %v7818, %v7887
        %v7889 = vcombine.low %v7881, %v7888
        %v7890 = vcombine.high %v7881, %v7888
        %v7892 = vshrl.u32 %v7841, 16
        %v7894 = vrot.slane %v7892, 6
        %v7895 = vshll.u32 %v7841, 16
        %v7897 = vrot.slane %v7895, 7
        %v7898 = vor.u32 %v7894, %v7897
        %v7899 = vrot.slane %v7898, 2
        %v7901 = vshll.u32 %v7842, 16
        %v7903 = vrot.slane %v7901, 7
        %v7904 = vsel %vm487, %v7899, %v7903
        %v7906 = vshrl.u32 %v7857, 16
        %v7908 = vrot.slane %v7906, 6
        %v7909 = vshll.u32 %v7857, 16
        %v7911 = vrot.slane %v7909, 7
        %v7912 = vor.u32 %v7908, %v7911
        %v7913 = vrot.slane %v7912, 2
        %v7915 = vshll.u32 %v7858, 16
        %v7917 = vrot.slane %v7915, 7
        %v7918 = vsel %vm487, %v7913, %v7917
        %v7920 = vshrl.u32 %v7873, 16
        %v7922 = vrot.slane %v7920, 6
        %v7923 = vshll.u32 %v7873, 16
        %v7925 = vrot.slane %v7923, 7
        %v7926 = vor.u32 %v7922, %v7925
        %v7927 = vrot.slane %v7926, 2
        %v7929 = vshll.u32 %v7874, 16
        %v7931 = vrot.slane %v7929, 7
        %v7932 = vsel %vm487, %v7927, %v7931
        %v7934 = vshrl.u32 %v7889, 16
        %v7936 = vrot.slane %v7934, 6
        %v7937 = vshll.u32 %v7889, 16
        %v7939 = vrot.slane %v7937, 7
        %v7940 = vor.u32 %v7936, %v7939
        %v7941 = vrot.slane %v7940, 2
        %v7943 = vshll.u32 %v7890, 16
        %v7945 = vrot.slane %v7943, 7
        %v7946 = vsel %vm487, %v7941, %v7945
        %s7947 = scalar_lea.vmem [#allocation2], 7168
        %v7948 = vld [vmem:[%s7947] sm:$0xff]
        %v7949 = vld [vmem:[%s7947 + $0x8] sm:$0xff]
        %v7950 = vld [vmem:[%s7947 + $0x10] sm:$0xff]
        %v7951 = vld [vmem:[%s7947 + $0x18] sm:$0xff]
        %v7952 = vld [vmem:[%s7947 + $0x20] sm:$0xff]
        %v7953 = vld [vmem:[%s7947 + $0x28] sm:$0xff]
        %v7954 = vld [vmem:[%s7947 + $0x30] sm:$0xff]
        %v7955 = vld [vmem:[%s7947 + $0x38] sm:$0xff]
        %v7956 = vld [vmem:[%s7947 + $0x40] sm:$0xff]
        %v7957 = vld [vmem:[%s7947 + $0x48] sm:$0xff]
        %v7958 = vld [vmem:[%s7947 + $0x50] sm:$0xff]
        %v7959 = vld [vmem:[%s7947 + $0x58] sm:$0xff]
        %v7960 = vld [vmem:[%s7947 + $0x60] sm:$0xff]
        %v7961 = vld [vmem:[%s7947 + $0x68] sm:$0xff]
        %v7962 = vld [vmem:[%s7947 + $0x70] sm:$0xff]
        %v7963 = vld [vmem:[%s7947 + $0x78] sm:$0xff]
        %v7964 = vld [vmem:[%s7947 + $0x80] sm:$0xff]
        %v7965 = vld [vmem:[%s7947 + $0x88] sm:$0xff]
        %v7966 = vld [vmem:[%s7947 + $0x90] sm:$0xff]
        %v7967 = vld [vmem:[%s7947 + $0x98] sm:$0xff]
        %v7968 = vld [vmem:[%s7947 + $0xa0] sm:$0xff]
        %v7969 = vld [vmem:[%s7947 + $0xa8] sm:$0xff]
        %v7970 = vld [vmem:[%s7947 + $0xb0] sm:$0xff]
        %v7971 = vld [vmem:[%s7947 + $0xb8] sm:$0xff]
        %v7972 = vld [vmem:[%s7947 + $0xc0] sm:$0xff]
        %v7973 = vld [vmem:[%s7947 + $0xc8] sm:$0xff]
        %v7974 = vld [vmem:[%s7947 + $0xd0] sm:$0xff]
        %v7975 = vld [vmem:[%s7947 + $0xd8] sm:$0xff]
        %v7976 = vld [vmem:[%s7947 + $0xe0] sm:$0xff]
        %v7977 = vld [vmem:[%s7947 + $0xe8] sm:$0xff]
        %v7978 = vld [vmem:[%s7947 + $0xf0] sm:$0xff]
        %v7979 = vld [vmem:[%s7947 + $0xf8] sm:$0xff]
        %v7980 = vld [vmem:[%s7947 + $0x100] sm:$0xff]
        %v7981 = vld [vmem:[%s7947 + $0x108] sm:$0xff]
        %v7982 = vld [vmem:[%s7947 + $0x110] sm:$0xff]
        %v7983 = vld [vmem:[%s7947 + $0x118] sm:$0xff]
        %v7984 = vld [vmem:[%s7947 + $0x120] sm:$0xff]
        %v7985 = vld [vmem:[%s7947 + $0x128] sm:$0xff]
        %v7986 = vld [vmem:[%s7947 + $0x130] sm:$0xff]
        %v7987 = vld [vmem:[%s7947 + $0x138] sm:$0xff]
        %v7988 = vld [vmem:[%s7947 + $0x140] sm:$0xff]
        %v7989 = vld [vmem:[%s7947 + $0x148] sm:$0xff]
        %v7990 = vld [vmem:[%s7947 + $0x150] sm:$0xff]
        %v7991 = vld [vmem:[%s7947 + $0x158] sm:$0xff]
        %v7992 = vld [vmem:[%s7947 + $0x160] sm:$0xff]
        %v7993 = vld [vmem:[%s7947 + $0x168] sm:$0xff]
        %v7994 = vld [vmem:[%s7947 + $0x170] sm:$0xff]
        %v7995 = vld [vmem:[%s7947 + $0x178] sm:$0xff]
        %v7996 = vld [vmem:[%s7947 + $0x180] sm:$0xff]
        %v7997 = vld [vmem:[%s7947 + $0x188] sm:$0xff]
        %v7998 = vld [vmem:[%s7947 + $0x190] sm:$0xff]
        %v7999 = vld [vmem:[%s7947 + $0x198] sm:$0xff]
        %v8000 = vld [vmem:[%s7947 + $0x1a0] sm:$0xff]
        %v8001 = vld [vmem:[%s7947 + $0x1a8] sm:$0xff]
        %v8002 = vld [vmem:[%s7947 + $0x1b0] sm:$0xff]
        %v8003 = vld [vmem:[%s7947 + $0x1b8] sm:$0xff]
        %v8004 = vld [vmem:[%s7947 + $0x1c0] sm:$0xff]
        %v8005 = vld [vmem:[%s7947 + $0x1c8] sm:$0xff]
        %v8006 = vld [vmem:[%s7947 + $0x1d0] sm:$0xff]
        %v8007 = vld [vmem:[%s7947 + $0x1d8] sm:$0xff]
        %v8008 = vld [vmem:[%s7947 + $0x1e0] sm:$0xff]
        %v8009 = vld [vmem:[%s7947 + $0x1e8] sm:$0xff]
        %v8010 = vld [vmem:[%s7947 + $0x1f0] sm:$0xff]
        %v8011 = vld [vmem:[%s7947 + $0x1f8] sm:$0xff]
        %v8012 = vld [vmem:[%s7947 + $0x200] sm:$0xff]
        %v8013 = vld [vmem:[%s7947 + $0x208] sm:$0xff]
        %v8014 = vld [vmem:[%s7947 + $0x210] sm:$0xff]
        %v8015 = vld [vmem:[%s7947 + $0x218] sm:$0xff]
        %v8016 = vld [vmem:[%s7947 + $0x220] sm:$0xff]
        %v8017 = vld [vmem:[%s7947 + $0x228] sm:$0xff]
        %v8018 = vld [vmem:[%s7947 + $0x230] sm:$0xff]
        %v8019 = vld [vmem:[%s7947 + $0x238] sm:$0xff]
        %v8020 = vld [vmem:[%s7947 + $0x240] sm:$0xff]
        %v8021 = vld [vmem:[%s7947 + $0x248] sm:$0xff]
        %v8022 = vld [vmem:[%s7947 + $0x250] sm:$0xff]
        %v8023 = vld [vmem:[%s7947 + $0x258] sm:$0xff]
        %v8024 = vld [vmem:[%s7947 + $0x260] sm:$0xff]
        %v8025 = vld [vmem:[%s7947 + $0x268] sm:$0xff]
        %v8026 = vld [vmem:[%s7947 + $0x270] sm:$0xff]
        %v8027 = vld [vmem:[%s7947 + $0x278] sm:$0xff]
        %v8028 = vld [vmem:[%s7947 + $0x280] sm:$0xff]
        %v8029 = vld [vmem:[%s7947 + $0x288] sm:$0xff]
        %v8030 = vld [vmem:[%s7947 + $0x290] sm:$0xff]
        %v8031 = vld [vmem:[%s7947 + $0x298] sm:$0xff]
        %v8032 = vld [vmem:[%s7947 + $0x2a0] sm:$0xff]
        %v8033 = vld [vmem:[%s7947 + $0x2a8] sm:$0xff]
        %v8034 = vld [vmem:[%s7947 + $0x2b0] sm:$0xff]
        %v8035 = vld [vmem:[%s7947 + $0x2b8] sm:$0xff]
        %v8036 = vld [vmem:[%s7947 + $0x2c0] sm:$0xff]
        %v8037 = vld [vmem:[%s7947 + $0x2c8] sm:$0xff]
        %v8038 = vld [vmem:[%s7947 + $0x2d0] sm:$0xff]
        %v8039 = vld [vmem:[%s7947 + $0x2d8] sm:$0xff]
        %v8040 = vld [vmem:[%s7947 + $0x2e0] sm:$0xff]
        %v8041 = vld [vmem:[%s7947 + $0x2e8] sm:$0xff]
        %v8042 = vld [vmem:[%s7947 + $0x2f0] sm:$0xff]
        %v8043 = vld [vmem:[%s7947 + $0x2f8] sm:$0xff]
        %v8044 = vld [vmem:[%s7947 + $0x300] sm:$0xff]
        %v8045 = vld [vmem:[%s7947 + $0x308] sm:$0xff]
        %v8046 = vld [vmem:[%s7947 + $0x310] sm:$0xff]
        %v8047 = vld [vmem:[%s7947 + $0x318] sm:$0xff]
        %v8048 = vld [vmem:[%s7947 + $0x320] sm:$0xff]
        %v8049 = vld [vmem:[%s7947 + $0x328] sm:$0xff]
        %v8050 = vld [vmem:[%s7947 + $0x330] sm:$0xff]
        %v8051 = vld [vmem:[%s7947 + $0x338] sm:$0xff]
        %v8052 = vld [vmem:[%s7947 + $0x340] sm:$0xff]
        %v8053 = vld [vmem:[%s7947 + $0x348] sm:$0xff]
        %v8054 = vld [vmem:[%s7947 + $0x350] sm:$0xff]
        %v8055 = vld [vmem:[%s7947 + $0x358] sm:$0xff]
        %v8056 = vld [vmem:[%s7947 + $0x360] sm:$0xff]
        %v8057 = vld [vmem:[%s7947 + $0x368] sm:$0xff]
        %v8058 = vld [vmem:[%s7947 + $0x370] sm:$0xff]
        %v8059 = vld [vmem:[%s7947 + $0x378] sm:$0xff]
        %v8060 = vld [vmem:[%s7947 + $0x380] sm:$0xff]
        %v8061 = vld [vmem:[%s7947 + $0x388] sm:$0xff]
        %v8062 = vld [vmem:[%s7947 + $0x390] sm:$0xff]
        %v8063 = vld [vmem:[%s7947 + $0x398] sm:$0xff]
        %v8064 = vld [vmem:[%s7947 + $0x3a0] sm:$0xff]
        %v8065 = vld [vmem:[%s7947 + $0x3a8] sm:$0xff]
        %v8066 = vld [vmem:[%s7947 + $0x3b0] sm:$0xff]
        %v8067 = vld [vmem:[%s7947 + $0x3b8] sm:$0xff]
        %v8068 = vld [vmem:[%s7947 + $0x3c0] sm:$0xff]
        %v8069 = vld [vmem:[%s7947 + $0x3c8] sm:$0xff]
        %v8070 = vld [vmem:[%s7947 + $0x3d0] sm:$0xff]
        %v8071 = vld [vmem:[%s7947 + $0x3d8] sm:$0xff]
        %v8072 = vld [vmem:[%s7947 + $0x3e0] sm:$0xff]
        %v8073 = vld [vmem:[%s7947 + $0x3e8] sm:$0xff]
        %v8074 = vld [vmem:[%s7947 + $0x3f0] sm:$0xff]
        %v8075 = vld [vmem:[%s7947 + $0x3f8] sm:$0xff]
        %v8076 = vcombine.low %v7904, %v7918
        %v8077 = vcombine.high %v7904, %v7918
        %v8078 = vcombine.low %v7932, %v7946
        %v8079 = vcombine.high %v7932, %v7946
        %v8081 = vunpack.c.l.s4 1983009808
        %v8082 = vunpack.c.0.s8 %v8081
        %v8083 = vlaneseq
        %v8084 = vshrl.u32 %v8083, 7
        %v8085 = vsub.s32 %v8082, %v8084
        %v8086 = vrot.slane %v8076, %v8085
        %v8088 = vunpack.c.l.s4 1983009808
        %v8089 = vunpack.c.0.s8 %v8088
        %v8090 = vlaneseq
        %v8091 = vshrl.u32 %v8090, 7
        %v8092 = vsub.s32 %v8089, %v8091
        %v8093 = vrot.slane %v8077, %v8092
        %v8095 = vunpack.c.l.s4 1983009808
        %v8096 = vunpack.c.0.s8 %v8095
        %v8097 = vlaneseq
        %v8098 = vshrl.u32 %v8097, 7
        %v8099 = vsub.s32 %v8096, %v8098
        %v8100 = vrot.slane %v8078, %v8099
        %v8102 = vunpack.c.l.s4 1983009808
        %v8103 = vunpack.c.0.s8 %v8102
        %v8104 = vlaneseq
        %v8105 = vshrl.u32 %v8104, 7
        %v8106 = vsub.s32 %v8103, %v8105
        %v8107 = vrot.slane %v8079, %v8106
        %v8108 = vcombine.low %v8086, %v8100
        %v8109 = vcombine.high %v8086, %v8100
        %v8110 = vcombine.low %v8093, %v8107
        %v8111 = vcombine.high %v8093, %v8107
        %v8244 = vunpack.c.l.b16 %v7948
        %v8245 = vunpack.c.h.b16 %v7948
        %v8246 = vunpack.c.l.b16 %v7949
        %v8247 = vunpack.c.h.b16 %v7949
        %v8248 = vunpack.c.l.b16 %v7950
        %v8249 = vunpack.c.h.b16 %v7950
        %v8250 = vunpack.c.l.b16 %v7951
        %v8251 = vunpack.c.h.b16 %v7951
        %v8252 = vunpack.c.l.b16 %v7952
        %v8253 = vunpack.c.h.b16 %v7952
        %v8254 = vunpack.c.l.b16 %v7953
        %v8255 = vunpack.c.h.b16 %v7953
        %v8256 = vunpack.c.l.b16 %v7954
        %v8257 = vunpack.c.h.b16 %v7954
        %v8258 = vunpack.c.l.b16 %v7955
        %v8259 = vunpack.c.h.b16 %v7955
        %v8260 = vunpack.c.l.b16 %v7956
        %v8261 = vunpack.c.h.b16 %v7956
        %v8262 = vunpack.c.l.b16 %v7957
        %v8263 = vunpack.c.h.b16 %v7957
        %v8264 = vunpack.c.l.b16 %v7958
        %v8265 = vunpack.c.h.b16 %v7958
        %v8266 = vunpack.c.l.b16 %v7959
        %v8267 = vunpack.c.h.b16 %v7959
        %v8268 = vunpack.c.l.b16 %v7960
        %v8269 = vunpack.c.h.b16 %v7960
        %v8270 = vunpack.c.l.b16 %v7961
        %v8271 = vunpack.c.h.b16 %v7961
        %v8272 = vunpack.c.l.b16 %v7962
        %v8273 = vunpack.c.h.b16 %v7962
        %v8274 = vunpack.c.l.b16 %v7963
        %v8275 = vunpack.c.h.b16 %v7963
        %v8276 = vunpack.c.l.b16 %v7964
        %v8277 = vunpack.c.h.b16 %v7964
        %v8278 = vunpack.c.l.b16 %v7965
        %v8279 = vunpack.c.h.b16 %v7965
        %v8280 = vunpack.c.l.b16 %v7966
        %v8281 = vunpack.c.h.b16 %v7966
        %v8282 = vunpack.c.l.b16 %v7967
        %v8283 = vunpack.c.h.b16 %v7967
        %v8284 = vunpack.c.l.b16 %v7968
        %v8285 = vunpack.c.h.b16 %v7968
        %v8286 = vunpack.c.l.b16 %v7969
        %v8287 = vunpack.c.h.b16 %v7969
        %v8288 = vunpack.c.l.b16 %v7970
        %v8289 = vunpack.c.h.b16 %v7970
        %v8290 = vunpack.c.l.b16 %v7971
        %v8291 = vunpack.c.h.b16 %v7971
        %v8292 = vunpack.c.l.b16 %v7972
        %v8293 = vunpack.c.h.b16 %v7972
        %v8294 = vunpack.c.l.b16 %v7973
        %v8295 = vunpack.c.h.b16 %v7973
        %v8296 = vunpack.c.l.b16 %v7974
        %v8297 = vunpack.c.h.b16 %v7974
        %v8298 = vunpack.c.l.b16 %v7975
        %v8299 = vunpack.c.h.b16 %v7975
        %v8300 = vunpack.c.l.b16 %v7976
        %v8301 = vunpack.c.h.b16 %v7976
        %v8302 = vunpack.c.l.b16 %v7977
        %v8303 = vunpack.c.h.b16 %v7977
        %v8304 = vunpack.c.l.b16 %v7978
        %v8305 = vunpack.c.h.b16 %v7978
        %v8306 = vunpack.c.l.b16 %v7979
        %v8307 = vunpack.c.h.b16 %v7979
        %v8308 = vunpack.c.l.b16 %v7980
        %v8309 = vunpack.c.h.b16 %v7980
        %v8310 = vunpack.c.l.b16 %v7981
        %v8311 = vunpack.c.h.b16 %v7981
        %v8312 = vunpack.c.l.b16 %v7982
        %v8313 = vunpack.c.h.b16 %v7982
        %v8314 = vunpack.c.l.b16 %v7983
        %v8315 = vunpack.c.h.b16 %v7983
        %v8316 = vunpack.c.l.b16 %v7984
        %v8317 = vunpack.c.h.b16 %v7984
        %v8318 = vunpack.c.l.b16 %v7985
        %v8319 = vunpack.c.h.b16 %v7985
        %v8320 = vunpack.c.l.b16 %v7986
        %v8321 = vunpack.c.h.b16 %v7986
        %v8322 = vunpack.c.l.b16 %v7987
        %v8323 = vunpack.c.h.b16 %v7987
        %v8324 = vunpack.c.l.b16 %v7988
        %v8325 = vunpack.c.h.b16 %v7988
        %v8326 = vunpack.c.l.b16 %v7989
        %v8327 = vunpack.c.h.b16 %v7989
        %v8328 = vunpack.c.l.b16 %v7990
        %v8329 = vunpack.c.h.b16 %v7990
        %v8330 = vunpack.c.l.b16 %v7991
        %v8331 = vunpack.c.h.b16 %v7991
        %v8332 = vunpack.c.l.b16 %v7992
        %v8333 = vunpack.c.h.b16 %v7992
        %v8334 = vunpack.c.l.b16 %v7993
        %v8335 = vunpack.c.h.b16 %v7993
        %v8336 = vunpack.c.l.b16 %v7994
        %v8337 = vunpack.c.h.b16 %v7994
        %v8338 = vunpack.c.l.b16 %v7995
        %v8339 = vunpack.c.h.b16 %v7995
        %v8340 = vunpack.c.l.b16 %v7996
        %v8341 = vunpack.c.h.b16 %v7996
        %v8342 = vunpack.c.l.b16 %v7997
        %v8343 = vunpack.c.h.b16 %v7997
        %v8344 = vunpack.c.l.b16 %v7998
        %v8345 = vunpack.c.h.b16 %v7998
        %v8346 = vunpack.c.l.b16 %v7999
        %v8347 = vunpack.c.h.b16 %v7999
        %v8348 = vunpack.c.l.b16 %v8000
        %v8349 = vunpack.c.h.b16 %v8000
        %v8350 = vunpack.c.l.b16 %v8001
        %v8351 = vunpack.c.h.b16 %v8001
        %v8352 = vunpack.c.l.b16 %v8002
        %v8353 = vunpack.c.h.b16 %v8002
        %v8354 = vunpack.c.l.b16 %v8003
        %v8355 = vunpack.c.h.b16 %v8003
        %v8356 = vunpack.c.l.b16 %v8004
        %v8357 = vunpack.c.h.b16 %v8004
        %v8358 = vunpack.c.l.b16 %v8005
        %v8359 = vunpack.c.h.b16 %v8005
        %v8360 = vunpack.c.l.b16 %v8006
        %v8361 = vunpack.c.h.b16 %v8006
        %v8362 = vunpack.c.l.b16 %v8007
        %v8363 = vunpack.c.h.b16 %v8007
        %v8364 = vunpack.c.l.b16 %v8008
        %v8365 = vunpack.c.h.b16 %v8008
        %v8366 = vunpack.c.l.b16 %v8009
        %v8367 = vunpack.c.h.b16 %v8009
        %v8368 = vunpack.c.l.b16 %v8010
        %v8369 = vunpack.c.h.b16 %v8010
        %v8370 = vunpack.c.l.b16 %v8011
        %v8371 = vunpack.c.h.b16 %v8011
        %v8372 = vunpack.c.l.b16 %v8012
        %v8373 = vunpack.c.h.b16 %v8012
        %v8374 = vunpack.c.l.b16 %v8013
        %v8375 = vunpack.c.h.b16 %v8013
        %v8376 = vunpack.c.l.b16 %v8014
        %v8377 = vunpack.c.h.b16 %v8014
        %v8378 = vunpack.c.l.b16 %v8015
        %v8379 = vunpack.c.h.b16 %v8015
        %v8380 = vunpack.c.l.b16 %v8016
        %v8381 = vunpack.c.h.b16 %v8016
        %v8382 = vunpack.c.l.b16 %v8017
        %v8383 = vunpack.c.h.b16 %v8017
        %v8384 = vunpack.c.l.b16 %v8018
        %v8385 = vunpack.c.h.b16 %v8018
        %v8386 = vunpack.c.l.b16 %v8019
        %v8387 = vunpack.c.h.b16 %v8019
        %v8388 = vunpack.c.l.b16 %v8020
        %v8389 = vunpack.c.h.b16 %v8020
        %v8390 = vunpack.c.l.b16 %v8021
        %v8391 = vunpack.c.h.b16 %v8021
        %v8392 = vunpack.c.l.b16 %v8022
        %v8393 = vunpack.c.h.b16 %v8022
        %v8394 = vunpack.c.l.b16 %v8023
        %v8395 = vunpack.c.h.b16 %v8023
        %v8396 = vunpack.c.l.b16 %v8024
        %v8397 = vunpack.c.h.b16 %v8024
        %v8398 = vunpack.c.l.b16 %v8025
        %v8399 = vunpack.c.h.b16 %v8025
        %v8400 = vunpack.c.l.b16 %v8026
        %v8401 = vunpack.c.h.b16 %v8026
        %v8402 = vunpack.c.l.b16 %v8027
        %v8403 = vunpack.c.h.b16 %v8027
        %v8404 = vunpack.c.l.b16 %v8028
        %v8405 = vunpack.c.h.b16 %v8028
        %v8406 = vunpack.c.l.b16 %v8029
        %v8407 = vunpack.c.h.b16 %v8029
        %v8408 = vunpack.c.l.b16 %v8030
        %v8409 = vunpack.c.h.b16 %v8030
        %v8410 = vunpack.c.l.b16 %v8031
        %v8411 = vunpack.c.h.b16 %v8031
        %v8412 = vunpack.c.l.b16 %v8032
        %v8413 = vunpack.c.h.b16 %v8032
        %v8414 = vunpack.c.l.b16 %v8033
        %v8415 = vunpack.c.h.b16 %v8033
        %v8416 = vunpack.c.l.b16 %v8034
        %v8417 = vunpack.c.h.b16 %v8034
        %v8418 = vunpack.c.l.b16 %v8035
        %v8419 = vunpack.c.h.b16 %v8035
        %v8420 = vunpack.c.l.b16 %v8036
        %v8421 = vunpack.c.h.b16 %v8036
        %v8422 = vunpack.c.l.b16 %v8037
        %v8423 = vunpack.c.h.b16 %v8037
        %v8424 = vunpack.c.l.b16 %v8038
        %v8425 = vunpack.c.h.b16 %v8038
        %v8426 = vunpack.c.l.b16 %v8039
        %v8427 = vunpack.c.h.b16 %v8039
        %v8428 = vunpack.c.l.b16 %v8040
        %v8429 = vunpack.c.h.b16 %v8040
        %v8430 = vunpack.c.l.b16 %v8041
        %v8431 = vunpack.c.h.b16 %v8041
        %v8432 = vunpack.c.l.b16 %v8042
        %v8433 = vunpack.c.h.b16 %v8042
        %v8434 = vunpack.c.l.b16 %v8043
        %v8435 = vunpack.c.h.b16 %v8043
        %v8436 = vunpack.c.l.b16 %v8044
        %v8437 = vunpack.c.h.b16 %v8044
        %v8438 = vunpack.c.l.b16 %v8045
        %v8439 = vunpack.c.h.b16 %v8045
        %v8440 = vunpack.c.l.b16 %v8046
        %v8441 = vunpack.c.h.b16 %v8046
        %v8442 = vunpack.c.l.b16 %v8047
        %v8443 = vunpack.c.h.b16 %v8047
        %v8444 = vunpack.c.l.b16 %v8048
        %v8445 = vunpack.c.h.b16 %v8048
        %v8446 = vunpack.c.l.b16 %v8049
        %v8447 = vunpack.c.h.b16 %v8049
        %v8448 = vunpack.c.l.b16 %v8050
        %v8449 = vunpack.c.h.b16 %v8050
        %v8450 = vunpack.c.l.b16 %v8051
        %v8451 = vunpack.c.h.b16 %v8051
        %v8452 = vunpack.c.l.b16 %v8052
        %v8453 = vunpack.c.h.b16 %v8052
        %v8454 = vunpack.c.l.b16 %v8053
        %v8455 = vunpack.c.h.b16 %v8053
        %v8456 = vunpack.c.l.b16 %v8054
        %v8457 = vunpack.c.h.b16 %v8054
        %v8458 = vunpack.c.l.b16 %v8055
        %v8459 = vunpack.c.h.b16 %v8055
        %v8460 = vunpack.c.l.b16 %v8056
        %v8461 = vunpack.c.h.b16 %v8056
        %v8462 = vunpack.c.l.b16 %v8057
        %v8463 = vunpack.c.h.b16 %v8057
        %v8464 = vunpack.c.l.b16 %v8058
        %v8465 = vunpack.c.h.b16 %v8058
        %v8466 = vunpack.c.l.b16 %v8059
        %v8467 = vunpack.c.h.b16 %v8059
        %v8468 = vunpack.c.l.b16 %v8060
        %v8469 = vunpack.c.h.b16 %v8060
        %v8470 = vunpack.c.l.b16 %v8061
        %v8471 = vunpack.c.h.b16 %v8061
        %v8472 = vunpack.c.l.b16 %v8062
        %v8473 = vunpack.c.h.b16 %v8062
        %v8474 = vunpack.c.l.b16 %v8063
        %v8475 = vunpack.c.h.b16 %v8063
        %v8476 = vunpack.c.l.b16 %v8064
        %v8477 = vunpack.c.h.b16 %v8064
        %v8478 = vunpack.c.l.b16 %v8065
        %v8479 = vunpack.c.h.b16 %v8065
        %v8480 = vunpack.c.l.b16 %v8066
        %v8481 = vunpack.c.h.b16 %v8066
        %v8482 = vunpack.c.l.b16 %v8067
        %v8483 = vunpack.c.h.b16 %v8067
        %v8484 = vunpack.c.l.b16 %v8068
        %v8485 = vunpack.c.h.b16 %v8068
        %v8486 = vunpack.c.l.b16 %v8069
        %v8487 = vunpack.c.h.b16 %v8069
        %v8488 = vunpack.c.l.b16 %v8070
        %v8489 = vunpack.c.h.b16 %v8070
        %v8490 = vunpack.c.l.b16 %v8071
        %v8491 = vunpack.c.h.b16 %v8071
        %v8492 = vunpack.c.l.b16 %v8072
        %v8493 = vunpack.c.h.b16 %v8072
        %v8494 = vunpack.c.l.b16 %v8073
        %v8495 = vunpack.c.h.b16 %v8073
        %v8496 = vunpack.c.l.b16 %v8074
        %v8497 = vunpack.c.h.b16 %v8074
        %v8498 = vunpack.c.l.b16 %v8075
        %v8499 = vunpack.c.h.b16 %v8075
        %v8500 = vpack.c.b16 %v8248, %v8244
        %v8501 = vpack.c.b16 %v8249, %v8245
        %v8502 = vpack.c.b16 %v8250, %v8246
        %v8503 = vpack.c.b16 %v8251, %v8247
        %v8504 = vpack.c.b16 %v8256, %v8252
        %v8505 = vpack.c.b16 %v8257, %v8253
        %v8506 = vpack.c.b16 %v8258, %v8254
        %v8507 = vpack.c.b16 %v8259, %v8255
        %v8508 = vpack.c.b16 %v8264, %v8260
        %v8509 = vpack.c.b16 %v8265, %v8261
        %v8510 = vpack.c.b16 %v8266, %v8262
        %v8511 = vpack.c.b16 %v8267, %v8263
        %v8512 = vpack.c.b16 %v8272, %v8268
        %v8513 = vpack.c.b16 %v8273, %v8269
        %v8514 = vpack.c.b16 %v8274, %v8270
        %v8515 = vpack.c.b16 %v8275, %v8271
        %v8516 = vpack.c.b16 %v8280, %v8276
        %v8517 = vpack.c.b16 %v8281, %v8277
        %v8518 = vpack.c.b16 %v8282, %v8278
        %v8519 = vpack.c.b16 %v8283, %v8279
        %v8520 = vpack.c.b16 %v8288, %v8284
        %v8521 = vpack.c.b16 %v8289, %v8285
        %v8522 = vpack.c.b16 %v8290, %v8286
        %v8523 = vpack.c.b16 %v8291, %v8287
        %v8524 = vpack.c.b16 %v8296, %v8292
        %v8525 = vpack.c.b16 %v8297, %v8293
        %v8526 = vpack.c.b16 %v8298, %v8294
        %v8527 = vpack.c.b16 %v8299, %v8295
        %v8528 = vpack.c.b16 %v8304, %v8300
        %v8529 = vpack.c.b16 %v8305, %v8301
        %v8530 = vpack.c.b16 %v8306, %v8302
        %v8531 = vpack.c.b16 %v8307, %v8303
        %v8532 = vpack.c.b16 %v8312, %v8308
        %v8533 = vpack.c.b16 %v8313, %v8309
        %v8534 = vpack.c.b16 %v8314, %v8310
        %v8535 = vpack.c.b16 %v8315, %v8311
        %v8536 = vpack.c.b16 %v8320, %v8316
        %v8537 = vpack.c.b16 %v8321, %v8317
        %v8538 = vpack.c.b16 %v8322, %v8318
        %v8539 = vpack.c.b16 %v8323, %v8319
        %v8540 = vpack.c.b16 %v8328, %v8324
        %v8541 = vpack.c.b16 %v8329, %v8325
        %v8542 = vpack.c.b16 %v8330, %v8326
        %v8543 = vpack.c.b16 %v8331, %v8327
        %v8544 = vpack.c.b16 %v8336, %v8332
        %v8545 = vpack.c.b16 %v8337, %v8333
        %v8546 = vpack.c.b16 %v8338, %v8334
        %v8547 = vpack.c.b16 %v8339, %v8335
        %v8548 = vpack.c.b16 %v8344, %v8340
        %v8549 = vpack.c.b16 %v8345, %v8341
        %v8550 = vpack.c.b16 %v8346, %v8342
        %v8551 = vpack.c.b16 %v8347, %v8343
        %v8552 = vpack.c.b16 %v8352, %v8348
        %v8553 = vpack.c.b16 %v8353, %v8349
        %v8554 = vpack.c.b16 %v8354, %v8350
        %v8555 = vpack.c.b16 %v8355, %v8351
        %v8556 = vpack.c.b16 %v8360, %v8356
        %v8557 = vpack.c.b16 %v8361, %v8357
        %v8558 = vpack.c.b16 %v8362, %v8358
        %v8559 = vpack.c.b16 %v8363, %v8359
        %v8560 = vpack.c.b16 %v8368, %v8364
        %v8561 = vpack.c.b16 %v8369, %v8365
        %v8562 = vpack.c.b16 %v8370, %v8366
        %v8563 = vpack.c.b16 %v8371, %v8367
        %v8564 = vpack.c.b16 %v8376, %v8372
        %v8565 = vpack.c.b16 %v8377, %v8373
        %v8566 = vpack.c.b16 %v8378, %v8374
        %v8567 = vpack.c.b16 %v8379, %v8375
        %v8568 = vpack.c.b16 %v8384, %v8380
        %v8569 = vpack.c.b16 %v8385, %v8381
        %v8570 = vpack.c.b16 %v8386, %v8382
        %v8571 = vpack.c.b16 %v8387, %v8383
        %v8572 = vpack.c.b16 %v8392, %v8388
        %v8573 = vpack.c.b16 %v8393, %v8389
        %v8574 = vpack.c.b16 %v8394, %v8390
        %v8575 = vpack.c.b16 %v8395, %v8391
        %v8576 = vpack.c.b16 %v8400, %v8396
        %v8577 = vpack.c.b16 %v8401, %v8397
        %v8578 = vpack.c.b16 %v8402, %v8398
        %v8579 = vpack.c.b16 %v8403, %v8399
        %v8580 = vpack.c.b16 %v8408, %v8404
        %v8581 = vpack.c.b16 %v8409, %v8405
        %v8582 = vpack.c.b16 %v8410, %v8406
        %v8583 = vpack.c.b16 %v8411, %v8407
        %v8584 = vpack.c.b16 %v8416, %v8412
        %v8585 = vpack.c.b16 %v8417, %v8413
        %v8586 = vpack.c.b16 %v8418, %v8414
        %v8587 = vpack.c.b16 %v8419, %v8415
        %v8588 = vpack.c.b16 %v8424, %v8420
        %v8589 = vpack.c.b16 %v8425, %v8421
        %v8590 = vpack.c.b16 %v8426, %v8422
        %v8591 = vpack.c.b16 %v8427, %v8423
        %v8592 = vpack.c.b16 %v8432, %v8428
        %v8593 = vpack.c.b16 %v8433, %v8429
        %v8594 = vpack.c.b16 %v8434, %v8430
        %v8595 = vpack.c.b16 %v8435, %v8431
        %v8596 = vpack.c.b16 %v8440, %v8436
        %v8597 = vpack.c.b16 %v8441, %v8437
        %v8598 = vpack.c.b16 %v8442, %v8438
        %v8599 = vpack.c.b16 %v8443, %v8439
        %v8600 = vpack.c.b16 %v8448, %v8444
        %v8601 = vpack.c.b16 %v8449, %v8445
        %v8602 = vpack.c.b16 %v8450, %v8446
        %v8603 = vpack.c.b16 %v8451, %v8447
        %v8604 = vpack.c.b16 %v8456, %v8452
        %v8605 = vpack.c.b16 %v8457, %v8453
        %v8606 = vpack.c.b16 %v8458, %v8454
        %v8607 = vpack.c.b16 %v8459, %v8455
        %v8608 = vpack.c.b16 %v8464, %v8460
        %v8609 = vpack.c.b16 %v8465, %v8461
        %v8610 = vpack.c.b16 %v8466, %v8462
        %v8611 = vpack.c.b16 %v8467, %v8463
        %v8612 = vpack.c.b16 %v8472, %v8468
        %v8613 = vpack.c.b16 %v8473, %v8469
        %v8614 = vpack.c.b16 %v8474, %v8470
        %v8615 = vpack.c.b16 %v8475, %v8471
        %v8616 = vpack.c.b16 %v8480, %v8476
        %v8617 = vpack.c.b16 %v8481, %v8477
        %v8618 = vpack.c.b16 %v8482, %v8478
        %v8619 = vpack.c.b16 %v8483, %v8479
        %v8620 = vpack.c.b16 %v8488, %v8484
        %v8621 = vpack.c.b16 %v8489, %v8485
        %v8622 = vpack.c.b16 %v8490, %v8486
        %v8623 = vpack.c.b16 %v8491, %v8487
        %v8624 = vpack.c.b16 %v8496, %v8492
        %v8625 = vpack.c.b16 %v8497, %v8493
        %v8626 = vpack.c.b16 %v8498, %v8494
        %v8627 = vpack.c.b16 %v8499, %v8495
        %8756 = vmatprep.subr.bf16.mxu0 %v8529
        %8757 = vmatpush1.bf16.msra.mxu0 %v8528
        %8758 = vmatprep.subr.bf16.mxu0 %v8525
        %8759 = vmatpush1.bf16.msra.mxu0 %v8524
        %8760 = vmatprep.subr.bf16.mxu0 %v8521
        %8761 = vmatpush1.bf16.msra.mxu0 %v8520
        %8762 = vmatprep.subr.bf16.mxu0 %v8517
        %8763 = vmatpush1.bf16.msra.mxu0 %v8516
        %8764 = vmatprep.subr.bf16.mxu0 %v8513
        %8765 = vmatpush1.bf16.msra.mxu0 %v8512
        %8766 = vmatprep.subr.bf16.mxu0 %v8509
        %8767 = vmatpush1.bf16.msra.mxu0 %v8508
        %8768 = vmatprep.subr.bf16.mxu0 %v8505
        %8769 = vmatpush1.bf16.msra.mxu0 %v8504
        %8770 = vmatprep.subr.bf16.mxu0 %v8501
        %8771 = vmatpush1.bf16.msra.mxu0 %v8500
        %8772 = vmatprep.subr.bf16.mxu0 %v8561
        %8773 = vmatpush2.bf16.msra.mxu0 %v8560
        %8774 = vmatprep.subr.bf16.mxu0 %v8557
        %8775 = vmatpush2.bf16.msra.mxu0 %v8556
        %8776 = vmatprep.subr.bf16.mxu0 %v8553
        %8777 = vmatpush2.bf16.msra.mxu0 %v8552
        %8778 = vmatprep.subr.bf16.mxu0 %v8549
        %8779 = vmatpush2.bf16.msra.mxu0 %v8548
        %8780 = vmatprep.subr.bf16.mxu0 %v8545
        %8781 = vmatpush2.bf16.msra.mxu0 %v8544
        %8782 = vmatprep.subr.bf16.mxu0 %v8541
        %8783 = vmatpush2.bf16.msra.mxu0 %v8540
        %8784 = vmatprep.subr.bf16.mxu0 %v8537
        %8785 = vmatpush2.bf16.msra.mxu0 %v8536
        %8786 = vmatprep.subr.bf16.mxu0 %v8533
        %8787 = vmatpush2.bf16.msra.mxu0 %v8532
        %8788 = vmatprep.mubr.bf16.mxu0 %v8109
        %8789 = vmatmul.mubr.bf16.gmra.mxu0 %v8108
        %v8790 = vpop.f32.mrf.mxu0
        %v8791 = vadd.f32 0.0, %v8790
        %v8792 = vpop.f32.mrf.mxu0
        %v8793 = vadd.f32 0.0, %v8792
        %v8794 = vpop.f32.mrf.mxu0
        %v8795 = vadd.f32 0.0, %v8794
        %v8796 = vpop.f32.mrf.mxu0
        %v8797 = vadd.f32 0.0, %v8796
        %8798 = vdwg.mxu0
        %8799 = vmatprep.subr.bf16.mxu0 %v8593
        %8800 = vmatpush1.bf16.msra.mxu0 %v8592
        %8801 = vmatprep.subr.bf16.mxu0 %v8589
        %8802 = vmatpush1.bf16.msra.mxu0 %v8588
        %8803 = vmatprep.subr.bf16.mxu0 %v8585
        %8804 = vmatpush1.bf16.msra.mxu0 %v8584
        %8805 = vmatprep.subr.bf16.mxu0 %v8581
        %8806 = vmatpush1.bf16.msra.mxu0 %v8580
        %8807 = vmatprep.subr.bf16.mxu0 %v8577
        %8808 = vmatpush1.bf16.msra.mxu0 %v8576
        %8809 = vmatprep.subr.bf16.mxu0 %v8573
        %8810 = vmatpush1.bf16.msra.mxu0 %v8572
        %8811 = vmatprep.subr.bf16.mxu0 %v8569
        %8812 = vmatpush1.bf16.msra.mxu0 %v8568
        %8813 = vmatprep.subr.bf16.mxu0 %v8565
        %8814 = vmatpush1.bf16.msra.mxu0 %v8564
        %8815 = vmatprep.subr.bf16.mxu0 %v8625
        %8816 = vmatpush2.bf16.msra.mxu0 %v8624
        %8817 = vmatprep.subr.bf16.mxu0 %v8621
        %8818 = vmatpush2.bf16.msra.mxu0 %v8620
        %8819 = vmatprep.subr.bf16.mxu0 %v8617
        %8820 = vmatpush2.bf16.msra.mxu0 %v8616
        %8821 = vmatprep.subr.bf16.mxu0 %v8613
        %8822 = vmatpush2.bf16.msra.mxu0 %v8612
        %8823 = vmatprep.subr.bf16.mxu0 %v8609
        %8824 = vmatpush2.bf16.msra.mxu0 %v8608
        %8825 = vmatprep.subr.bf16.mxu0 %v8605
        %8826 = vmatpush2.bf16.msra.mxu0 %v8604
        %8827 = vmatprep.subr.bf16.mxu0 %v8601
        %8828 = vmatpush2.bf16.msra.mxu0 %v8600
        %8829 = vmatprep.subr.bf16.mxu0 %v8597
        %8830 = vmatpush2.bf16.msra.mxu0 %v8596
        %8831 = vmatprep.mubr.bf16.mxu0 %v8111
        %8832 = vmatmul.mubr.bf16.gmra.mxu0 %v8110
        %v8833 = vpop.f32.mrf.mxu0
        %v8834 = vadd.f32 %v8791, %v8833
        %v8835 = vpop.f32.mrf.mxu0
        %v8836 = vadd.f32 %v8793, %v8835
        %v8837 = vpop.f32.mrf.mxu0
        %v8838 = vadd.f32 %v8795, %v8837
        %v8839 = vpop.f32.mrf.mxu0
        %v8840 = vadd.f32 %v8797, %v8839
        %8841 = vdwg.mxu0
        %8842 = vmatprep.subr.bf16.mxu0 %v8531
        %8843 = vmatpush1.bf16.msra.mxu0 %v8530
        %8844 = vmatprep.subr.bf16.mxu0 %v8527
        %8845 = vmatpush1.bf16.msra.mxu0 %v8526
        %8846 = vmatprep.subr.bf16.mxu0 %v8523
        %8847 = vmatpush1.bf16.msra.mxu0 %v8522
        %8848 = vmatprep.subr.bf16.mxu0 %v8519
        %8849 = vmatpush1.bf16.msra.mxu0 %v8518
        %8850 = vmatprep.subr.bf16.mxu0 %v8515
        %8851 = vmatpush1.bf16.msra.mxu0 %v8514
        %8852 = vmatprep.subr.bf16.mxu0 %v8511
        %8853 = vmatpush1.bf16.msra.mxu0 %v8510
        %8854 = vmatprep.subr.bf16.mxu0 %v8507
        %8855 = vmatpush1.bf16.msra.mxu0 %v8506
        %8856 = vmatprep.subr.bf16.mxu0 %v8503
        %8857 = vmatpush1.bf16.msra.mxu0 %v8502
        %8858 = vmatprep.subr.bf16.mxu0 %v8563
        %8859 = vmatpush2.bf16.msra.mxu0 %v8562
        %8860 = vmatprep.subr.bf16.mxu0 %v8559
        %8861 = vmatpush2.bf16.msra.mxu0 %v8558
        %8862 = vmatprep.subr.bf16.mxu0 %v8555
        %8863 = vmatpush2.bf16.msra.mxu0 %v8554
        %8864 = vmatprep.subr.bf16.mxu0 %v8551
        %8865 = vmatpush2.bf16.msra.mxu0 %v8550
        %8866 = vmatprep.subr.bf16.mxu0 %v8547
        %8867 = vmatpush2.bf16.msra.mxu0 %v8546
        %8868 = vmatprep.subr.bf16.mxu0 %v8543
        %8869 = vmatpush2.bf16.msra.mxu0 %v8542
        %8870 = vmatprep.subr.bf16.mxu0 %v8539
        %8871 = vmatpush2.bf16.msra.mxu0 %v8538
        %8872 = vmatprep.subr.bf16.mxu0 %v8535
        %8873 = vmatpush2.bf16.msra.mxu0 %v8534
        %8874 = vmatprep.mubr.bf16.mxu0 %v8109
        %8875 = vmatmul.mubr.bf16.gmra.mxu0 %v8108
        %v8876 = vpop.f32.mrf.mxu0
        %v8877 = vadd.f32 0.0, %v8876
        %v8878 = vpop.f32.mrf.mxu0
        %v8879 = vadd.f32 0.0, %v8878
        %v8880 = vpop.f32.mrf.mxu0
        %v8881 = vadd.f32 0.0, %v8880
        %v8882 = vpop.f32.mrf.mxu0
        %v8883 = vadd.f32 0.0, %v8882
        %8884 = vdwg.mxu0
        %8885 = vmatprep.subr.bf16.mxu0 %v8595
        %8886 = vmatpush1.bf16.msra.mxu0 %v8594
        %8887 = vmatprep.subr.bf16.mxu0 %v8591
        %8888 = vmatpush1.bf16.msra.mxu0 %v8590
        %8889 = vmatprep.subr.bf16.mxu0 %v8587
        %8890 = vmatpush1.bf16.msra.mxu0 %v8586
        %8891 = vmatprep.subr.bf16.mxu0 %v8583
        %8892 = vmatpush1.bf16.msra.mxu0 %v8582
        %8893 = vmatprep.subr.bf16.mxu0 %v8579
        %8894 = vmatpush1.bf16.msra.mxu0 %v8578
        %8895 = vmatprep.subr.bf16.mxu0 %v8575
        %8896 = vmatpush1.bf16.msra.mxu0 %v8574
        %8897 = vmatprep.subr.bf16.mxu0 %v8571
        %8898 = vmatpush1.bf16.msra.mxu0 %v8570
        %8899 = vmatprep.subr.bf16.mxu0 %v8567
        %8900 = vmatpush1.bf16.msra.mxu0 %v8566
        %8901 = vmatprep.subr.bf16.mxu0 %v8627
        %8902 = vmatpush2.bf16.msra.mxu0 %v8626
        %8903 = vmatprep.subr.bf16.mxu0 %v8623
        %8904 = vmatpush2.bf16.msra.mxu0 %v8622
        %8905 = vmatprep.subr.bf16.mxu0 %v8619
        %8906 = vmatpush2.bf16.msra.mxu0 %v8618
        %8907 = vmatprep.subr.bf16.mxu0 %v8615
        %8908 = vmatpush2.bf16.msra.mxu0 %v8614
        %8909 = vmatprep.subr.bf16.mxu0 %v8611
        %8910 = vmatpush2.bf16.msra.mxu0 %v8610
        %8911 = vmatprep.subr.bf16.mxu0 %v8607
        %8912 = vmatpush2.bf16.msra.mxu0 %v8606
        %8913 = vmatprep.subr.bf16.mxu0 %v8603
        %8914 = vmatpush2.bf16.msra.mxu0 %v8602
        %8915 = vmatprep.subr.bf16.mxu0 %v8599
        %8916 = vmatpush2.bf16.msra.mxu0 %v8598
        %8917 = vmatprep.mubr.bf16.mxu0 %v8111
        %8918 = vmatmul.mubr.bf16.gmra.mxu0 %v8110
        %v8919 = vpop.f32.mrf.mxu0
        %v8920 = vadd.f32 %v8877, %v8919
        %v8921 = vpop.f32.mrf.mxu0
        %v8922 = vadd.f32 %v8879, %v8921
        %v8923 = vpop.f32.mrf.mxu0
        %v8924 = vadd.f32 %v8881, %v8923
        %v8925 = vpop.f32.mrf.mxu0
        %v8926 = vadd.f32 %v8883, %v8925
        %8927 = vdwg.mxu0
        %v8928 = vadd.f32 %v7803, %v8834
        %v8929 = vadd.f32 %v7804, %v8836
        %v8930 = vadd.f32 %v7805, %v8920
        %v8931 = vadd.f32 %v7806, %v8922
        %v8932 = vadd.f32 %v7807, %v8838
        %v8933 = vadd.f32 %v7808, %v8840
        %v8934 = vadd.f32 %v7809, %v8924
        %v8935 = vadd.f32 %v7810, %v8926
        %v8936 = vld [vmem:[%s6745] sm:$0x66]
        %v8937 = vld [vmem:[%s6745 + $0x8] sm:$0x66]
        %v8938 = vld [vmem:[%s6745 + $0x10] sm:$0x66]
        %v8939 = vld [vmem:[%s6745 + $0x18] sm:$0x66]
        %v8940 = vld [vmem:[%s6745 + $0x20] sm:$0x66]
        %v8941 = vld [vmem:[%s6745 + $0x28] sm:$0x66]
        %v8942 = vld [vmem:[%s6745 + $0x30] sm:$0x66]
        %v8943 = vld [vmem:[%s6745 + $0x38] sm:$0x66]
        %v8953 = vunpack.c.l.s4 1983009808
        %v8954 = vunpack.c.0.s8 %v8953
        %v8955 = vlaneseq
        %v8956 = vshrl.u32 %v8955, 7
        %v8957 = vsub.s32 %v8954, %v8956
        %v8958 = vrot.slane %v8936, %v8957
        %v8960 = vunpack.c.l.s4 1983009808
        %v8961 = vunpack.c.0.s8 %v8960
        %v8962 = vlaneseq
        %v8963 = vshrl.u32 %v8962, 7
        %v8964 = vsub.s32 %v8961, %v8963
        %v8965 = vrot.slane %v8937, %v8964
        %v8966 = vcombine.low %v8958, %v8965
        %v8967 = vcombine.high %v8958, %v8965
        %v8969 = vunpack.c.l.s4 1983009808
        %v8970 = vunpack.c.0.s8 %v8969
        %v8971 = vlaneseq
        %v8972 = vshrl.u32 %v8971, 7
        %v8973 = vsub.s32 %v8970, %v8972
        %v8974 = vrot.slane %v8938, %v8973
        %v8976 = vunpack.c.l.s4 1983009808
        %v8977 = vunpack.c.0.s8 %v8976
        %v8978 = vlaneseq
        %v8979 = vshrl.u32 %v8978, 7
        %v8980 = vsub.s32 %v8977, %v8979
        %v8981 = vrot.slane %v8939, %v8980
        %v8982 = vcombine.low %v8974, %v8981
        %v8983 = vcombine.high %v8974, %v8981
        %v8985 = vunpack.c.l.s4 1983009808
        %v8986 = vunpack.c.0.s8 %v8985
        %v8987 = vlaneseq
        %v8988 = vshrl.u32 %v8987, 7
        %v8989 = vsub.s32 %v8986, %v8988
        %v8990 = vrot.slane %v8940, %v8989
        %v8992 = vunpack.c.l.s4 1983009808
        %v8993 = vunpack.c.0.s8 %v8992
        %v8994 = vlaneseq
        %v8995 = vshrl.u32 %v8994, 7
        %v8996 = vsub.s32 %v8993, %v8995
        %v8997 = vrot.slane %v8941, %v8996
        %v8998 = vcombine.low %v8990, %v8997
        %v8999 = vcombine.high %v8990, %v8997
        %v9001 = vunpack.c.l.s4 1983009808
        %v9002 = vunpack.c.0.s8 %v9001
        %v9003 = vlaneseq
        %v9004 = vshrl.u32 %v9003, 7
        %v9005 = vsub.s32 %v9002, %v9004
        %v9006 = vrot.slane %v8942, %v9005
        %v9008 = vunpack.c.l.s4 1983009808
        %v9009 = vunpack.c.0.s8 %v9008
        %v9010 = vlaneseq
        %v9011 = vshrl.u32 %v9010, 7
        %v9012 = vsub.s32 %v9009, %v9011
        %v9013 = vrot.slane %v8943, %v9012
        %v9014 = vcombine.low %v9006, %v9013
        %v9015 = vcombine.high %v9006, %v9013
        %v9016 = vrot.slane %v8966, 7
        %v9017 = vrot.slane %v9016, 2
        %v9018 = vrot.slane %v8967, 7
        %v9019 = vsel %vm2463, %v9017, %v9018
        %v9020 = vrot.slane %v8982, 7
        %v9021 = vrot.slane %v9020, 2
        %v9022 = vrot.slane %v8983, 7
        %v9023 = vsel %vm2463, %v9021, %v9022
        %v9024 = vrot.slane %v8998, 7
        %v9025 = vrot.slane %v9024, 2
        %v9026 = vrot.slane %v8999, 7
        %v9027 = vsel %vm2463, %v9025, %v9026
        %v9028 = vrot.slane %v9014, 7
        %v9029 = vrot.slane %v9028, 2
        %v9030 = vrot.slane %v9015, 7
        %v9031 = vsel %vm2463, %v9029, %v9030
        %s9032 = scalar_lea.vmem [#allocation2], 8192
        %v9033 = vld [vmem:[%s9032] sm:$0xff]
        %v9034 = vld [vmem:[%s9032 + $0x8] sm:$0xff]
        %v9035 = vld [vmem:[%s9032 + $0x10] sm:$0xff]
        %v9036 = vld [vmem:[%s9032 + $0x18] sm:$0xff]
        %v9037 = vld [vmem:[%s9032 + $0x20] sm:$0xff]
        %v9038 = vld [vmem:[%s9032 + $0x28] sm:$0xff]
        %v9039 = vld [vmem:[%s9032 + $0x30] sm:$0xff]
        %v9040 = vld [vmem:[%s9032 + $0x38] sm:$0xff]
        %v9041 = vld [vmem:[%s9032 + $0x40] sm:$0xff]
        %v9042 = vld [vmem:[%s9032 + $0x48] sm:$0xff]
        %v9043 = vld [vmem:[%s9032 + $0x50] sm:$0xff]
        %v9044 = vld [vmem:[%s9032 + $0x58] sm:$0xff]
        %v9045 = vld [vmem:[%s9032 + $0x60] sm:$0xff]
        %v9046 = vld [vmem:[%s9032 + $0x68] sm:$0xff]
        %v9047 = vld [vmem:[%s9032 + $0x70] sm:$0xff]
        %v9048 = vld [vmem:[%s9032 + $0x78] sm:$0xff]
        %v9049 = vld [vmem:[%s9032 + $0x80] sm:$0xff]
        %v9050 = vld [vmem:[%s9032 + $0x88] sm:$0xff]
        %v9051 = vld [vmem:[%s9032 + $0x90] sm:$0xff]
        %v9052 = vld [vmem:[%s9032 + $0x98] sm:$0xff]
        %v9053 = vld [vmem:[%s9032 + $0xa0] sm:$0xff]
        %v9054 = vld [vmem:[%s9032 + $0xa8] sm:$0xff]
        %v9055 = vld [vmem:[%s9032 + $0xb0] sm:$0xff]
        %v9056 = vld [vmem:[%s9032 + $0xb8] sm:$0xff]
        %v9057 = vld [vmem:[%s9032 + $0xc0] sm:$0xff]
        %v9058 = vld [vmem:[%s9032 + $0xc8] sm:$0xff]
        %v9059 = vld [vmem:[%s9032 + $0xd0] sm:$0xff]
        %v9060 = vld [vmem:[%s9032 + $0xd8] sm:$0xff]
        %v9061 = vld [vmem:[%s9032 + $0xe0] sm:$0xff]
        %v9062 = vld [vmem:[%s9032 + $0xe8] sm:$0xff]
        %v9063 = vld [vmem:[%s9032 + $0xf0] sm:$0xff]
        %v9064 = vld [vmem:[%s9032 + $0xf8] sm:$0xff]
        %v9065 = vld [vmem:[%s9032 + $0x100] sm:$0xff]
        %v9066 = vld [vmem:[%s9032 + $0x108] sm:$0xff]
        %v9067 = vld [vmem:[%s9032 + $0x110] sm:$0xff]
        %v9068 = vld [vmem:[%s9032 + $0x118] sm:$0xff]
        %v9069 = vld [vmem:[%s9032 + $0x120] sm:$0xff]
        %v9070 = vld [vmem:[%s9032 + $0x128] sm:$0xff]
        %v9071 = vld [vmem:[%s9032 + $0x130] sm:$0xff]
        %v9072 = vld [vmem:[%s9032 + $0x138] sm:$0xff]
        %v9073 = vld [vmem:[%s9032 + $0x140] sm:$0xff]
        %v9074 = vld [vmem:[%s9032 + $0x148] sm:$0xff]
        %v9075 = vld [vmem:[%s9032 + $0x150] sm:$0xff]
        %v9076 = vld [vmem:[%s9032 + $0x158] sm:$0xff]
        %v9077 = vld [vmem:[%s9032 + $0x160] sm:$0xff]
        %v9078 = vld [vmem:[%s9032 + $0x168] sm:$0xff]
        %v9079 = vld [vmem:[%s9032 + $0x170] sm:$0xff]
        %v9080 = vld [vmem:[%s9032 + $0x178] sm:$0xff]
        %v9081 = vld [vmem:[%s9032 + $0x180] sm:$0xff]
        %v9082 = vld [vmem:[%s9032 + $0x188] sm:$0xff]
        %v9083 = vld [vmem:[%s9032 + $0x190] sm:$0xff]
        %v9084 = vld [vmem:[%s9032 + $0x198] sm:$0xff]
        %v9085 = vld [vmem:[%s9032 + $0x1a0] sm:$0xff]
        %v9086 = vld [vmem:[%s9032 + $0x1a8] sm:$0xff]
        %v9087 = vld [vmem:[%s9032 + $0x1b0] sm:$0xff]
        %v9088 = vld [vmem:[%s9032 + $0x1b8] sm:$0xff]
        %v9089 = vld [vmem:[%s9032 + $0x1c0] sm:$0xff]
        %v9090 = vld [vmem:[%s9032 + $0x1c8] sm:$0xff]
        %v9091 = vld [vmem:[%s9032 + $0x1d0] sm:$0xff]
        %v9092 = vld [vmem:[%s9032 + $0x1d8] sm:$0xff]
        %v9093 = vld [vmem:[%s9032 + $0x1e0] sm:$0xff]
        %v9094 = vld [vmem:[%s9032 + $0x1e8] sm:$0xff]
        %v9095 = vld [vmem:[%s9032 + $0x1f0] sm:$0xff]
        %v9096 = vld [vmem:[%s9032 + $0x1f8] sm:$0xff]
        %v9097 = vld [vmem:[%s9032 + $0x200] sm:$0xff]
        %v9098 = vld [vmem:[%s9032 + $0x208] sm:$0xff]
        %v9099 = vld [vmem:[%s9032 + $0x210] sm:$0xff]
        %v9100 = vld [vmem:[%s9032 + $0x218] sm:$0xff]
        %v9101 = vld [vmem:[%s9032 + $0x220] sm:$0xff]
        %v9102 = vld [vmem:[%s9032 + $0x228] sm:$0xff]
        %v9103 = vld [vmem:[%s9032 + $0x230] sm:$0xff]
        %v9104 = vld [vmem:[%s9032 + $0x238] sm:$0xff]
        %v9105 = vld [vmem:[%s9032 + $0x240] sm:$0xff]
        %v9106 = vld [vmem:[%s9032 + $0x248] sm:$0xff]
        %v9107 = vld [vmem:[%s9032 + $0x250] sm:$0xff]
        %v9108 = vld [vmem:[%s9032 + $0x258] sm:$0xff]
        %v9109 = vld [vmem:[%s9032 + $0x260] sm:$0xff]
        %v9110 = vld [vmem:[%s9032 + $0x268] sm:$0xff]
        %v9111 = vld [vmem:[%s9032 + $0x270] sm:$0xff]
        %v9112 = vld [vmem:[%s9032 + $0x278] sm:$0xff]
        %v9113 = vld [vmem:[%s9032 + $0x280] sm:$0xff]
        %v9114 = vld [vmem:[%s9032 + $0x288] sm:$0xff]
        %v9115 = vld [vmem:[%s9032 + $0x290] sm:$0xff]
        %v9116 = vld [vmem:[%s9032 + $0x298] sm:$0xff]
        %v9117 = vld [vmem:[%s9032 + $0x2a0] sm:$0xff]
        %v9118 = vld [vmem:[%s9032 + $0x2a8] sm:$0xff]
        %v9119 = vld [vmem:[%s9032 + $0x2b0] sm:$0xff]
        %v9120 = vld [vmem:[%s9032 + $0x2b8] sm:$0xff]
        %v9121 = vld [vmem:[%s9032 + $0x2c0] sm:$0xff]
        %v9122 = vld [vmem:[%s9032 + $0x2c8] sm:$0xff]
        %v9123 = vld [vmem:[%s9032 + $0x2d0] sm:$0xff]
        %v9124 = vld [vmem:[%s9032 + $0x2d8] sm:$0xff]
        %v9125 = vld [vmem:[%s9032 + $0x2e0] sm:$0xff]
        %v9126 = vld [vmem:[%s9032 + $0x2e8] sm:$0xff]
        %v9127 = vld [vmem:[%s9032 + $0x2f0] sm:$0xff]
        %v9128 = vld [vmem:[%s9032 + $0x2f8] sm:$0xff]
        %v9129 = vld [vmem:[%s9032 + $0x300] sm:$0xff]
        %v9130 = vld [vmem:[%s9032 + $0x308] sm:$0xff]
        %v9131 = vld [vmem:[%s9032 + $0x310] sm:$0xff]
        %v9132 = vld [vmem:[%s9032 + $0x318] sm:$0xff]
        %v9133 = vld [vmem:[%s9032 + $0x320] sm:$0xff]
        %v9134 = vld [vmem:[%s9032 + $0x328] sm:$0xff]
        %v9135 = vld [vmem:[%s9032 + $0x330] sm:$0xff]
        %v9136 = vld [vmem:[%s9032 + $0x338] sm:$0xff]
        %v9137 = vld [vmem:[%s9032 + $0x340] sm:$0xff]
        %v9138 = vld [vmem:[%s9032 + $0x348] sm:$0xff]
        %v9139 = vld [vmem:[%s9032 + $0x350] sm:$0xff]
        %v9140 = vld [vmem:[%s9032 + $0x358] sm:$0xff]
        %v9141 = vld [vmem:[%s9032 + $0x360] sm:$0xff]
        %v9142 = vld [vmem:[%s9032 + $0x368] sm:$0xff]
        %v9143 = vld [vmem:[%s9032 + $0x370] sm:$0xff]
        %v9144 = vld [vmem:[%s9032 + $0x378] sm:$0xff]
        %v9145 = vld [vmem:[%s9032 + $0x380] sm:$0xff]
        %v9146 = vld [vmem:[%s9032 + $0x388] sm:$0xff]
        %v9147 = vld [vmem:[%s9032 + $0x390] sm:$0xff]
        %v9148 = vld [vmem:[%s9032 + $0x398] sm:$0xff]
        %v9149 = vld [vmem:[%s9032 + $0x3a0] sm:$0xff]
        %v9150 = vld [vmem:[%s9032 + $0x3a8] sm:$0xff]
        %v9151 = vld [vmem:[%s9032 + $0x3b0] sm:$0xff]
        %v9152 = vld [vmem:[%s9032 + $0x3b8] sm:$0xff]
        %v9153 = vld [vmem:[%s9032 + $0x3c0] sm:$0xff]
        %v9154 = vld [vmem:[%s9032 + $0x3c8] sm:$0xff]
        %v9155 = vld [vmem:[%s9032 + $0x3d0] sm:$0xff]
        %v9156 = vld [vmem:[%s9032 + $0x3d8] sm:$0xff]
        %v9157 = vld [vmem:[%s9032 + $0x3e0] sm:$0xff]
        %v9158 = vld [vmem:[%s9032 + $0x3e8] sm:$0xff]
        %v9159 = vld [vmem:[%s9032 + $0x3f0] sm:$0xff]
        %v9160 = vld [vmem:[%s9032 + $0x3f8] sm:$0xff]
        %v9161 = vcombine.low %v9019, %v9023
        %v9162 = vcombine.high %v9019, %v9023
        %v9163 = vcombine.low %v9027, %v9031
        %v9164 = vcombine.high %v9027, %v9031
        %v9166 = vunpack.c.l.s4 1983009808
        %v9167 = vunpack.c.0.s8 %v9166
        %v9168 = vlaneseq
        %v9169 = vshrl.u32 %v9168, 7
        %v9170 = vsub.s32 %v9167, %v9169
        %v9171 = vrot.slane %v9161, %v9170
        %v9173 = vunpack.c.l.s4 1983009808
        %v9174 = vunpack.c.0.s8 %v9173
        %v9175 = vlaneseq
        %v9176 = vshrl.u32 %v9175, 7
        %v9177 = vsub.s32 %v9174, %v9176
        %v9178 = vrot.slane %v9162, %v9177
        %v9180 = vunpack.c.l.s4 1983009808
        %v9181 = vunpack.c.0.s8 %v9180
        %v9182 = vlaneseq
        %v9183 = vshrl.u32 %v9182, 7
        %v9184 = vsub.s32 %v9181, %v9183
        %v9185 = vrot.slane %v9163, %v9184
        %v9187 = vunpack.c.l.s4 1983009808
        %v9188 = vunpack.c.0.s8 %v9187
        %v9189 = vlaneseq
        %v9190 = vshrl.u32 %v9189, 7
        %v9191 = vsub.s32 %v9188, %v9190
        %v9192 = vrot.slane %v9164, %v9191
        %v9193 = vcombine.low %v9171, %v9185
        %v9194 = vcombine.high %v9171, %v9185
        %v9195 = vcombine.low %v9178, %v9192
        %v9196 = vcombine.high %v9178, %v9192
        %v9329 = vunpack.c.l.b16 %v9033
        %v9330 = vunpack.c.h.b16 %v9033
        %v9331 = vunpack.c.l.b16 %v9034
        %v9332 = vunpack.c.h.b16 %v9034
        %v9333 = vunpack.c.l.b16 %v9035
        %v9334 = vunpack.c.h.b16 %v9035
        %v9335 = vunpack.c.l.b16 %v9036
        %v9336 = vunpack.c.h.b16 %v9036
        %v9337 = vunpack.c.l.b16 %v9037
        %v9338 = vunpack.c.h.b16 %v9037
        %v9339 = vunpack.c.l.b16 %v9038
        %v9340 = vunpack.c.h.b16 %v9038
        %v9341 = vunpack.c.l.b16 %v9039
        %v9342 = vunpack.c.h.b16 %v9039
        %v9343 = vunpack.c.l.b16 %v9040
        %v9344 = vunpack.c.h.b16 %v9040
        %v9345 = vunpack.c.l.b16 %v9041
        %v9346 = vunpack.c.h.b16 %v9041
        %v9347 = vunpack.c.l.b16 %v9042
        %v9348 = vunpack.c.h.b16 %v9042
        %v9349 = vunpack.c.l.b16 %v9043
        %v9350 = vunpack.c.h.b16 %v9043
        %v9351 = vunpack.c.l.b16 %v9044
        %v9352 = vunpack.c.h.b16 %v9044
        %v9353 = vunpack.c.l.b16 %v9045
        %v9354 = vunpack.c.h.b16 %v9045
        %v9355 = vunpack.c.l.b16 %v9046
        %v9356 = vunpack.c.h.b16 %v9046
        %v9357 = vunpack.c.l.b16 %v9047
        %v9358 = vunpack.c.h.b16 %v9047
        %v9359 = vunpack.c.l.b16 %v9048
        %v9360 = vunpack.c.h.b16 %v9048
        %v9361 = vunpack.c.l.b16 %v9049
        %v9362 = vunpack.c.h.b16 %v9049
        %v9363 = vunpack.c.l.b16 %v9050
        %v9364 = vunpack.c.h.b16 %v9050
        %v9365 = vunpack.c.l.b16 %v9051
        %v9366 = vunpack.c.h.b16 %v9051
        %v9367 = vunpack.c.l.b16 %v9052
        %v9368 = vunpack.c.h.b16 %v9052
        %v9369 = vunpack.c.l.b16 %v9053
        %v9370 = vunpack.c.h.b16 %v9053
        %v9371 = vunpack.c.l.b16 %v9054
        %v9372 = vunpack.c.h.b16 %v9054
        %v9373 = vunpack.c.l.b16 %v9055
        %v9374 = vunpack.c.h.b16 %v9055
        %v9375 = vunpack.c.l.b16 %v9056
        %v9376 = vunpack.c.h.b16 %v9056
        %v9377 = vunpack.c.l.b16 %v9057
        %v9378 = vunpack.c.h.b16 %v9057
        %v9379 = vunpack.c.l.b16 %v9058
        %v9380 = vunpack.c.h.b16 %v9058
        %v9381 = vunpack.c.l.b16 %v9059
        %v9382 = vunpack.c.h.b16 %v9059
        %v9383 = vunpack.c.l.b16 %v9060
        %v9384 = vunpack.c.h.b16 %v9060
        %v9385 = vunpack.c.l.b16 %v9061
        %v9386 = vunpack.c.h.b16 %v9061
        %v9387 = vunpack.c.l.b16 %v9062
        %v9388 = vunpack.c.h.b16 %v9062
        %v9389 = vunpack.c.l.b16 %v9063
        %v9390 = vunpack.c.h.b16 %v9063
        %v9391 = vunpack.c.l.b16 %v9064
        %v9392 = vunpack.c.h.b16 %v9064
        %v9393 = vunpack.c.l.b16 %v9065
        %v9394 = vunpack.c.h.b16 %v9065
        %v9395 = vunpack.c.l.b16 %v9066
        %v9396 = vunpack.c.h.b16 %v9066
        %v9397 = vunpack.c.l.b16 %v9067
        %v9398 = vunpack.c.h.b16 %v9067
        %v9399 = vunpack.c.l.b16 %v9068
        %v9400 = vunpack.c.h.b16 %v9068
        %v9401 = vunpack.c.l.b16 %v9069
        %v9402 = vunpack.c.h.b16 %v9069
        %v9403 = vunpack.c.l.b16 %v9070
        %v9404 = vunpack.c.h.b16 %v9070
        %v9405 = vunpack.c.l.b16 %v9071
        %v9406 = vunpack.c.h.b16 %v9071
        %v9407 = vunpack.c.l.b16 %v9072
        %v9408 = vunpack.c.h.b16 %v9072
        %v9409 = vunpack.c.l.b16 %v9073
        %v9410 = vunpack.c.h.b16 %v9073
        %v9411 = vunpack.c.l.b16 %v9074
        %v9412 = vunpack.c.h.b16 %v9074
        %v9413 = vunpack.c.l.b16 %v9075
        %v9414 = vunpack.c.h.b16 %v9075
        %v9415 = vunpack.c.l.b16 %v9076
        %v9416 = vunpack.c.h.b16 %v9076
        %v9417 = vunpack.c.l.b16 %v9077
        %v9418 = vunpack.c.h.b16 %v9077
        %v9419 = vunpack.c.l.b16 %v9078
        %v9420 = vunpack.c.h.b16 %v9078
        %v9421 = vunpack.c.l.b16 %v9079
        %v9422 = vunpack.c.h.b16 %v9079
        %v9423 = vunpack.c.l.b16 %v9080
        %v9424 = vunpack.c.h.b16 %v9080
        %v9425 = vunpack.c.l.b16 %v9081
        %v9426 = vunpack.c.h.b16 %v9081
        %v9427 = vunpack.c.l.b16 %v9082
        %v9428 = vunpack.c.h.b16 %v9082
        %v9429 = vunpack.c.l.b16 %v9083
        %v9430 = vunpack.c.h.b16 %v9083
        %v9431 = vunpack.c.l.b16 %v9084
        %v9432 = vunpack.c.h.b16 %v9084
        %v9433 = vunpack.c.l.b16 %v9085
        %v9434 = vunpack.c.h.b16 %v9085
        %v9435 = vunpack.c.l.b16 %v9086
        %v9436 = vunpack.c.h.b16 %v9086
        %v9437 = vunpack.c.l.b16 %v9087
        %v9438 = vunpack.c.h.b16 %v9087
        %v9439 = vunpack.c.l.b16 %v9088
        %v9440 = vunpack.c.h.b16 %v9088
        %v9441 = vunpack.c.l.b16 %v9089
        %v9442 = vunpack.c.h.b16 %v9089
        %v9443 = vunpack.c.l.b16 %v9090
        %v9444 = vunpack.c.h.b16 %v9090
        %v9445 = vunpack.c.l.b16 %v9091
        %v9446 = vunpack.c.h.b16 %v9091
        %v9447 = vunpack.c.l.b16 %v9092
        %v9448 = vunpack.c.h.b16 %v9092
        %v9449 = vunpack.c.l.b16 %v9093
        %v9450 = vunpack.c.h.b16 %v9093
        %v9451 = vunpack.c.l.b16 %v9094
        %v9452 = vunpack.c.h.b16 %v9094
        %v9453 = vunpack.c.l.b16 %v9095
        %v9454 = vunpack.c.h.b16 %v9095
        %v9455 = vunpack.c.l.b16 %v9096
        %v9456 = vunpack.c.h.b16 %v9096
        %v9457 = vunpack.c.l.b16 %v9097
        %v9458 = vunpack.c.h.b16 %v9097
        %v9459 = vunpack.c.l.b16 %v9098
        %v9460 = vunpack.c.h.b16 %v9098
        %v9461 = vunpack.c.l.b16 %v9099
        %v9462 = vunpack.c.h.b16 %v9099
        %v9463 = vunpack.c.l.b16 %v9100
        %v9464 = vunpack.c.h.b16 %v9100
        %v9465 = vunpack.c.l.b16 %v9101
        %v9466 = vunpack.c.h.b16 %v9101
        %v9467 = vunpack.c.l.b16 %v9102
        %v9468 = vunpack.c.h.b16 %v9102
        %v9469 = vunpack.c.l.b16 %v9103
        %v9470 = vunpack.c.h.b16 %v9103
        %v9471 = vunpack.c.l.b16 %v9104
        %v9472 = vunpack.c.h.b16 %v9104
        %v9473 = vunpack.c.l.b16 %v9105
        %v9474 = vunpack.c.h.b16 %v9105
        %v9475 = vunpack.c.l.b16 %v9106
        %v9476 = vunpack.c.h.b16 %v9106
        %v9477 = vunpack.c.l.b16 %v9107
        %v9478 = vunpack.c.h.b16 %v9107
        %v9479 = vunpack.c.l.b16 %v9108
        %v9480 = vunpack.c.h.b16 %v9108
        %v9481 = vunpack.c.l.b16 %v9109
        %v9482 = vunpack.c.h.b16 %v9109
        %v9483 = vunpack.c.l.b16 %v9110
        %v9484 = vunpack.c.h.b16 %v9110
        %v9485 = vunpack.c.l.b16 %v9111
        %v9486 = vunpack.c.h.b16 %v9111
        %v9487 = vunpack.c.l.b16 %v9112
        %v9488 = vunpack.c.h.b16 %v9112
        %v9489 = vunpack.c.l.b16 %v9113
        %v9490 = vunpack.c.h.b16 %v9113
        %v9491 = vunpack.c.l.b16 %v9114
        %v9492 = vunpack.c.h.b16 %v9114
        %v9493 = vunpack.c.l.b16 %v9115
        %v9494 = vunpack.c.h.b16 %v9115
        %v9495 = vunpack.c.l.b16 %v9116
        %v9496 = vunpack.c.h.b16 %v9116
        %v9497 = vunpack.c.l.b16 %v9117
        %v9498 = vunpack.c.h.b16 %v9117
        %v9499 = vunpack.c.l.b16 %v9118
        %v9500 = vunpack.c.h.b16 %v9118
        %v9501 = vunpack.c.l.b16 %v9119
        %v9502 = vunpack.c.h.b16 %v9119
        %v9503 = vunpack.c.l.b16 %v9120
        %v9504 = vunpack.c.h.b16 %v9120
        %v9505 = vunpack.c.l.b16 %v9121
        %v9506 = vunpack.c.h.b16 %v9121
        %v9507 = vunpack.c.l.b16 %v9122
        %v9508 = vunpack.c.h.b16 %v9122
        %v9509 = vunpack.c.l.b16 %v9123
        %v9510 = vunpack.c.h.b16 %v9123
        %v9511 = vunpack.c.l.b16 %v9124
        %v9512 = vunpack.c.h.b16 %v9124
        %v9513 = vunpack.c.l.b16 %v9125
        %v9514 = vunpack.c.h.b16 %v9125
        %v9515 = vunpack.c.l.b16 %v9126
        %v9516 = vunpack.c.h.b16 %v9126
        %v9517 = vunpack.c.l.b16 %v9127
        %v9518 = vunpack.c.h.b16 %v9127
        %v9519 = vunpack.c.l.b16 %v9128
        %v9520 = vunpack.c.h.b16 %v9128
        %v9521 = vunpack.c.l.b16 %v9129
        %v9522 = vunpack.c.h.b16 %v9129
        %v9523 = vunpack.c.l.b16 %v9130
        %v9524 = vunpack.c.h.b16 %v9130
        %v9525 = vunpack.c.l.b16 %v9131
        %v9526 = vunpack.c.h.b16 %v9131
        %v9527 = vunpack.c.l.b16 %v9132
        %v9528 = vunpack.c.h.b16 %v9132
        %v9529 = vunpack.c.l.b16 %v9133
        %v9530 = vunpack.c.h.b16 %v9133
        %v9531 = vunpack.c.l.b16 %v9134
        %v9532 = vunpack.c.h.b16 %v9134
        %v9533 = vunpack.c.l.b16 %v9135
        %v9534 = vunpack.c.h.b16 %v9135
        %v9535 = vunpack.c.l.b16 %v9136
        %v9536 = vunpack.c.h.b16 %v9136
        %v9537 = vunpack.c.l.b16 %v9137
        %v9538 = vunpack.c.h.b16 %v9137
        %v9539 = vunpack.c.l.b16 %v9138
        %v9540 = vunpack.c.h.b16 %v9138
        %v9541 = vunpack.c.l.b16 %v9139
        %v9542 = vunpack.c.h.b16 %v9139
        %v9543 = vunpack.c.l.b16 %v9140
        %v9544 = vunpack.c.h.b16 %v9140
        %v9545 = vunpack.c.l.b16 %v9141
        %v9546 = vunpack.c.h.b16 %v9141
        %v9547 = vunpack.c.l.b16 %v9142
        %v9548 = vunpack.c.h.b16 %v9142
        %v9549 = vunpack.c.l.b16 %v9143
        %v9550 = vunpack.c.h.b16 %v9143
        %v9551 = vunpack.c.l.b16 %v9144
        %v9552 = vunpack.c.h.b16 %v9144
        %v9553 = vunpack.c.l.b16 %v9145
        %v9554 = vunpack.c.h.b16 %v9145
        %v9555 = vunpack.c.l.b16 %v9146
        %v9556 = vunpack.c.h.b16 %v9146
        %v9557 = vunpack.c.l.b16 %v9147
        %v9558 = vunpack.c.h.b16 %v9147
        %v9559 = vunpack.c.l.b16 %v9148
        %v9560 = vunpack.c.h.b16 %v9148
        %v9561 = vunpack.c.l.b16 %v9149
        %v9562 = vunpack.c.h.b16 %v9149
        %v9563 = vunpack.c.l.b16 %v9150
        %v9564 = vunpack.c.h.b16 %v9150
        %v9565 = vunpack.c.l.b16 %v9151
        %v9566 = vunpack.c.h.b16 %v9151
        %v9567 = vunpack.c.l.b16 %v9152
        %v9568 = vunpack.c.h.b16 %v9152
        %v9569 = vunpack.c.l.b16 %v9153
        %v9570 = vunpack.c.h.b16 %v9153
        %v9571 = vunpack.c.l.b16 %v9154
        %v9572 = vunpack.c.h.b16 %v9154
        %v9573 = vunpack.c.l.b16 %v9155
        %v9574 = vunpack.c.h.b16 %v9155
        %v9575 = vunpack.c.l.b16 %v9156
        %v9576 = vunpack.c.h.b16 %v9156
        %v9577 = vunpack.c.l.b16 %v9157
        %v9578 = vunpack.c.h.b16 %v9157
        %v9579 = vunpack.c.l.b16 %v9158
        %v9580 = vunpack.c.h.b16 %v9158
        %v9581 = vunpack.c.l.b16 %v9159
        %v9582 = vunpack.c.h.b16 %v9159
        %v9583 = vunpack.c.l.b16 %v9160
        %v9584 = vunpack.c.h.b16 %v9160
        %v9585 = vpack.c.b16 %v9333, %v9329
        %v9586 = vpack.c.b16 %v9334, %v9330
        %v9587 = vpack.c.b16 %v9335, %v9331
        %v9588 = vpack.c.b16 %v9336, %v9332
        %v9589 = vpack.c.b16 %v9341, %v9337
        %v9590 = vpack.c.b16 %v9342, %v9338
        %v9591 = vpack.c.b16 %v9343, %v9339
        %v9592 = vpack.c.b16 %v9344, %v9340
        %v9593 = vpack.c.b16 %v9349, %v9345
        %v9594 = vpack.c.b16 %v9350, %v9346
        %v9595 = vpack.c.b16 %v9351, %v9347
        %v9596 = vpack.c.b16 %v9352, %v9348
        %v9597 = vpack.c.b16 %v9357, %v9353
        %v9598 = vpack.c.b16 %v9358, %v9354
        %v9599 = vpack.c.b16 %v9359, %v9355
        %v9600 = vpack.c.b16 %v9360, %v9356
        %v9601 = vpack.c.b16 %v9365, %v9361
        %v9602 = vpack.c.b16 %v9366, %v9362
        %v9603 = vpack.c.b16 %v9367, %v9363
        %v9604 = vpack.c.b16 %v9368, %v9364
        %v9605 = vpack.c.b16 %v9373, %v9369
        %v9606 = vpack.c.b16 %v9374, %v9370
        %v9607 = vpack.c.b16 %v9375, %v9371
        %v9608 = vpack.c.b16 %v9376, %v9372
        %v9609 = vpack.c.b16 %v9381, %v9377
        %v9610 = vpack.c.b16 %v9382, %v9378
        %v9611 = vpack.c.b16 %v9383, %v9379
        %v9612 = vpack.c.b16 %v9384, %v9380
        %v9613 = vpack.c.b16 %v9389, %v9385
        %v9614 = vpack.c.b16 %v9390, %v9386
        %v9615 = vpack.c.b16 %v9391, %v9387
        %v9616 = vpack.c.b16 %v9392, %v9388
        %v9617 = vpack.c.b16 %v9397, %v9393
        %v9618 = vpack.c.b16 %v9398, %v9394
        %v9619 = vpack.c.b16 %v9399, %v9395
        %v9620 = vpack.c.b16 %v9400, %v9396
        %v9621 = vpack.c.b16 %v9405, %v9401
        %v9622 = vpack.c.b16 %v9406, %v9402
        %v9623 = vpack.c.b16 %v9407, %v9403
        %v9624 = vpack.c.b16 %v9408, %v9404
        %v9625 = vpack.c.b16 %v9413, %v9409
        %v9626 = vpack.c.b16 %v9414, %v9410
        %v9627 = vpack.c.b16 %v9415, %v9411
        %v9628 = vpack.c.b16 %v9416, %v9412
        %v9629 = vpack.c.b16 %v9421, %v9417
        %v9630 = vpack.c.b16 %v9422, %v9418
        %v9631 = vpack.c.b16 %v9423, %v9419
        %v9632 = vpack.c.b16 %v9424, %v9420
        %v9633 = vpack.c.b16 %v9429, %v9425
        %v9634 = vpack.c.b16 %v9430, %v9426
        %v9635 = vpack.c.b16 %v9431, %v9427
        %v9636 = vpack.c.b16 %v9432, %v9428
        %v9637 = vpack.c.b16 %v9437, %v9433
        %v9638 = vpack.c.b16 %v9438, %v9434
        %v9639 = vpack.c.b16 %v9439, %v9435
        %v9640 = vpack.c.b16 %v9440, %v9436
        %v9641 = vpack.c.b16 %v9445, %v9441
        %v9642 = vpack.c.b16 %v9446, %v9442
        %v9643 = vpack.c.b16 %v9447, %v9443
        %v9644 = vpack.c.b16 %v9448, %v9444
        %v9645 = vpack.c.b16 %v9453, %v9449
        %v9646 = vpack.c.b16 %v9454, %v9450
        %v9647 = vpack.c.b16 %v9455, %v9451
        %v9648 = vpack.c.b16 %v9456, %v9452
        %v9649 = vpack.c.b16 %v9461, %v9457
        %v9650 = vpack.c.b16 %v9462, %v9458
        %v9651 = vpack.c.b16 %v9463, %v9459
        %v9652 = vpack.c.b16 %v9464, %v9460
        %v9653 = vpack.c.b16 %v9469, %v9465
        %v9654 = vpack.c.b16 %v9470, %v9466
        %v9655 = vpack.c.b16 %v9471, %v9467
        %v9656 = vpack.c.b16 %v9472, %v9468
        %v9657 = vpack.c.b16 %v9477, %v9473
        %v9658 = vpack.c.b16 %v9478, %v9474
        %v9659 = vpack.c.b16 %v9479, %v9475
        %v9660 = vpack.c.b16 %v9480, %v9476
        %v9661 = vpack.c.b16 %v9485, %v9481
        %v9662 = vpack.c.b16 %v9486, %v9482
        %v9663 = vpack.c.b16 %v9487, %v9483
        %v9664 = vpack.c.b16 %v9488, %v9484
        %v9665 = vpack.c.b16 %v9493, %v9489
        %v9666 = vpack.c.b16 %v9494, %v9490
        %v9667 = vpack.c.b16 %v9495, %v9491
        %v9668 = vpack.c.b16 %v9496, %v9492
        %v9669 = vpack.c.b16 %v9501, %v9497
        %v9670 = vpack.c.b16 %v9502, %v9498
        %v9671 = vpack.c.b16 %v9503, %v9499
        %v9672 = vpack.c.b16 %v9504, %v9500
        %v9673 = vpack.c.b16 %v9509, %v9505
        %v9674 = vpack.c.b16 %v9510, %v9506
        %v9675 = vpack.c.b16 %v9511, %v9507
        %v9676 = vpack.c.b16 %v9512, %v9508
        %v9677 = vpack.c.b16 %v9517, %v9513
        %v9678 = vpack.c.b16 %v9518, %v9514
        %v9679 = vpack.c.b16 %v9519, %v9515
        %v9680 = vpack.c.b16 %v9520, %v9516
        %v9681 = vpack.c.b16 %v9525, %v9521
        %v9682 = vpack.c.b16 %v9526, %v9522
        %v9683 = vpack.c.b16 %v9527, %v9523
        %v9684 = vpack.c.b16 %v9528, %v9524
        %v9685 = vpack.c.b16 %v9533, %v9529
        %v9686 = vpack.c.b16 %v9534, %v9530
        %v9687 = vpack.c.b16 %v9535, %v9531
        %v9688 = vpack.c.b16 %v9536, %v9532
        %v9689 = vpack.c.b16 %v9541, %v9537
        %v9690 = vpack.c.b16 %v9542, %v9538
        %v9691 = vpack.c.b16 %v9543, %v9539
        %v9692 = vpack.c.b16 %v9544, %v9540
        %v9693 = vpack.c.b16 %v9549, %v9545
        %v9694 = vpack.c.b16 %v9550, %v9546
        %v9695 = vpack.c.b16 %v9551, %v9547
        %v9696 = vpack.c.b16 %v9552, %v9548
        %v9697 = vpack.c.b16 %v9557, %v9553
        %v9698 = vpack.c.b16 %v9558, %v9554
        %v9699 = vpack.c.b16 %v9559, %v9555
        %v9700 = vpack.c.b16 %v9560, %v9556
        %v9701 = vpack.c.b16 %v9565, %v9561
        %v9702 = vpack.c.b16 %v9566, %v9562
        %v9703 = vpack.c.b16 %v9567, %v9563
        %v9704 = vpack.c.b16 %v9568, %v9564
        %v9705 = vpack.c.b16 %v9573, %v9569
        %v9706 = vpack.c.b16 %v9574, %v9570
        %v9707 = vpack.c.b16 %v9575, %v9571
        %v9708 = vpack.c.b16 %v9576, %v9572
        %v9709 = vpack.c.b16 %v9581, %v9577
        %v9710 = vpack.c.b16 %v9582, %v9578
        %v9711 = vpack.c.b16 %v9583, %v9579
        %v9712 = vpack.c.b16 %v9584, %v9580
        %9841 = vmatprep.subr.bf16.mxu0 %v9614
        %9842 = vmatpush1.bf16.msra.mxu0 %v9613
        %9843 = vmatprep.subr.bf16.mxu0 %v9610
        %9844 = vmatpush1.bf16.msra.mxu0 %v9609
        %9845 = vmatprep.subr.bf16.mxu0 %v9606
        %9846 = vmatpush1.bf16.msra.mxu0 %v9605
        %9847 = vmatprep.subr.bf16.mxu0 %v9602
        %9848 = vmatpush1.bf16.msra.mxu0 %v9601
        %9849 = vmatprep.subr.bf16.mxu0 %v9598
        %9850 = vmatpush1.bf16.msra.mxu0 %v9597
        %9851 = vmatprep.subr.bf16.mxu0 %v9594
        %9852 = vmatpush1.bf16.msra.mxu0 %v9593
        %9853 = vmatprep.subr.bf16.mxu0 %v9590
        %9854 = vmatpush1.bf16.msra.mxu0 %v9589
        %9855 = vmatprep.subr.bf16.mxu0 %v9586
        %9856 = vmatpush1.bf16.msra.mxu0 %v9585
        %9857 = vmatprep.subr.bf16.mxu0 %v9646
        %9858 = vmatpush2.bf16.msra.mxu0 %v9645
        %9859 = vmatprep.subr.bf16.mxu0 %v9642
        %9860 = vmatpush2.bf16.msra.mxu0 %v9641
        %9861 = vmatprep.subr.bf16.mxu0 %v9638
        %9862 = vmatpush2.bf16.msra.mxu0 %v9637
        %9863 = vmatprep.subr.bf16.mxu0 %v9634
        %9864 = vmatpush2.bf16.msra.mxu0 %v9633
        %9865 = vmatprep.subr.bf16.mxu0 %v9630
        %9866 = vmatpush2.bf16.msra.mxu0 %v9629
        %9867 = vmatprep.subr.bf16.mxu0 %v9626
        %9868 = vmatpush2.bf16.msra.mxu0 %v9625
        %9869 = vmatprep.subr.bf16.mxu0 %v9622
        %9870 = vmatpush2.bf16.msra.mxu0 %v9621
        %9871 = vmatprep.subr.bf16.mxu0 %v9618
        %9872 = vmatpush2.bf16.msra.mxu0 %v9617
        %9873 = vmatprep.mubr.bf16.mxu0 %v9194
        %9874 = vmatmul.mubr.bf16.gmra.mxu0 %v9193
        %v9875 = vpop.f32.mrf.mxu0
        %v9876 = vadd.f32 0.0, %v9875
        %v9877 = vpop.f32.mrf.mxu0
        %v9878 = vadd.f32 0.0, %v9877
        %v9879 = vpop.f32.mrf.mxu0
        %v9880 = vadd.f32 0.0, %v9879
        %v9881 = vpop.f32.mrf.mxu0
        %v9882 = vadd.f32 0.0, %v9881
        %9883 = vdwg.mxu0
        %9884 = vmatprep.subr.bf16.mxu0 %v9678
        %9885 = vmatpush1.bf16.msra.mxu0 %v9677
        %9886 = vmatprep.subr.bf16.mxu0 %v9674
        %9887 = vmatpush1.bf16.msra.mxu0 %v9673
        %9888 = vmatprep.subr.bf16.mxu0 %v9670
        %9889 = vmatpush1.bf16.msra.mxu0 %v9669
        %9890 = vmatprep.subr.bf16.mxu0 %v9666
        %9891 = vmatpush1.bf16.msra.mxu0 %v9665
        %9892 = vmatprep.subr.bf16.mxu0 %v9662
        %9893 = vmatpush1.bf16.msra.mxu0 %v9661
        %9894 = vmatprep.subr.bf16.mxu0 %v9658
        %9895 = vmatpush1.bf16.msra.mxu0 %v9657
        %9896 = vmatprep.subr.bf16.mxu0 %v9654
        %9897 = vmatpush1.bf16.msra.mxu0 %v9653
        %9898 = vmatprep.subr.bf16.mxu0 %v9650
        %9899 = vmatpush1.bf16.msra.mxu0 %v9649
        %9900 = vmatprep.subr.bf16.mxu0 %v9710
        %9901 = vmatpush2.bf16.msra.mxu0 %v9709
        %9902 = vmatprep.subr.bf16.mxu0 %v9706
        %9903 = vmatpush2.bf16.msra.mxu0 %v9705
        %9904 = vmatprep.subr.bf16.mxu0 %v9702
        %9905 = vmatpush2.bf16.msra.mxu0 %v9701
        %9906 = vmatprep.subr.bf16.mxu0 %v9698
        %9907 = vmatpush2.bf16.msra.mxu0 %v9697
        %9908 = vmatprep.subr.bf16.mxu0 %v9694
        %9909 = vmatpush2.bf16.msra.mxu0 %v9693
        %9910 = vmatprep.subr.bf16.mxu0 %v9690
        %9911 = vmatpush2.bf16.msra.mxu0 %v9689
        %9912 = vmatprep.subr.bf16.mxu0 %v9686
        %9913 = vmatpush2.bf16.msra.mxu0 %v9685
        %9914 = vmatprep.subr.bf16.mxu0 %v9682
        %9915 = vmatpush2.bf16.msra.mxu0 %v9681
        %9916 = vmatprep.mubr.bf16.mxu0 %v9196
        %9917 = vmatmul.mubr.bf16.gmra.mxu0 %v9195
        %v9918 = vpop.f32.mrf.mxu0
        %v9919 = vadd.f32 %v9876, %v9918
        %v9920 = vpop.f32.mrf.mxu0
        %v9921 = vadd.f32 %v9878, %v9920
        %v9922 = vpop.f32.mrf.mxu0
        %v9923 = vadd.f32 %v9880, %v9922
        %v9924 = vpop.f32.mrf.mxu0
        %v9925 = vadd.f32 %v9882, %v9924
        %9926 = vdwg.mxu0
        %9927 = vmatprep.subr.bf16.mxu0 %v9616
        %9928 = vmatpush1.bf16.msra.mxu0 %v9615
        %9929 = vmatprep.subr.bf16.mxu0 %v9612
        %9930 = vmatpush1.bf16.msra.mxu0 %v9611
        %9931 = vmatprep.subr.bf16.mxu0 %v9608
        %9932 = vmatpush1.bf16.msra.mxu0 %v9607
        %9933 = vmatprep.subr.bf16.mxu0 %v9604
        %9934 = vmatpush1.bf16.msra.mxu0 %v9603
        %9935 = vmatprep.subr.bf16.mxu0 %v9600
        %9936 = vmatpush1.bf16.msra.mxu0 %v9599
        %9937 = vmatprep.subr.bf16.mxu0 %v9596
        %9938 = vmatpush1.bf16.msra.mxu0 %v9595
        %9939 = vmatprep.subr.bf16.mxu0 %v9592
        %9940 = vmatpush1.bf16.msra.mxu0 %v9591
        %9941 = vmatprep.subr.bf16.mxu0 %v9588
        %9942 = vmatpush1.bf16.msra.mxu0 %v9587
        %9943 = vmatprep.subr.bf16.mxu0 %v9648
        %9944 = vmatpush2.bf16.msra.mxu0 %v9647
        %9945 = vmatprep.subr.bf16.mxu0 %v9644
        %9946 = vmatpush2.bf16.msra.mxu0 %v9643
        %9947 = vmatprep.subr.bf16.mxu0 %v9640
        %9948 = vmatpush2.bf16.msra.mxu0 %v9639
        %9949 = vmatprep.subr.bf16.mxu0 %v9636
        %9950 = vmatpush2.bf16.msra.mxu0 %v9635
        %9951 = vmatprep.subr.bf16.mxu0 %v9632
        %9952 = vmatpush2.bf16.msra.mxu0 %v9631
        %9953 = vmatprep.subr.bf16.mxu0 %v9628
        %9954 = vmatpush2.bf16.msra.mxu0 %v9627
        %9955 = vmatprep.subr.bf16.mxu0 %v9624
        %9956 = vmatpush2.bf16.msra.mxu0 %v9623
        %9957 = vmatprep.subr.bf16.mxu0 %v9620
        %9958 = vmatpush2.bf16.msra.mxu0 %v9619
        %9959 = vmatprep.mubr.bf16.mxu0 %v9194
        %9960 = vmatmul.mubr.bf16.gmra.mxu0 %v9193
        %v9961 = vpop.f32.mrf.mxu0
        %v9962 = vadd.f32 0.0, %v9961
        %v9963 = vpop.f32.mrf.mxu0
        %v9964 = vadd.f32 0.0, %v9963
        %v9965 = vpop.f32.mrf.mxu0
        %v9966 = vadd.f32 0.0, %v9965
        %v9967 = vpop.f32.mrf.mxu0
        %v9968 = vadd.f32 0.0, %v9967
        %9969 = vdwg.mxu0
        %9970 = vmatprep.subr.bf16.mxu0 %v9680
        %9971 = vmatpush1.bf16.msra.mxu0 %v9679
        %9972 = vmatprep.subr.bf16.mxu0 %v9676
        %9973 = vmatpush1.bf16.msra.mxu0 %v9675
        %9974 = vmatprep.subr.bf16.mxu0 %v9672
        %9975 = vmatpush1.bf16.msra.mxu0 %v9671
        %9976 = vmatprep.subr.bf16.mxu0 %v9668
        %9977 = vmatpush1.bf16.msra.mxu0 %v9667
        %9978 = vmatprep.subr.bf16.mxu0 %v9664
        %9979 = vmatpush1.bf16.msra.mxu0 %v9663
        %9980 = vmatprep.subr.bf16.mxu0 %v9660
        %9981 = vmatpush1.bf16.msra.mxu0 %v9659
        %9982 = vmatprep.subr.bf16.mxu0 %v9656
        %9983 = vmatpush1.bf16.msra.mxu0 %v9655
        %9984 = vmatprep.subr.bf16.mxu0 %v9652
        %9985 = vmatpush1.bf16.msra.mxu0 %v9651
        %9986 = vmatprep.subr.bf16.mxu0 %v9712
        %9987 = vmatpush2.bf16.msra.mxu0 %v9711
        %9988 = vmatprep.subr.bf16.mxu0 %v9708
        %9989 = vmatpush2.bf16.msra.mxu0 %v9707
        %9990 = vmatprep.subr.bf16.mxu0 %v9704
        %9991 = vmatpush2.bf16.msra.mxu0 %v9703
        %9992 = vmatprep.subr.bf16.mxu0 %v9700
        %9993 = vmatpush2.bf16.msra.mxu0 %v9699
        %9994 = vmatprep.subr.bf16.mxu0 %v9696
        %9995 = vmatpush2.bf16.msra.mxu0 %v9695
        %9996 = vmatprep.subr.bf16.mxu0 %v9692
        %9997 = vmatpush2.bf16.msra.mxu0 %v9691
        %9998 = vmatprep.subr.bf16.mxu0 %v9688
        %9999 = vmatpush2.bf16.msra.mxu0 %v9687
        %10000 = vmatprep.subr.bf16.mxu0 %v9684
        %10001 = vmatpush2.bf16.msra.mxu0 %v9683
        %10002 = vmatprep.mubr.bf16.mxu0 %v9196
        %10003 = vmatmul.mubr.bf16.gmra.mxu0 %v9195
        %v10004 = vpop.f32.mrf.mxu0
        %v10005 = vadd.f32 %v9962, %v10004
        %v10006 = vpop.f32.mrf.mxu0
        %v10007 = vadd.f32 %v9964, %v10006
        %v10008 = vpop.f32.mrf.mxu0
        %v10009 = vadd.f32 %v9966, %v10008
        %v10010 = vpop.f32.mrf.mxu0
        %v10011 = vadd.f32 %v9968, %v10010
        %10012 = vdwg.mxu0
        %v10013 = vadd.f32 %v8928, %v9919
        %v10014 = vadd.f32 %v8929, %v9921
        %v10015 = vadd.f32 %v8930, %v10005
        %v10016 = vadd.f32 %v8931, %v10007
        %v10017 = vadd.f32 %v8932, %v9923
        %v10018 = vadd.f32 %v8933, %v9925
        %v10019 = vadd.f32 %v8934, %v10009
        %v10020 = vadd.f32 %v8935, %v10011
        %v10021 = vld [vmem:[#allocation5] sm:$0xf]
        %v10023 = vlaneseq
        %v10024 = vshrl.u32 %v10023, 7
        %v10025 = vsub.s32 0, %v10024
        %v10026 = vrot.slane %v10021, %v10025
        %v10027 = vlaneseq
        %v10028 = vshrl.u32 %v10027, 7
        %v10029 = vsub.s32 1, %v10028
        %v10030 = vrot.slane %v10021, %v10029
        %v10031 = vlaneseq
        %v10032 = vshrl.u32 %v10031, 7
        %v10033 = vsub.s32 2, %v10032
        %v10034 = vrot.slane %v10021, %v10033
        %v10035 = vlaneseq
        %v10036 = vshrl.u32 %v10035, 7
        %v10037 = vsub.s32 3, %v10036
        %v10038 = vrot.slane %v10021, %v10037
        %v10043 = vadd.f32 %v10013, %v10026
        %v10044 = vadd.f32 %v10014, %v10030
        %v10045 = vadd.f32 %v10015, %v10034
        %v10046 = vadd.f32 %v10016, %v10038
        %v10047 = vadd.f32 %v10017, %v10026
        %v10048 = vadd.f32 %v10018, %v10030
        %v10049 = vadd.f32 %v10019, %v10034
        %v10050 = vadd.f32 %v10020, %v10038
        %v10051 = vmax.f32 %v10043, 0.0
        %v10052 = vmax.f32 %v10044, 0.0
        %v10053 = vmax.f32 %v10045, 0.0
        %v10054 = vmax.f32 %v10046, 0.0
        %v10055 = vmax.f32 %v10047, 0.0
        %v10056 = vmax.f32 %v10048, 0.0
        %v10057 = vmax.f32 %v10049, 0.0
        %v10058 = vmax.f32 %v10050, 0.0
        %v10059 = vpack.c.bf16 %v10055, %v10051
        %v10060 = vpack.c.bf16 %v10056, %v10052
        %v10061 = vpack.c.bf16 %v10057, %v10053
        %v10062 = vpack.c.bf16 %v10058, %v10054
        %v10067 = vunpack.c.l.b16 %v10059
        %v10068 = vunpack.c.l.b16 %v10060
        %v10069 = vunpack.c.l.b16 %v10061
        %v10070 = vunpack.c.l.b16 %v10062
        %v10071 = vunpack.c.h.b16 %v10059
        %v10072 = vunpack.c.h.b16 %v10060
        %v10073 = vunpack.c.h.b16 %v10061
        %v10074 = vunpack.c.h.b16 %v10062
        %v10075 = vpack.c.b16 %v10068, %v10067
        %v10076 = vpack.c.b16 %v10070, %v10069
        %v10077 = vpack.c.b16 %v10072, %v10071
        %v10078 = vpack.c.b16 %v10074, %v10073
        %10083 = vst [vmem:[%s191] sm:$0xff] %v10075
        %10084 = vst [vmem:[%s191 + $0x8] sm:$0xff] %v10076
        %10085 = vst [vmem:[%s191 + $0x10] sm:$0xff] %v10077
        %10086 = vst [vmem:[%s191 + $0x18] sm:$0xff] %v10078
        %s10087 = sand.u32 %s95, 1
        %s10088 = scalar_lea.sflag [#allocation4], %s10087
        %s10089 = sand.u32 %s95, 1
        %s10090 = smul.addr %s10089, 32
        %s10091 = scalar_lea.vmem [#allocation7], %s10090
        // Predicated region
        $region41: #{tpu_custom_call.1} parent=31 // pred_check
          %p10092 = pneg %p105
        $region42: #{tpu_custom_call.1} parent=31 // pred_check_branch
          %10094 = sbr.rel (%p10092) target = $region44
        $region43: #{tpu_custom_call.1} parent=31 // pred_region
          %s10096 = ssub.s32 512, 512
          %10097 = vsyncadd %s10088, %s10096
          %s10098 = smul.addr %s19, 8
          %s10099 = smul.addr %s10098, 64
          %s10100 = scalar_lea.hbm %s3, %s10099
          %s10101 = sshll.u32 %s10091, 4
          %s10102 = int_to_ptr.vmem [resolvable:$true] %s10101
          %10107 = dma.vmem_to_hbm [thread:$0]  %s10102, 512, %s10100, %s10088, 256, 256, 16
        $region44: #{tpu_custom_call.1} parent=31 // pred_fallthru
          _
      $region32: #{tpu_custom_call.1} parent=5 // pred_fallthru
        _
      %p10108 = scmp.le.s32.totalorder 2, %s14
      // Predicated region
      $region45: #{tpu_custom_call.1} parent=5 // pred_check
        %p10109 = pneg %p10108
      $region46: #{tpu_custom_call.1} parent=5 // pred_check_branch
        %10111 = sbr.rel (%p10109) target = $region48
      $region47: #{tpu_custom_call.1} parent=5 // pred_region
        %s10112 = ssub.s32 %s14, 2
        // Predicated region
        $region49: #{tpu_custom_call.1} parent=47 // pred_check
          %p10113 = pneg %p111
        $region50: #{tpu_custom_call.1} parent=47 // pred_check_branch
          %10115 = sbr.rel (%p10113) target = $region52
        $region51: #{tpu_custom_call.1} parent=47 // pred_region
          %s10116 = sand.u32 %s96, 1
          %s10117 = scalar_lea.sflag [#allocation4], %s10116
          %s10118 = sand.u32 %s96, 1
          %s10119 = smul.addr %s10118, 32
          %s10120 = scalar_lea.vmem [#allocation7], %s10119
          %10121 = dma.done %s10117, 512
        $region52: #{tpu_custom_call.1} parent=47 // pred_fallthru
          _
      $region48: #{tpu_custom_call.1} parent=5 // pred_fallthru
        _
    $region6: #{tpu_custom_call.1} parent=1 // loop_footer
      %s18 = sadd.s32 1, %s14
    $region7: #{tpu_custom_call.1} parent=1 // loop_footer_branch
      %13 = sbr.rel target = $region3
    $region8: #{tpu_custom_call.1} parent=1 // loop_exit
      _
    %10122 = vsyncpa [#allocation3], 1
    %s10123 = scalar_lea.sflag [#allocation3], 1
    %10124 = vsyncpa %s10123, 1
    %10125 = vsyncpa [#allocation6], 1
    %10126 = vsyncpa [#allocation4], 1
    %s10127 = scalar_lea.sflag [#allocation4], 1
    %10128 = vsyncpa %s10127, 1

</llo_original>
